<compile_context>
chip_gen: v7x
topology: tpu7x:2x2x1
jax: 0.10.0
libtpu: 0.0.40
codegen_flags: <defaults>
</compile_context>

<pallas_src>
import functools
import math

import jax
import jax.numpy as jnp
from jax.experimental import pallas as pl
from jax.experimental.pallas import tpu as pltpu


# ----------------------------------------------------------------------------
# Kernel: one (batch element, layer) pair per grid step.
# ----------------------------------------------------------------------------
def model_kernel(x_ref, conv_w_ref, conv_b_ref, pe_ref, mask_row_ref, mask_col_ref,
                 wqkv_ref, bqkv_ref, wo_ref, bo_ref, ln1a_ref, ln1b_ref,
                 w1_ref, b1_ref, w2_ref, b2_ref, ln2a_ref, ln2b_ref,
                 pvw1_ref, pvb1_ref, pvw2_ref, pvb2_ref,
                 gw1_ref, gb1_ref, gw2_ref, gb2_ref,
                 o_last_ref, o_pv_ref, o_means_ref, o_glob_ref,
                 x_scr, *, num_heads):
    f32, bf16 = jnp.float32, jnp.bfloat16
    T, D = pe_ref.shape
    FM = x_ref.shape[2] - 2
    NH = num_heads
    DK = D // NH
    eps = 1e-6

    l = pl.program_id(1)
    n_layers = pl.num_programs(1)

    # ---------------- CNN front-end + positional encoding (once per batch) ----
    @pl.when(l == 0)
    def _():
        # 3x3 conv (1 -> D), ReLU, mean over frequency — taps taken straight
        # from the haloed raw input tile (no HBM-materialized im2col).
        xmean = jnp.zeros((T, D), f32)
        for f in range(FM):
            pre = conv_b_ref[...]                                        # (1, D)
            for di in range(3):
                for dj in range(3):
                    tap = di * 3 + dj
                    w_row = conv_w_ref[tap:tap + 1, :]                   # (1, D)
                    col = x_ref[0, di:di + T, f + dj:f + dj + 1]         # (T, 1)
                    pre = pre + col * w_row
            xmean = xmean + jnp.maximum(pre, 0.0)
        # TODO(synk): chunk this frequency loop for production FM*T*D.
        x_scr[...] = xmean * (1.0 / FM) + pe_ref[...]

    # ---------------- pre-norm transformer encoder layer l --------------------
    mask_r = mask_row_ref[0]                                             # (1, T)
    cnt = jnp.sum(mask_r, axis=-1, keepdims=True)                        # (1, 1)

    def layer_norm(v, a, b):
        # TODO(synk): Annotated-Transformer style LayerNorm (unbiased std,
        # eps on std) — original LayerNorm module was not provided.
        mu = jnp.mean(v, axis=-1, keepdims=True)
        var = jnp.sum((v - mu) * (v - mu), axis=-1, keepdims=True) * (1.0 / (D - 1))
        return a * (v - mu) / (jnp.sqrt(var) + eps) + b

    x_cur = x_scr[...]                                                   # (T, D)

    # --- self-attention sublayer: x + Attn(LN(x)) (dropout = identity) -------
    xn = layer_norm(x_cur, ln1a_ref[0], ln1b_ref[0])
    # Fused QKV projection: one full-width matmul; 1/sqrt(dk) is already
    # folded into the q block of wqkv / bqkv in the wrapper.
    qkv = (jnp.dot(xn.astype(bf16), wqkv_ref[0], preferred_element_type=f32)
           + bqkv_ref[0]).astype(bf16)                                   # (T, 3D)

    def split_heads(base):  # lane slices -> (NH, T, DK), no data-dependent work
        return jnp.stack([qkv[:, base + h * DK: base + (h + 1) * DK]
                          for h in range(NH)], axis=0)

    q = split_heads(0)
    k = split_heads(D)
    v = split_heads(2 * D)

    s = jnp.einsum('htk,hsk->hts', q, k, preferred_element_type=f32)     # (NH,T,T)
    s = s - jnp.max(s, axis=-1, keepdims=True)
    e = jnp.exp(s)
    p = e * pl.reciprocal(jnp.sum(e, axis=-1, keepdims=True), approx=True)
    ctx = jnp.einsum('hts,hsk->htk', p.astype(bf16), v,
                     preferred_element_type=f32)                         # (NH,T,DK)
    # TODO(synk): src_mask not applied; KV-tiled online softmax for large T.
    ctx_cat = jnp.concatenate([ctx[h] for h in range(NH)], axis=-1)      # (T, D)
    attn = jnp.dot(ctx_cat.astype(bf16), wo_ref[0],
                   preferred_element_type=f32) + bo_ref[0]               # (T, D)
    x1 = x_cur + attn

    # --- feed-forward sublayer: x1 + FFN(LN(x1)) ------------------------------
    x1n = layer_norm(x1, ln2a_ref[0], ln2b_ref[0])
    hid = jnp.maximum(
        jnp.dot(x1n.astype(bf16), w1_ref[0], preferred_element_type=f32) + b1_ref[0],
        0.0)
    x2 = x1 + jnp.dot(hid.astype(bf16), w2_ref[0],
                      preferred_element_type=f32) + b2_ref[0]
    x_scr[...] = x2

    # --- per-layer masked temporal mean, written straight to its output row ---
    @pl.when(l < n_layers - 1)
    def _():
        mean_l = jnp.dot(mask_r, x2, preferred_element_type=f32) / cnt   # (1, D)
        o_means_ref[0, pl.ds(l, 1), :] = mean_l

    # --- epilogue at the last layer: L2-normalize + prediction heads ----------
    @pl.when(l == n_layers - 1)
    def _():
        nrm = jnp.sqrt(jnp.sum(x2 * x2, axis=-1, keepdims=True))
        last_n = x2 / jnp.maximum(nrm, 1e-12)                            # F.normalize
        o_last_ref[0] = last_n

        mean_last = jnp.dot(mask_r, last_n, preferred_element_type=f32) / cnt
        o_means_ref[0, pl.ds(l, 1), :] = mean_last

        # per-frame pedal-value head: Linear(D,2D) -> ReLU -> Linear(2D,1)
        hid_pv = jnp.maximum(
            jnp.dot(last_n.astype(bf16), pvw1_ref[...],
                    preferred_element_type=f32) + pvb1_ref[...], 0.0)    # (T, 2D)
        pv = jnp.sum(hid_pv * pvw2_ref[...], axis=-1, keepdims=True) + pvb2_ref[...]
        o_pv_ref[0] = pv * mask_col_ref[0]                               # (T, 1)

        # global pedal-value head on the last masked mean
        ghid = jnp.maximum(
            jnp.dot(mean_last.astype(bf16), gw1_ref[...],
                    preferred_element_type=f32) + gb1_ref[...], 0.0)     # (1, 2D)
        o_glob_ref[0] = (jnp.sum(ghid * gw2_ref[...], axis=-1, keepdims=True)
                         + gb2_ref[...])                                 # (1, 1)


# ----------------------------------------------------------------------------
# Parameter init (deterministic, torch-like uniform fan-in scaling)
# ----------------------------------------------------------------------------
def _uniform(key, shape, fan_in):
    bound = 1.0 / math.sqrt(fan_in)
    return jax.random.uniform(key, shape, jnp.float32, -bound, bound)


def _linear(key, d_in, d_out):
    kw, kb = jax.random.split(key)
    return _uniform(kw, (d_in, d_out), d_in), _uniform(kb, (1, d_out), d_in)


def _sinusoidal_pe(t, d):
    pos = jnp.arange(t, dtype=jnp.float32)[:, None]
    div = jnp.exp(jnp.arange(0, d, 2, dtype=jnp.float32) * (-math.log(10000.0) / d))
    pe = jnp.zeros((t, d), jnp.float32)
    pe = pe.at[:, 0::2].set(jnp.sin(pos * div))
    pe = pe.at[:, 1::2].set(jnp.cos(pos * div))
    return pe


def _mlp_head(key, d):
    """Linear(d,2d) -> ReLU -> (Dropout=id) -> Linear(2d,1)."""
    k1, k2 = jax.random.split(key)
    w1, b1 = _linear(k1, d, 2 * d)
    w2, b2 = _linear(k2, 2 * d, 1)
    # second layer stored as a (1, 2d) row for an in-kernel lane-reduce matvec
    return w1.astype(jnp.bfloat16), b1, w2.reshape(1, 2 * d), b2.reshape(1, 1)


def init_params(key, d, num_heads, ff, num_layers, max_len):
    # TODO(synk): at production size pad d / ff up to multiples of 128.
    dk = d // num_heads
    scale = 1.0 / math.sqrt(dk)
    keys = jax.random.split(key, num_layers + 3)
    kcw, kcb = jax.random.split(keys[0])
    conv_w = _uniform(kcw, (9, d), 9)        # Conv2d(1, d, 3, pad=1): rows = di*3+dj
    conv_b = _uniform(kcb, (1, d), 9)

    names = ['wqkv', 'bqkv', 'wo', 'bo', 'ln1a', 'ln1b',
             'w1', 'b1', 'w2', 'b2', 'ln2a', 'ln2b']
    acc = {n: [] for n in names}
    for li in range(num_layers):
        lk = jax.random.split(keys[1 + li], 6)
        wq, bq = _linear(lk[0], d, d)
        wk, bk = _linear(lk[1], d, d)
        wv, bv = _linear(lk[2], d, d)
        wo, bo = _linear(lk[3], d, d)
        w1, b1 = _linear(lk[4], d, ff)
        w2, b2 = _linear(lk[5], ff, d)
        # fused QKV projection; 1/sqrt(dk) folded into the q block
        acc['wqkv'].append(jnp.concatenate([wq * scale, wk, wv], axis=1))   # (d, 3d)
        acc['bqkv'].append(jnp.concatenate([bq * scale, bk, bv], axis=1))   # (1, 3d)
        acc['wo'].append(wo); acc['bo'].append(bo)
        acc['ln1a'].append(jnp.ones((1, d), jnp.float32))
        acc['ln1b'].append(jnp.zeros((1, d), jnp.float32))
        acc['w1'].append(w1); acc['b1'].append(b1)
        acc['w2'].append(w2); acc['b2'].append(b2)
        acc['ln2a'].append(jnp.ones((1, d), jnp.float32))
        acc['ln2b'].append(jnp.zeros((1, d), jnp.float32))
    params = {n: jnp.stack(v) for n, v in acc.items()}        # stacked over layers
    for n in ['wqkv', 'wo', 'w1', 'w2']:                      # bf16 MXU operands
        params[n] = params[n].astype(jnp.bfloat16)

    pv_w1, pv_b1, pv_w2, pv_b2 = _mlp_head(keys[num_layers + 1], d)
    g_w1, g_b1, g_w2, g_b2 = _mlp_head(keys[num_layers + 2], d)
    params.update(conv_w=conv_w, conv_b=conv_b, pe=_sinusoidal_pe(max_len, d),
                  pv_w1=pv_w1, pv_b1=pv_b1, pv_w2=pv_w2, pv_b2=pv_b2,
                  g_w1=g_w1, g_b1=g_b1, g_w2=g_w2, g_b2=g_b2)
    return params


# ----------------------------------------------------------------------------
# Forward (predict_global_pedal=True, predict_room/onset/offset=False; inference)
# ----------------------------------------------------------------------------
def forward(params, x, loss_mask, src_mask=None, *, num_heads):
    del src_mask  # TODO(synk): attention masking (src_mask) not supported.
    B, T, FM = x.shape
    D = params['pe'].shape[-1]
    L = params['wqkv'].shape[0]

    # Haloed raw input (zero pad of 1 on time & freq) -> in-kernel 3x3 taps.
    x_halo = jnp.pad(x, ((0, 0), (1, 1), (1, 1)))                  # (B, T+2, FM+2)
    pe = params['pe'][:T]
    mask_row = loss_mask[:, None, :].astype(jnp.float32)           # (B, 1, T)
    mask_col = loss_mask[:, :, None].astype(jnp.float32)           # (B, T, 1)

    per_layer_names = ['wqkv', 'bqkv', 'wo', 'bo', 'ln1a', 'ln1b',
                       'w1', 'b1', 'w2', 'b2', 'ln2a', 'ln2b']
    const_names = ['pv_w1', 'pv_b1', 'pv_w2', 'pv_b2',
                   'g_w1', 'g_b1', 'g_w2', 'g_b2']

    def _const_spec(a):
        """Grid-invariant operand: fetched once, single-buffered when supported."""
        nd = a.ndim
        idx = lambda i, l, _n=nd: (0,) * _n
        try:
            return pl.BlockSpec(a.shape, idx, pipeline_mode=pl.Buffered(1))
        except Exception:                 # older jax without pipeline_mode/Buffered
            return pl.BlockSpec(a.shape, idx)

    def _per_batch_spec(a):
        return pl.BlockSpec((1,) + tuple(a.shape[1:]), lambda i, l: (i, 0, 0))

    def _per_layer_spec(a):
        nd = a.ndim
        return pl.BlockSpec((1,) + tuple(a.shape[1:]),
                            lambda i, l, _n=nd: (l,) + (0,) * (_n - 1))

    args = ([x_halo, params['conv_w'], params['conv_b'], pe, mask_row, mask_col]
            + [params[n] for n in per_layer_names]
            + [params[n] for n in const_names])
    in_specs = ([_per_batch_spec(x_halo), _const_spec(params['conv_w']),
                 _const_spec(params['conv_b']), _const_spec(pe),
                 _per_batch_spec(mask_row), _per_batch_spec(mask_col)]
                + [_per_layer_spec(params[n]) for n in per_layer_names]
                + [_const_spec(params[n]) for n in const_names])

    out_shape = (jax.ShapeDtypeStruct((B, T, D), jnp.float32),     # L2-normalized latent
                 jax.ShapeDtypeStruct((B, T, 1), jnp.float32),     # masked per-frame p_v
                 jax.ShapeDtypeStruct((B, L, D), jnp.float32),     # per-layer masked means
                 jax.ShapeDtypeStruct((B, 1, 1), jnp.float32))     # global p_v
    out_specs = (pl.BlockSpec((1, T, D), lambda i, l: (i, 0, 0)),
                 pl.BlockSpec((1, T, 1), lambda i, l: (i, 0, 0)),
                 pl.BlockSpec((1, L, D), lambda i, l: (i, 0, 0)),
                 pl.BlockSpec((1, 1, 1), lambda i, l: (i, 0, 0)))

    # VMEM budget derived from actual block footprint (x2 = double-buffered,
    # x1 = single-buffered constants), capped below v7x's 64 MiB physical VMEM.
    def _nbytes(a):
        return int(a.size) * a.dtype.itemsize
    est_vmem = (
        2 * (_nbytes(x_halo) // B + _nbytes(mask_row) // B + _nbytes(mask_col) // B)
        + 2 * sum(_nbytes(params[n]) // L for n in per_layer_names)
        + sum(_nbytes(params[n]) for n in const_names)
        + _nbytes(params['conv_w']) + _nbytes(params['conv_b']) + _nbytes(pe)
        + 2 * 4 * (T * D + T + L * D + 1)       # double-buffered output blocks (f32)
        + 4 * T * D)                            # x_cur carry scratch
    vmem_limit = int(min(64 * 2 ** 20, max(3 * est_vmem, 32 * 2 ** 20)))

    o_last, o_pv, o_means, o_glob = pl.pallas_call(
        functools.partial(model_kernel, num_heads=num_heads),
        grid=(B, L),                            # (batch, layer); layers stream weights
        in_specs=in_specs,
        out_specs=out_specs,
        out_shape=out_shape,
        scratch_shapes=[pltpu.VMEM((T, D), jnp.float32)],   # x_cur carried over layers
        compiler_params=pltpu.CompilerParams(
            dimension_semantics=("parallel", "arbitrary"),
            vmem_limit_bytes=vmem_limit),
    )(*args)

    p_v = o_pv                                         # (B, T, 1), already masked
    p_on = jnp.zeros_like(p_v)                         # predict_pedal_onset=False
    p_off = jnp.zeros_like(p_v)                        # predict_pedal_offset=False
    room_logits = jnp.zeros((B, 4, 1), jnp.float32)    # predict_room=False
    global_p_v = o_glob[:, 0, :]                       # (B, 1)
    mean_latent_reprs = [o_means[:, li, :] for li in range(L)]
    return (global_p_v, p_v, p_on, p_off, room_logits, o_last, mean_latent_reprs)


# ----------------------------------------------------------------------------
if __name__ == "__main__":
    B, T, F_MEL = 2, 16, 32
    HIDDEN, HEADS, FF, LAYERS = 32, 4, 64, 2

    key = jax.random.PRNGKey(0)
    k_x, k_m, k_p = jax.random.split(key, 3)
    x = jax.random.normal(k_x, (B, T, F_MEL), jnp.float32)
    loss_mask = (jax.random.uniform(k_m, (B, T)) > 0.3).astype(jnp.float32)
    loss_mask = loss_mask.at[:, 0].set(1.0)            # avoid all-masked rows

    params = init_params(k_p, HIDDEN, HEADS, FF, LAYERS, T)
    fwd = jax.jit(functools.partial(forward, num_heads=HEADS))
    outs = jax.block_until_ready(fwd(params, x, loss_mask))
    print("KERNEL_OK")
</pallas_src>

<mosaic_0001>
module attributes {stable_mosaic.version = 11 : i64} {
  func.func @model_kernel(%arg0: i32, %arg1: i32, %arg2: memref<1x18x34xf32, #tpu.memory_space<vmem>>, %arg3: memref<9x32xf32, #tpu.memory_space<vmem>>, %arg4: memref<1x32xf32, #tpu.memory_space<vmem>>, %arg5: memref<16x32xf32, #tpu.memory_space<vmem>>, %arg6: memref<1x1x16xf32, #tpu.memory_space<vmem>>, %arg7: memref<1x16x1xf32, #tpu.memory_space<vmem>>, %arg8: memref<1x32x96xbf16, #tpu.memory_space<vmem>>, %arg9: memref<1x1x96xf32, #tpu.memory_space<vmem>>, %arg10: memref<1x32x32xbf16, #tpu.memory_space<vmem>>, %arg11: memref<1x1x32xf32, #tpu.memory_space<vmem>>, %arg12: memref<1x1x32xf32, #tpu.memory_space<vmem>>, %arg13: memref<1x1x32xf32, #tpu.memory_space<vmem>>, %arg14: memref<1x32x64xbf16, #tpu.memory_space<vmem>>, %arg15: memref<1x1x64xf32, #tpu.memory_space<vmem>>, %arg16: memref<1x64x32xbf16, #tpu.memory_space<vmem>>, %arg17: memref<1x1x32xf32, #tpu.memory_space<vmem>>, %arg18: memref<1x1x32xf32, #tpu.memory_space<vmem>>, %arg19: memref<1x1x32xf32, #tpu.memory_space<vmem>>, %arg20: memref<32x64xbf16, #tpu.memory_space<vmem>>, %arg21: memref<1x64xf32, #tpu.memory_space<vmem>>, %arg22: memref<1x64xf32, #tpu.memory_space<vmem>>, %arg23: memref<1x1xf32, #tpu.memory_space<vmem>>, %arg24: memref<32x64xbf16, #tpu.memory_space<vmem>>, %arg25: memref<1x64xf32, #tpu.memory_space<vmem>>, %arg26: memref<1x64xf32, #tpu.memory_space<vmem>>, %arg27: memref<1x1xf32, #tpu.memory_space<vmem>>, %arg28: memref<1x16x32xf32, #tpu.memory_space<vmem>>, %arg29: memref<1x16x1xf32, #tpu.memory_space<vmem>>, %arg30: memref<1x2x32xf32, #tpu.memory_space<vmem>>, %arg31: memref<1x1x1xf32, #tpu.memory_space<vmem>>, %arg32: memref<16x32xf32, #tpu.memory_space<vmem>>) attributes {dimension_semantics = [#tpu.dimension_semantics<parallel>, #tpu.dimension_semantics<arbitrary>], iteration_bounds = array<i64: 2, 2>, scalar_prefetch = 0 : i64, scratch_operands = 1 : i64, tpu.core_type = #tpu.core_type<tc>, window_params = [{transform_indices = @transform_0, window_bounds = array<i64: 1, 18, 34>}, {pipeline_mode = #tpu.pipeline_mode<synchronous>, transform_indices = @transform_1, window_bounds = array<i64: 9, 32>}, {pipeline_mode = #tpu.pipeline_mode<synchronous>, transform_indices = @transform_2, window_bounds = array<i64: 1, 32>}, {pipeline_mode = #tpu.pipeline_mode<synchronous>, transform_indices = @transform_3, window_bounds = array<i64: 16, 32>}, {transform_indices = @transform_4, window_bounds = array<i64: 1, 1, 16>}, {transform_indices = @transform_5, window_bounds = array<i64: 1, 16, 1>}, {transform_indices = @transform_6, window_bounds = array<i64: 1, 32, 96>}, {transform_indices = @transform_7, window_bounds = array<i64: 1, 1, 96>}, {transform_indices = @transform_8, window_bounds = array<i64: 1, 32, 32>}, {transform_indices = @transform_9, window_bounds = array<i64: 1, 1, 32>}, {transform_indices = @transform_10, window_bounds = array<i64: 1, 1, 32>}, {transform_indices = @transform_11, window_bounds = array<i64: 1, 1, 32>}, {transform_indices = @transform_12, window_bounds = array<i64: 1, 32, 64>}, {transform_indices = @transform_13, window_bounds = array<i64: 1, 1, 64>}, {transform_indices = @transform_14, window_bounds = array<i64: 1, 64, 32>}, {transform_indices = @transform_15, window_bounds = array<i64: 1, 1, 32>}, {transform_indices = @transform_16, window_bounds = array<i64: 1, 1, 32>}, {transform_indices = @transform_17, window_bounds = array<i64: 1, 1, 32>}, {pipeline_mode = #tpu.pipeline_mode<synchronous>, transform_indices = @transform_18, window_bounds = array<i64: 32, 64>}, {pipeline_mode = #tpu.pipeline_mode<synchronous>, transform_indices = @transform_19, window_bounds = array<i64: 1, 64>}, {pipeline_mode = #tpu.pipeline_mode<synchronous>, transform_indices = @transform_20, window_bounds = array<i64: 1, 64>}, {pipeline_mode = #tpu.pipeline_mode<synchronous>, transform_indices = @transform_21, window_bounds = array<i64: 1, 1>}, {pipeline_mode = #tpu.pipeline_mode<synchronous>, transform_indices = @transform_22, window_bounds = array<i64: 32, 64>}, {pipeline_mode = #tpu.pipeline_mode<synchronous>, transform_indices = @transform_23, window_bounds = array<i64: 1, 64>}, {pipeline_mode = #tpu.pipeline_mode<synchronous>, transform_indices = @transform_24, window_bounds = array<i64: 1, 64>}, {pipeline_mode = #tpu.pipeline_mode<synchronous>, transform_indices = @transform_25, window_bounds = array<i64: 1, 1>}, {transform_indices = @transform_26, window_bounds = array<i64: 1, 16, 32>}, {transform_indices = @transform_27, window_bounds = array<i64: 1, 16, 1>}, {transform_indices = @transform_28, window_bounds = array<i64: 1, 2, 32>}, {transform_indices = @transform_29, window_bounds = array<i64: 1, 1, 1>}]} {
    %c0_i32 = arith.constant 0 : i32
    %0 = arith.cmpi eq, %arg1, %c0_i32 : i32
    %1 = arith.extui %0 : i1 to i32
    %c0_i32_0 = arith.constant 0 : i32
    %2 = arith.cmpi ne, %1, %c0_i32_0 : i32
    scf.if %2 {
      %cst_65 = arith.constant 0.000000e+00 : f32
      %157 = vector.broadcast %cst_65 : f32 to vector<16x32xf32>
      %c0_66 = arith.constant 0 : index
      %c0_67 = arith.constant 0 : index
      %158 = vector.load %arg4[%c0_66, %c0_67] : memref<1x32xf32, #tpu.memory_space<vmem>>, vector<1x32xf32>
      %c0_68 = arith.constant 0 : index
      %c0_69 = arith.constant 0 : index
      %159 = vector.load %arg3[%c0_68, %c0_69] : memref<9x32xf32, #tpu.memory_space<vmem>>, vector<1x32xf32>
      %c0_70 = arith.constant 0 : index
      %c0_71 = arith.constant 0 : index
      %c0_72 = arith.constant 0 : index
      %160 = vector.load %arg2[%c0_70, %c0_71, %c0_72] : memref<1x18x34xf32, #tpu.memory_space<vmem>>, vector<1x16x1xf32>
      %161 = vector.shape_cast %160 : vector<1x16x1xf32> to vector<16x1xf32>
      %162 = vector.broadcast %161 : vector<16x1xf32> to vector<16x32xf32>
      %163 = vector.broadcast %159 : vector<1x32xf32> to vector<16x32xf32>
      %164 = arith.mulf %162, %163 : vector<16x32xf32>
      %165 = vector.broadcast %158 : vector<1x32xf32> to vector<16x32xf32>
      %166 = arith.addf %165, %164 : vector<16x32xf32>
      %c1 = arith.constant 1 : index
      %c0_73 = arith.constant 0 : index
      %167 = vector.load %arg3[%c1, %c0_73] : memref<9x32xf32, #tpu.memory_space<vmem>>, vector<1x32xf32>
      %c0_74 = arith.constant 0 : index
      %c0_75 = arith.constant 0 : index
      %c1_76 = arith.constant 1 : index
      %168 = vector.load %arg2[%c0_74, %c0_75, %c1_76] : memref<1x18x34xf32, #tpu.memory_space<vmem>>, vector<1x16x1xf32>
      %169 = vector.shape_cast %168 : vector<1x16x1xf32> to vector<16x1xf32>
      %170 = vector.broadcast %169 : vector<16x1xf32> to vector<16x32xf32>
      %171 = vector.broadcast %167 : vector<1x32xf32> to vector<16x32xf32>
      %172 = arith.mulf %170, %171 : vector<16x32xf32>
      %173 = arith.addf %166, %172 : vector<16x32xf32>
      %c2 = arith.constant 2 : index
      %c0_77 = arith.constant 0 : index
      %174 = vector.load %arg3[%c2, %c0_77] : memref<9x32xf32, #tpu.memory_space<vmem>>, vector<1x32xf32>
      %c0_78 = arith.constant 0 : index
      %c0_79 = arith.constant 0 : index
      %c2_80 = arith.constant 2 : index
      %175 = vector.load %arg2[%c0_78, %c0_79, %c2_80] : memref<1x18x34xf32, #tpu.memory_space<vmem>>, vector<1x16x1xf32>
      %176 = vector.shape_cast %175 : vector<1x16x1xf32> to vector<16x1xf32>
      %177 = vector.broadcast %176 : vector<16x1xf32> to vector<16x32xf32>
      %178 = vector.broadcast %174 : vector<1x32xf32> to vector<16x32xf32>
      %179 = arith.mulf %177, %178 : vector<16x32xf32>
      %180 = arith.addf %173, %179 : vector<16x32xf32>
      %c3 = arith.constant 3 : index
      %c0_81 = arith.constant 0 : index
      %181 = vector.load %arg3[%c3, %c0_81] : memref<9x32xf32, #tpu.memory_space<vmem>>, vector<1x32xf32>
      %c0_82 = arith.constant 0 : index
      %c1_83 = arith.constant 1 : index
      %c0_84 = arith.constant 0 : index
      %182 = vector.load %arg2[%c0_82, %c1_83, %c0_84] : memref<1x18x34xf32, #tpu.memory_space<vmem>>, vector<1x16x1xf32>
      %183 = vector.shape_cast %182 : vector<1x16x1xf32> to vector<16x1xf32>
      %184 = vector.broadcast %183 : vector<16x1xf32> to vector<16x32xf32>
      %185 = vector.broadcast %181 : vector<1x32xf32> to vector<16x32xf32>
      %186 = arith.mulf %184, %185 : vector<16x32xf32>
      %187 = arith.addf %180, %186 : vector<16x32xf32>
      %c4 = arith.constant 4 : index
      %c0_85 = arith.constant 0 : index
      %188 = vector.load %arg3[%c4, %c0_85] : memref<9x32xf32, #tpu.memory_space<vmem>>, vector<1x32xf32>
      %c0_86 = arith.constant 0 : index
      %c1_87 = arith.constant 1 : index
      %c1_88 = arith.constant 1 : index
      %189 = vector.load %arg2[%c0_86, %c1_87, %c1_88] : memref<1x18x34xf32, #tpu.memory_space<vmem>>, vector<1x16x1xf32>
      %190 = vector.shape_cast %189 : vector<1x16x1xf32> to vector<16x1xf32>
      %191 = vector.broadcast %190 : vector<16x1xf32> to vector<16x32xf32>
      %192 = vector.broadcast %188 : vector<1x32xf32> to vector<16x32xf32>
      %193 = arith.mulf %191, %192 : vector<16x32xf32>
      %194 = arith.addf %187, %193 : vector<16x32xf32>
      %c5 = arith.constant 5 : index
      %c0_89 = arith.constant 0 : index
      %195 = vector.load %arg3[%c5, %c0_89] : memref<9x32xf32, #tpu.memory_space<vmem>>, vector<1x32xf32>
      %c0_90 = arith.constant 0 : index
      %c1_91 = arith.constant 1 : index
      %c2_92 = arith.constant 2 : index
      %196 = vector.load %arg2[%c0_90, %c1_91, %c2_92] : memref<1x18x34xf32, #tpu.memory_space<vmem>>, vector<1x16x1xf32>
      %197 = vector.shape_cast %196 : vector<1x16x1xf32> to vector<16x1xf32>
      %198 = vector.broadcast %197 : vector<16x1xf32> to vector<16x32xf32>
      %199 = vector.broadcast %195 : vector<1x32xf32> to vector<16x32xf32>
      %200 = arith.mulf %198, %199 : vector<16x32xf32>
      %201 = arith.addf %194, %200 : vector<16x32xf32>
      %c6 = arith.constant 6 : index
      %c0_93 = arith.constant 0 : index
      %202 = vector.load %arg3[%c6, %c0_93] : memref<9x32xf32, #tpu.memory_space<vmem>>, vector<1x32xf32>
      %c0_94 = arith.constant 0 : index
      %c2_95 = arith.constant 2 : index
      %c0_96 = arith.constant 0 : index
      %203 = vector.load %arg2[%c0_94, %c2_95, %c0_96] : memref<1x18x34xf32, #tpu.memory_space<vmem>>, vector<1x16x1xf32>
      %204 = vector.shape_cast %203 : vector<1x16x1xf32> to vector<16x1xf32>
      %205 = vector.broadcast %204 : vector<16x1xf32> to vector<16x32xf32>
      %206 = vector.broadcast %202 : vector<1x32xf32> to vector<16x32xf32>
      %207 = arith.mulf %205, %206 : vector<16x32xf32>
      %208 = arith.addf %201, %207 : vector<16x32xf32>
      %c7 = arith.constant 7 : index
      %c0_97 = arith.constant 0 : index
      %209 = vector.load %arg3[%c7, %c0_97] : memref<9x32xf32, #tpu.memory_space<vmem>>, vector<1x32xf32>
      %c0_98 = arith.constant 0 : index
      %c2_99 = arith.constant 2 : index
      %c1_100 = arith.constant 1 : index
      %210 = vector.load %arg2[%c0_98, %c2_99, %c1_100] : memref<1x18x34xf32, #tpu.memory_space<vmem>>, vector<1x16x1xf32>
      %211 = vector.shape_cast %210 : vector<1x16x1xf32> to vector<16x1xf32>
      %212 = vector.broadcast %211 : vector<16x1xf32> to vector<16x32xf32>
      %213 = vector.broadcast %209 : vector<1x32xf32> to vector<16x32xf32>
      %214 = arith.mulf %212, %213 : vector<16x32xf32>
      %215 = arith.addf %208, %214 : vector<16x32xf32>
      %c8 = arith.constant 8 : index
      %c0_101 = arith.constant 0 : index
      %216 = vector.load %arg3[%c8, %c0_101] : memref<9x32xf32, #tpu.memory_space<vmem>>, vector<1x32xf32>
      %c0_102 = arith.constant 0 : index
      %c2_103 = arith.constant 2 : index
      %c2_104 = arith.constant 2 : index
      %217 = vector.load %arg2[%c0_102, %c2_103, %c2_104] : memref<1x18x34xf32, #tpu.memory_space<vmem>>, vector<1x16x1xf32>
      %218 = vector.shape_cast %217 : vector<1x16x1xf32> to vector<16x1xf32>
      %219 = vector.broadcast %218 : vector<16x1xf32> to vector<16x32xf32>
      %220 = vector.broadcast %216 : vector<1x32xf32> to vector<16x32xf32>
      %221 = arith.mulf %219, %220 : vector<16x32xf32>
      %222 = arith.addf %215, %221 : vector<16x32xf32>
      %cst_105 = arith.constant 0.000000e+00 : f32
      %223 = vector.broadcast %cst_105 : f32 to vector<16x32xf32>
      %224 = arith.maximumf %222, %223 : vector<16x32xf32>
      %225 = arith.addf %157, %224 : vector<16x32xf32>
      %c0_106 = arith.constant 0 : index
      %c0_107 = arith.constant 0 : index
      %226 = vector.load %arg4[%c0_106, %c0_107] : memref<1x32xf32, #tpu.memory_space<vmem>>, vector<1x32xf32>
      %c0_108 = arith.constant 0 : index
      %c0_109 = arith.constant 0 : index
      %227 = vector.load %arg3[%c0_108, %c0_109] : memref<9x32xf32, #tpu.memory_space<vmem>>, vector<1x32xf32>
      %c0_110 = arith.constant 0 : index
      %c0_111 = arith.constant 0 : index
      %c1_112 = arith.constant 1 : index
      %228 = vector.load %arg2[%c0_110, %c0_111, %c1_112] : memref<1x18x34xf32, #tpu.memory_space<vmem>>, vector<1x16x1xf32>
      %229 = vector.shape_cast %228 : vector<1x16x1xf32> to vector<16x1xf32>
      %230 = vector.broadcast %229 : vector<16x1xf32> to vector<16x32xf32>
      %231 = vector.broadcast %227 : vector<1x32xf32> to vector<16x32xf32>
      %232 = arith.mulf %230, %231 : vector<16x32xf32>
      %233 = vector.broadcast %226 : vector<1x32xf32> to vector<16x32xf32>
      %234 = arith.addf %233, %232 : vector<16x32xf32>
      %c1_113 = arith.constant 1 : index
      %c0_114 = arith.constant 0 : index
      %235 = vector.load %arg3[%c1_113, %c0_114] : memref<9x32xf32, #tpu.memory_space<vmem>>, vector<1x32xf32>
      %c0_115 = arith.constant 0 : index
      %c0_116 = arith.constant 0 : index
      %c2_117 = arith.constant 2 : index
      %236 = vector.load %arg2[%c0_115, %c0_116, %c2_117] : memref<1x18x34xf32, #tpu.memory_space<vmem>>, vector<1x16x1xf32>
      %237 = vector.shape_cast %236 : vector<1x16x1xf32> to vector<16x1xf32>
      %238 = vector.broadcast %237 : vector<16x1xf32> to vector<16x32xf32>
      %239 = vector.broadcast %235 : vector<1x32xf32> to vector<16x32xf32>
      %240 = arith.mulf %238, %239 : vector<16x32xf32>
      %241 = arith.addf %234, %240 : vector<16x32xf32>
      %c2_118 = arith.constant 2 : index
      %c0_119 = arith.constant 0 : index
      %242 = vector.load %arg3[%c2_118, %c0_119] : memref<9x32xf32, #tpu.memory_space<vmem>>, vector<1x32xf32>
      %c0_120 = arith.constant 0 : index
      %c0_121 = arith.constant 0 : index
      %c3_122 = arith.constant 3 : index
      %243 = vector.load %arg2[%c0_120, %c0_121, %c3_122] : memref<1x18x34xf32, #tpu.memory_space<vmem>>, vector<1x16x1xf32>
      %244 = vector.shape_cast %243 : vector<1x16x1xf32> to vector<16x1xf32>
      %245 = vector.broadcast %244 : vector<16x1xf32> to vector<16x32xf32>
      %246 = vector.broadcast %242 : vector<1x32xf32> to vector<16x32xf32>
      %247 = arith.mulf %245, %246 : vector<16x32xf32>
      %248 = arith.addf %241, %247 : vector<16x32xf32>
      %c3_123 = arith.constant 3 : index
      %c0_124 = arith.constant 0 : index
      %249 = vector.load %arg3[%c3_123, %c0_124] : memref<9x32xf32, #tpu.memory_space<vmem>>, vector<1x32xf32>
      %c0_125 = arith.constant 0 : index
      %c1_126 = arith.constant 1 : index
      %c1_127 = arith.constant 1 : index
      %250 = vector.load %arg2[%c0_125, %c1_126, %c1_127] : memref<1x18x34xf32, #tpu.memory_space<vmem>>, vector<1x16x1xf32>
      %251 = vector.shape_cast %250 : vector<1x16x1xf32> to vector<16x1xf32>
      %252 = vector.broadcast %251 : vector<16x1xf32> to vector<16x32xf32>
      %253 = vector.broadcast %249 : vector<1x32xf32> to vector<16x32xf32>
      %254 = arith.mulf %252, %253 : vector<16x32xf32>
      %255 = arith.addf %248, %254 : vector<16x32xf32>
      %c4_128 = arith.constant 4 : index
      %c0_129 = arith.constant 0 : index
      %256 = vector.load %arg3[%c4_128, %c0_129] : memref<9x32xf32, #tpu.memory_space<vmem>>, vector<1x32xf32>
      %c0_130 = arith.constant 0 : index
      %c1_131 = arith.constant 1 : index
      %c2_132 = arith.constant 2 : index
      %257 = vector.load %arg2[%c0_130, %c1_131, %c2_132] : memref<1x18x34xf32, #tpu.memory_space<vmem>>, vector<1x16x1xf32>
      %258 = vector.shape_cast %257 : vector<1x16x1xf32> to vector<16x1xf32>
      %259 = vector.broadcast %258 : vector<16x1xf32> to vector<16x32xf32>
      %260 = vector.broadcast %256 : vector<1x32xf32> to vector<16x32xf32>
      %261 = arith.mulf %259, %260 : vector<16x32xf32>
      %262 = arith.addf %255, %261 : vector<16x32xf32>
      %c5_133 = arith.constant 5 : index
      %c0_134 = arith.constant 0 : index
      %263 = vector.load %arg3[%c5_133, %c0_134] : memref<9x32xf32, #tpu.memory_space<vmem>>, vector<1x32xf32>
      %c0_135 = arith.constant 0 : index
      %c1_136 = arith.constant 1 : index
      %c3_137 = arith.constant 3 : index
      %264 = vector.load %arg2[%c0_135, %c1_136, %c3_137] : memref<1x18x34xf32, #tpu.memory_space<vmem>>, vector<1x16x1xf32>
      %265 = vector.shape_cast %264 : vector<1x16x1xf32> to vector<16x1xf32>
      %266 = vector.broadcast %265 : vector<16x1xf32> to vector<16x32xf32>
      %267 = vector.broadcast %263 : vector<1x32xf32> to vector<16x32xf32>
      %268 = arith.mulf %266, %267 : vector<16x32xf32>
      %269 = arith.addf %262, %268 : vector<16x32xf32>
      %c6_138 = arith.constant 6 : index
      %c0_139 = arith.constant 0 : index
      %270 = vector.load %arg3[%c6_138, %c0_139] : memref<9x32xf32, #tpu.memory_space<vmem>>, vector<1x32xf32>
      %c0_140 = arith.constant 0 : index
      %c2_141 = arith.constant 2 : index
      %c1_142 = arith.constant 1 : index
      %271 = vector.load %arg2[%c0_140, %c2_141, %c1_142] : memref<1x18x34xf32, #tpu.memory_space<vmem>>, vector<1x16x1xf32>
      %272 = vector.shape_cast %271 : vector<1x16x1xf32> to vector<16x1xf32>
      %273 = vector.broadcast %272 : vector<16x1xf32> to vector<16x32xf32>
      %274 = vector.broadcast %270 : vector<1x32xf32> to vector<16x32xf32>
      %275 = arith.mulf %273, %274 : vector<16x32xf32>
      %276 = arith.addf %269, %275 : vector<16x32xf32>
      %c7_143 = arith.constant 7 : index
      %c0_144 = arith.constant 0 : index
      %277 = vector.load %arg3[%c7_143, %c0_144] : memref<9x32xf32, #tpu.memory_space<vmem>>, vector<1x32xf32>
      %c0_145 = arith.constant 0 : index
      %c2_146 = arith.constant 2 : index
      %c2_147 = arith.constant 2 : index
      %278 = vector.load %arg2[%c0_145, %c2_146, %c2_147] : memref<1x18x34xf32, #tpu.memory_space<vmem>>, vector<1x16x1xf32>
      %279 = vector.shape_cast %278 : vector<1x16x1xf32> to vector<16x1xf32>
      %280 = vector.broadcast %279 : vector<16x1xf32> to vector<16x32xf32>
      %281 = vector.broadcast %277 : vector<1x32xf32> to vector<16x32xf32>
      %282 = arith.mulf %280, %281 : vector<16x32xf32>
      %283 = arith.addf %276, %282 : vector<16x32xf32>
      %c8_148 = arith.constant 8 : index
      %c0_149 = arith.constant 0 : index
      %284 = vector.load %arg3[%c8_148, %c0_149] : memref<9x32xf32, #tpu.memory_space<vmem>>, vector<1x32xf32>
      %c0_150 = arith.constant 0 : index
      %c2_151 = arith.constant 2 : index
      %c3_152 = arith.constant 3 : index
      %285 = vector.load %arg2[%c0_150, %c2_151, %c3_152] : memref<1x18x34xf32, #tpu.memory_space<vmem>>, vector<1x16x1xf32>
      %286 = vector.shape_cast %285 : vector<1x16x1xf32> to vector<16x1xf32>
      %287 = vector.broadcast %286 : vector<16x1xf32> to vector<16x32xf32>
      %288 = vector.broadcast %284 : vector<1x32xf32> to vector<16x32xf32>
      %289 = arith.mulf %287, %288 : vector<16x32xf32>
      %290 = arith.addf %283, %289 : vector<16x32xf32>
      %cst_153 = arith.constant 0.000000e+00 : f32
      %291 = vector.broadcast %cst_153 : f32 to vector<16x32xf32>
      %292 = arith.maximumf %290, %291 : vector<16x32xf32>
      %293 = arith.addf %225, %292 : vector<16x32xf32>
      %c0_154 = arith.constant 0 : index
      %c0_155 = arith.constant 0 : index
      %294 = vector.load %arg4[%c0_154, %c0_155] : memref<1x32xf32, #tpu.memory_space<vmem>>, vector<1x32xf32>
      %c0_156 = arith.constant 0 : index
      %c0_157 = arith.constant 0 : index
      %295 = vector.load %arg3[%c0_156, %c0_157] : memref<9x32xf32, #tpu.memory_space<vmem>>, vector<1x32xf32>
      %c0_158 = arith.constant 0 : index
      %c0_159 = arith.constant 0 : index
      %c2_160 = arith.constant 2 : index
      %296 = vector.load %arg2[%c0_158, %c0_159, %c2_160] : memref<1x18x34xf32, #tpu.memory_space<vmem>>, vector<1x16x1xf32>
      %297 = vector.shape_cast %296 : vector<1x16x1xf32> to vector<16x1xf32>
      %298 = vector.broadcast %297 : vector<16x1xf32> to vector<16x32xf32>
      %299 = vector.broadcast %295 : vector<1x32xf32> to vector<16x32xf32>
      %300 = arith.mulf %298, %299 : vector<16x32xf32>
      %301 = vector.broadcast %294 : vector<1x32xf32> to vector<16x32xf32>
      %302 = arith.addf %301, %300 : vector<16x32xf32>
      %c1_161 = arith.constant 1 : index
      %c0_162 = arith.constant 0 : index
      %303 = vector.load %arg3[%c1_161, %c0_162] : memref<9x32xf32, #tpu.memory_space<vmem>>, vector<1x32xf32>
      %c0_163 = arith.constant 0 : index
      %c0_164 = arith.constant 0 : index
      %c3_165 = arith.constant 3 : index
      %304 = vector.load %arg2[%c0_163, %c0_164, %c3_165] : memref<1x18x34xf32, #tpu.memory_space<vmem>>, vector<1x16x1xf32>
      %305 = vector.shape_cast %304 : vector<1x16x1xf32> to vector<16x1xf32>
      %306 = vector.broadcast %305 : vector<16x1xf32> to vector<16x32xf32>
      %307 = vector.broadcast %303 : vector<1x32xf32> to vector<16x32xf32>
      %308 = arith.mulf %306, %307 : vector<16x32xf32>
      %309 = arith.addf %302, %308 : vector<16x32xf32>
      %c2_166 = arith.constant 2 : index
      %c0_167 = arith.constant 0 : index
      %310 = vector.load %arg3[%c2_166, %c0_167] : memref<9x32xf32, #tpu.memory_space<vmem>>, vector<1x32xf32>
      %c0_168 = arith.constant 0 : index
      %c0_169 = arith.constant 0 : index
      %c4_170 = arith.constant 4 : index
      %311 = vector.load %arg2[%c0_168, %c0_169, %c4_170] : memref<1x18x34xf32, #tpu.memory_space<vmem>>, vector<1x16x1xf32>
      %312 = vector.shape_cast %311 : vector<1x16x1xf32> to vector<16x1xf32>
      %313 = vector.broadcast %312 : vector<16x1xf32> to vector<16x32xf32>
      %314 = vector.broadcast %310 : vector<1x32xf32> to vector<16x32xf32>
      %315 = arith.mulf %313, %314 : vector<16x32xf32>
      %316 = arith.addf %309, %315 : vector<16x32xf32>
      %c3_171 = arith.constant 3 : index
      %c0_172 = arith.constant 0 : index
      %317 = vector.load %arg3[%c3_171, %c0_172] : memref<9x32xf32, #tpu.memory_space<vmem>>, vector<1x32xf32>
      %c0_173 = arith.constant 0 : index
      %c1_174 = arith.constant 1 : index
      %c2_175 = arith.constant 2 : index
      %318 = vector.load %arg2[%c0_173, %c1_174, %c2_175] : memref<1x18x34xf32, #tpu.memory_space<vmem>>, vector<1x16x1xf32>
      %319 = vector.shape_cast %318 : vector<1x16x1xf32> to vector<16x1xf32>
      %320 = vector.broadcast %319 : vector<16x1xf32> to vector<16x32xf32>
      %321 = vector.broadcast %317 : vector<1x32xf32> to vector<16x32xf32>
      %322 = arith.mulf %320, %321 : vector<16x32xf32>
      %323 = arith.addf %316, %322 : vector<16x32xf32>
      %c4_176 = arith.constant 4 : index
      %c0_177 = arith.constant 0 : index
      %324 = vector.load %arg3[%c4_176, %c0_177] : memref<9x32xf32, #tpu.memory_space<vmem>>, vector<1x32xf32>
      %c0_178 = arith.constant 0 : index
      %c1_179 = arith.constant 1 : index
      %c3_180 = arith.constant 3 : index
      %325 = vector.load %arg2[%c0_178, %c1_179, %c3_180] : memref<1x18x34xf32, #tpu.memory_space<vmem>>, vector<1x16x1xf32>
      %326 = vector.shape_cast %325 : vector<1x16x1xf32> to vector<16x1xf32>
      %327 = vector.broadcast %326 : vector<16x1xf32> to vector<16x32xf32>
      %328 = vector.broadcast %324 : vector<1x32xf32> to vector<16x32xf32>
      %329 = arith.mulf %327, %328 : vector<16x32xf32>
      %330 = arith.addf %323, %329 : vector<16x32xf32>
      %c5_181 = arith.constant 5 : index
      %c0_182 = arith.constant 0 : index
      %331 = vector.load %arg3[%c5_181, %c0_182] : memref<9x32xf32, #tpu.memory_space<vmem>>, vector<1x32xf32>
      %c0_183 = arith.constant 0 : index
      %c1_184 = arith.constant 1 : index
      %c4_185 = arith.constant 4 : index
      %332 = vector.load %arg2[%c0_183, %c1_184, %c4_185] : memref<1x18x34xf32, #tpu.memory_space<vmem>>, vector<1x16x1xf32>
      %333 = vector.shape_cast %332 : vector<1x16x1xf32> to vector<16x1xf32>
      %334 = vector.broadcast %333 : vector<16x1xf32> to vector<16x32xf32>
      %335 = vector.broadcast %331 : vector<1x32xf32> to vector<16x32xf32>
      %336 = arith.mulf %334, %335 : vector<16x32xf32>
      %337 = arith.addf %330, %336 : vector<16x32xf32>
      %c6_186 = arith.constant 6 : index
      %c0_187 = arith.constant 0 : index
      %338 = vector.load %arg3[%c6_186, %c0_187] : memref<9x32xf32, #tpu.memory_space<vmem>>, vector<1x32xf32>
      %c0_188 = arith.constant 0 : index
      %c2_189 = arith.constant 2 : index
      %c2_190 = arith.constant 2 : index
      %339 = vector.load %arg2[%c0_188, %c2_189, %c2_190] : memref<1x18x34xf32, #tpu.memory_space<vmem>>, vector<1x16x1xf32>
      %340 = vector.shape_cast %339 : vector<1x16x1xf32> to vector<16x1xf32>
      %341 = vector.broadcast %340 : vector<16x1xf32> to vector<16x32xf32>
      %342 = vector.broadcast %338 : vector<1x32xf32> to vector<16x32xf32>
      %343 = arith.mulf %341, %342 : vector<16x32xf32>
      %344 = arith.addf %337, %343 : vector<16x32xf32>
      %c7_191 = arith.constant 7 : index
      %c0_192 = arith.constant 0 : index
      %345 = vector.load %arg3[%c7_191, %c0_192] : memref<9x32xf32, #tpu.memory_space<vmem>>, vector<1x32xf32>
      %c0_193 = arith.constant 0 : index
      %c2_194 = arith.constant 2 : index
      %c3_195 = arith.constant 3 : index
      %346 = vector.load %arg2[%c0_193, %c2_194, %c3_195] : memref<1x18x34xf32, #tpu.memory_space<vmem>>, vector<1x16x1xf32>
      %347 = vector.shape_cast %346 : vector<1x16x1xf32> to vector<16x1xf32>
      %348 = vector.broadcast %347 : vector<16x1xf32> to vector<16x32xf32>
      %349 = vector.broadcast %345 : vector<1x32xf32> to vector<16x32xf32>
      %350 = arith.mulf %348, %349 : vector<16x32xf32>
      %351 = arith.addf %344, %350 : vector<16x32xf32>
      %c8_196 = arith.constant 8 : index
      %c0_197 = arith.constant 0 : index
      %352 = vector.load %arg3[%c8_196, %c0_197] : memref<9x32xf32, #tpu.memory_space<vmem>>, vector<1x32xf32>
      %c0_198 = arith.constant 0 : index
      %c2_199 = arith.constant 2 : index
      %c4_200 = arith.constant 4 : index
      %353 = vector.load %arg2[%c0_198, %c2_199, %c4_200] : memref<1x18x34xf32, #tpu.memory_space<vmem>>, vector<1x16x1xf32>
      %354 = vector.shape_cast %353 : vector<1x16x1xf32> to vector<16x1xf32>
      %355 = vector.broadcast %354 : vector<16x1xf32> to vector<16x32xf32>
      %356 = vector.broadcast %352 : vector<1x32xf32> to vector<16x32xf32>
      %357 = arith.mulf %355, %356 : vector<16x32xf32>
      %358 = arith.addf %351, %357 : vector<16x32xf32>
      %cst_201 = arith.constant 0.000000e+00 : f32
      %359 = vector.broadcast %cst_201 : f32 to vector<16x32xf32>
      %360 = arith.maximumf %358, %359 : vector<16x32xf32>
      %361 = arith.addf %293, %360 : vector<16x32xf32>
      %c0_202 = arith.constant 0 : index
      %c0_203 = arith.constant 0 : index
      %362 = vector.load %arg4[%c0_202, %c0_203] : memref<1x32xf32, #tpu.memory_space<vmem>>, vector<1x32xf32>
      %c0_204 = arith.constant 0 : index
      %c0_205 = arith.constant 0 : index
      %363 = vector.load %arg3[%c0_204, %c0_205] : memref<9x32xf32, #tpu.memory_space<vmem>>, vector<1x32xf32>
      %c0_206 = arith.constant 0 : index
      %c0_207 = arith.constant 0 : index
      %c3_208 = arith.constant 3 : index
      %364 = vector.load %arg2[%c0_206, %c0_207, %c3_208] : memref<1x18x34xf32, #tpu.memory_space<vmem>>, vector<1x16x1xf32>
      %365 = vector.shape_cast %364 : vector<1x16x1xf32> to vector<16x1xf32>
      %366 = vector.broadcast %365 : vector<16x1xf32> to vector<16x32xf32>
      %367 = vector.broadcast %363 : vector<1x32xf32> to vector<16x32xf32>
      %368 = arith.mulf %366, %367 : vector<16x32xf32>
      %369 = vector.broadcast %362 : vector<1x32xf32> to vector<16x32xf32>
      %370 = arith.addf %369, %368 : vector<16x32xf32>
      %c1_209 = arith.constant 1 : index
      %c0_210 = arith.constant 0 : index
      %371 = vector.load %arg3[%c1_209, %c0_210] : memref<9x32xf32, #tpu.memory_space<vmem>>, vector<1x32xf32>
      %c0_211 = arith.constant 0 : index
      %c0_212 = arith.constant 0 : index
      %c4_213 = arith.constant 4 : index
      %372 = vector.load %arg2[%c0_211, %c0_212, %c4_213] : memref<1x18x34xf32, #tpu.memory_space<vmem>>, vector<1x16x1xf32>
      %373 = vector.shape_cast %372 : vector<1x16x1xf32> to vector<16x1xf32>
      %374 = vector.broadcast %373 : vector<16x1xf32> to vector<16x32xf32>
      %375 = vector.broadcast %371 : vector<1x32xf32> to vector<16x32xf32>
      %376 = arith.mulf %374, %375 : vector<16x32xf32>
      %377 = arith.addf %370, %376 : vector<16x32xf32>
      %c2_214 = arith.constant 2 : index
      %c0_215 = arith.constant 0 : index
      %378 = vector.load %arg3[%c2_214, %c0_215] : memref<9x32xf32, #tpu.memory_space<vmem>>, vector<1x32xf32>
      %c0_216 = arith.constant 0 : index
      %c0_217 = arith.constant 0 : index
      %c5_218 = arith.constant 5 : index
      %379 = vector.load %arg2[%c0_216, %c0_217, %c5_218] : memref<1x18x34xf32, #tpu.memory_space<vmem>>, vector<1x16x1xf32>
      %380 = vector.shape_cast %379 : vector<1x16x1xf32> to vector<16x1xf32>
      %381 = vector.broadcast %380 : vector<16x1xf32> to vector<16x32xf32>
      %382 = vector.broadcast %378 : vector<1x32xf32> to vector<16x32xf32>
      %383 = arith.mulf %381, %382 : vector<16x32xf32>
      %384 = arith.addf %377, %383 : vector<16x32xf32>
      %c3_219 = arith.constant 3 : index
      %c0_220 = arith.constant 0 : index
      %385 = vector.load %arg3[%c3_219, %c0_220] : memref<9x32xf32, #tpu.memory_space<vmem>>, vector<1x32xf32>
      %c0_221 = arith.constant 0 : index
      %c1_222 = arith.constant 1 : index
      %c3_223 = arith.constant 3 : index
      %386 = vector.load %arg2[%c0_221, %c1_222, %c3_223] : memref<1x18x34xf32, #tpu.memory_space<vmem>>, vector<1x16x1xf32>
      %387 = vector.shape_cast %386 : vector<1x16x1xf32> to vector<16x1xf32>
      %388 = vector.broadcast %387 : vector<16x1xf32> to vector<16x32xf32>
      %389 = vector.broadcast %385 : vector<1x32xf32> to vector<16x32xf32>
      %390 = arith.mulf %388, %389 : vector<16x32xf32>
      %391 = arith.addf %384, %390 : vector<16x32xf32>
      %c4_224 = arith.constant 4 : index
      %c0_225 = arith.constant 0 : index
      %392 = vector.load %arg3[%c4_224, %c0_225] : memref<9x32xf32, #tpu.memory_space<vmem>>, vector<1x32xf32>
      %c0_226 = arith.constant 0 : index
      %c1_227 = arith.constant 1 : index
      %c4_228 = arith.constant 4 : index
      %393 = vector.load %arg2[%c0_226, %c1_227, %c4_228] : memref<1x18x34xf32, #tpu.memory_space<vmem>>, vector<1x16x1xf32>
      %394 = vector.shape_cast %393 : vector<1x16x1xf32> to vector<16x1xf32>
      %395 = vector.broadcast %394 : vector<16x1xf32> to vector<16x32xf32>
      %396 = vector.broadcast %392 : vector<1x32xf32> to vector<16x32xf32>
      %397 = arith.mulf %395, %396 : vector<16x32xf32>
      %398 = arith.addf %391, %397 : vector<16x32xf32>
      %c5_229 = arith.constant 5 : index
      %c0_230 = arith.constant 0 : index
      %399 = vector.load %arg3[%c5_229, %c0_230] : memref<9x32xf32, #tpu.memory_space<vmem>>, vector<1x32xf32>
      %c0_231 = arith.constant 0 : index
      %c1_232 = arith.constant 1 : index
      %c5_233 = arith.constant 5 : index
      %400 = vector.load %arg2[%c0_231, %c1_232, %c5_233] : memref<1x18x34xf32, #tpu.memory_space<vmem>>, vector<1x16x1xf32>
      %401 = vector.shape_cast %400 : vector<1x16x1xf32> to vector<16x1xf32>
      %402 = vector.broadcast %401 : vector<16x1xf32> to vector<16x32xf32>
      %403 = vector.broadcast %399 : vector<1x32xf32> to vector<16x32xf32>
      %404 = arith.mulf %402, %403 : vector<16x32xf32>
      %405 = arith.addf %398, %404 : vector<16x32xf32>
      %c6_234 = arith.constant 6 : index
      %c0_235 = arith.constant 0 : index
      %406 = vector.load %arg3[%c6_234, %c0_235] : memref<9x32xf32, #tpu.memory_space<vmem>>, vector<1x32xf32>
      %c0_236 = arith.constant 0 : index
      %c2_237 = arith.constant 2 : index
      %c3_238 = arith.constant 3 : index
      %407 = vector.load %arg2[%c0_236, %c2_237, %c3_238] : memref<1x18x34xf32, #tpu.memory_space<vmem>>, vector<1x16x1xf32>
      %408 = vector.shape_cast %407 : vector<1x16x1xf32> to vector<16x1xf32>
      %409 = vector.broadcast %408 : vector<16x1xf32> to vector<16x32xf32>
      %410 = vector.broadcast %406 : vector<1x32xf32> to vector<16x32xf32>
      %411 = arith.mulf %409, %410 : vector<16x32xf32>
      %412 = arith.addf %405, %411 : vector<16x32xf32>
      %c7_239 = arith.constant 7 : index
      %c0_240 = arith.constant 0 : index
      %413 = vector.load %arg3[%c7_239, %c0_240] : memref<9x32xf32, #tpu.memory_space<vmem>>, vector<1x32xf32>
      %c0_241 = arith.constant 0 : index
      %c2_242 = arith.constant 2 : index
      %c4_243 = arith.constant 4 : index
      %414 = vector.load %arg2[%c0_241, %c2_242, %c4_243] : memref<1x18x34xf32, #tpu.memory_space<vmem>>, vector<1x16x1xf32>
      %415 = vector.shape_cast %414 : vector<1x16x1xf32> to vector<16x1xf32>
      %416 = vector.broadcast %415 : vector<16x1xf32> to vector<16x32xf32>
      %417 = vector.broadcast %413 : vector<1x32xf32> to vector<16x32xf32>
      %418 = arith.mulf %416, %417 : vector<16x32xf32>
      %419 = arith.addf %412, %418 : vector<16x32xf32>
      %c8_244 = arith.constant 8 : index
      %c0_245 = arith.constant 0 : index
      %420 = vector.load %arg3[%c8_244, %c0_245] : memref<9x32xf32, #tpu.memory_space<vmem>>, vector<1x32xf32>
      %c0_246 = arith.constant 0 : index
      %c2_247 = arith.constant 2 : index
      %c5_248 = arith.constant 5 : index
      %421 = vector.load %arg2[%c0_246, %c2_247, %c5_248] : memref<1x18x34xf32, #tpu.memory_space<vmem>>, vector<1x16x1xf32>
      %422 = vector.shape_cast %421 : vector<1x16x1xf32> to vector<16x1xf32>
      %423 = vector.broadcast %422 : vector<16x1xf32> to vector<16x32xf32>
      %424 = vector.broadcast %420 : vector<1x32xf32> to vector<16x32xf32>
      %425 = arith.mulf %423, %424 : vector<16x32xf32>
      %426 = arith.addf %419, %425 : vector<16x32xf32>
      %cst_249 = arith.constant 0.000000e+00 : f32
      %427 = vector.broadcast %cst_249 : f32 to vector<16x32xf32>
      %428 = arith.maximumf %426, %427 : vector<16x32xf32>
      %429 = arith.addf %361, %428 : vector<16x32xf32>
      %c0_250 = arith.constant 0 : index
      %c0_251 = arith.constant 0 : index
      %430 = vector.load %arg4[%c0_250, %c0_251] : memref<1x32xf32, #tpu.memory_space<vmem>>, vector<1x32xf32>
      %c0_252 = arith.constant 0 : index
      %c0_253 = arith.constant 0 : index
      %431 = vector.load %arg3[%c0_252, %c0_253] : memref<9x32xf32, #tpu.memory_space<vmem>>, vector<1x32xf32>
      %c0_254 = arith.constant 0 : index
      %c0_255 = arith.constant 0 : index
      %c4_256 = arith.constant 4 : index
      %432 = vector.load %arg2[%c0_254, %c0_255, %c4_256] : memref<1x18x34xf32, #tpu.memory_space<vmem>>, vector<1x16x1xf32>
      %433 = vector.shape_cast %432 : vector<1x16x1xf32> to vector<16x1xf32>
      %434 = vector.broadcast %433 : vector<16x1xf32> to vector<16x32xf32>
      %435 = vector.broadcast %431 : vector<1x32xf32> to vector<16x32xf32>
      %436 = arith.mulf %434, %435 : vector<16x32xf32>
      %437 = vector.broadcast %430 : vector<1x32xf32> to vector<16x32xf32>
      %438 = arith.addf %437, %436 : vector<16x32xf32>
      %c1_257 = arith.constant 1 : index
      %c0_258 = arith.constant 0 : index
      %439 = vector.load %arg3[%c1_257, %c0_258] : memref<9x32xf32, #tpu.memory_space<vmem>>, vector<1x32xf32>
      %c0_259 = arith.constant 0 : index
      %c0_260 = arith.constant 0 : index
      %c5_261 = arith.constant 5 : index
      %440 = vector.load %arg2[%c0_259, %c0_260, %c5_261] : memref<1x18x34xf32, #tpu.memory_space<vmem>>, vector<1x16x1xf32>
      %441 = vector.shape_cast %440 : vector<1x16x1xf32> to vector<16x1xf32>
      %442 = vector.broadcast %441 : vector<16x1xf32> to vector<16x32xf32>
      %443 = vector.broadcast %439 : vector<1x32xf32> to vector<16x32xf32>
      %444 = arith.mulf %442, %443 : vector<16x32xf32>
      %445 = arith.addf %438, %444 : vector<16x32xf32>
      %c2_262 = arith.constant 2 : index
      %c0_263 = arith.constant 0 : index
      %446 = vector.load %arg3[%c2_262, %c0_263] : memref<9x32xf32, #tpu.memory_space<vmem>>, vector<1x32xf32>
      %c0_264 = arith.constant 0 : index
      %c0_265 = arith.constant 0 : index
      %c6_266 = arith.constant 6 : index
      %447 = vector.load %arg2[%c0_264, %c0_265, %c6_266] : memref<1x18x34xf32, #tpu.memory_space<vmem>>, vector<1x16x1xf32>
      %448 = vector.shape_cast %447 : vector<1x16x1xf32> to vector<16x1xf32>
      %449 = vector.broadcast %448 : vector<16x1xf32> to vector<16x32xf32>
      %450 = vector.broadcast %446 : vector<1x32xf32> to vector<16x32xf32>
      %451 = arith.mulf %449, %450 : vector<16x32xf32>
      %452 = arith.addf %445, %451 : vector<16x32xf32>
      %c3_267 = arith.constant 3 : index
      %c0_268 = arith.constant 0 : index
      %453 = vector.load %arg3[%c3_267, %c0_268] : memref<9x32xf32, #tpu.memory_space<vmem>>, vector<1x32xf32>
      %c0_269 = arith.constant 0 : index
      %c1_270 = arith.constant 1 : index
      %c4_271 = arith.constant 4 : index
      %454 = vector.load %arg2[%c0_269, %c1_270, %c4_271] : memref<1x18x34xf32, #tpu.memory_space<vmem>>, vector<1x16x1xf32>
      %455 = vector.shape_cast %454 : vector<1x16x1xf32> to vector<16x1xf32>
      %456 = vector.broadcast %455 : vector<16x1xf32> to vector<16x32xf32>
      %457 = vector.broadcast %453 : vector<1x32xf32> to vector<16x32xf32>
      %458 = arith.mulf %456, %457 : vector<16x32xf32>
      %459 = arith.addf %452, %458 : vector<16x32xf32>
      %c4_272 = arith.constant 4 : index
      %c0_273 = arith.constant 0 : index
      %460 = vector.load %arg3[%c4_272, %c0_273] : memref<9x32xf32, #tpu.memory_space<vmem>>, vector<1x32xf32>
      %c0_274 = arith.constant 0 : index
      %c1_275 = arith.constant 1 : index
      %c5_276 = arith.constant 5 : index
      %461 = vector.load %arg2[%c0_274, %c1_275, %c5_276] : memref<1x18x34xf32, #tpu.memory_space<vmem>>, vector<1x16x1xf32>
      %462 = vector.shape_cast %461 : vector<1x16x1xf32> to vector<16x1xf32>
      %463 = vector.broadcast %462 : vector<16x1xf32> to vector<16x32xf32>
      %464 = vector.broadcast %460 : vector<1x32xf32> to vector<16x32xf32>
      %465 = arith.mulf %463, %464 : vector<16x32xf32>
      %466 = arith.addf %459, %465 : vector<16x32xf32>
      %c5_277 = arith.constant 5 : index
      %c0_278 = arith.constant 0 : index
      %467 = vector.load %arg3[%c5_277, %c0_278] : memref<9x32xf32, #tpu.memory_space<vmem>>, vector<1x32xf32>
      %c0_279 = arith.constant 0 : index
      %c1_280 = arith.constant 1 : index
      %c6_281 = arith.constant 6 : index
      %468 = vector.load %arg2[%c0_279, %c1_280, %c6_281] : memref<1x18x34xf32, #tpu.memory_space<vmem>>, vector<1x16x1xf32>
      %469 = vector.shape_cast %468 : vector<1x16x1xf32> to vector<16x1xf32>
      %470 = vector.broadcast %469 : vector<16x1xf32> to vector<16x32xf32>
      %471 = vector.broadcast %467 : vector<1x32xf32> to vector<16x32xf32>
      %472 = arith.mulf %470, %471 : vector<16x32xf32>
      %473 = arith.addf %466, %472 : vector<16x32xf32>
      %c6_282 = arith.constant 6 : index
      %c0_283 = arith.constant 0 : index
      %474 = vector.load %arg3[%c6_282, %c0_283] : memref<9x32xf32, #tpu.memory_space<vmem>>, vector<1x32xf32>
      %c0_284 = arith.constant 0 : index
      %c2_285 = arith.constant 2 : index
      %c4_286 = arith.constant 4 : index
      %475 = vector.load %arg2[%c0_284, %c2_285, %c4_286] : memref<1x18x34xf32, #tpu.memory_space<vmem>>, vector<1x16x1xf32>
      %476 = vector.shape_cast %475 : vector<1x16x1xf32> to vector<16x1xf32>
      %477 = vector.broadcast %476 : vector<16x1xf32> to vector<16x32xf32>
      %478 = vector.broadcast %474 : vector<1x32xf32> to vector<16x32xf32>
      %479 = arith.mulf %477, %478 : vector<16x32xf32>
      %480 = arith.addf %473, %479 : vector<16x32xf32>
      %c7_287 = arith.constant 7 : index
      %c0_288 = arith.constant 0 : index
      %481 = vector.load %arg3[%c7_287, %c0_288] : memref<9x32xf32, #tpu.memory_space<vmem>>, vector<1x32xf32>
      %c0_289 = arith.constant 0 : index
      %c2_290 = arith.constant 2 : index
      %c5_291 = arith.constant 5 : index
      %482 = vector.load %arg2[%c0_289, %c2_290, %c5_291] : memref<1x18x34xf32, #tpu.memory_space<vmem>>, vector<1x16x1xf32>
      %483 = vector.shape_cast %482 : vector<1x16x1xf32> to vector<16x1xf32>
      %484 = vector.broadcast %483 : vector<16x1xf32> to vector<16x32xf32>
      %485 = vector.broadcast %481 : vector<1x32xf32> to vector<16x32xf32>
      %486 = arith.mulf %484, %485 : vector<16x32xf32>
      %487 = arith.addf %480, %486 : vector<16x32xf32>
      %c8_292 = arith.constant 8 : index
      %c0_293 = arith.constant 0 : index
      %488 = vector.load %arg3[%c8_292, %c0_293] : memref<9x32xf32, #tpu.memory_space<vmem>>, vector<1x32xf32>
      %c0_294 = arith.constant 0 : index
      %c2_295 = arith.constant 2 : index
      %c6_296 = arith.constant 6 : index
      %489 = vector.load %arg2[%c0_294, %c2_295, %c6_296] : memref<1x18x34xf32, #tpu.memory_space<vmem>>, vector<1x16x1xf32>
      %490 = vector.shape_cast %489 : vector<1x16x1xf32> to vector<16x1xf32>
      %491 = vector.broadcast %490 : vector<16x1xf32> to vector<16x32xf32>
      %492 = vector.broadcast %488 : vector<1x32xf32> to vector<16x32xf32>
      %493 = arith.mulf %491, %492 : vector<16x32xf32>
      %494 = arith.addf %487, %493 : vector<16x32xf32>
      %cst_297 = arith.constant 0.000000e+00 : f32
      %495 = vector.broadcast %cst_297 : f32 to vector<16x32xf32>
      %496 = arith.maximumf %494, %495 : vector<16x32xf32>
      %497 = arith.addf %429, %496 : vector<16x32xf32>
      %c0_298 = arith.constant 0 : index
      %c0_299 = arith.constant 0 : index
      %498 = vector.load %arg4[%c0_298, %c0_299] : memref<1x32xf32, #tpu.memory_space<vmem>>, vector<1x32xf32>
      %c0_300 = arith.constant 0 : index
      %c0_301 = arith.constant 0 : index
      %499 = vector.load %arg3[%c0_300, %c0_301] : memref<9x32xf32, #tpu.memory_space<vmem>>, vector<1x32xf32>
      %c0_302 = arith.constant 0 : index
      %c0_303 = arith.constant 0 : index
      %c5_304 = arith.constant 5 : index
      %500 = vector.load %arg2[%c0_302, %c0_303, %c5_304] : memref<1x18x34xf32, #tpu.memory_space<vmem>>, vector<1x16x1xf32>
      %501 = vector.shape_cast %500 : vector<1x16x1xf32> to vector<16x1xf32>
      %502 = vector.broadcast %501 : vector<16x1xf32> to vector<16x32xf32>
      %503 = vector.broadcast %499 : vector<1x32xf32> to vector<16x32xf32>
      %504 = arith.mulf %502, %503 : vector<16x32xf32>
      %505 = vector.broadcast %498 : vector<1x32xf32> to vector<16x32xf32>
      %506 = arith.addf %505, %504 : vector<16x32xf32>
      %c1_305 = arith.constant 1 : index
      %c0_306 = arith.constant 0 : index
      %507 = vector.load %arg3[%c1_305, %c0_306] : memref<9x32xf32, #tpu.memory_space<vmem>>, vector<1x32xf32>
      %c0_307 = arith.constant 0 : index
      %c0_308 = arith.constant 0 : index
      %c6_309 = arith.constant 6 : index
      %508 = vector.load %arg2[%c0_307, %c0_308, %c6_309] : memref<1x18x34xf32, #tpu.memory_space<vmem>>, vector<1x16x1xf32>
      %509 = vector.shape_cast %508 : vector<1x16x1xf32> to vector<16x1xf32>
      %510 = vector.broadcast %509 : vector<16x1xf32> to vector<16x32xf32>
      %511 = vector.broadcast %507 : vector<1x32xf32> to vector<16x32xf32>
      %512 = arith.mulf %510, %511 : vector<16x32xf32>
      %513 = arith.addf %506, %512 : vector<16x32xf32>
      %c2_310 = arith.constant 2 : index
      %c0_311 = arith.constant 0 : index
      %514 = vector.load %arg3[%c2_310, %c0_311] : memref<9x32xf32, #tpu.memory_space<vmem>>, vector<1x32xf32>
      %c0_312 = arith.constant 0 : index
      %c0_313 = arith.constant 0 : index
      %c7_314 = arith.constant 7 : index
      %515 = vector.load %arg2[%c0_312, %c0_313, %c7_314] : memref<1x18x34xf32, #tpu.memory_space<vmem>>, vector<1x16x1xf32>
      %516 = vector.shape_cast %515 : vector<1x16x1xf32> to vector<16x1xf32>
      %517 = vector.broadcast %516 : vector<16x1xf32> to vector<16x32xf32>
      %518 = vector.broadcast %514 : vector<1x32xf32> to vector<16x32xf32>
      %519 = arith.mulf %517, %518 : vector<16x32xf32>
      %520 = arith.addf %513, %519 : vector<16x32xf32>
      %c3_315 = arith.constant 3 : index
      %c0_316 = arith.constant 0 : index
      %521 = vector.load %arg3[%c3_315, %c0_316] : memref<9x32xf32, #tpu.memory_space<vmem>>, vector<1x32xf32>
      %c0_317 = arith.constant 0 : index
      %c1_318 = arith.constant 1 : index
      %c5_319 = arith.constant 5 : index
      %522 = vector.load %arg2[%c0_317, %c1_318, %c5_319] : memref<1x18x34xf32, #tpu.memory_space<vmem>>, vector<1x16x1xf32>
      %523 = vector.shape_cast %522 : vector<1x16x1xf32> to vector<16x1xf32>
      %524 = vector.broadcast %523 : vector<16x1xf32> to vector<16x32xf32>
      %525 = vector.broadcast %521 : vector<1x32xf32> to vector<16x32xf32>
      %526 = arith.mulf %524, %525 : vector<16x32xf32>
      %527 = arith.addf %520, %526 : vector<16x32xf32>
      %c4_320 = arith.constant 4 : index
      %c0_321 = arith.constant 0 : index
      %528 = vector.load %arg3[%c4_320, %c0_321] : memref<9x32xf32, #tpu.memory_space<vmem>>, vector<1x32xf32>
      %c0_322 = arith.constant 0 : index
      %c1_323 = arith.constant 1 : index
      %c6_324 = arith.constant 6 : index
      %529 = vector.load %arg2[%c0_322, %c1_323, %c6_324] : memref<1x18x34xf32, #tpu.memory_space<vmem>>, vector<1x16x1xf32>
      %530 = vector.shape_cast %529 : vector<1x16x1xf32> to vector<16x1xf32>
      %531 = vector.broadcast %530 : vector<16x1xf32> to vector<16x32xf32>
      %532 = vector.broadcast %528 : vector<1x32xf32> to vector<16x32xf32>
      %533 = arith.mulf %531, %532 : vector<16x32xf32>
      %534 = arith.addf %527, %533 : vector<16x32xf32>
      %c5_325 = arith.constant 5 : index
      %c0_326 = arith.constant 0 : index
      %535 = vector.load %arg3[%c5_325, %c0_326] : memref<9x32xf32, #tpu.memory_space<vmem>>, vector<1x32xf32>
      %c0_327 = arith.constant 0 : index
      %c1_328 = arith.constant 1 : index
      %c7_329 = arith.constant 7 : index
      %536 = vector.load %arg2[%c0_327, %c1_328, %c7_329] : memref<1x18x34xf32, #tpu.memory_space<vmem>>, vector<1x16x1xf32>
      %537 = vector.shape_cast %536 : vector<1x16x1xf32> to vector<16x1xf32>
      %538 = vector.broadcast %537 : vector<16x1xf32> to vector<16x32xf32>
      %539 = vector.broadcast %535 : vector<1x32xf32> to vector<16x32xf32>
      %540 = arith.mulf %538, %539 : vector<16x32xf32>
      %541 = arith.addf %534, %540 : vector<16x32xf32>
      %c6_330 = arith.constant 6 : index
      %c0_331 = arith.constant 0 : index
      %542 = vector.load %arg3[%c6_330, %c0_331] : memref<9x32xf32, #tpu.memory_space<vmem>>, vector<1x32xf32>
      %c0_332 = arith.constant 0 : index
      %c2_333 = arith.constant 2 : index
      %c5_334 = arith.constant 5 : index
      %543 = vector.load %arg2[%c0_332, %c2_333, %c5_334] : memref<1x18x34xf32, #tpu.memory_space<vmem>>, vector<1x16x1xf32>
      %544 = vector.shape_cast %543 : vector<1x16x1xf32> to vector<16x1xf32>
      %545 = vector.broadcast %544 : vector<16x1xf32> to vector<16x32xf32>
      %546 = vector.broadcast %542 : vector<1x32xf32> to vector<16x32xf32>
      %547 = arith.mulf %545, %546 : vector<16x32xf32>
      %548 = arith.addf %541, %547 : vector<16x32xf32>
      %c7_335 = arith.constant 7 : index
      %c0_336 = arith.constant 0 : index
      %549 = vector.load %arg3[%c7_335, %c0_336] : memref<9x32xf32, #tpu.memory_space<vmem>>, vector<1x32xf32>
      %c0_337 = arith.constant 0 : index
      %c2_338 = arith.constant 2 : index
      %c6_339 = arith.constant 6 : index
      %550 = vector.load %arg2[%c0_337, %c2_338, %c6_339] : memref<1x18x34xf32, #tpu.memory_space<vmem>>, vector<1x16x1xf32>
      %551 = vector.shape_cast %550 : vector<1x16x1xf32> to vector<16x1xf32>
      %552 = vector.broadcast %551 : vector<16x1xf32> to vector<16x32xf32>
      %553 = vector.broadcast %549 : vector<1x32xf32> to vector<16x32xf32>
      %554 = arith.mulf %552, %553 : vector<16x32xf32>
      %555 = arith.addf %548, %554 : vector<16x32xf32>
      %c8_340 = arith.constant 8 : index
      %c0_341 = arith.constant 0 : index
      %556 = vector.load %arg3[%c8_340, %c0_341] : memref<9x32xf32, #tpu.memory_space<vmem>>, vector<1x32xf32>
      %c0_342 = arith.constant 0 : index
      %c2_343 = arith.constant 2 : index
      %c7_344 = arith.constant 7 : index
      %557 = vector.load %arg2[%c0_342, %c2_343, %c7_344] : memref<1x18x34xf32, #tpu.memory_space<vmem>>, vector<1x16x1xf32>
      %558 = vector.shape_cast %557 : vector<1x16x1xf32> to vector<16x1xf32>
      %559 = vector.broadcast %558 : vector<16x1xf32> to vector<16x32xf32>
      %560 = vector.broadcast %556 : vector<1x32xf32> to vector<16x32xf32>
      %561 = arith.mulf %559, %560 : vector<16x32xf32>
      %562 = arith.addf %555, %561 : vector<16x32xf32>
      %cst_345 = arith.constant 0.000000e+00 : f32
      %563 = vector.broadcast %cst_345 : f32 to vector<16x32xf32>
      %564 = arith.maximumf %562, %563 : vector<16x32xf32>
      %565 = arith.addf %497, %564 : vector<16x32xf32>
      %c0_346 = arith.constant 0 : index
      %c0_347 = arith.constant 0 : index
      %566 = vector.load %arg4[%c0_346, %c0_347] : memref<1x32xf32, #tpu.memory_space<vmem>>, vector<1x32xf32>
      %c0_348 = arith.constant 0 : index
      %c0_349 = arith.constant 0 : index
      %567 = vector.load %arg3[%c0_348, %c0_349] : memref<9x32xf32, #tpu.memory_space<vmem>>, vector<1x32xf32>
      %c0_350 = arith.constant 0 : index
      %c0_351 = arith.constant 0 : index
      %c6_352 = arith.constant 6 : index
      %568 = vector.load %arg2[%c0_350, %c0_351, %c6_352] : memref<1x18x34xf32, #tpu.memory_space<vmem>>, vector<1x16x1xf32>
      %569 = vector.shape_cast %568 : vector<1x16x1xf32> to vector<16x1xf32>
      %570 = vector.broadcast %569 : vector<16x1xf32> to vector<16x32xf32>
      %571 = vector.broadcast %567 : vector<1x32xf32> to vector<16x32xf32>
      %572 = arith.mulf %570, %571 : vector<16x32xf32>
      %573 = vector.broadcast %566 : vector<1x32xf32> to vector<16x32xf32>
      %574 = arith.addf %573, %572 : vector<16x32xf32>
      %c1_353 = arith.constant 1 : index
      %c0_354 = arith.constant 0 : index
      %575 = vector.load %arg3[%c1_353, %c0_354] : memref<9x32xf32, #tpu.memory_space<vmem>>, vector<1x32xf32>
      %c0_355 = arith.constant 0 : index
      %c0_356 = arith.constant 0 : index
      %c7_357 = arith.constant 7 : index
      %576 = vector.load %arg2[%c0_355, %c0_356, %c7_357] : memref<1x18x34xf32, #tpu.memory_space<vmem>>, vector<1x16x1xf32>
      %577 = vector.shape_cast %576 : vector<1x16x1xf32> to vector<16x1xf32>
      %578 = vector.broadcast %577 : vector<16x1xf32> to vector<16x32xf32>
      %579 = vector.broadcast %575 : vector<1x32xf32> to vector<16x32xf32>
      %580 = arith.mulf %578, %579 : vector<16x32xf32>
      %581 = arith.addf %574, %580 : vector<16x32xf32>
      %c2_358 = arith.constant 2 : index
      %c0_359 = arith.constant 0 : index
      %582 = vector.load %arg3[%c2_358, %c0_359] : memref<9x32xf32, #tpu.memory_space<vmem>>, vector<1x32xf32>
      %c0_360 = arith.constant 0 : index
      %c0_361 = arith.constant 0 : index
      %c8_362 = arith.constant 8 : index
      %583 = vector.load %arg2[%c0_360, %c0_361, %c8_362] : memref<1x18x34xf32, #tpu.memory_space<vmem>>, vector<1x16x1xf32>
      %584 = vector.shape_cast %583 : vector<1x16x1xf32> to vector<16x1xf32>
      %585 = vector.broadcast %584 : vector<16x1xf32> to vector<16x32xf32>
      %586 = vector.broadcast %582 : vector<1x32xf32> to vector<16x32xf32>
      %587 = arith.mulf %585, %586 : vector<16x32xf32>
      %588 = arith.addf %581, %587 : vector<16x32xf32>
      %c3_363 = arith.constant 3 : index
      %c0_364 = arith.constant 0 : index
      %589 = vector.load %arg3[%c3_363, %c0_364] : memref<9x32xf32, #tpu.memory_space<vmem>>, vector<1x32xf32>
      %c0_365 = arith.constant 0 : index
      %c1_366 = arith.constant 1 : index
      %c6_367 = arith.constant 6 : index
      %590 = vector.load %arg2[%c0_365, %c1_366, %c6_367] : memref<1x18x34xf32, #tpu.memory_space<vmem>>, vector<1x16x1xf32>
      %591 = vector.shape_cast %590 : vector<1x16x1xf32> to vector<16x1xf32>
      %592 = vector.broadcast %591 : vector<16x1xf32> to vector<16x32xf32>
      %593 = vector.broadcast %589 : vector<1x32xf32> to vector<16x32xf32>
      %594 = arith.mulf %592, %593 : vector<16x32xf32>
      %595 = arith.addf %588, %594 : vector<16x32xf32>
      %c4_368 = arith.constant 4 : index
      %c0_369 = arith.constant 0 : index
      %596 = vector.load %arg3[%c4_368, %c0_369] : memref<9x32xf32, #tpu.memory_space<vmem>>, vector<1x32xf32>
      %c0_370 = arith.constant 0 : index
      %c1_371 = arith.constant 1 : index
      %c7_372 = arith.constant 7 : index
      %597 = vector.load %arg2[%c0_370, %c1_371, %c7_372] : memref<1x18x34xf32, #tpu.memory_space<vmem>>, vector<1x16x1xf32>
      %598 = vector.shape_cast %597 : vector<1x16x1xf32> to vector<16x1xf32>
      %599 = vector.broadcast %598 : vector<16x1xf32> to vector<16x32xf32>
      %600 = vector.broadcast %596 : vector<1x32xf32> to vector<16x32xf32>
      %601 = arith.mulf %599, %600 : vector<16x32xf32>
      %602 = arith.addf %595, %601 : vector<16x32xf32>
      %c5_373 = arith.constant 5 : index
      %c0_374 = arith.constant 0 : index
      %603 = vector.load %arg3[%c5_373, %c0_374] : memref<9x32xf32, #tpu.memory_space<vmem>>, vector<1x32xf32>
      %c0_375 = arith.constant 0 : index
      %c1_376 = arith.constant 1 : index
      %c8_377 = arith.constant 8 : index
      %604 = vector.load %arg2[%c0_375, %c1_376, %c8_377] : memref<1x18x34xf32, #tpu.memory_space<vmem>>, vector<1x16x1xf32>
      %605 = vector.shape_cast %604 : vector<1x16x1xf32> to vector<16x1xf32>
      %606 = vector.broadcast %605 : vector<16x1xf32> to vector<16x32xf32>
      %607 = vector.broadcast %603 : vector<1x32xf32> to vector<16x32xf32>
      %608 = arith.mulf %606, %607 : vector<16x32xf32>
      %609 = arith.addf %602, %608 : vector<16x32xf32>
      %c6_378 = arith.constant 6 : index
      %c0_379 = arith.constant 0 : index
      %610 = vector.load %arg3[%c6_378, %c0_379] : memref<9x32xf32, #tpu.memory_space<vmem>>, vector<1x32xf32>
      %c0_380 = arith.constant 0 : index
      %c2_381 = arith.constant 2 : index
      %c6_382 = arith.constant 6 : index
      %611 = vector.load %arg2[%c0_380, %c2_381, %c6_382] : memref<1x18x34xf32, #tpu.memory_space<vmem>>, vector<1x16x1xf32>
      %612 = vector.shape_cast %611 : vector<1x16x1xf32> to vector<16x1xf32>
      %613 = vector.broadcast %612 : vector<16x1xf32> to vector<16x32xf32>
      %614 = vector.broadcast %610 : vector<1x32xf32> to vector<16x32xf32>
      %615 = arith.mulf %613, %614 : vector<16x32xf32>
      %616 = arith.addf %609, %615 : vector<16x32xf32>
      %c7_383 = arith.constant 7 : index
      %c0_384 = arith.constant 0 : index
      %617 = vector.load %arg3[%c7_383, %c0_384] : memref<9x32xf32, #tpu.memory_space<vmem>>, vector<1x32xf32>
      %c0_385 = arith.constant 0 : index
      %c2_386 = arith.constant 2 : index
      %c7_387 = arith.constant 7 : index
      %618 = vector.load %arg2[%c0_385, %c2_386, %c7_387] : memref<1x18x34xf32, #tpu.memory_space<vmem>>, vector<1x16x1xf32>
      %619 = vector.shape_cast %618 : vector<1x16x1xf32> to vector<16x1xf32>
      %620 = vector.broadcast %619 : vector<16x1xf32> to vector<16x32xf32>
      %621 = vector.broadcast %617 : vector<1x32xf32> to vector<16x32xf32>
      %622 = arith.mulf %620, %621 : vector<16x32xf32>
      %623 = arith.addf %616, %622 : vector<16x32xf32>
      %c8_388 = arith.constant 8 : index
      %c0_389 = arith.constant 0 : index
      %624 = vector.load %arg3[%c8_388, %c0_389] : memref<9x32xf32, #tpu.memory_space<vmem>>, vector<1x32xf32>
      %c0_390 = arith.constant 0 : index
      %c2_391 = arith.constant 2 : index
      %c8_392 = arith.constant 8 : index
      %625 = vector.load %arg2[%c0_390, %c2_391, %c8_392] : memref<1x18x34xf32, #tpu.memory_space<vmem>>, vector<1x16x1xf32>
      %626 = vector.shape_cast %625 : vector<1x16x1xf32> to vector<16x1xf32>
      %627 = vector.broadcast %626 : vector<16x1xf32> to vector<16x32xf32>
      %628 = vector.broadcast %624 : vector<1x32xf32> to vector<16x32xf32>
      %629 = arith.mulf %627, %628 : vector<16x32xf32>
      %630 = arith.addf %623, %629 : vector<16x32xf32>
      %cst_393 = arith.constant 0.000000e+00 : f32
      %631 = vector.broadcast %cst_393 : f32 to vector<16x32xf32>
      %632 = arith.maximumf %630, %631 : vector<16x32xf32>
      %633 = arith.addf %565, %632 : vector<16x32xf32>
      %c0_394 = arith.constant 0 : index
      %c0_395 = arith.constant 0 : index
      %634 = vector.load %arg4[%c0_394, %c0_395] : memref<1x32xf32, #tpu.memory_space<vmem>>, vector<1x32xf32>
      %c0_396 = arith.constant 0 : index
      %c0_397 = arith.constant 0 : index
      %635 = vector.load %arg3[%c0_396, %c0_397] : memref<9x32xf32, #tpu.memory_space<vmem>>, vector<1x32xf32>
      %c0_398 = arith.constant 0 : index
      %c0_399 = arith.constant 0 : index
      %c7_400 = arith.constant 7 : index
      %636 = vector.load %arg2[%c0_398, %c0_399, %c7_400] : memref<1x18x34xf32, #tpu.memory_space<vmem>>, vector<1x16x1xf32>
      %637 = vector.shape_cast %636 : vector<1x16x1xf32> to vector<16x1xf32>
      %638 = vector.broadcast %637 : vector<16x1xf32> to vector<16x32xf32>
      %639 = vector.broadcast %635 : vector<1x32xf32> to vector<16x32xf32>
      %640 = arith.mulf %638, %639 : vector<16x32xf32>
      %641 = vector.broadcast %634 : vector<1x32xf32> to vector<16x32xf32>
      %642 = arith.addf %641, %640 : vector<16x32xf32>
      %c1_401 = arith.constant 1 : index
      %c0_402 = arith.constant 0 : index
      %643 = vector.load %arg3[%c1_401, %c0_402] : memref<9x32xf32, #tpu.memory_space<vmem>>, vector<1x32xf32>
      %c0_403 = arith.constant 0 : index
      %c0_404 = arith.constant 0 : index
      %c8_405 = arith.constant 8 : index
      %644 = vector.load %arg2[%c0_403, %c0_404, %c8_405] : memref<1x18x34xf32, #tpu.memory_space<vmem>>, vector<1x16x1xf32>
      %645 = vector.shape_cast %644 : vector<1x16x1xf32> to vector<16x1xf32>
      %646 = vector.broadcast %645 : vector<16x1xf32> to vector<16x32xf32>
      %647 = vector.broadcast %643 : vector<1x32xf32> to vector<16x32xf32>
      %648 = arith.mulf %646, %647 : vector<16x32xf32>
      %649 = arith.addf %642, %648 : vector<16x32xf32>
      %c2_406 = arith.constant 2 : index
      %c0_407 = arith.constant 0 : index
      %650 = vector.load %arg3[%c2_406, %c0_407] : memref<9x32xf32, #tpu.memory_space<vmem>>, vector<1x32xf32>
      %c0_408 = arith.constant 0 : index
      %c0_409 = arith.constant 0 : index
      %c9 = arith.constant 9 : index
      %651 = vector.load %arg2[%c0_408, %c0_409, %c9] : memref<1x18x34xf32, #tpu.memory_space<vmem>>, vector<1x16x1xf32>
      %652 = vector.shape_cast %651 : vector<1x16x1xf32> to vector<16x1xf32>
      %653 = vector.broadcast %652 : vector<16x1xf32> to vector<16x32xf32>
      %654 = vector.broadcast %650 : vector<1x32xf32> to vector<16x32xf32>
      %655 = arith.mulf %653, %654 : vector<16x32xf32>
      %656 = arith.addf %649, %655 : vector<16x32xf32>
      %c3_410 = arith.constant 3 : index
      %c0_411 = arith.constant 0 : index
      %657 = vector.load %arg3[%c3_410, %c0_411] : memref<9x32xf32, #tpu.memory_space<vmem>>, vector<1x32xf32>
      %c0_412 = arith.constant 0 : index
      %c1_413 = arith.constant 1 : index
      %c7_414 = arith.constant 7 : index
      %658 = vector.load %arg2[%c0_412, %c1_413, %c7_414] : memref<1x18x34xf32, #tpu.memory_space<vmem>>, vector<1x16x1xf32>
      %659 = vector.shape_cast %658 : vector<1x16x1xf32> to vector<16x1xf32>
      %660 = vector.broadcast %659 : vector<16x1xf32> to vector<16x32xf32>
      %661 = vector.broadcast %657 : vector<1x32xf32> to vector<16x32xf32>
      %662 = arith.mulf %660, %661 : vector<16x32xf32>
      %663 = arith.addf %656, %662 : vector<16x32xf32>
      %c4_415 = arith.constant 4 : index
      %c0_416 = arith.constant 0 : index
      %664 = vector.load %arg3[%c4_415, %c0_416] : memref<9x32xf32, #tpu.memory_space<vmem>>, vector<1x32xf32>
      %c0_417 = arith.constant 0 : index
      %c1_418 = arith.constant 1 : index
      %c8_419 = arith.constant 8 : index
      %665 = vector.load %arg2[%c0_417, %c1_418, %c8_419] : memref<1x18x34xf32, #tpu.memory_space<vmem>>, vector<1x16x1xf32>
      %666 = vector.shape_cast %665 : vector<1x16x1xf32> to vector<16x1xf32>
      %667 = vector.broadcast %666 : vector<16x1xf32> to vector<16x32xf32>
      %668 = vector.broadcast %664 : vector<1x32xf32> to vector<16x32xf32>
      %669 = arith.mulf %667, %668 : vector<16x32xf32>
      %670 = arith.addf %663, %669 : vector<16x32xf32>
      %c5_420 = arith.constant 5 : index
      %c0_421 = arith.constant 0 : index
      %671 = vector.load %arg3[%c5_420, %c0_421] : memref<9x32xf32, #tpu.memory_space<vmem>>, vector<1x32xf32>
      %c0_422 = arith.constant 0 : index
      %c1_423 = arith.constant 1 : index
      %c9_424 = arith.constant 9 : index
      %672 = vector.load %arg2[%c0_422, %c1_423, %c9_424] : memref<1x18x34xf32, #tpu.memory_space<vmem>>, vector<1x16x1xf32>
      %673 = vector.shape_cast %672 : vector<1x16x1xf32> to vector<16x1xf32>
      %674 = vector.broadcast %673 : vector<16x1xf32> to vector<16x32xf32>
      %675 = vector.broadcast %671 : vector<1x32xf32> to vector<16x32xf32>
      %676 = arith.mulf %674, %675 : vector<16x32xf32>
      %677 = arith.addf %670, %676 : vector<16x32xf32>
      %c6_425 = arith.constant 6 : index
      %c0_426 = arith.constant 0 : index
      %678 = vector.load %arg3[%c6_425, %c0_426] : memref<9x32xf32, #tpu.memory_space<vmem>>, vector<1x32xf32>
      %c0_427 = arith.constant 0 : index
      %c2_428 = arith.constant 2 : index
      %c7_429 = arith.constant 7 : index
      %679 = vector.load %arg2[%c0_427, %c2_428, %c7_429] : memref<1x18x34xf32, #tpu.memory_space<vmem>>, vector<1x16x1xf32>
      %680 = vector.shape_cast %679 : vector<1x16x1xf32> to vector<16x1xf32>
      %681 = vector.broadcast %680 : vector<16x1xf32> to vector<16x32xf32>
      %682 = vector.broadcast %678 : vector<1x32xf32> to vector<16x32xf32>
      %683 = arith.mulf %681, %682 : vector<16x32xf32>
      %684 = arith.addf %677, %683 : vector<16x32xf32>
      %c7_430 = arith.constant 7 : index
      %c0_431 = arith.constant 0 : index
      %685 = vector.load %arg3[%c7_430, %c0_431] : memref<9x32xf32, #tpu.memory_space<vmem>>, vector<1x32xf32>
      %c0_432 = arith.constant 0 : index
      %c2_433 = arith.constant 2 : index
      %c8_434 = arith.constant 8 : index
      %686 = vector.load %arg2[%c0_432, %c2_433, %c8_434] : memref<1x18x34xf32, #tpu.memory_space<vmem>>, vector<1x16x1xf32>
      %687 = vector.shape_cast %686 : vector<1x16x1xf32> to vector<16x1xf32>
      %688 = vector.broadcast %687 : vector<16x1xf32> to vector<16x32xf32>
      %689 = vector.broadcast %685 : vector<1x32xf32> to vector<16x32xf32>
      %690 = arith.mulf %688, %689 : vector<16x32xf32>
      %691 = arith.addf %684, %690 : vector<16x32xf32>
      %c8_435 = arith.constant 8 : index
      %c0_436 = arith.constant 0 : index
      %692 = vector.load %arg3[%c8_435, %c0_436] : memref<9x32xf32, #tpu.memory_space<vmem>>, vector<1x32xf32>
      %c0_437 = arith.constant 0 : index
      %c2_438 = arith.constant 2 : index
      %c9_439 = arith.constant 9 : index
      %693 = vector.load %arg2[%c0_437, %c2_438, %c9_439] : memref<1x18x34xf32, #tpu.memory_space<vmem>>, vector<1x16x1xf32>
      %694 = vector.shape_cast %693 : vector<1x16x1xf32> to vector<16x1xf32>
      %695 = vector.broadcast %694 : vector<16x1xf32> to vector<16x32xf32>
      %696 = vector.broadcast %692 : vector<1x32xf32> to vector<16x32xf32>
      %697 = arith.mulf %695, %696 : vector<16x32xf32>
      %698 = arith.addf %691, %697 : vector<16x32xf32>
      %cst_440 = arith.constant 0.000000e+00 : f32
      %699 = vector.broadcast %cst_440 : f32 to vector<16x32xf32>
      %700 = arith.maximumf %698, %699 : vector<16x32xf32>
      %701 = arith.addf %633, %700 : vector<16x32xf32>
      %c0_441 = arith.constant 0 : index
      %c0_442 = arith.constant 0 : index
      %702 = vector.load %arg4[%c0_441, %c0_442] : memref<1x32xf32, #tpu.memory_space<vmem>>, vector<1x32xf32>
      %c0_443 = arith.constant 0 : index
      %c0_444 = arith.constant 0 : index
      %703 = vector.load %arg3[%c0_443, %c0_444] : memref<9x32xf32, #tpu.memory_space<vmem>>, vector<1x32xf32>
      %c0_445 = arith.constant 0 : index
      %c0_446 = arith.constant 0 : index
      %c8_447 = arith.constant 8 : index
      %704 = vector.load %arg2[%c0_445, %c0_446, %c8_447] : memref<1x18x34xf32, #tpu.memory_space<vmem>>, vector<1x16x1xf32>
      %705 = vector.shape_cast %704 : vector<1x16x1xf32> to vector<16x1xf32>
      %706 = vector.broadcast %705 : vector<16x1xf32> to vector<16x32xf32>
      %707 = vector.broadcast %703 : vector<1x32xf32> to vector<16x32xf32>
      %708 = arith.mulf %706, %707 : vector<16x32xf32>
      %709 = vector.broadcast %702 : vector<1x32xf32> to vector<16x32xf32>
      %710 = arith.addf %709, %708 : vector<16x32xf32>
      %c1_448 = arith.constant 1 : index
      %c0_449 = arith.constant 0 : index
      %711 = vector.load %arg3[%c1_448, %c0_449] : memref<9x32xf32, #tpu.memory_space<vmem>>, vector<1x32xf32>
      %c0_450 = arith.constant 0 : index
      %c0_451 = arith.constant 0 : index
      %c9_452 = arith.constant 9 : index
      %712 = vector.load %arg2[%c0_450, %c0_451, %c9_452] : memref<1x18x34xf32, #tpu.memory_space<vmem>>, vector<1x16x1xf32>
      %713 = vector.shape_cast %712 : vector<1x16x1xf32> to vector<16x1xf32>
      %714 = vector.broadcast %713 : vector<16x1xf32> to vector<16x32xf32>
      %715 = vector.broadcast %711 : vector<1x32xf32> to vector<16x32xf32>
      %716 = arith.mulf %714, %715 : vector<16x32xf32>
      %717 = arith.addf %710, %716 : vector<16x32xf32>
      %c2_453 = arith.constant 2 : index
      %c0_454 = arith.constant 0 : index
      %718 = vector.load %arg3[%c2_453, %c0_454] : memref<9x32xf32, #tpu.memory_space<vmem>>, vector<1x32xf32>
      %c0_455 = arith.constant 0 : index
      %c0_456 = arith.constant 0 : index
      %c10 = arith.constant 10 : index
      %719 = vector.load %arg2[%c0_455, %c0_456, %c10] : memref<1x18x34xf32, #tpu.memory_space<vmem>>, vector<1x16x1xf32>
      %720 = vector.shape_cast %719 : vector<1x16x1xf32> to vector<16x1xf32>
      %721 = vector.broadcast %720 : vector<16x1xf32> to vector<16x32xf32>
      %722 = vector.broadcast %718 : vector<1x32xf32> to vector<16x32xf32>
      %723 = arith.mulf %721, %722 : vector<16x32xf32>
      %724 = arith.addf %717, %723 : vector<16x32xf32>
      %c3_457 = arith.constant 3 : index
      %c0_458 = arith.constant 0 : index
      %725 = vector.load %arg3[%c3_457, %c0_458] : memref<9x32xf32, #tpu.memory_space<vmem>>, vector<1x32xf32>
      %c0_459 = arith.constant 0 : index
      %c1_460 = arith.constant 1 : index
      %c8_461 = arith.constant 8 : index
      %726 = vector.load %arg2[%c0_459, %c1_460, %c8_461] : memref<1x18x34xf32, #tpu.memory_space<vmem>>, vector<1x16x1xf32>
      %727 = vector.shape_cast %726 : vector<1x16x1xf32> to vector<16x1xf32>
      %728 = vector.broadcast %727 : vector<16x1xf32> to vector<16x32xf32>
      %729 = vector.broadcast %725 : vector<1x32xf32> to vector<16x32xf32>
      %730 = arith.mulf %728, %729 : vector<16x32xf32>
      %731 = arith.addf %724, %730 : vector<16x32xf32>
      %c4_462 = arith.constant 4 : index
      %c0_463 = arith.constant 0 : index
      %732 = vector.load %arg3[%c4_462, %c0_463] : memref<9x32xf32, #tpu.memory_space<vmem>>, vector<1x32xf32>
      %c0_464 = arith.constant 0 : index
      %c1_465 = arith.constant 1 : index
      %c9_466 = arith.constant 9 : index
      %733 = vector.load %arg2[%c0_464, %c1_465, %c9_466] : memref<1x18x34xf32, #tpu.memory_space<vmem>>, vector<1x16x1xf32>
      %734 = vector.shape_cast %733 : vector<1x16x1xf32> to vector<16x1xf32>
      %735 = vector.broadcast %734 : vector<16x1xf32> to vector<16x32xf32>
      %736 = vector.broadcast %732 : vector<1x32xf32> to vector<16x32xf32>
      %737 = arith.mulf %735, %736 : vector<16x32xf32>
      %738 = arith.addf %731, %737 : vector<16x32xf32>
      %c5_467 = arith.constant 5 : index
      %c0_468 = arith.constant 0 : index
      %739 = vector.load %arg3[%c5_467, %c0_468] : memref<9x32xf32, #tpu.memory_space<vmem>>, vector<1x32xf32>
      %c0_469 = arith.constant 0 : index
      %c1_470 = arith.constant 1 : index
      %c10_471 = arith.constant 10 : index
      %740 = vector.load %arg2[%c0_469, %c1_470, %c10_471] : memref<1x18x34xf32, #tpu.memory_space<vmem>>, vector<1x16x1xf32>
      %741 = vector.shape_cast %740 : vector<1x16x1xf32> to vector<16x1xf32>
      %742 = vector.broadcast %741 : vector<16x1xf32> to vector<16x32xf32>
      %743 = vector.broadcast %739 : vector<1x32xf32> to vector<16x32xf32>
      %744 = arith.mulf %742, %743 : vector<16x32xf32>
      %745 = arith.addf %738, %744 : vector<16x32xf32>
      %c6_472 = arith.constant 6 : index
      %c0_473 = arith.constant 0 : index
      %746 = vector.load %arg3[%c6_472, %c0_473] : memref<9x32xf32, #tpu.memory_space<vmem>>, vector<1x32xf32>
      %c0_474 = arith.constant 0 : index
      %c2_475 = arith.constant 2 : index
      %c8_476 = arith.constant 8 : index
      %747 = vector.load %arg2[%c0_474, %c2_475, %c8_476] : memref<1x18x34xf32, #tpu.memory_space<vmem>>, vector<1x16x1xf32>
      %748 = vector.shape_cast %747 : vector<1x16x1xf32> to vector<16x1xf32>
      %749 = vector.broadcast %748 : vector<16x1xf32> to vector<16x32xf32>
      %750 = vector.broadcast %746 : vector<1x32xf32> to vector<16x32xf32>
      %751 = arith.mulf %749, %750 : vector<16x32xf32>
      %752 = arith.addf %745, %751 : vector<16x32xf32>
      %c7_477 = arith.constant 7 : index
      %c0_478 = arith.constant 0 : index
      %753 = vector.load %arg3[%c7_477, %c0_478] : memref<9x32xf32, #tpu.memory_space<vmem>>, vector<1x32xf32>
      %c0_479 = arith.constant 0 : index
      %c2_480 = arith.constant 2 : index
      %c9_481 = arith.constant 9 : index
      %754 = vector.load %arg2[%c0_479, %c2_480, %c9_481] : memref<1x18x34xf32, #tpu.memory_space<vmem>>, vector<1x16x1xf32>
      %755 = vector.shape_cast %754 : vector<1x16x1xf32> to vector<16x1xf32>
      %756 = vector.broadcast %755 : vector<16x1xf32> to vector<16x32xf32>
      %757 = vector.broadcast %753 : vector<1x32xf32> to vector<16x32xf32>
      %758 = arith.mulf %756, %757 : vector<16x32xf32>
      %759 = arith.addf %752, %758 : vector<16x32xf32>
      %c8_482 = arith.constant 8 : index
      %c0_483 = arith.constant 0 : index
      %760 = vector.load %arg3[%c8_482, %c0_483] : memref<9x32xf32, #tpu.memory_space<vmem>>, vector<1x32xf32>
      %c0_484 = arith.constant 0 : index
      %c2_485 = arith.constant 2 : index
      %c10_486 = arith.constant 10 : index
      %761 = vector.load %arg2[%c0_484, %c2_485, %c10_486] : memref<1x18x34xf32, #tpu.memory_space<vmem>>, vector<1x16x1xf32>
      %762 = vector.shape_cast %761 : vector<1x16x1xf32> to vector<16x1xf32>
      %763 = vector.broadcast %762 : vector<16x1xf32> to vector<16x32xf32>
      %764 = vector.broadcast %760 : vector<1x32xf32> to vector<16x32xf32>
      %765 = arith.mulf %763, %764 : vector<16x32xf32>
      %766 = arith.addf %759, %765 : vector<16x32xf32>
      %cst_487 = arith.constant 0.000000e+00 : f32
      %767 = vector.broadcast %cst_487 : f32 to vector<16x32xf32>
      %768 = arith.maximumf %766, %767 : vector<16x32xf32>
      %769 = arith.addf %701, %768 : vector<16x32xf32>
      %c0_488 = arith.constant 0 : index
      %c0_489 = arith.constant 0 : index
      %770 = vector.load %arg4[%c0_488, %c0_489] : memref<1x32xf32, #tpu.memory_space<vmem>>, vector<1x32xf32>
      %c0_490 = arith.constant 0 : index
      %c0_491 = arith.constant 0 : index
      %771 = vector.load %arg3[%c0_490, %c0_491] : memref<9x32xf32, #tpu.memory_space<vmem>>, vector<1x32xf32>
      %c0_492 = arith.constant 0 : index
      %c0_493 = arith.constant 0 : index
      %c9_494 = arith.constant 9 : index
      %772 = vector.load %arg2[%c0_492, %c0_493, %c9_494] : memref<1x18x34xf32, #tpu.memory_space<vmem>>, vector<1x16x1xf32>
      %773 = vector.shape_cast %772 : vector<1x16x1xf32> to vector<16x1xf32>
      %774 = vector.broadcast %773 : vector<16x1xf32> to vector<16x32xf32>
      %775 = vector.broadcast %771 : vector<1x32xf32> to vector<16x32xf32>
      %776 = arith.mulf %774, %775 : vector<16x32xf32>
      %777 = vector.broadcast %770 : vector<1x32xf32> to vector<16x32xf32>
      %778 = arith.addf %777, %776 : vector<16x32xf32>
      %c1_495 = arith.constant 1 : index
      %c0_496 = arith.constant 0 : index
      %779 = vector.load %arg3[%c1_495, %c0_496] : memref<9x32xf32, #tpu.memory_space<vmem>>, vector<1x32xf32>
      %c0_497 = arith.constant 0 : index
      %c0_498 = arith.constant 0 : index
      %c10_499 = arith.constant 10 : index
      %780 = vector.load %arg2[%c0_497, %c0_498, %c10_499] : memref<1x18x34xf32, #tpu.memory_space<vmem>>, vector<1x16x1xf32>
      %781 = vector.shape_cast %780 : vector<1x16x1xf32> to vector<16x1xf32>
      %782 = vector.broadcast %781 : vector<16x1xf32> to vector<16x32xf32>
      %783 = vector.broadcast %779 : vector<1x32xf32> to vector<16x32xf32>
      %784 = arith.mulf %782, %783 : vector<16x32xf32>
      %785 = arith.addf %778, %784 : vector<16x32xf32>
      %c2_500 = arith.constant 2 : index
      %c0_501 = arith.constant 0 : index
      %786 = vector.load %arg3[%c2_500, %c0_501] : memref<9x32xf32, #tpu.memory_space<vmem>>, vector<1x32xf32>
      %c0_502 = arith.constant 0 : index
      %c0_503 = arith.constant 0 : index
      %c11 = arith.constant 11 : index
      %787 = vector.load %arg2[%c0_502, %c0_503, %c11] : memref<1x18x34xf32, #tpu.memory_space<vmem>>, vector<1x16x1xf32>
      %788 = vector.shape_cast %787 : vector<1x16x1xf32> to vector<16x1xf32>
      %789 = vector.broadcast %788 : vector<16x1xf32> to vector<16x32xf32>
      %790 = vector.broadcast %786 : vector<1x32xf32> to vector<16x32xf32>
      %791 = arith.mulf %789, %790 : vector<16x32xf32>
      %792 = arith.addf %785, %791 : vector<16x32xf32>
      %c3_504 = arith.constant 3 : index
      %c0_505 = arith.constant 0 : index
      %793 = vector.load %arg3[%c3_504, %c0_505] : memref<9x32xf32, #tpu.memory_space<vmem>>, vector<1x32xf32>
      %c0_506 = arith.constant 0 : index
      %c1_507 = arith.constant 1 : index
      %c9_508 = arith.constant 9 : index
      %794 = vector.load %arg2[%c0_506, %c1_507, %c9_508] : memref<1x18x34xf32, #tpu.memory_space<vmem>>, vector<1x16x1xf32>
      %795 = vector.shape_cast %794 : vector<1x16x1xf32> to vector<16x1xf32>
      %796 = vector.broadcast %795 : vector<16x1xf32> to vector<16x32xf32>
      %797 = vector.broadcast %793 : vector<1x32xf32> to vector<16x32xf32>
      %798 = arith.mulf %796, %797 : vector<16x32xf32>
      %799 = arith.addf %792, %798 : vector<16x32xf32>
      %c4_509 = arith.constant 4 : index
      %c0_510 = arith.constant 0 : index
      %800 = vector.load %arg3[%c4_509, %c0_510] : memref<9x32xf32, #tpu.memory_space<vmem>>, vector<1x32xf32>
      %c0_511 = arith.constant 0 : index
      %c1_512 = arith.constant 1 : index
      %c10_513 = arith.constant 10 : index
      %801 = vector.load %arg2[%c0_511, %c1_512, %c10_513] : memref<1x18x34xf32, #tpu.memory_space<vmem>>, vector<1x16x1xf32>
      %802 = vector.shape_cast %801 : vector<1x16x1xf32> to vector<16x1xf32>
      %803 = vector.broadcast %802 : vector<16x1xf32> to vector<16x32xf32>
      %804 = vector.broadcast %800 : vector<1x32xf32> to vector<16x32xf32>
      %805 = arith.mulf %803, %804 : vector<16x32xf32>
      %806 = arith.addf %799, %805 : vector<16x32xf32>
      %c5_514 = arith.constant 5 : index
      %c0_515 = arith.constant 0 : index
      %807 = vector.load %arg3[%c5_514, %c0_515] : memref<9x32xf32, #tpu.memory_space<vmem>>, vector<1x32xf32>
      %c0_516 = arith.constant 0 : index
      %c1_517 = arith.constant 1 : index
      %c11_518 = arith.constant 11 : index
      %808 = vector.load %arg2[%c0_516, %c1_517, %c11_518] : memref<1x18x34xf32, #tpu.memory_space<vmem>>, vector<1x16x1xf32>
      %809 = vector.shape_cast %808 : vector<1x16x1xf32> to vector<16x1xf32>
      %810 = vector.broadcast %809 : vector<16x1xf32> to vector<16x32xf32>
      %811 = vector.broadcast %807 : vector<1x32xf32> to vector<16x32xf32>
      %812 = arith.mulf %810, %811 : vector<16x32xf32>
      %813 = arith.addf %806, %812 : vector<16x32xf32>
      %c6_519 = arith.constant 6 : index
      %c0_520 = arith.constant 0 : index
      %814 = vector.load %arg3[%c6_519, %c0_520] : memref<9x32xf32, #tpu.memory_space<vmem>>, vector<1x32xf32>
      %c0_521 = arith.constant 0 : index
      %c2_522 = arith.constant 2 : index
      %c9_523 = arith.constant 9 : index
      %815 = vector.load %arg2[%c0_521, %c2_522, %c9_523] : memref<1x18x34xf32, #tpu.memory_space<vmem>>, vector<1x16x1xf32>
      %816 = vector.shape_cast %815 : vector<1x16x1xf32> to vector<16x1xf32>
      %817 = vector.broadcast %816 : vector<16x1xf32> to vector<16x32xf32>
      %818 = vector.broadcast %814 : vector<1x32xf32> to vector<16x32xf32>
      %819 = arith.mulf %817, %818 : vector<16x32xf32>
      %820 = arith.addf %813, %819 : vector<16x32xf32>
      %c7_524 = arith.constant 7 : index
      %c0_525 = arith.constant 0 : index
      %821 = vector.load %arg3[%c7_524, %c0_525] : memref<9x32xf32, #tpu.memory_space<vmem>>, vector<1x32xf32>
      %c0_526 = arith.constant 0 : index
      %c2_527 = arith.constant 2 : index
      %c10_528 = arith.constant 10 : index
      %822 = vector.load %arg2[%c0_526, %c2_527, %c10_528] : memref<1x18x34xf32, #tpu.memory_space<vmem>>, vector<1x16x1xf32>
      %823 = vector.shape_cast %822 : vector<1x16x1xf32> to vector<16x1xf32>
      %824 = vector.broadcast %823 : vector<16x1xf32> to vector<16x32xf32>
      %825 = vector.broadcast %821 : vector<1x32xf32> to vector<16x32xf32>
      %826 = arith.mulf %824, %825 : vector<16x32xf32>
      %827 = arith.addf %820, %826 : vector<16x32xf32>
      %c8_529 = arith.constant 8 : index
      %c0_530 = arith.constant 0 : index
      %828 = vector.load %arg3[%c8_529, %c0_530] : memref<9x32xf32, #tpu.memory_space<vmem>>, vector<1x32xf32>
      %c0_531 = arith.constant 0 : index
      %c2_532 = arith.constant 2 : index
      %c11_533 = arith.constant 11 : index
      %829 = vector.load %arg2[%c0_531, %c2_532, %c11_533] : memref<1x18x34xf32, #tpu.memory_space<vmem>>, vector<1x16x1xf32>
      %830 = vector.shape_cast %829 : vector<1x16x1xf32> to vector<16x1xf32>
      %831 = vector.broadcast %830 : vector<16x1xf32> to vector<16x32xf32>
      %832 = vector.broadcast %828 : vector<1x32xf32> to vector<16x32xf32>
      %833 = arith.mulf %831, %832 : vector<16x32xf32>
      %834 = arith.addf %827, %833 : vector<16x32xf32>
      %cst_534 = arith.constant 0.000000e+00 : f32
      %835 = vector.broadcast %cst_534 : f32 to vector<16x32xf32>
      %836 = arith.maximumf %834, %835 : vector<16x32xf32>
      %837 = arith.addf %769, %836 : vector<16x32xf32>
      %c0_535 = arith.constant 0 : index
      %c0_536 = arith.constant 0 : index
      %838 = vector.load %arg4[%c0_535, %c0_536] : memref<1x32xf32, #tpu.memory_space<vmem>>, vector<1x32xf32>
      %c0_537 = arith.constant 0 : index
      %c0_538 = arith.constant 0 : index
      %839 = vector.load %arg3[%c0_537, %c0_538] : memref<9x32xf32, #tpu.memory_space<vmem>>, vector<1x32xf32>
      %c0_539 = arith.constant 0 : index
      %c0_540 = arith.constant 0 : index
      %c10_541 = arith.constant 10 : index
      %840 = vector.load %arg2[%c0_539, %c0_540, %c10_541] : memref<1x18x34xf32, #tpu.memory_space<vmem>>, vector<1x16x1xf32>
      %841 = vector.shape_cast %840 : vector<1x16x1xf32> to vector<16x1xf32>
      %842 = vector.broadcast %841 : vector<16x1xf32> to vector<16x32xf32>
      %843 = vector.broadcast %839 : vector<1x32xf32> to vector<16x32xf32>
      %844 = arith.mulf %842, %843 : vector<16x32xf32>
      %845 = vector.broadcast %838 : vector<1x32xf32> to vector<16x32xf32>
      %846 = arith.addf %845, %844 : vector<16x32xf32>
      %c1_542 = arith.constant 1 : index
      %c0_543 = arith.constant 0 : index
      %847 = vector.load %arg3[%c1_542, %c0_543] : memref<9x32xf32, #tpu.memory_space<vmem>>, vector<1x32xf32>
      %c0_544 = arith.constant 0 : index
      %c0_545 = arith.constant 0 : index
      %c11_546 = arith.constant 11 : index
      %848 = vector.load %arg2[%c0_544, %c0_545, %c11_546] : memref<1x18x34xf32, #tpu.memory_space<vmem>>, vector<1x16x1xf32>
      %849 = vector.shape_cast %848 : vector<1x16x1xf32> to vector<16x1xf32>
      %850 = vector.broadcast %849 : vector<16x1xf32> to vector<16x32xf32>
      %851 = vector.broadcast %847 : vector<1x32xf32> to vector<16x32xf32>
      %852 = arith.mulf %850, %851 : vector<16x32xf32>
      %853 = arith.addf %846, %852 : vector<16x32xf32>
      %c2_547 = arith.constant 2 : index
      %c0_548 = arith.constant 0 : index
      %854 = vector.load %arg3[%c2_547, %c0_548] : memref<9x32xf32, #tpu.memory_space<vmem>>, vector<1x32xf32>
      %c0_549 = arith.constant 0 : index
      %c0_550 = arith.constant 0 : index
      %c12 = arith.constant 12 : index
      %855 = vector.load %arg2[%c0_549, %c0_550, %c12] : memref<1x18x34xf32, #tpu.memory_space<vmem>>, vector<1x16x1xf32>
      %856 = vector.shape_cast %855 : vector<1x16x1xf32> to vector<16x1xf32>
      %857 = vector.broadcast %856 : vector<16x1xf32> to vector<16x32xf32>
      %858 = vector.broadcast %854 : vector<1x32xf32> to vector<16x32xf32>
      %859 = arith.mulf %857, %858 : vector<16x32xf32>
      %860 = arith.addf %853, %859 : vector<16x32xf32>
      %c3_551 = arith.constant 3 : index
      %c0_552 = arith.constant 0 : index
      %861 = vector.load %arg3[%c3_551, %c0_552] : memref<9x32xf32, #tpu.memory_space<vmem>>, vector<1x32xf32>
      %c0_553 = arith.constant 0 : index
      %c1_554 = arith.constant 1 : index
      %c10_555 = arith.constant 10 : index
      %862 = vector.load %arg2[%c0_553, %c1_554, %c10_555] : memref<1x18x34xf32, #tpu.memory_space<vmem>>, vector<1x16x1xf32>
      %863 = vector.shape_cast %862 : vector<1x16x1xf32> to vector<16x1xf32>
      %864 = vector.broadcast %863 : vector<16x1xf32> to vector<16x32xf32>
      %865 = vector.broadcast %861 : vector<1x32xf32> to vector<16x32xf32>
      %866 = arith.mulf %864, %865 : vector<16x32xf32>
      %867 = arith.addf %860, %866 : vector<16x32xf32>
      %c4_556 = arith.constant 4 : index
      %c0_557 = arith.constant 0 : index
      %868 = vector.load %arg3[%c4_556, %c0_557] : memref<9x32xf32, #tpu.memory_space<vmem>>, vector<1x32xf32>
      %c0_558 = arith.constant 0 : index
      %c1_559 = arith.constant 1 : index
      %c11_560 = arith.constant 11 : index
      %869 = vector.load %arg2[%c0_558, %c1_559, %c11_560] : memref<1x18x34xf32, #tpu.memory_space<vmem>>, vector<1x16x1xf32>
      %870 = vector.shape_cast %869 : vector<1x16x1xf32> to vector<16x1xf32>
      %871 = vector.broadcast %870 : vector<16x1xf32> to vector<16x32xf32>
      %872 = vector.broadcast %868 : vector<1x32xf32> to vector<16x32xf32>
      %873 = arith.mulf %871, %872 : vector<16x32xf32>
      %874 = arith.addf %867, %873 : vector<16x32xf32>
      %c5_561 = arith.constant 5 : index
      %c0_562 = arith.constant 0 : index
      %875 = vector.load %arg3[%c5_561, %c0_562] : memref<9x32xf32, #tpu.memory_space<vmem>>, vector<1x32xf32>
      %c0_563 = arith.constant 0 : index
      %c1_564 = arith.constant 1 : index
      %c12_565 = arith.constant 12 : index
      %876 = vector.load %arg2[%c0_563, %c1_564, %c12_565] : memref<1x18x34xf32, #tpu.memory_space<vmem>>, vector<1x16x1xf32>
      %877 = vector.shape_cast %876 : vector<1x16x1xf32> to vector<16x1xf32>
      %878 = vector.broadcast %877 : vector<16x1xf32> to vector<16x32xf32>
      %879 = vector.broadcast %875 : vector<1x32xf32> to vector<16x32xf32>
      %880 = arith.mulf %878, %879 : vector<16x32xf32>
      %881 = arith.addf %874, %880 : vector<16x32xf32>
      %c6_566 = arith.constant 6 : index
      %c0_567 = arith.constant 0 : index
      %882 = vector.load %arg3[%c6_566, %c0_567] : memref<9x32xf32, #tpu.memory_space<vmem>>, vector<1x32xf32>
      %c0_568 = arith.constant 0 : index
      %c2_569 = arith.constant 2 : index
      %c10_570 = arith.constant 10 : index
      %883 = vector.load %arg2[%c0_568, %c2_569, %c10_570] : memref<1x18x34xf32, #tpu.memory_space<vmem>>, vector<1x16x1xf32>
      %884 = vector.shape_cast %883 : vector<1x16x1xf32> to vector<16x1xf32>
      %885 = vector.broadcast %884 : vector<16x1xf32> to vector<16x32xf32>
      %886 = vector.broadcast %882 : vector<1x32xf32> to vector<16x32xf32>
      %887 = arith.mulf %885, %886 : vector<16x32xf32>
      %888 = arith.addf %881, %887 : vector<16x32xf32>
      %c7_571 = arith.constant 7 : index
      %c0_572 = arith.constant 0 : index
      %889 = vector.load %arg3[%c7_571, %c0_572] : memref<9x32xf32, #tpu.memory_space<vmem>>, vector<1x32xf32>
      %c0_573 = arith.constant 0 : index
      %c2_574 = arith.constant 2 : index
      %c11_575 = arith.constant 11 : index
      %890 = vector.load %arg2[%c0_573, %c2_574, %c11_575] : memref<1x18x34xf32, #tpu.memory_space<vmem>>, vector<1x16x1xf32>
      %891 = vector.shape_cast %890 : vector<1x16x1xf32> to vector<16x1xf32>
      %892 = vector.broadcast %891 : vector<16x1xf32> to vector<16x32xf32>
      %893 = vector.broadcast %889 : vector<1x32xf32> to vector<16x32xf32>
      %894 = arith.mulf %892, %893 : vector<16x32xf32>
      %895 = arith.addf %888, %894 : vector<16x32xf32>
      %c8_576 = arith.constant 8 : index
      %c0_577 = arith.constant 0 : index
      %896 = vector.load %arg3[%c8_576, %c0_577] : memref<9x32xf32, #tpu.memory_space<vmem>>, vector<1x32xf32>
      %c0_578 = arith.constant 0 : index
      %c2_579 = arith.constant 2 : index
      %c12_580 = arith.constant 12 : index
      %897 = vector.load %arg2[%c0_578, %c2_579, %c12_580] : memref<1x18x34xf32, #tpu.memory_space<vmem>>, vector<1x16x1xf32>
      %898 = vector.shape_cast %897 : vector<1x16x1xf32> to vector<16x1xf32>
      %899 = vector.broadcast %898 : vector<16x1xf32> to vector<16x32xf32>
      %900 = vector.broadcast %896 : vector<1x32xf32> to vector<16x32xf32>
      %901 = arith.mulf %899, %900 : vector<16x32xf32>
      %902 = arith.addf %895, %901 : vector<16x32xf32>
      %cst_581 = arith.constant 0.000000e+00 : f32
      %903 = vector.broadcast %cst_581 : f32 to vector<16x32xf32>
      %904 = arith.maximumf %902, %903 : vector<16x32xf32>
      %905 = arith.addf %837, %904 : vector<16x32xf32>
      %c0_582 = arith.constant 0 : index
      %c0_583 = arith.constant 0 : index
      %906 = vector.load %arg4[%c0_582, %c0_583] : memref<1x32xf32, #tpu.memory_space<vmem>>, vector<1x32xf32>
      %c0_584 = arith.constant 0 : index
      %c0_585 = arith.constant 0 : index
      %907 = vector.load %arg3[%c0_584, %c0_585] : memref<9x32xf32, #tpu.memory_space<vmem>>, vector<1x32xf32>
      %c0_586 = arith.constant 0 : index
      %c0_587 = arith.constant 0 : index
      %c11_588 = arith.constant 11 : index
      %908 = vector.load %arg2[%c0_586, %c0_587, %c11_588] : memref<1x18x34xf32, #tpu.memory_space<vmem>>, vector<1x16x1xf32>
      %909 = vector.shape_cast %908 : vector<1x16x1xf32> to vector<16x1xf32>
      %910 = vector.broadcast %909 : vector<16x1xf32> to vector<16x32xf32>
      %911 = vector.broadcast %907 : vector<1x32xf32> to vector<16x32xf32>
      %912 = arith.mulf %910, %911 : vector<16x32xf32>
      %913 = vector.broadcast %906 : vector<1x32xf32> to vector<16x32xf32>
      %914 = arith.addf %913, %912 : vector<16x32xf32>
      %c1_589 = arith.constant 1 : index
      %c0_590 = arith.constant 0 : index
      %915 = vector.load %arg3[%c1_589, %c0_590] : memref<9x32xf32, #tpu.memory_space<vmem>>, vector<1x32xf32>
      %c0_591 = arith.constant 0 : index
      %c0_592 = arith.constant 0 : index
      %c12_593 = arith.constant 12 : index
      %916 = vector.load %arg2[%c0_591, %c0_592, %c12_593] : memref<1x18x34xf32, #tpu.memory_space<vmem>>, vector<1x16x1xf32>
      %917 = vector.shape_cast %916 : vector<1x16x1xf32> to vector<16x1xf32>
      %918 = vector.broadcast %917 : vector<16x1xf32> to vector<16x32xf32>
      %919 = vector.broadcast %915 : vector<1x32xf32> to vector<16x32xf32>
      %920 = arith.mulf %918, %919 : vector<16x32xf32>
      %921 = arith.addf %914, %920 : vector<16x32xf32>
      %c2_594 = arith.constant 2 : index
      %c0_595 = arith.constant 0 : index
      %922 = vector.load %arg3[%c2_594, %c0_595] : memref<9x32xf32, #tpu.memory_space<vmem>>, vector<1x32xf32>
      %c0_596 = arith.constant 0 : index
      %c0_597 = arith.constant 0 : index
      %c13 = arith.constant 13 : index
      %923 = vector.load %arg2[%c0_596, %c0_597, %c13] : memref<1x18x34xf32, #tpu.memory_space<vmem>>, vector<1x16x1xf32>
      %924 = vector.shape_cast %923 : vector<1x16x1xf32> to vector<16x1xf32>
      %925 = vector.broadcast %924 : vector<16x1xf32> to vector<16x32xf32>
      %926 = vector.broadcast %922 : vector<1x32xf32> to vector<16x32xf32>
      %927 = arith.mulf %925, %926 : vector<16x32xf32>
      %928 = arith.addf %921, %927 : vector<16x32xf32>
      %c3_598 = arith.constant 3 : index
      %c0_599 = arith.constant 0 : index
      %929 = vector.load %arg3[%c3_598, %c0_599] : memref<9x32xf32, #tpu.memory_space<vmem>>, vector<1x32xf32>
      %c0_600 = arith.constant 0 : index
      %c1_601 = arith.constant 1 : index
      %c11_602 = arith.constant 11 : index
      %930 = vector.load %arg2[%c0_600, %c1_601, %c11_602] : memref<1x18x34xf32, #tpu.memory_space<vmem>>, vector<1x16x1xf32>
      %931 = vector.shape_cast %930 : vector<1x16x1xf32> to vector<16x1xf32>
      %932 = vector.broadcast %931 : vector<16x1xf32> to vector<16x32xf32>
      %933 = vector.broadcast %929 : vector<1x32xf32> to vector<16x32xf32>
      %934 = arith.mulf %932, %933 : vector<16x32xf32>
      %935 = arith.addf %928, %934 : vector<16x32xf32>
      %c4_603 = arith.constant 4 : index
      %c0_604 = arith.constant 0 : index
      %936 = vector.load %arg3[%c4_603, %c0_604] : memref<9x32xf32, #tpu.memory_space<vmem>>, vector<1x32xf32>
      %c0_605 = arith.constant 0 : index
      %c1_606 = arith.constant 1 : index
      %c12_607 = arith.constant 12 : index
      %937 = vector.load %arg2[%c0_605, %c1_606, %c12_607] : memref<1x18x34xf32, #tpu.memory_space<vmem>>, vector<1x16x1xf32>
      %938 = vector.shape_cast %937 : vector<1x16x1xf32> to vector<16x1xf32>
      %939 = vector.broadcast %938 : vector<16x1xf32> to vector<16x32xf32>
      %940 = vector.broadcast %936 : vector<1x32xf32> to vector<16x32xf32>
      %941 = arith.mulf %939, %940 : vector<16x32xf32>
      %942 = arith.addf %935, %941 : vector<16x32xf32>
      %c5_608 = arith.constant 5 : index
      %c0_609 = arith.constant 0 : index
      %943 = vector.load %arg3[%c5_608, %c0_609] : memref<9x32xf32, #tpu.memory_space<vmem>>, vector<1x32xf32>
      %c0_610 = arith.constant 0 : index
      %c1_611 = arith.constant 1 : index
      %c13_612 = arith.constant 13 : index
      %944 = vector.load %arg2[%c0_610, %c1_611, %c13_612] : memref<1x18x34xf32, #tpu.memory_space<vmem>>, vector<1x16x1xf32>
      %945 = vector.shape_cast %944 : vector<1x16x1xf32> to vector<16x1xf32>
      %946 = vector.broadcast %945 : vector<16x1xf32> to vector<16x32xf32>
      %947 = vector.broadcast %943 : vector<1x32xf32> to vector<16x32xf32>
      %948 = arith.mulf %946, %947 : vector<16x32xf32>
      %949 = arith.addf %942, %948 : vector<16x32xf32>
      %c6_613 = arith.constant 6 : index
      %c0_614 = arith.constant 0 : index
      %950 = vector.load %arg3[%c6_613, %c0_614] : memref<9x32xf32, #tpu.memory_space<vmem>>, vector<1x32xf32>
      %c0_615 = arith.constant 0 : index
      %c2_616 = arith.constant 2 : index
      %c11_617 = arith.constant 11 : index
      %951 = vector.load %arg2[%c0_615, %c2_616, %c11_617] : memref<1x18x34xf32, #tpu.memory_space<vmem>>, vector<1x16x1xf32>
      %952 = vector.shape_cast %951 : vector<1x16x1xf32> to vector<16x1xf32>
      %953 = vector.broadcast %952 : vector<16x1xf32> to vector<16x32xf32>
      %954 = vector.broadcast %950 : vector<1x32xf32> to vector<16x32xf32>
      %955 = arith.mulf %953, %954 : vector<16x32xf32>
      %956 = arith.addf %949, %955 : vector<16x32xf32>
      %c7_618 = arith.constant 7 : index
      %c0_619 = arith.constant 0 : index
      %957 = vector.load %arg3[%c7_618, %c0_619] : memref<9x32xf32, #tpu.memory_space<vmem>>, vector<1x32xf32>
      %c0_620 = arith.constant 0 : index
      %c2_621 = arith.constant 2 : index
      %c12_622 = arith.constant 12 : index
      %958 = vector.load %arg2[%c0_620, %c2_621, %c12_622] : memref<1x18x34xf32, #tpu.memory_space<vmem>>, vector<1x16x1xf32>
      %959 = vector.shape_cast %958 : vector<1x16x1xf32> to vector<16x1xf32>
      %960 = vector.broadcast %959 : vector<16x1xf32> to vector<16x32xf32>
      %961 = vector.broadcast %957 : vector<1x32xf32> to vector<16x32xf32>
      %962 = arith.mulf %960, %961 : vector<16x32xf32>
      %963 = arith.addf %956, %962 : vector<16x32xf32>
      %c8_623 = arith.constant 8 : index
      %c0_624 = arith.constant 0 : index
      %964 = vector.load %arg3[%c8_623, %c0_624] : memref<9x32xf32, #tpu.memory_space<vmem>>, vector<1x32xf32>
      %c0_625 = arith.constant 0 : index
      %c2_626 = arith.constant 2 : index
      %c13_627 = arith.constant 13 : index
      %965 = vector.load %arg2[%c0_625, %c2_626, %c13_627] : memref<1x18x34xf32, #tpu.memory_space<vmem>>, vector<1x16x1xf32>
      %966 = vector.shape_cast %965 : vector<1x16x1xf32> to vector<16x1xf32>
      %967 = vector.broadcast %966 : vector<16x1xf32> to vector<16x32xf32>
      %968 = vector.broadcast %964 : vector<1x32xf32> to vector<16x32xf32>
      %969 = arith.mulf %967, %968 : vector<16x32xf32>
      %970 = arith.addf %963, %969 : vector<16x32xf32>
      %cst_628 = arith.constant 0.000000e+00 : f32
      %971 = vector.broadcast %cst_628 : f32 to vector<16x32xf32>
      %972 = arith.maximumf %970, %971 : vector<16x32xf32>
      %973 = arith.addf %905, %972 : vector<16x32xf32>
      %c0_629 = arith.constant 0 : index
      %c0_630 = arith.constant 0 : index
      %974 = vector.load %arg4[%c0_629, %c0_630] : memref<1x32xf32, #tpu.memory_space<vmem>>, vector<1x32xf32>
      %c0_631 = arith.constant 0 : index
      %c0_632 = arith.constant 0 : index
      %975 = vector.load %arg3[%c0_631, %c0_632] : memref<9x32xf32, #tpu.memory_space<vmem>>, vector<1x32xf32>
      %c0_633 = arith.constant 0 : index
      %c0_634 = arith.constant 0 : index
      %c12_635 = arith.constant 12 : index
      %976 = vector.load %arg2[%c0_633, %c0_634, %c12_635] : memref<1x18x34xf32, #tpu.memory_space<vmem>>, vector<1x16x1xf32>
      %977 = vector.shape_cast %976 : vector<1x16x1xf32> to vector<16x1xf32>
      %978 = vector.broadcast %977 : vector<16x1xf32> to vector<16x32xf32>
      %979 = vector.broadcast %975 : vector<1x32xf32> to vector<16x32xf32>
      %980 = arith.mulf %978, %979 : vector<16x32xf32>
      %981 = vector.broadcast %974 : vector<1x32xf32> to vector<16x32xf32>
      %982 = arith.addf %981, %980 : vector<16x32xf32>
      %c1_636 = arith.constant 1 : index
      %c0_637 = arith.constant 0 : index
      %983 = vector.load %arg3[%c1_636, %c0_637] : memref<9x32xf32, #tpu.memory_space<vmem>>, vector<1x32xf32>
      %c0_638 = arith.constant 0 : index
      %c0_639 = arith.constant 0 : index
      %c13_640 = arith.constant 13 : index
      %984 = vector.load %arg2[%c0_638, %c0_639, %c13_640] : memref<1x18x34xf32, #tpu.memory_space<vmem>>, vector<1x16x1xf32>
      %985 = vector.shape_cast %984 : vector<1x16x1xf32> to vector<16x1xf32>
      %986 = vector.broadcast %985 : vector<16x1xf32> to vector<16x32xf32>
      %987 = vector.broadcast %983 : vector<1x32xf32> to vector<16x32xf32>
      %988 = arith.mulf %986, %987 : vector<16x32xf32>
      %989 = arith.addf %982, %988 : vector<16x32xf32>
      %c2_641 = arith.constant 2 : index
      %c0_642 = arith.constant 0 : index
      %990 = vector.load %arg3[%c2_641, %c0_642] : memref<9x32xf32, #tpu.memory_space<vmem>>, vector<1x32xf32>
      %c0_643 = arith.constant 0 : index
      %c0_644 = arith.constant 0 : index
      %c14 = arith.constant 14 : index
      %991 = vector.load %arg2[%c0_643, %c0_644, %c14] : memref<1x18x34xf32, #tpu.memory_space<vmem>>, vector<1x16x1xf32>
      %992 = vector.shape_cast %991 : vector<1x16x1xf32> to vector<16x1xf32>
      %993 = vector.broadcast %992 : vector<16x1xf32> to vector<16x32xf32>
      %994 = vector.broadcast %990 : vector<1x32xf32> to vector<16x32xf32>
      %995 = arith.mulf %993, %994 : vector<16x32xf32>
      %996 = arith.addf %989, %995 : vector<16x32xf32>
      %c3_645 = arith.constant 3 : index
      %c0_646 = arith.constant 0 : index
      %997 = vector.load %arg3[%c3_645, %c0_646] : memref<9x32xf32, #tpu.memory_space<vmem>>, vector<1x32xf32>
      %c0_647 = arith.constant 0 : index
      %c1_648 = arith.constant 1 : index
      %c12_649 = arith.constant 12 : index
      %998 = vector.load %arg2[%c0_647, %c1_648, %c12_649] : memref<1x18x34xf32, #tpu.memory_space<vmem>>, vector<1x16x1xf32>
      %999 = vector.shape_cast %998 : vector<1x16x1xf32> to vector<16x1xf32>
      %1000 = vector.broadcast %999 : vector<16x1xf32> to vector<16x32xf32>
      %1001 = vector.broadcast %997 : vector<1x32xf32> to vector<16x32xf32>
      %1002 = arith.mulf %1000, %1001 : vector<16x32xf32>
      %1003 = arith.addf %996, %1002 : vector<16x32xf32>
      %c4_650 = arith.constant 4 : index
      %c0_651 = arith.constant 0 : index
      %1004 = vector.load %arg3[%c4_650, %c0_651] : memref<9x32xf32, #tpu.memory_space<vmem>>, vector<1x32xf32>
      %c0_652 = arith.constant 0 : index
      %c1_653 = arith.constant 1 : index
      %c13_654 = arith.constant 13 : index
      %1005 = vector.load %arg2[%c0_652, %c1_653, %c13_654] : memref<1x18x34xf32, #tpu.memory_space<vmem>>, vector<1x16x1xf32>
      %1006 = vector.shape_cast %1005 : vector<1x16x1xf32> to vector<16x1xf32>
      %1007 = vector.broadcast %1006 : vector<16x1xf32> to vector<16x32xf32>
      %1008 = vector.broadcast %1004 : vector<1x32xf32> to vector<16x32xf32>
      %1009 = arith.mulf %1007, %1008 : vector<16x32xf32>
      %1010 = arith.addf %1003, %1009 : vector<16x32xf32>
      %c5_655 = arith.constant 5 : index
      %c0_656 = arith.constant 0 : index
      %1011 = vector.load %arg3[%c5_655, %c0_656] : memref<9x32xf32, #tpu.memory_space<vmem>>, vector<1x32xf32>
      %c0_657 = arith.constant 0 : index
      %c1_658 = arith.constant 1 : index
      %c14_659 = arith.constant 14 : index
      %1012 = vector.load %arg2[%c0_657, %c1_658, %c14_659] : memref<1x18x34xf32, #tpu.memory_space<vmem>>, vector<1x16x1xf32>
      %1013 = vector.shape_cast %1012 : vector<1x16x1xf32> to vector<16x1xf32>
      %1014 = vector.broadcast %1013 : vector<16x1xf32> to vector<16x32xf32>
      %1015 = vector.broadcast %1011 : vector<1x32xf32> to vector<16x32xf32>
      %1016 = arith.mulf %1014, %1015 : vector<16x32xf32>
      %1017 = arith.addf %1010, %1016 : vector<16x32xf32>
      %c6_660 = arith.constant 6 : index
      %c0_661 = arith.constant 0 : index
      %1018 = vector.load %arg3[%c6_660, %c0_661] : memref<9x32xf32, #tpu.memory_space<vmem>>, vector<1x32xf32>
      %c0_662 = arith.constant 0 : index
      %c2_663 = arith.constant 2 : index
      %c12_664 = arith.constant 12 : index
      %1019 = vector.load %arg2[%c0_662, %c2_663, %c12_664] : memref<1x18x34xf32, #tpu.memory_space<vmem>>, vector<1x16x1xf32>
      %1020 = vector.shape_cast %1019 : vector<1x16x1xf32> to vector<16x1xf32>
      %1021 = vector.broadcast %1020 : vector<16x1xf32> to vector<16x32xf32>
      %1022 = vector.broadcast %1018 : vector<1x32xf32> to vector<16x32xf32>
      %1023 = arith.mulf %1021, %1022 : vector<16x32xf32>
      %1024 = arith.addf %1017, %1023 : vector<16x32xf32>
      %c7_665 = arith.constant 7 : index
      %c0_666 = arith.constant 0 : index
      %1025 = vector.load %arg3[%c7_665, %c0_666] : memref<9x32xf32, #tpu.memory_space<vmem>>, vector<1x32xf32>
      %c0_667 = arith.constant 0 : index
      %c2_668 = arith.constant 2 : index
      %c13_669 = arith.constant 13 : index
      %1026 = vector.load %arg2[%c0_667, %c2_668, %c13_669] : memref<1x18x34xf32, #tpu.memory_space<vmem>>, vector<1x16x1xf32>
      %1027 = vector.shape_cast %1026 : vector<1x16x1xf32> to vector<16x1xf32>
      %1028 = vector.broadcast %1027 : vector<16x1xf32> to vector<16x32xf32>
      %1029 = vector.broadcast %1025 : vector<1x32xf32> to vector<16x32xf32>
      %1030 = arith.mulf %1028, %1029 : vector<16x32xf32>
      %1031 = arith.addf %1024, %1030 : vector<16x32xf32>
      %c8_670 = arith.constant 8 : index
      %c0_671 = arith.constant 0 : index
      %1032 = vector.load %arg3[%c8_670, %c0_671] : memref<9x32xf32, #tpu.memory_space<vmem>>, vector<1x32xf32>
      %c0_672 = arith.constant 0 : index
      %c2_673 = arith.constant 2 : index
      %c14_674 = arith.constant 14 : index
      %1033 = vector.load %arg2[%c0_672, %c2_673, %c14_674] : memref<1x18x34xf32, #tpu.memory_space<vmem>>, vector<1x16x1xf32>
      %1034 = vector.shape_cast %1033 : vector<1x16x1xf32> to vector<16x1xf32>
      %1035 = vector.broadcast %1034 : vector<16x1xf32> to vector<16x32xf32>
      %1036 = vector.broadcast %1032 : vector<1x32xf32> to vector<16x32xf32>
      %1037 = arith.mulf %1035, %1036 : vector<16x32xf32>
      %1038 = arith.addf %1031, %1037 : vector<16x32xf32>
      %cst_675 = arith.constant 0.000000e+00 : f32
      %1039 = vector.broadcast %cst_675 : f32 to vector<16x32xf32>
      %1040 = arith.maximumf %1038, %1039 : vector<16x32xf32>
      %1041 = arith.addf %973, %1040 : vector<16x32xf32>
      %c0_676 = arith.constant 0 : index
      %c0_677 = arith.constant 0 : index
      %1042 = vector.load %arg4[%c0_676, %c0_677] : memref<1x32xf32, #tpu.memory_space<vmem>>, vector<1x32xf32>
      %c0_678 = arith.constant 0 : index
      %c0_679 = arith.constant 0 : index
      %1043 = vector.load %arg3[%c0_678, %c0_679] : memref<9x32xf32, #tpu.memory_space<vmem>>, vector<1x32xf32>
      %c0_680 = arith.constant 0 : index
      %c0_681 = arith.constant 0 : index
      %c13_682 = arith.constant 13 : index
      %1044 = vector.load %arg2[%c0_680, %c0_681, %c13_682] : memref<1x18x34xf32, #tpu.memory_space<vmem>>, vector<1x16x1xf32>
      %1045 = vector.shape_cast %1044 : vector<1x16x1xf32> to vector<16x1xf32>
      %1046 = vector.broadcast %1045 : vector<16x1xf32> to vector<16x32xf32>
      %1047 = vector.broadcast %1043 : vector<1x32xf32> to vector<16x32xf32>
      %1048 = arith.mulf %1046, %1047 : vector<16x32xf32>
      %1049 = vector.broadcast %1042 : vector<1x32xf32> to vector<16x32xf32>
      %1050 = arith.addf %1049, %1048 : vector<16x32xf32>
      %c1_683 = arith.constant 1 : index
      %c0_684 = arith.constant 0 : index
      %1051 = vector.load %arg3[%c1_683, %c0_684] : memref<9x32xf32, #tpu.memory_space<vmem>>, vector<1x32xf32>
      %c0_685 = arith.constant 0 : index
      %c0_686 = arith.constant 0 : index
      %c14_687 = arith.constant 14 : index
      %1052 = vector.load %arg2[%c0_685, %c0_686, %c14_687] : memref<1x18x34xf32, #tpu.memory_space<vmem>>, vector<1x16x1xf32>
      %1053 = vector.shape_cast %1052 : vector<1x16x1xf32> to vector<16x1xf32>
      %1054 = vector.broadcast %1053 : vector<16x1xf32> to vector<16x32xf32>
      %1055 = vector.broadcast %1051 : vector<1x32xf32> to vector<16x32xf32>
      %1056 = arith.mulf %1054, %1055 : vector<16x32xf32>
      %1057 = arith.addf %1050, %1056 : vector<16x32xf32>
      %c2_688 = arith.constant 2 : index
      %c0_689 = arith.constant 0 : index
      %1058 = vector.load %arg3[%c2_688, %c0_689] : memref<9x32xf32, #tpu.memory_space<vmem>>, vector<1x32xf32>
      %c0_690 = arith.constant 0 : index
      %c0_691 = arith.constant 0 : index
      %c15 = arith.constant 15 : index
      %1059 = vector.load %arg2[%c0_690, %c0_691, %c15] : memref<1x18x34xf32, #tpu.memory_space<vmem>>, vector<1x16x1xf32>
      %1060 = vector.shape_cast %1059 : vector<1x16x1xf32> to vector<16x1xf32>
      %1061 = vector.broadcast %1060 : vector<16x1xf32> to vector<16x32xf32>
      %1062 = vector.broadcast %1058 : vector<1x32xf32> to vector<16x32xf32>
      %1063 = arith.mulf %1061, %1062 : vector<16x32xf32>
      %1064 = arith.addf %1057, %1063 : vector<16x32xf32>
      %c3_692 = arith.constant 3 : index
      %c0_693 = arith.constant 0 : index
      %1065 = vector.load %arg3[%c3_692, %c0_693] : memref<9x32xf32, #tpu.memory_space<vmem>>, vector<1x32xf32>
      %c0_694 = arith.constant 0 : index
      %c1_695 = arith.constant 1 : index
      %c13_696 = arith.constant 13 : index
      %1066 = vector.load %arg2[%c0_694, %c1_695, %c13_696] : memref<1x18x34xf32, #tpu.memory_space<vmem>>, vector<1x16x1xf32>
      %1067 = vector.shape_cast %1066 : vector<1x16x1xf32> to vector<16x1xf32>
      %1068 = vector.broadcast %1067 : vector<16x1xf32> to vector<16x32xf32>
      %1069 = vector.broadcast %1065 : vector<1x32xf32> to vector<16x32xf32>
      %1070 = arith.mulf %1068, %1069 : vector<16x32xf32>
      %1071 = arith.addf %1064, %1070 : vector<16x32xf32>
      %c4_697 = arith.constant 4 : index
      %c0_698 = arith.constant 0 : index
      %1072 = vector.load %arg3[%c4_697, %c0_698] : memref<9x32xf32, #tpu.memory_space<vmem>>, vector<1x32xf32>
      %c0_699 = arith.constant 0 : index
      %c1_700 = arith.constant 1 : index
      %c14_701 = arith.constant 14 : index
      %1073 = vector.load %arg2[%c0_699, %c1_700, %c14_701] : memref<1x18x34xf32, #tpu.memory_space<vmem>>, vector<1x16x1xf32>
      %1074 = vector.shape_cast %1073 : vector<1x16x1xf32> to vector<16x1xf32>
      %1075 = vector.broadcast %1074 : vector<16x1xf32> to vector<16x32xf32>
      %1076 = vector.broadcast %1072 : vector<1x32xf32> to vector<16x32xf32>
      %1077 = arith.mulf %1075, %1076 : vector<16x32xf32>
      %1078 = arith.addf %1071, %1077 : vector<16x32xf32>
      %c5_702 = arith.constant 5 : index
      %c0_703 = arith.constant 0 : index
      %1079 = vector.load %arg3[%c5_702, %c0_703] : memref<9x32xf32, #tpu.memory_space<vmem>>, vector<1x32xf32>
      %c0_704 = arith.constant 0 : index
      %c1_705 = arith.constant 1 : index
      %c15_706 = arith.constant 15 : index
      %1080 = vector.load %arg2[%c0_704, %c1_705, %c15_706] : memref<1x18x34xf32, #tpu.memory_space<vmem>>, vector<1x16x1xf32>
      %1081 = vector.shape_cast %1080 : vector<1x16x1xf32> to vector<16x1xf32>
      %1082 = vector.broadcast %1081 : vector<16x1xf32> to vector<16x32xf32>
      %1083 = vector.broadcast %1079 : vector<1x32xf32> to vector<16x32xf32>
      %1084 = arith.mulf %1082, %1083 : vector<16x32xf32>
      %1085 = arith.addf %1078, %1084 : vector<16x32xf32>
      %c6_707 = arith.constant 6 : index
      %c0_708 = arith.constant 0 : index
      %1086 = vector.load %arg3[%c6_707, %c0_708] : memref<9x32xf32, #tpu.memory_space<vmem>>, vector<1x32xf32>
      %c0_709 = arith.constant 0 : index
      %c2_710 = arith.constant 2 : index
      %c13_711 = arith.constant 13 : index
      %1087 = vector.load %arg2[%c0_709, %c2_710, %c13_711] : memref<1x18x34xf32, #tpu.memory_space<vmem>>, vector<1x16x1xf32>
      %1088 = vector.shape_cast %1087 : vector<1x16x1xf32> to vector<16x1xf32>
      %1089 = vector.broadcast %1088 : vector<16x1xf32> to vector<16x32xf32>
      %1090 = vector.broadcast %1086 : vector<1x32xf32> to vector<16x32xf32>
      %1091 = arith.mulf %1089, %1090 : vector<16x32xf32>
      %1092 = arith.addf %1085, %1091 : vector<16x32xf32>
      %c7_712 = arith.constant 7 : index
      %c0_713 = arith.constant 0 : index
      %1093 = vector.load %arg3[%c7_712, %c0_713] : memref<9x32xf32, #tpu.memory_space<vmem>>, vector<1x32xf32>
      %c0_714 = arith.constant 0 : index
      %c2_715 = arith.constant 2 : index
      %c14_716 = arith.constant 14 : index
      %1094 = vector.load %arg2[%c0_714, %c2_715, %c14_716] : memref<1x18x34xf32, #tpu.memory_space<vmem>>, vector<1x16x1xf32>
      %1095 = vector.shape_cast %1094 : vector<1x16x1xf32> to vector<16x1xf32>
      %1096 = vector.broadcast %1095 : vector<16x1xf32> to vector<16x32xf32>
      %1097 = vector.broadcast %1093 : vector<1x32xf32> to vector<16x32xf32>
      %1098 = arith.mulf %1096, %1097 : vector<16x32xf32>
      %1099 = arith.addf %1092, %1098 : vector<16x32xf32>
      %c8_717 = arith.constant 8 : index
      %c0_718 = arith.constant 0 : index
      %1100 = vector.load %arg3[%c8_717, %c0_718] : memref<9x32xf32, #tpu.memory_space<vmem>>, vector<1x32xf32>
      %c0_719 = arith.constant 0 : index
      %c2_720 = arith.constant 2 : index
      %c15_721 = arith.constant 15 : index
      %1101 = vector.load %arg2[%c0_719, %c2_720, %c15_721] : memref<1x18x34xf32, #tpu.memory_space<vmem>>, vector<1x16x1xf32>
      %1102 = vector.shape_cast %1101 : vector<1x16x1xf32> to vector<16x1xf32>
      %1103 = vector.broadcast %1102 : vector<16x1xf32> to vector<16x32xf32>
      %1104 = vector.broadcast %1100 : vector<1x32xf32> to vector<16x32xf32>
      %1105 = arith.mulf %1103, %1104 : vector<16x32xf32>
      %1106 = arith.addf %1099, %1105 : vector<16x32xf32>
      %cst_722 = arith.constant 0.000000e+00 : f32
      %1107 = vector.broadcast %cst_722 : f32 to vector<16x32xf32>
      %1108 = arith.maximumf %1106, %1107 : vector<16x32xf32>
      %1109 = arith.addf %1041, %1108 : vector<16x32xf32>
      %c0_723 = arith.constant 0 : index
      %c0_724 = arith.constant 0 : index
      %1110 = vector.load %arg4[%c0_723, %c0_724] : memref<1x32xf32, #tpu.memory_space<vmem>>, vector<1x32xf32>
      %c0_725 = arith.constant 0 : index
      %c0_726 = arith.constant 0 : index
      %1111 = vector.load %arg3[%c0_725, %c0_726] : memref<9x32xf32, #tpu.memory_space<vmem>>, vector<1x32xf32>
      %c0_727 = arith.constant 0 : index
      %c0_728 = arith.constant 0 : index
      %c14_729 = arith.constant 14 : index
      %1112 = vector.load %arg2[%c0_727, %c0_728, %c14_729] : memref<1x18x34xf32, #tpu.memory_space<vmem>>, vector<1x16x1xf32>
      %1113 = vector.shape_cast %1112 : vector<1x16x1xf32> to vector<16x1xf32>
      %1114 = vector.broadcast %1113 : vector<16x1xf32> to vector<16x32xf32>
      %1115 = vector.broadcast %1111 : vector<1x32xf32> to vector<16x32xf32>
      %1116 = arith.mulf %1114, %1115 : vector<16x32xf32>
      %1117 = vector.broadcast %1110 : vector<1x32xf32> to vector<16x32xf32>
      %1118 = arith.addf %1117, %1116 : vector<16x32xf32>
      %c1_730 = arith.constant 1 : index
      %c0_731 = arith.constant 0 : index
      %1119 = vector.load %arg3[%c1_730, %c0_731] : memref<9x32xf32, #tpu.memory_space<vmem>>, vector<1x32xf32>
      %c0_732 = arith.constant 0 : index
      %c0_733 = arith.constant 0 : index
      %c15_734 = arith.constant 15 : index
      %1120 = vector.load %arg2[%c0_732, %c0_733, %c15_734] : memref<1x18x34xf32, #tpu.memory_space<vmem>>, vector<1x16x1xf32>
      %1121 = vector.shape_cast %1120 : vector<1x16x1xf32> to vector<16x1xf32>
      %1122 = vector.broadcast %1121 : vector<16x1xf32> to vector<16x32xf32>
      %1123 = vector.broadcast %1119 : vector<1x32xf32> to vector<16x32xf32>
      %1124 = arith.mulf %1122, %1123 : vector<16x32xf32>
      %1125 = arith.addf %1118, %1124 : vector<16x32xf32>
      %c2_735 = arith.constant 2 : index
      %c0_736 = arith.constant 0 : index
      %1126 = vector.load %arg3[%c2_735, %c0_736] : memref<9x32xf32, #tpu.memory_space<vmem>>, vector<1x32xf32>
      %c0_737 = arith.constant 0 : index
      %c0_738 = arith.constant 0 : index
      %c16 = arith.constant 16 : index
      %1127 = vector.load %arg2[%c0_737, %c0_738, %c16] : memref<1x18x34xf32, #tpu.memory_space<vmem>>, vector<1x16x1xf32>
      %1128 = vector.shape_cast %1127 : vector<1x16x1xf32> to vector<16x1xf32>
      %1129 = vector.broadcast %1128 : vector<16x1xf32> to vector<16x32xf32>
      %1130 = vector.broadcast %1126 : vector<1x32xf32> to vector<16x32xf32>
      %1131 = arith.mulf %1129, %1130 : vector<16x32xf32>
      %1132 = arith.addf %1125, %1131 : vector<16x32xf32>
      %c3_739 = arith.constant 3 : index
      %c0_740 = arith.constant 0 : index
      %1133 = vector.load %arg3[%c3_739, %c0_740] : memref<9x32xf32, #tpu.memory_space<vmem>>, vector<1x32xf32>
      %c0_741 = arith.constant 0 : index
      %c1_742 = arith.constant 1 : index
      %c14_743 = arith.constant 14 : index
      %1134 = vector.load %arg2[%c0_741, %c1_742, %c14_743] : memref<1x18x34xf32, #tpu.memory_space<vmem>>, vector<1x16x1xf32>
      %1135 = vector.shape_cast %1134 : vector<1x16x1xf32> to vector<16x1xf32>
      %1136 = vector.broadcast %1135 : vector<16x1xf32> to vector<16x32xf32>
      %1137 = vector.broadcast %1133 : vector<1x32xf32> to vector<16x32xf32>
      %1138 = arith.mulf %1136, %1137 : vector<16x32xf32>
      %1139 = arith.addf %1132, %1138 : vector<16x32xf32>
      %c4_744 = arith.constant 4 : index
      %c0_745 = arith.constant 0 : index
      %1140 = vector.load %arg3[%c4_744, %c0_745] : memref<9x32xf32, #tpu.memory_space<vmem>>, vector<1x32xf32>
      %c0_746 = arith.constant 0 : index
      %c1_747 = arith.constant 1 : index
      %c15_748 = arith.constant 15 : index
      %1141 = vector.load %arg2[%c0_746, %c1_747, %c15_748] : memref<1x18x34xf32, #tpu.memory_space<vmem>>, vector<1x16x1xf32>
      %1142 = vector.shape_cast %1141 : vector<1x16x1xf32> to vector<16x1xf32>
      %1143 = vector.broadcast %1142 : vector<16x1xf32> to vector<16x32xf32>
      %1144 = vector.broadcast %1140 : vector<1x32xf32> to vector<16x32xf32>
      %1145 = arith.mulf %1143, %1144 : vector<16x32xf32>
      %1146 = arith.addf %1139, %1145 : vector<16x32xf32>
      %c5_749 = arith.constant 5 : index
      %c0_750 = arith.constant 0 : index
      %1147 = vector.load %arg3[%c5_749, %c0_750] : memref<9x32xf32, #tpu.memory_space<vmem>>, vector<1x32xf32>
      %c0_751 = arith.constant 0 : index
      %c1_752 = arith.constant 1 : index
      %c16_753 = arith.constant 16 : index
      %1148 = vector.load %arg2[%c0_751, %c1_752, %c16_753] : memref<1x18x34xf32, #tpu.memory_space<vmem>>, vector<1x16x1xf32>
      %1149 = vector.shape_cast %1148 : vector<1x16x1xf32> to vector<16x1xf32>
      %1150 = vector.broadcast %1149 : vector<16x1xf32> to vector<16x32xf32>
      %1151 = vector.broadcast %1147 : vector<1x32xf32> to vector<16x32xf32>
      %1152 = arith.mulf %1150, %1151 : vector<16x32xf32>
      %1153 = arith.addf %1146, %1152 : vector<16x32xf32>
      %c6_754 = arith.constant 6 : index
      %c0_755 = arith.constant 0 : index
      %1154 = vector.load %arg3[%c6_754, %c0_755] : memref<9x32xf32, #tpu.memory_space<vmem>>, vector<1x32xf32>
      %c0_756 = arith.constant 0 : index
      %c2_757 = arith.constant 2 : index
      %c14_758 = arith.constant 14 : index
      %1155 = vector.load %arg2[%c0_756, %c2_757, %c14_758] : memref<1x18x34xf32, #tpu.memory_space<vmem>>, vector<1x16x1xf32>
      %1156 = vector.shape_cast %1155 : vector<1x16x1xf32> to vector<16x1xf32>
      %1157 = vector.broadcast %1156 : vector<16x1xf32> to vector<16x32xf32>
      %1158 = vector.broadcast %1154 : vector<1x32xf32> to vector<16x32xf32>
      %1159 = arith.mulf %1157, %1158 : vector<16x32xf32>
      %1160 = arith.addf %1153, %1159 : vector<16x32xf32>
      %c7_759 = arith.constant 7 : index
      %c0_760 = arith.constant 0 : index
      %1161 = vector.load %arg3[%c7_759, %c0_760] : memref<9x32xf32, #tpu.memory_space<vmem>>, vector<1x32xf32>
      %c0_761 = arith.constant 0 : index
      %c2_762 = arith.constant 2 : index
      %c15_763 = arith.constant 15 : index
      %1162 = vector.load %arg2[%c0_761, %c2_762, %c15_763] : memref<1x18x34xf32, #tpu.memory_space<vmem>>, vector<1x16x1xf32>
      %1163 = vector.shape_cast %1162 : vector<1x16x1xf32> to vector<16x1xf32>
      %1164 = vector.broadcast %1163 : vector<16x1xf32> to vector<16x32xf32>
      %1165 = vector.broadcast %1161 : vector<1x32xf32> to vector<16x32xf32>
      %1166 = arith.mulf %1164, %1165 : vector<16x32xf32>
      %1167 = arith.addf %1160, %1166 : vector<16x32xf32>
      %c8_764 = arith.constant 8 : index
      %c0_765 = arith.constant 0 : index
      %1168 = vector.load %arg3[%c8_764, %c0_765] : memref<9x32xf32, #tpu.memory_space<vmem>>, vector<1x32xf32>
      %c0_766 = arith.constant 0 : index
      %c2_767 = arith.constant 2 : index
      %c16_768 = arith.constant 16 : index
      %1169 = vector.load %arg2[%c0_766, %c2_767, %c16_768] : memref<1x18x34xf32, #tpu.memory_space<vmem>>, vector<1x16x1xf32>
      %1170 = vector.shape_cast %1169 : vector<1x16x1xf32> to vector<16x1xf32>
      %1171 = vector.broadcast %1170 : vector<16x1xf32> to vector<16x32xf32>
      %1172 = vector.broadcast %1168 : vector<1x32xf32> to vector<16x32xf32>
      %1173 = arith.mulf %1171, %1172 : vector<16x32xf32>
      %1174 = arith.addf %1167, %1173 : vector<16x32xf32>
      %cst_769 = arith.constant 0.000000e+00 : f32
      %1175 = vector.broadcast %cst_769 : f32 to vector<16x32xf32>
      %1176 = arith.maximumf %1174, %1175 : vector<16x32xf32>
      %1177 = arith.addf %1109, %1176 : vector<16x32xf32>
      %c0_770 = arith.constant 0 : index
      %c0_771 = arith.constant 0 : index
      %1178 = vector.load %arg4[%c0_770, %c0_771] : memref<1x32xf32, #tpu.memory_space<vmem>>, vector<1x32xf32>
      %c0_772 = arith.constant 0 : index
      %c0_773 = arith.constant 0 : index
      %1179 = vector.load %arg3[%c0_772, %c0_773] : memref<9x32xf32, #tpu.memory_space<vmem>>, vector<1x32xf32>
      %c0_774 = arith.constant 0 : index
      %c0_775 = arith.constant 0 : index
      %c15_776 = arith.constant 15 : index
      %1180 = vector.load %arg2[%c0_774, %c0_775, %c15_776] : memref<1x18x34xf32, #tpu.memory_space<vmem>>, vector<1x16x1xf32>
      %1181 = vector.shape_cast %1180 : vector<1x16x1xf32> to vector<16x1xf32>
      %1182 = vector.broadcast %1181 : vector<16x1xf32> to vector<16x32xf32>
      %1183 = vector.broadcast %1179 : vector<1x32xf32> to vector<16x32xf32>
      %1184 = arith.mulf %1182, %1183 : vector<16x32xf32>
      %1185 = vector.broadcast %1178 : vector<1x32xf32> to vector<16x32xf32>
      %1186 = arith.addf %1185, %1184 : vector<16x32xf32>
      %c1_777 = arith.constant 1 : index
      %c0_778 = arith.constant 0 : index
      %1187 = vector.load %arg3[%c1_777, %c0_778] : memref<9x32xf32, #tpu.memory_space<vmem>>, vector<1x32xf32>
      %c0_779 = arith.constant 0 : index
      %c0_780 = arith.constant 0 : index
      %c16_781 = arith.constant 16 : index
      %1188 = vector.load %arg2[%c0_779, %c0_780, %c16_781] : memref<1x18x34xf32, #tpu.memory_space<vmem>>, vector<1x16x1xf32>
      %1189 = vector.shape_cast %1188 : vector<1x16x1xf32> to vector<16x1xf32>
      %1190 = vector.broadcast %1189 : vector<16x1xf32> to vector<16x32xf32>
      %1191 = vector.broadcast %1187 : vector<1x32xf32> to vector<16x32xf32>
      %1192 = arith.mulf %1190, %1191 : vector<16x32xf32>
      %1193 = arith.addf %1186, %1192 : vector<16x32xf32>
      %c2_782 = arith.constant 2 : index
      %c0_783 = arith.constant 0 : index
      %1194 = vector.load %arg3[%c2_782, %c0_783] : memref<9x32xf32, #tpu.memory_space<vmem>>, vector<1x32xf32>
      %c0_784 = arith.constant 0 : index
      %c0_785 = arith.constant 0 : index
      %c17 = arith.constant 17 : index
      %1195 = vector.load %arg2[%c0_784, %c0_785, %c17] : memref<1x18x34xf32, #tpu.memory_space<vmem>>, vector<1x16x1xf32>
      %1196 = vector.shape_cast %1195 : vector<1x16x1xf32> to vector<16x1xf32>
      %1197 = vector.broadcast %1196 : vector<16x1xf32> to vector<16x32xf32>
      %1198 = vector.broadcast %1194 : vector<1x32xf32> to vector<16x32xf32>
      %1199 = arith.mulf %1197, %1198 : vector<16x32xf32>
      %1200 = arith.addf %1193, %1199 : vector<16x32xf32>
      %c3_786 = arith.constant 3 : index
      %c0_787 = arith.constant 0 : index
      %1201 = vector.load %arg3[%c3_786, %c0_787] : memref<9x32xf32, #tpu.memory_space<vmem>>, vector<1x32xf32>
      %c0_788 = arith.constant 0 : index
      %c1_789 = arith.constant 1 : index
      %c15_790 = arith.constant 15 : index
      %1202 = vector.load %arg2[%c0_788, %c1_789, %c15_790] : memref<1x18x34xf32, #tpu.memory_space<vmem>>, vector<1x16x1xf32>
      %1203 = vector.shape_cast %1202 : vector<1x16x1xf32> to vector<16x1xf32>
      %1204 = vector.broadcast %1203 : vector<16x1xf32> to vector<16x32xf32>
      %1205 = vector.broadcast %1201 : vector<1x32xf32> to vector<16x32xf32>
      %1206 = arith.mulf %1204, %1205 : vector<16x32xf32>
      %1207 = arith.addf %1200, %1206 : vector<16x32xf32>
      %c4_791 = arith.constant 4 : index
      %c0_792 = arith.constant 0 : index
      %1208 = vector.load %arg3[%c4_791, %c0_792] : memref<9x32xf32, #tpu.memory_space<vmem>>, vector<1x32xf32>
      %c0_793 = arith.constant 0 : index
      %c1_794 = arith.constant 1 : index
      %c16_795 = arith.constant 16 : index
      %1209 = vector.load %arg2[%c0_793, %c1_794, %c16_795] : memref<1x18x34xf32, #tpu.memory_space<vmem>>, vector<1x16x1xf32>
      %1210 = vector.shape_cast %1209 : vector<1x16x1xf32> to vector<16x1xf32>
      %1211 = vector.broadcast %1210 : vector<16x1xf32> to vector<16x32xf32>
      %1212 = vector.broadcast %1208 : vector<1x32xf32> to vector<16x32xf32>
      %1213 = arith.mulf %1211, %1212 : vector<16x32xf32>
      %1214 = arith.addf %1207, %1213 : vector<16x32xf32>
      %c5_796 = arith.constant 5 : index
      %c0_797 = arith.constant 0 : index
      %1215 = vector.load %arg3[%c5_796, %c0_797] : memref<9x32xf32, #tpu.memory_space<vmem>>, vector<1x32xf32>
      %c0_798 = arith.constant 0 : index
      %c1_799 = arith.constant 1 : index
      %c17_800 = arith.constant 17 : index
      %1216 = vector.load %arg2[%c0_798, %c1_799, %c17_800] : memref<1x18x34xf32, #tpu.memory_space<vmem>>, vector<1x16x1xf32>
      %1217 = vector.shape_cast %1216 : vector<1x16x1xf32> to vector<16x1xf32>
      %1218 = vector.broadcast %1217 : vector<16x1xf32> to vector<16x32xf32>
      %1219 = vector.broadcast %1215 : vector<1x32xf32> to vector<16x32xf32>
      %1220 = arith.mulf %1218, %1219 : vector<16x32xf32>
      %1221 = arith.addf %1214, %1220 : vector<16x32xf32>
      %c6_801 = arith.constant 6 : index
      %c0_802 = arith.constant 0 : index
      %1222 = vector.load %arg3[%c6_801, %c0_802] : memref<9x32xf32, #tpu.memory_space<vmem>>, vector<1x32xf32>
      %c0_803 = arith.constant 0 : index
      %c2_804 = arith.constant 2 : index
      %c15_805 = arith.constant 15 : index
      %1223 = vector.load %arg2[%c0_803, %c2_804, %c15_805] : memref<1x18x34xf32, #tpu.memory_space<vmem>>, vector<1x16x1xf32>
      %1224 = vector.shape_cast %1223 : vector<1x16x1xf32> to vector<16x1xf32>
      %1225 = vector.broadcast %1224 : vector<16x1xf32> to vector<16x32xf32>
      %1226 = vector.broadcast %1222 : vector<1x32xf32> to vector<16x32xf32>
      %1227 = arith.mulf %1225, %1226 : vector<16x32xf32>
      %1228 = arith.addf %1221, %1227 : vector<16x32xf32>
      %c7_806 = arith.constant 7 : index
      %c0_807 = arith.constant 0 : index
      %1229 = vector.load %arg3[%c7_806, %c0_807] : memref<9x32xf32, #tpu.memory_space<vmem>>, vector<1x32xf32>
      %c0_808 = arith.constant 0 : index
      %c2_809 = arith.constant 2 : index
      %c16_810 = arith.constant 16 : index
      %1230 = vector.load %arg2[%c0_808, %c2_809, %c16_810] : memref<1x18x34xf32, #tpu.memory_space<vmem>>, vector<1x16x1xf32>
      %1231 = vector.shape_cast %1230 : vector<1x16x1xf32> to vector<16x1xf32>
      %1232 = vector.broadcast %1231 : vector<16x1xf32> to vector<16x32xf32>
      %1233 = vector.broadcast %1229 : vector<1x32xf32> to vector<16x32xf32>
      %1234 = arith.mulf %1232, %1233 : vector<16x32xf32>
      %1235 = arith.addf %1228, %1234 : vector<16x32xf32>
      %c8_811 = arith.constant 8 : index
      %c0_812 = arith.constant 0 : index
      %1236 = vector.load %arg3[%c8_811, %c0_812] : memref<9x32xf32, #tpu.memory_space<vmem>>, vector<1x32xf32>
      %c0_813 = arith.constant 0 : index
      %c2_814 = arith.constant 2 : index
      %c17_815 = arith.constant 17 : index
      %1237 = vector.load %arg2[%c0_813, %c2_814, %c17_815] : memref<1x18x34xf32, #tpu.memory_space<vmem>>, vector<1x16x1xf32>
      %1238 = vector.shape_cast %1237 : vector<1x16x1xf32> to vector<16x1xf32>
      %1239 = vector.broadcast %1238 : vector<16x1xf32> to vector<16x32xf32>
      %1240 = vector.broadcast %1236 : vector<1x32xf32> to vector<16x32xf32>
      %1241 = arith.mulf %1239, %1240 : vector<16x32xf32>
      %1242 = arith.addf %1235, %1241 : vector<16x32xf32>
      %cst_816 = arith.constant 0.000000e+00 : f32
      %1243 = vector.broadcast %cst_816 : f32 to vector<16x32xf32>
      %1244 = arith.maximumf %1242, %1243 : vector<16x32xf32>
      %1245 = arith.addf %1177, %1244 : vector<16x32xf32>
      %c0_817 = arith.constant 0 : index
      %c0_818 = arith.constant 0 : index
      %1246 = vector.load %arg4[%c0_817, %c0_818] : memref<1x32xf32, #tpu.memory_space<vmem>>, vector<1x32xf32>
      %c0_819 = arith.constant 0 : index
      %c0_820 = arith.constant 0 : index
      %1247 = vector.load %arg3[%c0_819, %c0_820] : memref<9x32xf32, #tpu.memory_space<vmem>>, vector<1x32xf32>
      %c0_821 = arith.constant 0 : index
      %c0_822 = arith.constant 0 : index
      %c16_823 = arith.constant 16 : index
      %1248 = vector.load %arg2[%c0_821, %c0_822, %c16_823] : memref<1x18x34xf32, #tpu.memory_space<vmem>>, vector<1x16x1xf32>
      %1249 = vector.shape_cast %1248 : vector<1x16x1xf32> to vector<16x1xf32>
      %1250 = vector.broadcast %1249 : vector<16x1xf32> to vector<16x32xf32>
      %1251 = vector.broadcast %1247 : vector<1x32xf32> to vector<16x32xf32>
      %1252 = arith.mulf %1250, %1251 : vector<16x32xf32>
      %1253 = vector.broadcast %1246 : vector<1x32xf32> to vector<16x32xf32>
      %1254 = arith.addf %1253, %1252 : vector<16x32xf32>
      %c1_824 = arith.constant 1 : index
      %c0_825 = arith.constant 0 : index
      %1255 = vector.load %arg3[%c1_824, %c0_825] : memref<9x32xf32, #tpu.memory_space<vmem>>, vector<1x32xf32>
      %c0_826 = arith.constant 0 : index
      %c0_827 = arith.constant 0 : index
      %c17_828 = arith.constant 17 : index
      %1256 = vector.load %arg2[%c0_826, %c0_827, %c17_828] : memref<1x18x34xf32, #tpu.memory_space<vmem>>, vector<1x16x1xf32>
      %1257 = vector.shape_cast %1256 : vector<1x16x1xf32> to vector<16x1xf32>
      %1258 = vector.broadcast %1257 : vector<16x1xf32> to vector<16x32xf32>
      %1259 = vector.broadcast %1255 : vector<1x32xf32> to vector<16x32xf32>
      %1260 = arith.mulf %1258, %1259 : vector<16x32xf32>
      %1261 = arith.addf %1254, %1260 : vector<16x32xf32>
      %c2_829 = arith.constant 2 : index
      %c0_830 = arith.constant 0 : index
      %1262 = vector.load %arg3[%c2_829, %c0_830] : memref<9x32xf32, #tpu.memory_space<vmem>>, vector<1x32xf32>
      %c0_831 = arith.constant 0 : index
      %c0_832 = arith.constant 0 : index
      %c18 = arith.constant 18 : index
      %1263 = vector.load %arg2[%c0_831, %c0_832, %c18] : memref<1x18x34xf32, #tpu.memory_space<vmem>>, vector<1x16x1xf32>
      %1264 = vector.shape_cast %1263 : vector<1x16x1xf32> to vector<16x1xf32>
      %1265 = vector.broadcast %1264 : vector<16x1xf32> to vector<16x32xf32>
      %1266 = vector.broadcast %1262 : vector<1x32xf32> to vector<16x32xf32>
      %1267 = arith.mulf %1265, %1266 : vector<16x32xf32>
      %1268 = arith.addf %1261, %1267 : vector<16x32xf32>
      %c3_833 = arith.constant 3 : index
      %c0_834 = arith.constant 0 : index
      %1269 = vector.load %arg3[%c3_833, %c0_834] : memref<9x32xf32, #tpu.memory_space<vmem>>, vector<1x32xf32>
      %c0_835 = arith.constant 0 : index
      %c1_836 = arith.constant 1 : index
      %c16_837 = arith.constant 16 : index
      %1270 = vector.load %arg2[%c0_835, %c1_836, %c16_837] : memref<1x18x34xf32, #tpu.memory_space<vmem>>, vector<1x16x1xf32>
      %1271 = vector.shape_cast %1270 : vector<1x16x1xf32> to vector<16x1xf32>
      %1272 = vector.broadcast %1271 : vector<16x1xf32> to vector<16x32xf32>
      %1273 = vector.broadcast %1269 : vector<1x32xf32> to vector<16x32xf32>
      %1274 = arith.mulf %1272, %1273 : vector<16x32xf32>
      %1275 = arith.addf %1268, %1274 : vector<16x32xf32>
      %c4_838 = arith.constant 4 : index
      %c0_839 = arith.constant 0 : index
      %1276 = vector.load %arg3[%c4_838, %c0_839] : memref<9x32xf32, #tpu.memory_space<vmem>>, vector<1x32xf32>
      %c0_840 = arith.constant 0 : index
      %c1_841 = arith.constant 1 : index
      %c17_842 = arith.constant 17 : index
      %1277 = vector.load %arg2[%c0_840, %c1_841, %c17_842] : memref<1x18x34xf32, #tpu.memory_space<vmem>>, vector<1x16x1xf32>
      %1278 = vector.shape_cast %1277 : vector<1x16x1xf32> to vector<16x1xf32>
      %1279 = vector.broadcast %1278 : vector<16x1xf32> to vector<16x32xf32>
      %1280 = vector.broadcast %1276 : vector<1x32xf32> to vector<16x32xf32>
      %1281 = arith.mulf %1279, %1280 : vector<16x32xf32>
      %1282 = arith.addf %1275, %1281 : vector<16x32xf32>
      %c5_843 = arith.constant 5 : index
      %c0_844 = arith.constant 0 : index
      %1283 = vector.load %arg3[%c5_843, %c0_844] : memref<9x32xf32, #tpu.memory_space<vmem>>, vector<1x32xf32>
      %c0_845 = arith.constant 0 : index
      %c1_846 = arith.constant 1 : index
      %c18_847 = arith.constant 18 : index
      %1284 = vector.load %arg2[%c0_845, %c1_846, %c18_847] : memref<1x18x34xf32, #tpu.memory_space<vmem>>, vector<1x16x1xf32>
      %1285 = vector.shape_cast %1284 : vector<1x16x1xf32> to vector<16x1xf32>
      %1286 = vector.broadcast %1285 : vector<16x1xf32> to vector<16x32xf32>
      %1287 = vector.broadcast %1283 : vector<1x32xf32> to vector<16x32xf32>
      %1288 = arith.mulf %1286, %1287 : vector<16x32xf32>
      %1289 = arith.addf %1282, %1288 : vector<16x32xf32>
      %c6_848 = arith.constant 6 : index
      %c0_849 = arith.constant 0 : index
      %1290 = vector.load %arg3[%c6_848, %c0_849] : memref<9x32xf32, #tpu.memory_space<vmem>>, vector<1x32xf32>
      %c0_850 = arith.constant 0 : index
      %c2_851 = arith.constant 2 : index
      %c16_852 = arith.constant 16 : index
      %1291 = vector.load %arg2[%c0_850, %c2_851, %c16_852] : memref<1x18x34xf32, #tpu.memory_space<vmem>>, vector<1x16x1xf32>
      %1292 = vector.shape_cast %1291 : vector<1x16x1xf32> to vector<16x1xf32>
      %1293 = vector.broadcast %1292 : vector<16x1xf32> to vector<16x32xf32>
      %1294 = vector.broadcast %1290 : vector<1x32xf32> to vector<16x32xf32>
      %1295 = arith.mulf %1293, %1294 : vector<16x32xf32>
      %1296 = arith.addf %1289, %1295 : vector<16x32xf32>
      %c7_853 = arith.constant 7 : index
      %c0_854 = arith.constant 0 : index
      %1297 = vector.load %arg3[%c7_853, %c0_854] : memref<9x32xf32, #tpu.memory_space<vmem>>, vector<1x32xf32>
      %c0_855 = arith.constant 0 : index
      %c2_856 = arith.constant 2 : index
      %c17_857 = arith.constant 17 : index
      %1298 = vector.load %arg2[%c0_855, %c2_856, %c17_857] : memref<1x18x34xf32, #tpu.memory_space<vmem>>, vector<1x16x1xf32>
      %1299 = vector.shape_cast %1298 : vector<1x16x1xf32> to vector<16x1xf32>
      %1300 = vector.broadcast %1299 : vector<16x1xf32> to vector<16x32xf32>
      %1301 = vector.broadcast %1297 : vector<1x32xf32> to vector<16x32xf32>
      %1302 = arith.mulf %1300, %1301 : vector<16x32xf32>
      %1303 = arith.addf %1296, %1302 : vector<16x32xf32>
      %c8_858 = arith.constant 8 : index
      %c0_859 = arith.constant 0 : index
      %1304 = vector.load %arg3[%c8_858, %c0_859] : memref<9x32xf32, #tpu.memory_space<vmem>>, vector<1x32xf32>
      %c0_860 = arith.constant 0 : index
      %c2_861 = arith.constant 2 : index
      %c18_862 = arith.constant 18 : index
      %1305 = vector.load %arg2[%c0_860, %c2_861, %c18_862] : memref<1x18x34xf32, #tpu.memory_space<vmem>>, vector<1x16x1xf32>
      %1306 = vector.shape_cast %1305 : vector<1x16x1xf32> to vector<16x1xf32>
      %1307 = vector.broadcast %1306 : vector<16x1xf32> to vector<16x32xf32>
      %1308 = vector.broadcast %1304 : vector<1x32xf32> to vector<16x32xf32>
      %1309 = arith.mulf %1307, %1308 : vector<16x32xf32>
      %1310 = arith.addf %1303, %1309 : vector<16x32xf32>
      %cst_863 = arith.constant 0.000000e+00 : f32
      %1311 = vector.broadcast %cst_863 : f32 to vector<16x32xf32>
      %1312 = arith.maximumf %1310, %1311 : vector<16x32xf32>
      %1313 = arith.addf %1245, %1312 : vector<16x32xf32>
      %c0_864 = arith.constant 0 : index
      %c0_865 = arith.constant 0 : index
      %1314 = vector.load %arg4[%c0_864, %c0_865] : memref<1x32xf32, #tpu.memory_space<vmem>>, vector<1x32xf32>
      %c0_866 = arith.constant 0 : index
      %c0_867 = arith.constant 0 : index
      %1315 = vector.load %arg3[%c0_866, %c0_867] : memref<9x32xf32, #tpu.memory_space<vmem>>, vector<1x32xf32>
      %c0_868 = arith.constant 0 : index
      %c0_869 = arith.constant 0 : index
      %c17_870 = arith.constant 17 : index
      %1316 = vector.load %arg2[%c0_868, %c0_869, %c17_870] : memref<1x18x34xf32, #tpu.memory_space<vmem>>, vector<1x16x1xf32>
      %1317 = vector.shape_cast %1316 : vector<1x16x1xf32> to vector<16x1xf32>
      %1318 = vector.broadcast %1317 : vector<16x1xf32> to vector<16x32xf32>
      %1319 = vector.broadcast %1315 : vector<1x32xf32> to vector<16x32xf32>
      %1320 = arith.mulf %1318, %1319 : vector<16x32xf32>
      %1321 = vector.broadcast %1314 : vector<1x32xf32> to vector<16x32xf32>
      %1322 = arith.addf %1321, %1320 : vector<16x32xf32>
      %c1_871 = arith.constant 1 : index
      %c0_872 = arith.constant 0 : index
      %1323 = vector.load %arg3[%c1_871, %c0_872] : memref<9x32xf32, #tpu.memory_space<vmem>>, vector<1x32xf32>
      %c0_873 = arith.constant 0 : index
      %c0_874 = arith.constant 0 : index
      %c18_875 = arith.constant 18 : index
      %1324 = vector.load %arg2[%c0_873, %c0_874, %c18_875] : memref<1x18x34xf32, #tpu.memory_space<vmem>>, vector<1x16x1xf32>
      %1325 = vector.shape_cast %1324 : vector<1x16x1xf32> to vector<16x1xf32>
      %1326 = vector.broadcast %1325 : vector<16x1xf32> to vector<16x32xf32>
      %1327 = vector.broadcast %1323 : vector<1x32xf32> to vector<16x32xf32>
      %1328 = arith.mulf %1326, %1327 : vector<16x32xf32>
      %1329 = arith.addf %1322, %1328 : vector<16x32xf32>
      %c2_876 = arith.constant 2 : index
      %c0_877 = arith.constant 0 : index
      %1330 = vector.load %arg3[%c2_876, %c0_877] : memref<9x32xf32, #tpu.memory_space<vmem>>, vector<1x32xf32>
      %c0_878 = arith.constant 0 : index
      %c0_879 = arith.constant 0 : index
      %c19 = arith.constant 19 : index
      %1331 = vector.load %arg2[%c0_878, %c0_879, %c19] : memref<1x18x34xf32, #tpu.memory_space<vmem>>, vector<1x16x1xf32>
      %1332 = vector.shape_cast %1331 : vector<1x16x1xf32> to vector<16x1xf32>
      %1333 = vector.broadcast %1332 : vector<16x1xf32> to vector<16x32xf32>
      %1334 = vector.broadcast %1330 : vector<1x32xf32> to vector<16x32xf32>
      %1335 = arith.mulf %1333, %1334 : vector<16x32xf32>
      %1336 = arith.addf %1329, %1335 : vector<16x32xf32>
      %c3_880 = arith.constant 3 : index
      %c0_881 = arith.constant 0 : index
      %1337 = vector.load %arg3[%c3_880, %c0_881] : memref<9x32xf32, #tpu.memory_space<vmem>>, vector<1x32xf32>
      %c0_882 = arith.constant 0 : index
      %c1_883 = arith.constant 1 : index
      %c17_884 = arith.constant 17 : index
      %1338 = vector.load %arg2[%c0_882, %c1_883, %c17_884] : memref<1x18x34xf32, #tpu.memory_space<vmem>>, vector<1x16x1xf32>
      %1339 = vector.shape_cast %1338 : vector<1x16x1xf32> to vector<16x1xf32>
      %1340 = vector.broadcast %1339 : vector<16x1xf32> to vector<16x32xf32>
      %1341 = vector.broadcast %1337 : vector<1x32xf32> to vector<16x32xf32>
      %1342 = arith.mulf %1340, %1341 : vector<16x32xf32>
      %1343 = arith.addf %1336, %1342 : vector<16x32xf32>
      %c4_885 = arith.constant 4 : index
      %c0_886 = arith.constant 0 : index
      %1344 = vector.load %arg3[%c4_885, %c0_886] : memref<9x32xf32, #tpu.memory_space<vmem>>, vector<1x32xf32>
      %c0_887 = arith.constant 0 : index
      %c1_888 = arith.constant 1 : index
      %c18_889 = arith.constant 18 : index
      %1345 = vector.load %arg2[%c0_887, %c1_888, %c18_889] : memref<1x18x34xf32, #tpu.memory_space<vmem>>, vector<1x16x1xf32>
      %1346 = vector.shape_cast %1345 : vector<1x16x1xf32> to vector<16x1xf32>
      %1347 = vector.broadcast %1346 : vector<16x1xf32> to vector<16x32xf32>
      %1348 = vector.broadcast %1344 : vector<1x32xf32> to vector<16x32xf32>
      %1349 = arith.mulf %1347, %1348 : vector<16x32xf32>
      %1350 = arith.addf %1343, %1349 : vector<16x32xf32>
      %c5_890 = arith.constant 5 : index
      %c0_891 = arith.constant 0 : index
      %1351 = vector.load %arg3[%c5_890, %c0_891] : memref<9x32xf32, #tpu.memory_space<vmem>>, vector<1x32xf32>
      %c0_892 = arith.constant 0 : index
      %c1_893 = arith.constant 1 : index
      %c19_894 = arith.constant 19 : index
      %1352 = vector.load %arg2[%c0_892, %c1_893, %c19_894] : memref<1x18x34xf32, #tpu.memory_space<vmem>>, vector<1x16x1xf32>
      %1353 = vector.shape_cast %1352 : vector<1x16x1xf32> to vector<16x1xf32>
      %1354 = vector.broadcast %1353 : vector<16x1xf32> to vector<16x32xf32>
      %1355 = vector.broadcast %1351 : vector<1x32xf32> to vector<16x32xf32>
      %1356 = arith.mulf %1354, %1355 : vector<16x32xf32>
      %1357 = arith.addf %1350, %1356 : vector<16x32xf32>
      %c6_895 = arith.constant 6 : index
      %c0_896 = arith.constant 0 : index
      %1358 = vector.load %arg3[%c6_895, %c0_896] : memref<9x32xf32, #tpu.memory_space<vmem>>, vector<1x32xf32>
      %c0_897 = arith.constant 0 : index
      %c2_898 = arith.constant 2 : index
      %c17_899 = arith.constant 17 : index
      %1359 = vector.load %arg2[%c0_897, %c2_898, %c17_899] : memref<1x18x34xf32, #tpu.memory_space<vmem>>, vector<1x16x1xf32>
      %1360 = vector.shape_cast %1359 : vector<1x16x1xf32> to vector<16x1xf32>
      %1361 = vector.broadcast %1360 : vector<16x1xf32> to vector<16x32xf32>
      %1362 = vector.broadcast %1358 : vector<1x32xf32> to vector<16x32xf32>
      %1363 = arith.mulf %1361, %1362 : vector<16x32xf32>
      %1364 = arith.addf %1357, %1363 : vector<16x32xf32>
      %c7_900 = arith.constant 7 : index
      %c0_901 = arith.constant 0 : index
      %1365 = vector.load %arg3[%c7_900, %c0_901] : memref<9x32xf32, #tpu.memory_space<vmem>>, vector<1x32xf32>
      %c0_902 = arith.constant 0 : index
      %c2_903 = arith.constant 2 : index
      %c18_904 = arith.constant 18 : index
      %1366 = vector.load %arg2[%c0_902, %c2_903, %c18_904] : memref<1x18x34xf32, #tpu.memory_space<vmem>>, vector<1x16x1xf32>
      %1367 = vector.shape_cast %1366 : vector<1x16x1xf32> to vector<16x1xf32>
      %1368 = vector.broadcast %1367 : vector<16x1xf32> to vector<16x32xf32>
      %1369 = vector.broadcast %1365 : vector<1x32xf32> to vector<16x32xf32>
      %1370 = arith.mulf %1368, %1369 : vector<16x32xf32>
      %1371 = arith.addf %1364, %1370 : vector<16x32xf32>
      %c8_905 = arith.constant 8 : index
      %c0_906 = arith.constant 0 : index
      %1372 = vector.load %arg3[%c8_905, %c0_906] : memref<9x32xf32, #tpu.memory_space<vmem>>, vector<1x32xf32>
      %c0_907 = arith.constant 0 : index
      %c2_908 = arith.constant 2 : index
      %c19_909 = arith.constant 19 : index
      %1373 = vector.load %arg2[%c0_907, %c2_908, %c19_909] : memref<1x18x34xf32, #tpu.memory_space<vmem>>, vector<1x16x1xf32>
      %1374 = vector.shape_cast %1373 : vector<1x16x1xf32> to vector<16x1xf32>
      %1375 = vector.broadcast %1374 : vector<16x1xf32> to vector<16x32xf32>
      %1376 = vector.broadcast %1372 : vector<1x32xf32> to vector<16x32xf32>
      %1377 = arith.mulf %1375, %1376 : vector<16x32xf32>
      %1378 = arith.addf %1371, %1377 : vector<16x32xf32>
      %cst_910 = arith.constant 0.000000e+00 : f32
      %1379 = vector.broadcast %cst_910 : f32 to vector<16x32xf32>
      %1380 = arith.maximumf %1378, %1379 : vector<16x32xf32>
      %1381 = arith.addf %1313, %1380 : vector<16x32xf32>
      %c0_911 = arith.constant 0 : index
      %c0_912 = arith.constant 0 : index
      %1382 = vector.load %arg4[%c0_911, %c0_912] : memref<1x32xf32, #tpu.memory_space<vmem>>, vector<1x32xf32>
      %c0_913 = arith.constant 0 : index
      %c0_914 = arith.constant 0 : index
      %1383 = vector.load %arg3[%c0_913, %c0_914] : memref<9x32xf32, #tpu.memory_space<vmem>>, vector<1x32xf32>
      %c0_915 = arith.constant 0 : index
      %c0_916 = arith.constant 0 : index
      %c18_917 = arith.constant 18 : index
      %1384 = vector.load %arg2[%c0_915, %c0_916, %c18_917] : memref<1x18x34xf32, #tpu.memory_space<vmem>>, vector<1x16x1xf32>
      %1385 = vector.shape_cast %1384 : vector<1x16x1xf32> to vector<16x1xf32>
      %1386 = vector.broadcast %1385 : vector<16x1xf32> to vector<16x32xf32>
      %1387 = vector.broadcast %1383 : vector<1x32xf32> to vector<16x32xf32>
      %1388 = arith.mulf %1386, %1387 : vector<16x32xf32>
      %1389 = vector.broadcast %1382 : vector<1x32xf32> to vector<16x32xf32>
      %1390 = arith.addf %1389, %1388 : vector<16x32xf32>
      %c1_918 = arith.constant 1 : index
      %c0_919 = arith.constant 0 : index
      %1391 = vector.load %arg3[%c1_918, %c0_919] : memref<9x32xf32, #tpu.memory_space<vmem>>, vector<1x32xf32>
      %c0_920 = arith.constant 0 : index
      %c0_921 = arith.constant 0 : index
      %c19_922 = arith.constant 19 : index
      %1392 = vector.load %arg2[%c0_920, %c0_921, %c19_922] : memref<1x18x34xf32, #tpu.memory_space<vmem>>, vector<1x16x1xf32>
      %1393 = vector.shape_cast %1392 : vector<1x16x1xf32> to vector<16x1xf32>
      %1394 = vector.broadcast %1393 : vector<16x1xf32> to vector<16x32xf32>
      %1395 = vector.broadcast %1391 : vector<1x32xf32> to vector<16x32xf32>
      %1396 = arith.mulf %1394, %1395 : vector<16x32xf32>
      %1397 = arith.addf %1390, %1396 : vector<16x32xf32>
      %c2_923 = arith.constant 2 : index
      %c0_924 = arith.constant 0 : index
      %1398 = vector.load %arg3[%c2_923, %c0_924] : memref<9x32xf32, #tpu.memory_space<vmem>>, vector<1x32xf32>
      %c0_925 = arith.constant 0 : index
      %c0_926 = arith.constant 0 : index
      %c20 = arith.constant 20 : index
      %1399 = vector.load %arg2[%c0_925, %c0_926, %c20] : memref<1x18x34xf32, #tpu.memory_space<vmem>>, vector<1x16x1xf32>
      %1400 = vector.shape_cast %1399 : vector<1x16x1xf32> to vector<16x1xf32>
      %1401 = vector.broadcast %1400 : vector<16x1xf32> to vector<16x32xf32>
      %1402 = vector.broadcast %1398 : vector<1x32xf32> to vector<16x32xf32>
      %1403 = arith.mulf %1401, %1402 : vector<16x32xf32>
      %1404 = arith.addf %1397, %1403 : vector<16x32xf32>
      %c3_927 = arith.constant 3 : index
      %c0_928 = arith.constant 0 : index
      %1405 = vector.load %arg3[%c3_927, %c0_928] : memref<9x32xf32, #tpu.memory_space<vmem>>, vector<1x32xf32>
      %c0_929 = arith.constant 0 : index
      %c1_930 = arith.constant 1 : index
      %c18_931 = arith.constant 18 : index
      %1406 = vector.load %arg2[%c0_929, %c1_930, %c18_931] : memref<1x18x34xf32, #tpu.memory_space<vmem>>, vector<1x16x1xf32>
      %1407 = vector.shape_cast %1406 : vector<1x16x1xf32> to vector<16x1xf32>
      %1408 = vector.broadcast %1407 : vector<16x1xf32> to vector<16x32xf32>
      %1409 = vector.broadcast %1405 : vector<1x32xf32> to vector<16x32xf32>
      %1410 = arith.mulf %1408, %1409 : vector<16x32xf32>
      %1411 = arith.addf %1404, %1410 : vector<16x32xf32>
      %c4_932 = arith.constant 4 : index
      %c0_933 = arith.constant 0 : index
      %1412 = vector.load %arg3[%c4_932, %c0_933] : memref<9x32xf32, #tpu.memory_space<vmem>>, vector<1x32xf32>
      %c0_934 = arith.constant 0 : index
      %c1_935 = arith.constant 1 : index
      %c19_936 = arith.constant 19 : index
      %1413 = vector.load %arg2[%c0_934, %c1_935, %c19_936] : memref<1x18x34xf32, #tpu.memory_space<vmem>>, vector<1x16x1xf32>
      %1414 = vector.shape_cast %1413 : vector<1x16x1xf32> to vector<16x1xf32>
      %1415 = vector.broadcast %1414 : vector<16x1xf32> to vector<16x32xf32>
      %1416 = vector.broadcast %1412 : vector<1x32xf32> to vector<16x32xf32>
      %1417 = arith.mulf %1415, %1416 : vector<16x32xf32>
      %1418 = arith.addf %1411, %1417 : vector<16x32xf32>
      %c5_937 = arith.constant 5 : index
      %c0_938 = arith.constant 0 : index
      %1419 = vector.load %arg3[%c5_937, %c0_938] : memref<9x32xf32, #tpu.memory_space<vmem>>, vector<1x32xf32>
      %c0_939 = arith.constant 0 : index
      %c1_940 = arith.constant 1 : index
      %c20_941 = arith.constant 20 : index
      %1420 = vector.load %arg2[%c0_939, %c1_940, %c20_941] : memref<1x18x34xf32, #tpu.memory_space<vmem>>, vector<1x16x1xf32>
      %1421 = vector.shape_cast %1420 : vector<1x16x1xf32> to vector<16x1xf32>
      %1422 = vector.broadcast %1421 : vector<16x1xf32> to vector<16x32xf32>
      %1423 = vector.broadcast %1419 : vector<1x32xf32> to vector<16x32xf32>
      %1424 = arith.mulf %1422, %1423 : vector<16x32xf32>
      %1425 = arith.addf %1418, %1424 : vector<16x32xf32>
      %c6_942 = arith.constant 6 : index
      %c0_943 = arith.constant 0 : index
      %1426 = vector.load %arg3[%c6_942, %c0_943] : memref<9x32xf32, #tpu.memory_space<vmem>>, vector<1x32xf32>
      %c0_944 = arith.constant 0 : index
      %c2_945 = arith.constant 2 : index
      %c18_946 = arith.constant 18 : index
      %1427 = vector.load %arg2[%c0_944, %c2_945, %c18_946] : memref<1x18x34xf32, #tpu.memory_space<vmem>>, vector<1x16x1xf32>
      %1428 = vector.shape_cast %1427 : vector<1x16x1xf32> to vector<16x1xf32>
      %1429 = vector.broadcast %1428 : vector<16x1xf32> to vector<16x32xf32>
      %1430 = vector.broadcast %1426 : vector<1x32xf32> to vector<16x32xf32>
      %1431 = arith.mulf %1429, %1430 : vector<16x32xf32>
      %1432 = arith.addf %1425, %1431 : vector<16x32xf32>
      %c7_947 = arith.constant 7 : index
      %c0_948 = arith.constant 0 : index
      %1433 = vector.load %arg3[%c7_947, %c0_948] : memref<9x32xf32, #tpu.memory_space<vmem>>, vector<1x32xf32>
      %c0_949 = arith.constant 0 : index
      %c2_950 = arith.constant 2 : index
      %c19_951 = arith.constant 19 : index
      %1434 = vector.load %arg2[%c0_949, %c2_950, %c19_951] : memref<1x18x34xf32, #tpu.memory_space<vmem>>, vector<1x16x1xf32>
      %1435 = vector.shape_cast %1434 : vector<1x16x1xf32> to vector<16x1xf32>
      %1436 = vector.broadcast %1435 : vector<16x1xf32> to vector<16x32xf32>
      %1437 = vector.broadcast %1433 : vector<1x32xf32> to vector<16x32xf32>
      %1438 = arith.mulf %1436, %1437 : vector<16x32xf32>
      %1439 = arith.addf %1432, %1438 : vector<16x32xf32>
      %c8_952 = arith.constant 8 : index
      %c0_953 = arith.constant 0 : index
      %1440 = vector.load %arg3[%c8_952, %c0_953] : memref<9x32xf32, #tpu.memory_space<vmem>>, vector<1x32xf32>
      %c0_954 = arith.constant 0 : index
      %c2_955 = arith.constant 2 : index
      %c20_956 = arith.constant 20 : index
      %1441 = vector.load %arg2[%c0_954, %c2_955, %c20_956] : memref<1x18x34xf32, #tpu.memory_space<vmem>>, vector<1x16x1xf32>
      %1442 = vector.shape_cast %1441 : vector<1x16x1xf32> to vector<16x1xf32>
      %1443 = vector.broadcast %1442 : vector<16x1xf32> to vector<16x32xf32>
      %1444 = vector.broadcast %1440 : vector<1x32xf32> to vector<16x32xf32>
      %1445 = arith.mulf %1443, %1444 : vector<16x32xf32>
      %1446 = arith.addf %1439, %1445 : vector<16x32xf32>
      %cst_957 = arith.constant 0.000000e+00 : f32
      %1447 = vector.broadcast %cst_957 : f32 to vector<16x32xf32>
      %1448 = arith.maximumf %1446, %1447 : vector<16x32xf32>
      %1449 = arith.addf %1381, %1448 : vector<16x32xf32>
      %c0_958 = arith.constant 0 : index
      %c0_959 = arith.constant 0 : index
      %1450 = vector.load %arg4[%c0_958, %c0_959] : memref<1x32xf32, #tpu.memory_space<vmem>>, vector<1x32xf32>
      %c0_960 = arith.constant 0 : index
      %c0_961 = arith.constant 0 : index
      %1451 = vector.load %arg3[%c0_960, %c0_961] : memref<9x32xf32, #tpu.memory_space<vmem>>, vector<1x32xf32>
      %c0_962 = arith.constant 0 : index
      %c0_963 = arith.constant 0 : index
      %c19_964 = arith.constant 19 : index
      %1452 = vector.load %arg2[%c0_962, %c0_963, %c19_964] : memref<1x18x34xf32, #tpu.memory_space<vmem>>, vector<1x16x1xf32>
      %1453 = vector.shape_cast %1452 : vector<1x16x1xf32> to vector<16x1xf32>
      %1454 = vector.broadcast %1453 : vector<16x1xf32> to vector<16x32xf32>
      %1455 = vector.broadcast %1451 : vector<1x32xf32> to vector<16x32xf32>
      %1456 = arith.mulf %1454, %1455 : vector<16x32xf32>
      %1457 = vector.broadcast %1450 : vector<1x32xf32> to vector<16x32xf32>
      %1458 = arith.addf %1457, %1456 : vector<16x32xf32>
      %c1_965 = arith.constant 1 : index
      %c0_966 = arith.constant 0 : index
      %1459 = vector.load %arg3[%c1_965, %c0_966] : memref<9x32xf32, #tpu.memory_space<vmem>>, vector<1x32xf32>
      %c0_967 = arith.constant 0 : index
      %c0_968 = arith.constant 0 : index
      %c20_969 = arith.constant 20 : index
      %1460 = vector.load %arg2[%c0_967, %c0_968, %c20_969] : memref<1x18x34xf32, #tpu.memory_space<vmem>>, vector<1x16x1xf32>
      %1461 = vector.shape_cast %1460 : vector<1x16x1xf32> to vector<16x1xf32>
      %1462 = vector.broadcast %1461 : vector<16x1xf32> to vector<16x32xf32>
      %1463 = vector.broadcast %1459 : vector<1x32xf32> to vector<16x32xf32>
      %1464 = arith.mulf %1462, %1463 : vector<16x32xf32>
      %1465 = arith.addf %1458, %1464 : vector<16x32xf32>
      %c2_970 = arith.constant 2 : index
      %c0_971 = arith.constant 0 : index
      %1466 = vector.load %arg3[%c2_970, %c0_971] : memref<9x32xf32, #tpu.memory_space<vmem>>, vector<1x32xf32>
      %c0_972 = arith.constant 0 : index
      %c0_973 = arith.constant 0 : index
      %c21 = arith.constant 21 : index
      %1467 = vector.load %arg2[%c0_972, %c0_973, %c21] : memref<1x18x34xf32, #tpu.memory_space<vmem>>, vector<1x16x1xf32>
      %1468 = vector.shape_cast %1467 : vector<1x16x1xf32> to vector<16x1xf32>
      %1469 = vector.broadcast %1468 : vector<16x1xf32> to vector<16x32xf32>
      %1470 = vector.broadcast %1466 : vector<1x32xf32> to vector<16x32xf32>
      %1471 = arith.mulf %1469, %1470 : vector<16x32xf32>
      %1472 = arith.addf %1465, %1471 : vector<16x32xf32>
      %c3_974 = arith.constant 3 : index
      %c0_975 = arith.constant 0 : index
      %1473 = vector.load %arg3[%c3_974, %c0_975] : memref<9x32xf32, #tpu.memory_space<vmem>>, vector<1x32xf32>
      %c0_976 = arith.constant 0 : index
      %c1_977 = arith.constant 1 : index
      %c19_978 = arith.constant 19 : index
      %1474 = vector.load %arg2[%c0_976, %c1_977, %c19_978] : memref<1x18x34xf32, #tpu.memory_space<vmem>>, vector<1x16x1xf32>
      %1475 = vector.shape_cast %1474 : vector<1x16x1xf32> to vector<16x1xf32>
      %1476 = vector.broadcast %1475 : vector<16x1xf32> to vector<16x32xf32>
      %1477 = vector.broadcast %1473 : vector<1x32xf32> to vector<16x32xf32>
      %1478 = arith.mulf %1476, %1477 : vector<16x32xf32>
      %1479 = arith.addf %1472, %1478 : vector<16x32xf32>
      %c4_979 = arith.constant 4 : index
      %c0_980 = arith.constant 0 : index
      %1480 = vector.load %arg3[%c4_979, %c0_980] : memref<9x32xf32, #tpu.memory_space<vmem>>, vector<1x32xf32>
      %c0_981 = arith.constant 0 : index
      %c1_982 = arith.constant 1 : index
      %c20_983 = arith.constant 20 : index
      %1481 = vector.load %arg2[%c0_981, %c1_982, %c20_983] : memref<1x18x34xf32, #tpu.memory_space<vmem>>, vector<1x16x1xf32>
      %1482 = vector.shape_cast %1481 : vector<1x16x1xf32> to vector<16x1xf32>
      %1483 = vector.broadcast %1482 : vector<16x1xf32> to vector<16x32xf32>
      %1484 = vector.broadcast %1480 : vector<1x32xf32> to vector<16x32xf32>
      %1485 = arith.mulf %1483, %1484 : vector<16x32xf32>
      %1486 = arith.addf %1479, %1485 : vector<16x32xf32>
      %c5_984 = arith.constant 5 : index
      %c0_985 = arith.constant 0 : index
      %1487 = vector.load %arg3[%c5_984, %c0_985] : memref<9x32xf32, #tpu.memory_space<vmem>>, vector<1x32xf32>
      %c0_986 = arith.constant 0 : index
      %c1_987 = arith.constant 1 : index
      %c21_988 = arith.constant 21 : index
      %1488 = vector.load %arg2[%c0_986, %c1_987, %c21_988] : memref<1x18x34xf32, #tpu.memory_space<vmem>>, vector<1x16x1xf32>
      %1489 = vector.shape_cast %1488 : vector<1x16x1xf32> to vector<16x1xf32>
      %1490 = vector.broadcast %1489 : vector<16x1xf32> to vector<16x32xf32>
      %1491 = vector.broadcast %1487 : vector<1x32xf32> to vector<16x32xf32>
      %1492 = arith.mulf %1490, %1491 : vector<16x32xf32>
      %1493 = arith.addf %1486, %1492 : vector<16x32xf32>
      %c6_989 = arith.constant 6 : index
      %c0_990 = arith.constant 0 : index
      %1494 = vector.load %arg3[%c6_989, %c0_990] : memref<9x32xf32, #tpu.memory_space<vmem>>, vector<1x32xf32>
      %c0_991 = arith.constant 0 : index
      %c2_992 = arith.constant 2 : index
      %c19_993 = arith.constant 19 : index
      %1495 = vector.load %arg2[%c0_991, %c2_992, %c19_993] : memref<1x18x34xf32, #tpu.memory_space<vmem>>, vector<1x16x1xf32>
      %1496 = vector.shape_cast %1495 : vector<1x16x1xf32> to vector<16x1xf32>
      %1497 = vector.broadcast %1496 : vector<16x1xf32> to vector<16x32xf32>
      %1498 = vector.broadcast %1494 : vector<1x32xf32> to vector<16x32xf32>
      %1499 = arith.mulf %1497, %1498 : vector<16x32xf32>
      %1500 = arith.addf %1493, %1499 : vector<16x32xf32>
      %c7_994 = arith.constant 7 : index
      %c0_995 = arith.constant 0 : index
      %1501 = vector.load %arg3[%c7_994, %c0_995] : memref<9x32xf32, #tpu.memory_space<vmem>>, vector<1x32xf32>
      %c0_996 = arith.constant 0 : index
      %c2_997 = arith.constant 2 : index
      %c20_998 = arith.constant 20 : index
      %1502 = vector.load %arg2[%c0_996, %c2_997, %c20_998] : memref<1x18x34xf32, #tpu.memory_space<vmem>>, vector<1x16x1xf32>
      %1503 = vector.shape_cast %1502 : vector<1x16x1xf32> to vector<16x1xf32>
      %1504 = vector.broadcast %1503 : vector<16x1xf32> to vector<16x32xf32>
      %1505 = vector.broadcast %1501 : vector<1x32xf32> to vector<16x32xf32>
      %1506 = arith.mulf %1504, %1505 : vector<16x32xf32>
      %1507 = arith.addf %1500, %1506 : vector<16x32xf32>
      %c8_999 = arith.constant 8 : index
      %c0_1000 = arith.constant 0 : index
      %1508 = vector.load %arg3[%c8_999, %c0_1000] : memref<9x32xf32, #tpu.memory_space<vmem>>, vector<1x32xf32>
      %c0_1001 = arith.constant 0 : index
      %c2_1002 = arith.constant 2 : index
      %c21_1003 = arith.constant 21 : index
      %1509 = vector.load %arg2[%c0_1001, %c2_1002, %c21_1003] : memref<1x18x34xf32, #tpu.memory_space<vmem>>, vector<1x16x1xf32>
      %1510 = vector.shape_cast %1509 : vector<1x16x1xf32> to vector<16x1xf32>
      %1511 = vector.broadcast %1510 : vector<16x1xf32> to vector<16x32xf32>
      %1512 = vector.broadcast %1508 : vector<1x32xf32> to vector<16x32xf32>
      %1513 = arith.mulf %1511, %1512 : vector<16x32xf32>
      %1514 = arith.addf %1507, %1513 : vector<16x32xf32>
      %cst_1004 = arith.constant 0.000000e+00 : f32
      %1515 = vector.broadcast %cst_1004 : f32 to vector<16x32xf32>
      %1516 = arith.maximumf %1514, %1515 : vector<16x32xf32>
      %1517 = arith.addf %1449, %1516 : vector<16x32xf32>
      %c0_1005 = arith.constant 0 : index
      %c0_1006 = arith.constant 0 : index
      %1518 = vector.load %arg4[%c0_1005, %c0_1006] : memref<1x32xf32, #tpu.memory_space<vmem>>, vector<1x32xf32>
      %c0_1007 = arith.constant 0 : index
      %c0_1008 = arith.constant 0 : index
      %1519 = vector.load %arg3[%c0_1007, %c0_1008] : memref<9x32xf32, #tpu.memory_space<vmem>>, vector<1x32xf32>
      %c0_1009 = arith.constant 0 : index
      %c0_1010 = arith.constant 0 : index
      %c20_1011 = arith.constant 20 : index
      %1520 = vector.load %arg2[%c0_1009, %c0_1010, %c20_1011] : memref<1x18x34xf32, #tpu.memory_space<vmem>>, vector<1x16x1xf32>
      %1521 = vector.shape_cast %1520 : vector<1x16x1xf32> to vector<16x1xf32>
      %1522 = vector.broadcast %1521 : vector<16x1xf32> to vector<16x32xf32>
      %1523 = vector.broadcast %1519 : vector<1x32xf32> to vector<16x32xf32>
      %1524 = arith.mulf %1522, %1523 : vector<16x32xf32>
      %1525 = vector.broadcast %1518 : vector<1x32xf32> to vector<16x32xf32>
      %1526 = arith.addf %1525, %1524 : vector<16x32xf32>
      %c1_1012 = arith.constant 1 : index
      %c0_1013 = arith.constant 0 : index
      %1527 = vector.load %arg3[%c1_1012, %c0_1013] : memref<9x32xf32, #tpu.memory_space<vmem>>, vector<1x32xf32>
      %c0_1014 = arith.constant 0 : index
      %c0_1015 = arith.constant 0 : index
      %c21_1016 = arith.constant 21 : index
      %1528 = vector.load %arg2[%c0_1014, %c0_1015, %c21_1016] : memref<1x18x34xf32, #tpu.memory_space<vmem>>, vector<1x16x1xf32>
      %1529 = vector.shape_cast %1528 : vector<1x16x1xf32> to vector<16x1xf32>
      %1530 = vector.broadcast %1529 : vector<16x1xf32> to vector<16x32xf32>
      %1531 = vector.broadcast %1527 : vector<1x32xf32> to vector<16x32xf32>
      %1532 = arith.mulf %1530, %1531 : vector<16x32xf32>
      %1533 = arith.addf %1526, %1532 : vector<16x32xf32>
      %c2_1017 = arith.constant 2 : index
      %c0_1018 = arith.constant 0 : index
      %1534 = vector.load %arg3[%c2_1017, %c0_1018] : memref<9x32xf32, #tpu.memory_space<vmem>>, vector<1x32xf32>
      %c0_1019 = arith.constant 0 : index
      %c0_1020 = arith.constant 0 : index
      %c22 = arith.constant 22 : index
      %1535 = vector.load %arg2[%c0_1019, %c0_1020, %c22] : memref<1x18x34xf32, #tpu.memory_space<vmem>>, vector<1x16x1xf32>
      %1536 = vector.shape_cast %1535 : vector<1x16x1xf32> to vector<16x1xf32>
      %1537 = vector.broadcast %1536 : vector<16x1xf32> to vector<16x32xf32>
      %1538 = vector.broadcast %1534 : vector<1x32xf32> to vector<16x32xf32>
      %1539 = arith.mulf %1537, %1538 : vector<16x32xf32>
      %1540 = arith.addf %1533, %1539 : vector<16x32xf32>
      %c3_1021 = arith.constant 3 : index
      %c0_1022 = arith.constant 0 : index
      %1541 = vector.load %arg3[%c3_1021, %c0_1022] : memref<9x32xf32, #tpu.memory_space<vmem>>, vector<1x32xf32>
      %c0_1023 = arith.constant 0 : index
      %c1_1024 = arith.constant 1 : index
      %c20_1025 = arith.constant 20 : index
      %1542 = vector.load %arg2[%c0_1023, %c1_1024, %c20_1025] : memref<1x18x34xf32, #tpu.memory_space<vmem>>, vector<1x16x1xf32>
      %1543 = vector.shape_cast %1542 : vector<1x16x1xf32> to vector<16x1xf32>
      %1544 = vector.broadcast %1543 : vector<16x1xf32> to vector<16x32xf32>
      %1545 = vector.broadcast %1541 : vector<1x32xf32> to vector<16x32xf32>
      %1546 = arith.mulf %1544, %1545 : vector<16x32xf32>
      %1547 = arith.addf %1540, %1546 : vector<16x32xf32>
      %c4_1026 = arith.constant 4 : index
      %c0_1027 = arith.constant 0 : index
      %1548 = vector.load %arg3[%c4_1026, %c0_1027] : memref<9x32xf32, #tpu.memory_space<vmem>>, vector<1x32xf32>
      %c0_1028 = arith.constant 0 : index
      %c1_1029 = arith.constant 1 : index
      %c21_1030 = arith.constant 21 : index
      %1549 = vector.load %arg2[%c0_1028, %c1_1029, %c21_1030] : memref<1x18x34xf32, #tpu.memory_space<vmem>>, vector<1x16x1xf32>
      %1550 = vector.shape_cast %1549 : vector<1x16x1xf32> to vector<16x1xf32>
      %1551 = vector.broadcast %1550 : vector<16x1xf32> to vector<16x32xf32>
      %1552 = vector.broadcast %1548 : vector<1x32xf32> to vector<16x32xf32>
      %1553 = arith.mulf %1551, %1552 : vector<16x32xf32>
      %1554 = arith.addf %1547, %1553 : vector<16x32xf32>
      %c5_1031 = arith.constant 5 : index
      %c0_1032 = arith.constant 0 : index
      %1555 = vector.load %arg3[%c5_1031, %c0_1032] : memref<9x32xf32, #tpu.memory_space<vmem>>, vector<1x32xf32>
      %c0_1033 = arith.constant 0 : index
      %c1_1034 = arith.constant 1 : index
      %c22_1035 = arith.constant 22 : index
      %1556 = vector.load %arg2[%c0_1033, %c1_1034, %c22_1035] : memref<1x18x34xf32, #tpu.memory_space<vmem>>, vector<1x16x1xf32>
      %1557 = vector.shape_cast %1556 : vector<1x16x1xf32> to vector<16x1xf32>
      %1558 = vector.broadcast %1557 : vector<16x1xf32> to vector<16x32xf32>
      %1559 = vector.broadcast %1555 : vector<1x32xf32> to vector<16x32xf32>
      %1560 = arith.mulf %1558, %1559 : vector<16x32xf32>
      %1561 = arith.addf %1554, %1560 : vector<16x32xf32>
      %c6_1036 = arith.constant 6 : index
      %c0_1037 = arith.constant 0 : index
      %1562 = vector.load %arg3[%c6_1036, %c0_1037] : memref<9x32xf32, #tpu.memory_space<vmem>>, vector<1x32xf32>
      %c0_1038 = arith.constant 0 : index
      %c2_1039 = arith.constant 2 : index
      %c20_1040 = arith.constant 20 : index
      %1563 = vector.load %arg2[%c0_1038, %c2_1039, %c20_1040] : memref<1x18x34xf32, #tpu.memory_space<vmem>>, vector<1x16x1xf32>
      %1564 = vector.shape_cast %1563 : vector<1x16x1xf32> to vector<16x1xf32>
      %1565 = vector.broadcast %1564 : vector<16x1xf32> to vector<16x32xf32>
      %1566 = vector.broadcast %1562 : vector<1x32xf32> to vector<16x32xf32>
      %1567 = arith.mulf %1565, %1566 : vector<16x32xf32>
      %1568 = arith.addf %1561, %1567 : vector<16x32xf32>
      %c7_1041 = arith.constant 7 : index
      %c0_1042 = arith.constant 0 : index
      %1569 = vector.load %arg3[%c7_1041, %c0_1042] : memref<9x32xf32, #tpu.memory_space<vmem>>, vector<1x32xf32>
      %c0_1043 = arith.constant 0 : index
      %c2_1044 = arith.constant 2 : index
      %c21_1045 = arith.constant 21 : index
      %1570 = vector.load %arg2[%c0_1043, %c2_1044, %c21_1045] : memref<1x18x34xf32, #tpu.memory_space<vmem>>, vector<1x16x1xf32>
      %1571 = vector.shape_cast %1570 : vector<1x16x1xf32> to vector<16x1xf32>
      %1572 = vector.broadcast %1571 : vector<16x1xf32> to vector<16x32xf32>
      %1573 = vector.broadcast %1569 : vector<1x32xf32> to vector<16x32xf32>
      %1574 = arith.mulf %1572, %1573 : vector<16x32xf32>
      %1575 = arith.addf %1568, %1574 : vector<16x32xf32>
      %c8_1046 = arith.constant 8 : index
      %c0_1047 = arith.constant 0 : index
      %1576 = vector.load %arg3[%c8_1046, %c0_1047] : memref<9x32xf32, #tpu.memory_space<vmem>>, vector<1x32xf32>
      %c0_1048 = arith.constant 0 : index
      %c2_1049 = arith.constant 2 : index
      %c22_1050 = arith.constant 22 : index
      %1577 = vector.load %arg2[%c0_1048, %c2_1049, %c22_1050] : memref<1x18x34xf32, #tpu.memory_space<vmem>>, vector<1x16x1xf32>
      %1578 = vector.shape_cast %1577 : vector<1x16x1xf32> to vector<16x1xf32>
      %1579 = vector.broadcast %1578 : vector<16x1xf32> to vector<16x32xf32>
      %1580 = vector.broadcast %1576 : vector<1x32xf32> to vector<16x32xf32>
      %1581 = arith.mulf %1579, %1580 : vector<16x32xf32>
      %1582 = arith.addf %1575, %1581 : vector<16x32xf32>
      %cst_1051 = arith.constant 0.000000e+00 : f32
      %1583 = vector.broadcast %cst_1051 : f32 to vector<16x32xf32>
      %1584 = arith.maximumf %1582, %1583 : vector<16x32xf32>
      %1585 = arith.addf %1517, %1584 : vector<16x32xf32>
      %c0_1052 = arith.constant 0 : index
      %c0_1053 = arith.constant 0 : index
      %1586 = vector.load %arg4[%c0_1052, %c0_1053] : memref<1x32xf32, #tpu.memory_space<vmem>>, vector<1x32xf32>
      %c0_1054 = arith.constant 0 : index
      %c0_1055 = arith.constant 0 : index
      %1587 = vector.load %arg3[%c0_1054, %c0_1055] : memref<9x32xf32, #tpu.memory_space<vmem>>, vector<1x32xf32>
      %c0_1056 = arith.constant 0 : index
      %c0_1057 = arith.constant 0 : index
      %c21_1058 = arith.constant 21 : index
      %1588 = vector.load %arg2[%c0_1056, %c0_1057, %c21_1058] : memref<1x18x34xf32, #tpu.memory_space<vmem>>, vector<1x16x1xf32>
      %1589 = vector.shape_cast %1588 : vector<1x16x1xf32> to vector<16x1xf32>
      %1590 = vector.broadcast %1589 : vector<16x1xf32> to vector<16x32xf32>
      %1591 = vector.broadcast %1587 : vector<1x32xf32> to vector<16x32xf32>
      %1592 = arith.mulf %1590, %1591 : vector<16x32xf32>
      %1593 = vector.broadcast %1586 : vector<1x32xf32> to vector<16x32xf32>
      %1594 = arith.addf %1593, %1592 : vector<16x32xf32>
      %c1_1059 = arith.constant 1 : index
      %c0_1060 = arith.constant 0 : index
      %1595 = vector.load %arg3[%c1_1059, %c0_1060] : memref<9x32xf32, #tpu.memory_space<vmem>>, vector<1x32xf32>
      %c0_1061 = arith.constant 0 : index
      %c0_1062 = arith.constant 0 : index
      %c22_1063 = arith.constant 22 : index
      %1596 = vector.load %arg2[%c0_1061, %c0_1062, %c22_1063] : memref<1x18x34xf32, #tpu.memory_space<vmem>>, vector<1x16x1xf32>
      %1597 = vector.shape_cast %1596 : vector<1x16x1xf32> to vector<16x1xf32>
      %1598 = vector.broadcast %1597 : vector<16x1xf32> to vector<16x32xf32>
      %1599 = vector.broadcast %1595 : vector<1x32xf32> to vector<16x32xf32>
      %1600 = arith.mulf %1598, %1599 : vector<16x32xf32>
      %1601 = arith.addf %1594, %1600 : vector<16x32xf32>
      %c2_1064 = arith.constant 2 : index
      %c0_1065 = arith.constant 0 : index
      %1602 = vector.load %arg3[%c2_1064, %c0_1065] : memref<9x32xf32, #tpu.memory_space<vmem>>, vector<1x32xf32>
      %c0_1066 = arith.constant 0 : index
      %c0_1067 = arith.constant 0 : index
      %c23 = arith.constant 23 : index
      %1603 = vector.load %arg2[%c0_1066, %c0_1067, %c23] : memref<1x18x34xf32, #tpu.memory_space<vmem>>, vector<1x16x1xf32>
      %1604 = vector.shape_cast %1603 : vector<1x16x1xf32> to vector<16x1xf32>
      %1605 = vector.broadcast %1604 : vector<16x1xf32> to vector<16x32xf32>
      %1606 = vector.broadcast %1602 : vector<1x32xf32> to vector<16x32xf32>
      %1607 = arith.mulf %1605, %1606 : vector<16x32xf32>
      %1608 = arith.addf %1601, %1607 : vector<16x32xf32>
      %c3_1068 = arith.constant 3 : index
      %c0_1069 = arith.constant 0 : index
      %1609 = vector.load %arg3[%c3_1068, %c0_1069] : memref<9x32xf32, #tpu.memory_space<vmem>>, vector<1x32xf32>
      %c0_1070 = arith.constant 0 : index
      %c1_1071 = arith.constant 1 : index
      %c21_1072 = arith.constant 21 : index
      %1610 = vector.load %arg2[%c0_1070, %c1_1071, %c21_1072] : memref<1x18x34xf32, #tpu.memory_space<vmem>>, vector<1x16x1xf32>
      %1611 = vector.shape_cast %1610 : vector<1x16x1xf32> to vector<16x1xf32>
      %1612 = vector.broadcast %1611 : vector<16x1xf32> to vector<16x32xf32>
      %1613 = vector.broadcast %1609 : vector<1x32xf32> to vector<16x32xf32>
      %1614 = arith.mulf %1612, %1613 : vector<16x32xf32>
      %1615 = arith.addf %1608, %1614 : vector<16x32xf32>
      %c4_1073 = arith.constant 4 : index
      %c0_1074 = arith.constant 0 : index
      %1616 = vector.load %arg3[%c4_1073, %c0_1074] : memref<9x32xf32, #tpu.memory_space<vmem>>, vector<1x32xf32>
      %c0_1075 = arith.constant 0 : index
      %c1_1076 = arith.constant 1 : index
      %c22_1077 = arith.constant 22 : index
      %1617 = vector.load %arg2[%c0_1075, %c1_1076, %c22_1077] : memref<1x18x34xf32, #tpu.memory_space<vmem>>, vector<1x16x1xf32>
      %1618 = vector.shape_cast %1617 : vector<1x16x1xf32> to vector<16x1xf32>
      %1619 = vector.broadcast %1618 : vector<16x1xf32> to vector<16x32xf32>
      %1620 = vector.broadcast %1616 : vector<1x32xf32> to vector<16x32xf32>
      %1621 = arith.mulf %1619, %1620 : vector<16x32xf32>
      %1622 = arith.addf %1615, %1621 : vector<16x32xf32>
      %c5_1078 = arith.constant 5 : index
      %c0_1079 = arith.constant 0 : index
      %1623 = vector.load %arg3[%c5_1078, %c0_1079] : memref<9x32xf32, #tpu.memory_space<vmem>>, vector<1x32xf32>
      %c0_1080 = arith.constant 0 : index
      %c1_1081 = arith.constant 1 : index
      %c23_1082 = arith.constant 23 : index
      %1624 = vector.load %arg2[%c0_1080, %c1_1081, %c23_1082] : memref<1x18x34xf32, #tpu.memory_space<vmem>>, vector<1x16x1xf32>
      %1625 = vector.shape_cast %1624 : vector<1x16x1xf32> to vector<16x1xf32>
      %1626 = vector.broadcast %1625 : vector<16x1xf32> to vector<16x32xf32>
      %1627 = vector.broadcast %1623 : vector<1x32xf32> to vector<16x32xf32>
      %1628 = arith.mulf %1626, %1627 : vector<16x32xf32>
      %1629 = arith.addf %1622, %1628 : vector<16x32xf32>
      %c6_1083 = arith.constant 6 : index
      %c0_1084 = arith.constant 0 : index
      %1630 = vector.load %arg3[%c6_1083, %c0_1084] : memref<9x32xf32, #tpu.memory_space<vmem>>, vector<1x32xf32>
      %c0_1085 = arith.constant 0 : index
      %c2_1086 = arith.constant 2 : index
      %c21_1087 = arith.constant 21 : index
      %1631 = vector.load %arg2[%c0_1085, %c2_1086, %c21_1087] : memref<1x18x34xf32, #tpu.memory_space<vmem>>, vector<1x16x1xf32>
      %1632 = vector.shape_cast %1631 : vector<1x16x1xf32> to vector<16x1xf32>
      %1633 = vector.broadcast %1632 : vector<16x1xf32> to vector<16x32xf32>
      %1634 = vector.broadcast %1630 : vector<1x32xf32> to vector<16x32xf32>
      %1635 = arith.mulf %1633, %1634 : vector<16x32xf32>
      %1636 = arith.addf %1629, %1635 : vector<16x32xf32>
      %c7_1088 = arith.constant 7 : index
      %c0_1089 = arith.constant 0 : index
      %1637 = vector.load %arg3[%c7_1088, %c0_1089] : memref<9x32xf32, #tpu.memory_space<vmem>>, vector<1x32xf32>
      %c0_1090 = arith.constant 0 : index
      %c2_1091 = arith.constant 2 : index
      %c22_1092 = arith.constant 22 : index
      %1638 = vector.load %arg2[%c0_1090, %c2_1091, %c22_1092] : memref<1x18x34xf32, #tpu.memory_space<vmem>>, vector<1x16x1xf32>
      %1639 = vector.shape_cast %1638 : vector<1x16x1xf32> to vector<16x1xf32>
      %1640 = vector.broadcast %1639 : vector<16x1xf32> to vector<16x32xf32>
      %1641 = vector.broadcast %1637 : vector<1x32xf32> to vector<16x32xf32>
      %1642 = arith.mulf %1640, %1641 : vector<16x32xf32>
      %1643 = arith.addf %1636, %1642 : vector<16x32xf32>
      %c8_1093 = arith.constant 8 : index
      %c0_1094 = arith.constant 0 : index
      %1644 = vector.load %arg3[%c8_1093, %c0_1094] : memref<9x32xf32, #tpu.memory_space<vmem>>, vector<1x32xf32>
      %c0_1095 = arith.constant 0 : index
      %c2_1096 = arith.constant 2 : index
      %c23_1097 = arith.constant 23 : index
      %1645 = vector.load %arg2[%c0_1095, %c2_1096, %c23_1097] : memref<1x18x34xf32, #tpu.memory_space<vmem>>, vector<1x16x1xf32>
      %1646 = vector.shape_cast %1645 : vector<1x16x1xf32> to vector<16x1xf32>
      %1647 = vector.broadcast %1646 : vector<16x1xf32> to vector<16x32xf32>
      %1648 = vector.broadcast %1644 : vector<1x32xf32> to vector<16x32xf32>
      %1649 = arith.mulf %1647, %1648 : vector<16x32xf32>
      %1650 = arith.addf %1643, %1649 : vector<16x32xf32>
      %cst_1098 = arith.constant 0.000000e+00 : f32
      %1651 = vector.broadcast %cst_1098 : f32 to vector<16x32xf32>
      %1652 = arith.maximumf %1650, %1651 : vector<16x32xf32>
      %1653 = arith.addf %1585, %1652 : vector<16x32xf32>
      %c0_1099 = arith.constant 0 : index
      %c0_1100 = arith.constant 0 : index
      %1654 = vector.load %arg4[%c0_1099, %c0_1100] : memref<1x32xf32, #tpu.memory_space<vmem>>, vector<1x32xf32>
      %c0_1101 = arith.constant 0 : index
      %c0_1102 = arith.constant 0 : index
      %1655 = vector.load %arg3[%c0_1101, %c0_1102] : memref<9x32xf32, #tpu.memory_space<vmem>>, vector<1x32xf32>
      %c0_1103 = arith.constant 0 : index
      %c0_1104 = arith.constant 0 : index
      %c22_1105 = arith.constant 22 : index
      %1656 = vector.load %arg2[%c0_1103, %c0_1104, %c22_1105] : memref<1x18x34xf32, #tpu.memory_space<vmem>>, vector<1x16x1xf32>
      %1657 = vector.shape_cast %1656 : vector<1x16x1xf32> to vector<16x1xf32>
      %1658 = vector.broadcast %1657 : vector<16x1xf32> to vector<16x32xf32>
      %1659 = vector.broadcast %1655 : vector<1x32xf32> to vector<16x32xf32>
      %1660 = arith.mulf %1658, %1659 : vector<16x32xf32>
      %1661 = vector.broadcast %1654 : vector<1x32xf32> to vector<16x32xf32>
      %1662 = arith.addf %1661, %1660 : vector<16x32xf32>
      %c1_1106 = arith.constant 1 : index
      %c0_1107 = arith.constant 0 : index
      %1663 = vector.load %arg3[%c1_1106, %c0_1107] : memref<9x32xf32, #tpu.memory_space<vmem>>, vector<1x32xf32>
      %c0_1108 = arith.constant 0 : index
      %c0_1109 = arith.constant 0 : index
      %c23_1110 = arith.constant 23 : index
      %1664 = vector.load %arg2[%c0_1108, %c0_1109, %c23_1110] : memref<1x18x34xf32, #tpu.memory_space<vmem>>, vector<1x16x1xf32>
      %1665 = vector.shape_cast %1664 : vector<1x16x1xf32> to vector<16x1xf32>
      %1666 = vector.broadcast %1665 : vector<16x1xf32> to vector<16x32xf32>
      %1667 = vector.broadcast %1663 : vector<1x32xf32> to vector<16x32xf32>
      %1668 = arith.mulf %1666, %1667 : vector<16x32xf32>
      %1669 = arith.addf %1662, %1668 : vector<16x32xf32>
      %c2_1111 = arith.constant 2 : index
      %c0_1112 = arith.constant 0 : index
      %1670 = vector.load %arg3[%c2_1111, %c0_1112] : memref<9x32xf32, #tpu.memory_space<vmem>>, vector<1x32xf32>
      %c0_1113 = arith.constant 0 : index
      %c0_1114 = arith.constant 0 : index
      %c24 = arith.constant 24 : index
      %1671 = vector.load %arg2[%c0_1113, %c0_1114, %c24] : memref<1x18x34xf32, #tpu.memory_space<vmem>>, vector<1x16x1xf32>
      %1672 = vector.shape_cast %1671 : vector<1x16x1xf32> to vector<16x1xf32>
      %1673 = vector.broadcast %1672 : vector<16x1xf32> to vector<16x32xf32>
      %1674 = vector.broadcast %1670 : vector<1x32xf32> to vector<16x32xf32>
      %1675 = arith.mulf %1673, %1674 : vector<16x32xf32>
      %1676 = arith.addf %1669, %1675 : vector<16x32xf32>
      %c3_1115 = arith.constant 3 : index
      %c0_1116 = arith.constant 0 : index
      %1677 = vector.load %arg3[%c3_1115, %c0_1116] : memref<9x32xf32, #tpu.memory_space<vmem>>, vector<1x32xf32>
      %c0_1117 = arith.constant 0 : index
      %c1_1118 = arith.constant 1 : index
      %c22_1119 = arith.constant 22 : index
      %1678 = vector.load %arg2[%c0_1117, %c1_1118, %c22_1119] : memref<1x18x34xf32, #tpu.memory_space<vmem>>, vector<1x16x1xf32>
      %1679 = vector.shape_cast %1678 : vector<1x16x1xf32> to vector<16x1xf32>
      %1680 = vector.broadcast %1679 : vector<16x1xf32> to vector<16x32xf32>
      %1681 = vector.broadcast %1677 : vector<1x32xf32> to vector<16x32xf32>
      %1682 = arith.mulf %1680, %1681 : vector<16x32xf32>
      %1683 = arith.addf %1676, %1682 : vector<16x32xf32>
      %c4_1120 = arith.constant 4 : index
      %c0_1121 = arith.constant 0 : index
      %1684 = vector.load %arg3[%c4_1120, %c0_1121] : memref<9x32xf32, #tpu.memory_space<vmem>>, vector<1x32xf32>
      %c0_1122 = arith.constant 0 : index
      %c1_1123 = arith.constant 1 : index
      %c23_1124 = arith.constant 23 : index
      %1685 = vector.load %arg2[%c0_1122, %c1_1123, %c23_1124] : memref<1x18x34xf32, #tpu.memory_space<vmem>>, vector<1x16x1xf32>
      %1686 = vector.shape_cast %1685 : vector<1x16x1xf32> to vector<16x1xf32>
      %1687 = vector.broadcast %1686 : vector<16x1xf32> to vector<16x32xf32>
      %1688 = vector.broadcast %1684 : vector<1x32xf32> to vector<16x32xf32>
      %1689 = arith.mulf %1687, %1688 : vector<16x32xf32>
      %1690 = arith.addf %1683, %1689 : vector<16x32xf32>
      %c5_1125 = arith.constant 5 : index
      %c0_1126 = arith.constant 0 : index
      %1691 = vector.load %arg3[%c5_1125, %c0_1126] : memref<9x32xf32, #tpu.memory_space<vmem>>, vector<1x32xf32>
      %c0_1127 = arith.constant 0 : index
      %c1_1128 = arith.constant 1 : index
      %c24_1129 = arith.constant 24 : index
      %1692 = vector.load %arg2[%c0_1127, %c1_1128, %c24_1129] : memref<1x18x34xf32, #tpu.memory_space<vmem>>, vector<1x16x1xf32>
      %1693 = vector.shape_cast %1692 : vector<1x16x1xf32> to vector<16x1xf32>
      %1694 = vector.broadcast %1693 : vector<16x1xf32> to vector<16x32xf32>
      %1695 = vector.broadcast %1691 : vector<1x32xf32> to vector<16x32xf32>
      %1696 = arith.mulf %1694, %1695 : vector<16x32xf32>
      %1697 = arith.addf %1690, %1696 : vector<16x32xf32>
      %c6_1130 = arith.constant 6 : index
      %c0_1131 = arith.constant 0 : index
      %1698 = vector.load %arg3[%c6_1130, %c0_1131] : memref<9x32xf32, #tpu.memory_space<vmem>>, vector<1x32xf32>
      %c0_1132 = arith.constant 0 : index
      %c2_1133 = arith.constant 2 : index
      %c22_1134 = arith.constant 22 : index
      %1699 = vector.load %arg2[%c0_1132, %c2_1133, %c22_1134] : memref<1x18x34xf32, #tpu.memory_space<vmem>>, vector<1x16x1xf32>
      %1700 = vector.shape_cast %1699 : vector<1x16x1xf32> to vector<16x1xf32>
      %1701 = vector.broadcast %1700 : vector<16x1xf32> to vector<16x32xf32>
      %1702 = vector.broadcast %1698 : vector<1x32xf32> to vector<16x32xf32>
      %1703 = arith.mulf %1701, %1702 : vector<16x32xf32>
      %1704 = arith.addf %1697, %1703 : vector<16x32xf32>
      %c7_1135 = arith.constant 7 : index
      %c0_1136 = arith.constant 0 : index
      %1705 = vector.load %arg3[%c7_1135, %c0_1136] : memref<9x32xf32, #tpu.memory_space<vmem>>, vector<1x32xf32>
      %c0_1137 = arith.constant 0 : index
      %c2_1138 = arith.constant 2 : index
      %c23_1139 = arith.constant 23 : index
      %1706 = vector.load %arg2[%c0_1137, %c2_1138, %c23_1139] : memref<1x18x34xf32, #tpu.memory_space<vmem>>, vector<1x16x1xf32>
      %1707 = vector.shape_cast %1706 : vector<1x16x1xf32> to vector<16x1xf32>
      %1708 = vector.broadcast %1707 : vector<16x1xf32> to vector<16x32xf32>
      %1709 = vector.broadcast %1705 : vector<1x32xf32> to vector<16x32xf32>
      %1710 = arith.mulf %1708, %1709 : vector<16x32xf32>
      %1711 = arith.addf %1704, %1710 : vector<16x32xf32>
      %c8_1140 = arith.constant 8 : index
      %c0_1141 = arith.constant 0 : index
      %1712 = vector.load %arg3[%c8_1140, %c0_1141] : memref<9x32xf32, #tpu.memory_space<vmem>>, vector<1x32xf32>
      %c0_1142 = arith.constant 0 : index
      %c2_1143 = arith.constant 2 : index
      %c24_1144 = arith.constant 24 : index
      %1713 = vector.load %arg2[%c0_1142, %c2_1143, %c24_1144] : memref<1x18x34xf32, #tpu.memory_space<vmem>>, vector<1x16x1xf32>
      %1714 = vector.shape_cast %1713 : vector<1x16x1xf32> to vector<16x1xf32>
      %1715 = vector.broadcast %1714 : vector<16x1xf32> to vector<16x32xf32>
      %1716 = vector.broadcast %1712 : vector<1x32xf32> to vector<16x32xf32>
      %1717 = arith.mulf %1715, %1716 : vector<16x32xf32>
      %1718 = arith.addf %1711, %1717 : vector<16x32xf32>
      %cst_1145 = arith.constant 0.000000e+00 : f32
      %1719 = vector.broadcast %cst_1145 : f32 to vector<16x32xf32>
      %1720 = arith.maximumf %1718, %1719 : vector<16x32xf32>
      %1721 = arith.addf %1653, %1720 : vector<16x32xf32>
      %c0_1146 = arith.constant 0 : index
      %c0_1147 = arith.constant 0 : index
      %1722 = vector.load %arg4[%c0_1146, %c0_1147] : memref<1x32xf32, #tpu.memory_space<vmem>>, vector<1x32xf32>
      %c0_1148 = arith.constant 0 : index
      %c0_1149 = arith.constant 0 : index
      %1723 = vector.load %arg3[%c0_1148, %c0_1149] : memref<9x32xf32, #tpu.memory_space<vmem>>, vector<1x32xf32>
      %c0_1150 = arith.constant 0 : index
      %c0_1151 = arith.constant 0 : index
      %c23_1152 = arith.constant 23 : index
      %1724 = vector.load %arg2[%c0_1150, %c0_1151, %c23_1152] : memref<1x18x34xf32, #tpu.memory_space<vmem>>, vector<1x16x1xf32>
      %1725 = vector.shape_cast %1724 : vector<1x16x1xf32> to vector<16x1xf32>
      %1726 = vector.broadcast %1725 : vector<16x1xf32> to vector<16x32xf32>
      %1727 = vector.broadcast %1723 : vector<1x32xf32> to vector<16x32xf32>
      %1728 = arith.mulf %1726, %1727 : vector<16x32xf32>
      %1729 = vector.broadcast %1722 : vector<1x32xf32> to vector<16x32xf32>
      %1730 = arith.addf %1729, %1728 : vector<16x32xf32>
      %c1_1153 = arith.constant 1 : index
      %c0_1154 = arith.constant 0 : index
      %1731 = vector.load %arg3[%c1_1153, %c0_1154] : memref<9x32xf32, #tpu.memory_space<vmem>>, vector<1x32xf32>
      %c0_1155 = arith.constant 0 : index
      %c0_1156 = arith.constant 0 : index
      %c24_1157 = arith.constant 24 : index
      %1732 = vector.load %arg2[%c0_1155, %c0_1156, %c24_1157] : memref<1x18x34xf32, #tpu.memory_space<vmem>>, vector<1x16x1xf32>
      %1733 = vector.shape_cast %1732 : vector<1x16x1xf32> to vector<16x1xf32>
      %1734 = vector.broadcast %1733 : vector<16x1xf32> to vector<16x32xf32>
      %1735 = vector.broadcast %1731 : vector<1x32xf32> to vector<16x32xf32>
      %1736 = arith.mulf %1734, %1735 : vector<16x32xf32>
      %1737 = arith.addf %1730, %1736 : vector<16x32xf32>
      %c2_1158 = arith.constant 2 : index
      %c0_1159 = arith.constant 0 : index
      %1738 = vector.load %arg3[%c2_1158, %c0_1159] : memref<9x32xf32, #tpu.memory_space<vmem>>, vector<1x32xf32>
      %c0_1160 = arith.constant 0 : index
      %c0_1161 = arith.constant 0 : index
      %c25 = arith.constant 25 : index
      %1739 = vector.load %arg2[%c0_1160, %c0_1161, %c25] : memref<1x18x34xf32, #tpu.memory_space<vmem>>, vector<1x16x1xf32>
      %1740 = vector.shape_cast %1739 : vector<1x16x1xf32> to vector<16x1xf32>
      %1741 = vector.broadcast %1740 : vector<16x1xf32> to vector<16x32xf32>
      %1742 = vector.broadcast %1738 : vector<1x32xf32> to vector<16x32xf32>
      %1743 = arith.mulf %1741, %1742 : vector<16x32xf32>
      %1744 = arith.addf %1737, %1743 : vector<16x32xf32>
      %c3_1162 = arith.constant 3 : index
      %c0_1163 = arith.constant 0 : index
      %1745 = vector.load %arg3[%c3_1162, %c0_1163] : memref<9x32xf32, #tpu.memory_space<vmem>>, vector<1x32xf32>
      %c0_1164 = arith.constant 0 : index
      %c1_1165 = arith.constant 1 : index
      %c23_1166 = arith.constant 23 : index
      %1746 = vector.load %arg2[%c0_1164, %c1_1165, %c23_1166] : memref<1x18x34xf32, #tpu.memory_space<vmem>>, vector<1x16x1xf32>
      %1747 = vector.shape_cast %1746 : vector<1x16x1xf32> to vector<16x1xf32>
      %1748 = vector.broadcast %1747 : vector<16x1xf32> to vector<16x32xf32>
      %1749 = vector.broadcast %1745 : vector<1x32xf32> to vector<16x32xf32>
      %1750 = arith.mulf %1748, %1749 : vector<16x32xf32>
      %1751 = arith.addf %1744, %1750 : vector<16x32xf32>
      %c4_1167 = arith.constant 4 : index
      %c0_1168 = arith.constant 0 : index
      %1752 = vector.load %arg3[%c4_1167, %c0_1168] : memref<9x32xf32, #tpu.memory_space<vmem>>, vector<1x32xf32>
      %c0_1169 = arith.constant 0 : index
      %c1_1170 = arith.constant 1 : index
      %c24_1171 = arith.constant 24 : index
      %1753 = vector.load %arg2[%c0_1169, %c1_1170, %c24_1171] : memref<1x18x34xf32, #tpu.memory_space<vmem>>, vector<1x16x1xf32>
      %1754 = vector.shape_cast %1753 : vector<1x16x1xf32> to vector<16x1xf32>
      %1755 = vector.broadcast %1754 : vector<16x1xf32> to vector<16x32xf32>
      %1756 = vector.broadcast %1752 : vector<1x32xf32> to vector<16x32xf32>
      %1757 = arith.mulf %1755, %1756 : vector<16x32xf32>
      %1758 = arith.addf %1751, %1757 : vector<16x32xf32>
      %c5_1172 = arith.constant 5 : index
      %c0_1173 = arith.constant 0 : index
      %1759 = vector.load %arg3[%c5_1172, %c0_1173] : memref<9x32xf32, #tpu.memory_space<vmem>>, vector<1x32xf32>
      %c0_1174 = arith.constant 0 : index
      %c1_1175 = arith.constant 1 : index
      %c25_1176 = arith.constant 25 : index
      %1760 = vector.load %arg2[%c0_1174, %c1_1175, %c25_1176] : memref<1x18x34xf32, #tpu.memory_space<vmem>>, vector<1x16x1xf32>
      %1761 = vector.shape_cast %1760 : vector<1x16x1xf32> to vector<16x1xf32>
      %1762 = vector.broadcast %1761 : vector<16x1xf32> to vector<16x32xf32>
      %1763 = vector.broadcast %1759 : vector<1x32xf32> to vector<16x32xf32>
      %1764 = arith.mulf %1762, %1763 : vector<16x32xf32>
      %1765 = arith.addf %1758, %1764 : vector<16x32xf32>
      %c6_1177 = arith.constant 6 : index
      %c0_1178 = arith.constant 0 : index
      %1766 = vector.load %arg3[%c6_1177, %c0_1178] : memref<9x32xf32, #tpu.memory_space<vmem>>, vector<1x32xf32>
      %c0_1179 = arith.constant 0 : index
      %c2_1180 = arith.constant 2 : index
      %c23_1181 = arith.constant 23 : index
      %1767 = vector.load %arg2[%c0_1179, %c2_1180, %c23_1181] : memref<1x18x34xf32, #tpu.memory_space<vmem>>, vector<1x16x1xf32>
      %1768 = vector.shape_cast %1767 : vector<1x16x1xf32> to vector<16x1xf32>
      %1769 = vector.broadcast %1768 : vector<16x1xf32> to vector<16x32xf32>
      %1770 = vector.broadcast %1766 : vector<1x32xf32> to vector<16x32xf32>
      %1771 = arith.mulf %1769, %1770 : vector<16x32xf32>
      %1772 = arith.addf %1765, %1771 : vector<16x32xf32>
      %c7_1182 = arith.constant 7 : index
      %c0_1183 = arith.constant 0 : index
      %1773 = vector.load %arg3[%c7_1182, %c0_1183] : memref<9x32xf32, #tpu.memory_space<vmem>>, vector<1x32xf32>
      %c0_1184 = arith.constant 0 : index
      %c2_1185 = arith.constant 2 : index
      %c24_1186 = arith.constant 24 : index
      %1774 = vector.load %arg2[%c0_1184, %c2_1185, %c24_1186] : memref<1x18x34xf32, #tpu.memory_space<vmem>>, vector<1x16x1xf32>
      %1775 = vector.shape_cast %1774 : vector<1x16x1xf32> to vector<16x1xf32>
      %1776 = vector.broadcast %1775 : vector<16x1xf32> to vector<16x32xf32>
      %1777 = vector.broadcast %1773 : vector<1x32xf32> to vector<16x32xf32>
      %1778 = arith.mulf %1776, %1777 : vector<16x32xf32>
      %1779 = arith.addf %1772, %1778 : vector<16x32xf32>
      %c8_1187 = arith.constant 8 : index
      %c0_1188 = arith.constant 0 : index
      %1780 = vector.load %arg3[%c8_1187, %c0_1188] : memref<9x32xf32, #tpu.memory_space<vmem>>, vector<1x32xf32>
      %c0_1189 = arith.constant 0 : index
      %c2_1190 = arith.constant 2 : index
      %c25_1191 = arith.constant 25 : index
      %1781 = vector.load %arg2[%c0_1189, %c2_1190, %c25_1191] : memref<1x18x34xf32, #tpu.memory_space<vmem>>, vector<1x16x1xf32>
      %1782 = vector.shape_cast %1781 : vector<1x16x1xf32> to vector<16x1xf32>
      %1783 = vector.broadcast %1782 : vector<16x1xf32> to vector<16x32xf32>
      %1784 = vector.broadcast %1780 : vector<1x32xf32> to vector<16x32xf32>
      %1785 = arith.mulf %1783, %1784 : vector<16x32xf32>
      %1786 = arith.addf %1779, %1785 : vector<16x32xf32>
      %cst_1192 = arith.constant 0.000000e+00 : f32
      %1787 = vector.broadcast %cst_1192 : f32 to vector<16x32xf32>
      %1788 = arith.maximumf %1786, %1787 : vector<16x32xf32>
      %1789 = arith.addf %1721, %1788 : vector<16x32xf32>
      %c0_1193 = arith.constant 0 : index
      %c0_1194 = arith.constant 0 : index
      %1790 = vector.load %arg4[%c0_1193, %c0_1194] : memref<1x32xf32, #tpu.memory_space<vmem>>, vector<1x32xf32>
      %c0_1195 = arith.constant 0 : index
      %c0_1196 = arith.constant 0 : index
      %1791 = vector.load %arg3[%c0_1195, %c0_1196] : memref<9x32xf32, #tpu.memory_space<vmem>>, vector<1x32xf32>
      %c0_1197 = arith.constant 0 : index
      %c0_1198 = arith.constant 0 : index
      %c24_1199 = arith.constant 24 : index
      %1792 = vector.load %arg2[%c0_1197, %c0_1198, %c24_1199] : memref<1x18x34xf32, #tpu.memory_space<vmem>>, vector<1x16x1xf32>
      %1793 = vector.shape_cast %1792 : vector<1x16x1xf32> to vector<16x1xf32>
      %1794 = vector.broadcast %1793 : vector<16x1xf32> to vector<16x32xf32>
      %1795 = vector.broadcast %1791 : vector<1x32xf32> to vector<16x32xf32>
      %1796 = arith.mulf %1794, %1795 : vector<16x32xf32>
      %1797 = vector.broadcast %1790 : vector<1x32xf32> to vector<16x32xf32>
      %1798 = arith.addf %1797, %1796 : vector<16x32xf32>
      %c1_1200 = arith.constant 1 : index
      %c0_1201 = arith.constant 0 : index
      %1799 = vector.load %arg3[%c1_1200, %c0_1201] : memref<9x32xf32, #tpu.memory_space<vmem>>, vector<1x32xf32>
      %c0_1202 = arith.constant 0 : index
      %c0_1203 = arith.constant 0 : index
      %c25_1204 = arith.constant 25 : index
      %1800 = vector.load %arg2[%c0_1202, %c0_1203, %c25_1204] : memref<1x18x34xf32, #tpu.memory_space<vmem>>, vector<1x16x1xf32>
      %1801 = vector.shape_cast %1800 : vector<1x16x1xf32> to vector<16x1xf32>
      %1802 = vector.broadcast %1801 : vector<16x1xf32> to vector<16x32xf32>
      %1803 = vector.broadcast %1799 : vector<1x32xf32> to vector<16x32xf32>
      %1804 = arith.mulf %1802, %1803 : vector<16x32xf32>
      %1805 = arith.addf %1798, %1804 : vector<16x32xf32>
      %c2_1205 = arith.constant 2 : index
      %c0_1206 = arith.constant 0 : index
      %1806 = vector.load %arg3[%c2_1205, %c0_1206] : memref<9x32xf32, #tpu.memory_space<vmem>>, vector<1x32xf32>
      %c0_1207 = arith.constant 0 : index
      %c0_1208 = arith.constant 0 : index
      %c26 = arith.constant 26 : index
      %1807 = vector.load %arg2[%c0_1207, %c0_1208, %c26] : memref<1x18x34xf32, #tpu.memory_space<vmem>>, vector<1x16x1xf32>
      %1808 = vector.shape_cast %1807 : vector<1x16x1xf32> to vector<16x1xf32>
      %1809 = vector.broadcast %1808 : vector<16x1xf32> to vector<16x32xf32>
      %1810 = vector.broadcast %1806 : vector<1x32xf32> to vector<16x32xf32>
      %1811 = arith.mulf %1809, %1810 : vector<16x32xf32>
      %1812 = arith.addf %1805, %1811 : vector<16x32xf32>
      %c3_1209 = arith.constant 3 : index
      %c0_1210 = arith.constant 0 : index
      %1813 = vector.load %arg3[%c3_1209, %c0_1210] : memref<9x32xf32, #tpu.memory_space<vmem>>, vector<1x32xf32>
      %c0_1211 = arith.constant 0 : index
      %c1_1212 = arith.constant 1 : index
      %c24_1213 = arith.constant 24 : index
      %1814 = vector.load %arg2[%c0_1211, %c1_1212, %c24_1213] : memref<1x18x34xf32, #tpu.memory_space<vmem>>, vector<1x16x1xf32>
      %1815 = vector.shape_cast %1814 : vector<1x16x1xf32> to vector<16x1xf32>
      %1816 = vector.broadcast %1815 : vector<16x1xf32> to vector<16x32xf32>
      %1817 = vector.broadcast %1813 : vector<1x32xf32> to vector<16x32xf32>
      %1818 = arith.mulf %1816, %1817 : vector<16x32xf32>
      %1819 = arith.addf %1812, %1818 : vector<16x32xf32>
      %c4_1214 = arith.constant 4 : index
      %c0_1215 = arith.constant 0 : index
      %1820 = vector.load %arg3[%c4_1214, %c0_1215] : memref<9x32xf32, #tpu.memory_space<vmem>>, vector<1x32xf32>
      %c0_1216 = arith.constant 0 : index
      %c1_1217 = arith.constant 1 : index
      %c25_1218 = arith.constant 25 : index
      %1821 = vector.load %arg2[%c0_1216, %c1_1217, %c25_1218] : memref<1x18x34xf32, #tpu.memory_space<vmem>>, vector<1x16x1xf32>
      %1822 = vector.shape_cast %1821 : vector<1x16x1xf32> to vector<16x1xf32>
      %1823 = vector.broadcast %1822 : vector<16x1xf32> to vector<16x32xf32>
      %1824 = vector.broadcast %1820 : vector<1x32xf32> to vector<16x32xf32>
      %1825 = arith.mulf %1823, %1824 : vector<16x32xf32>
      %1826 = arith.addf %1819, %1825 : vector<16x32xf32>
      %c5_1219 = arith.constant 5 : index
      %c0_1220 = arith.constant 0 : index
      %1827 = vector.load %arg3[%c5_1219, %c0_1220] : memref<9x32xf32, #tpu.memory_space<vmem>>, vector<1x32xf32>
      %c0_1221 = arith.constant 0 : index
      %c1_1222 = arith.constant 1 : index
      %c26_1223 = arith.constant 26 : index
      %1828 = vector.load %arg2[%c0_1221, %c1_1222, %c26_1223] : memref<1x18x34xf32, #tpu.memory_space<vmem>>, vector<1x16x1xf32>
      %1829 = vector.shape_cast %1828 : vector<1x16x1xf32> to vector<16x1xf32>
      %1830 = vector.broadcast %1829 : vector<16x1xf32> to vector<16x32xf32>
      %1831 = vector.broadcast %1827 : vector<1x32xf32> to vector<16x32xf32>
      %1832 = arith.mulf %1830, %1831 : vector<16x32xf32>
      %1833 = arith.addf %1826, %1832 : vector<16x32xf32>
      %c6_1224 = arith.constant 6 : index
      %c0_1225 = arith.constant 0 : index
      %1834 = vector.load %arg3[%c6_1224, %c0_1225] : memref<9x32xf32, #tpu.memory_space<vmem>>, vector<1x32xf32>
      %c0_1226 = arith.constant 0 : index
      %c2_1227 = arith.constant 2 : index
      %c24_1228 = arith.constant 24 : index
      %1835 = vector.load %arg2[%c0_1226, %c2_1227, %c24_1228] : memref<1x18x34xf32, #tpu.memory_space<vmem>>, vector<1x16x1xf32>
      %1836 = vector.shape_cast %1835 : vector<1x16x1xf32> to vector<16x1xf32>
      %1837 = vector.broadcast %1836 : vector<16x1xf32> to vector<16x32xf32>
      %1838 = vector.broadcast %1834 : vector<1x32xf32> to vector<16x32xf32>
      %1839 = arith.mulf %1837, %1838 : vector<16x32xf32>
      %1840 = arith.addf %1833, %1839 : vector<16x32xf32>
      %c7_1229 = arith.constant 7 : index
      %c0_1230 = arith.constant 0 : index
      %1841 = vector.load %arg3[%c7_1229, %c0_1230] : memref<9x32xf32, #tpu.memory_space<vmem>>, vector<1x32xf32>
      %c0_1231 = arith.constant 0 : index
      %c2_1232 = arith.constant 2 : index
      %c25_1233 = arith.constant 25 : index
      %1842 = vector.load %arg2[%c0_1231, %c2_1232, %c25_1233] : memref<1x18x34xf32, #tpu.memory_space<vmem>>, vector<1x16x1xf32>
      %1843 = vector.shape_cast %1842 : vector<1x16x1xf32> to vector<16x1xf32>
      %1844 = vector.broadcast %1843 : vector<16x1xf32> to vector<16x32xf32>
      %1845 = vector.broadcast %1841 : vector<1x32xf32> to vector<16x32xf32>
      %1846 = arith.mulf %1844, %1845 : vector<16x32xf32>
      %1847 = arith.addf %1840, %1846 : vector<16x32xf32>
      %c8_1234 = arith.constant 8 : index
      %c0_1235 = arith.constant 0 : index
      %1848 = vector.load %arg3[%c8_1234, %c0_1235] : memref<9x32xf32, #tpu.memory_space<vmem>>, vector<1x32xf32>
      %c0_1236 = arith.constant 0 : index
      %c2_1237 = arith.constant 2 : index
      %c26_1238 = arith.constant 26 : index
      %1849 = vector.load %arg2[%c0_1236, %c2_1237, %c26_1238] : memref<1x18x34xf32, #tpu.memory_space<vmem>>, vector<1x16x1xf32>
      %1850 = vector.shape_cast %1849 : vector<1x16x1xf32> to vector<16x1xf32>
      %1851 = vector.broadcast %1850 : vector<16x1xf32> to vector<16x32xf32>
      %1852 = vector.broadcast %1848 : vector<1x32xf32> to vector<16x32xf32>
      %1853 = arith.mulf %1851, %1852 : vector<16x32xf32>
      %1854 = arith.addf %1847, %1853 : vector<16x32xf32>
      %cst_1239 = arith.constant 0.000000e+00 : f32
      %1855 = vector.broadcast %cst_1239 : f32 to vector<16x32xf32>
      %1856 = arith.maximumf %1854, %1855 : vector<16x32xf32>
      %1857 = arith.addf %1789, %1856 : vector<16x32xf32>
      %c0_1240 = arith.constant 0 : index
      %c0_1241 = arith.constant 0 : index
      %1858 = vector.load %arg4[%c0_1240, %c0_1241] : memref<1x32xf32, #tpu.memory_space<vmem>>, vector<1x32xf32>
      %c0_1242 = arith.constant 0 : index
      %c0_1243 = arith.constant 0 : index
      %1859 = vector.load %arg3[%c0_1242, %c0_1243] : memref<9x32xf32, #tpu.memory_space<vmem>>, vector<1x32xf32>
      %c0_1244 = arith.constant 0 : index
      %c0_1245 = arith.constant 0 : index
      %c25_1246 = arith.constant 25 : index
      %1860 = vector.load %arg2[%c0_1244, %c0_1245, %c25_1246] : memref<1x18x34xf32, #tpu.memory_space<vmem>>, vector<1x16x1xf32>
      %1861 = vector.shape_cast %1860 : vector<1x16x1xf32> to vector<16x1xf32>
      %1862 = vector.broadcast %1861 : vector<16x1xf32> to vector<16x32xf32>
      %1863 = vector.broadcast %1859 : vector<1x32xf32> to vector<16x32xf32>
      %1864 = arith.mulf %1862, %1863 : vector<16x32xf32>
      %1865 = vector.broadcast %1858 : vector<1x32xf32> to vector<16x32xf32>
      %1866 = arith.addf %1865, %1864 : vector<16x32xf32>
      %c1_1247 = arith.constant 1 : index
      %c0_1248 = arith.constant 0 : index
      %1867 = vector.load %arg3[%c1_1247, %c0_1248] : memref<9x32xf32, #tpu.memory_space<vmem>>, vector<1x32xf32>
      %c0_1249 = arith.constant 0 : index
      %c0_1250 = arith.constant 0 : index
      %c26_1251 = arith.constant 26 : index
      %1868 = vector.load %arg2[%c0_1249, %c0_1250, %c26_1251] : memref<1x18x34xf32, #tpu.memory_space<vmem>>, vector<1x16x1xf32>
      %1869 = vector.shape_cast %1868 : vector<1x16x1xf32> to vector<16x1xf32>
      %1870 = vector.broadcast %1869 : vector<16x1xf32> to vector<16x32xf32>
      %1871 = vector.broadcast %1867 : vector<1x32xf32> to vector<16x32xf32>
      %1872 = arith.mulf %1870, %1871 : vector<16x32xf32>
      %1873 = arith.addf %1866, %1872 : vector<16x32xf32>
      %c2_1252 = arith.constant 2 : index
      %c0_1253 = arith.constant 0 : index
      %1874 = vector.load %arg3[%c2_1252, %c0_1253] : memref<9x32xf32, #tpu.memory_space<vmem>>, vector<1x32xf32>
      %c0_1254 = arith.constant 0 : index
      %c0_1255 = arith.constant 0 : index
      %c27 = arith.constant 27 : index
      %1875 = vector.load %arg2[%c0_1254, %c0_1255, %c27] : memref<1x18x34xf32, #tpu.memory_space<vmem>>, vector<1x16x1xf32>
      %1876 = vector.shape_cast %1875 : vector<1x16x1xf32> to vector<16x1xf32>
      %1877 = vector.broadcast %1876 : vector<16x1xf32> to vector<16x32xf32>
      %1878 = vector.broadcast %1874 : vector<1x32xf32> to vector<16x32xf32>
      %1879 = arith.mulf %1877, %1878 : vector<16x32xf32>
      %1880 = arith.addf %1873, %1879 : vector<16x32xf32>
      %c3_1256 = arith.constant 3 : index
      %c0_1257 = arith.constant 0 : index
      %1881 = vector.load %arg3[%c3_1256, %c0_1257] : memref<9x32xf32, #tpu.memory_space<vmem>>, vector<1x32xf32>
      %c0_1258 = arith.constant 0 : index
      %c1_1259 = arith.constant 1 : index
      %c25_1260 = arith.constant 25 : index
      %1882 = vector.load %arg2[%c0_1258, %c1_1259, %c25_1260] : memref<1x18x34xf32, #tpu.memory_space<vmem>>, vector<1x16x1xf32>
      %1883 = vector.shape_cast %1882 : vector<1x16x1xf32> to vector<16x1xf32>
      %1884 = vector.broadcast %1883 : vector<16x1xf32> to vector<16x32xf32>
      %1885 = vector.broadcast %1881 : vector<1x32xf32> to vector<16x32xf32>
      %1886 = arith.mulf %1884, %1885 : vector<16x32xf32>
      %1887 = arith.addf %1880, %1886 : vector<16x32xf32>
      %c4_1261 = arith.constant 4 : index
      %c0_1262 = arith.constant 0 : index
      %1888 = vector.load %arg3[%c4_1261, %c0_1262] : memref<9x32xf32, #tpu.memory_space<vmem>>, vector<1x32xf32>
      %c0_1263 = arith.constant 0 : index
      %c1_1264 = arith.constant 1 : index
      %c26_1265 = arith.constant 26 : index
      %1889 = vector.load %arg2[%c0_1263, %c1_1264, %c26_1265] : memref<1x18x34xf32, #tpu.memory_space<vmem>>, vector<1x16x1xf32>
      %1890 = vector.shape_cast %1889 : vector<1x16x1xf32> to vector<16x1xf32>
      %1891 = vector.broadcast %1890 : vector<16x1xf32> to vector<16x32xf32>
      %1892 = vector.broadcast %1888 : vector<1x32xf32> to vector<16x32xf32>
      %1893 = arith.mulf %1891, %1892 : vector<16x32xf32>
      %1894 = arith.addf %1887, %1893 : vector<16x32xf32>
      %c5_1266 = arith.constant 5 : index
      %c0_1267 = arith.constant 0 : index
      %1895 = vector.load %arg3[%c5_1266, %c0_1267] : memref<9x32xf32, #tpu.memory_space<vmem>>, vector<1x32xf32>
      %c0_1268 = arith.constant 0 : index
      %c1_1269 = arith.constant 1 : index
      %c27_1270 = arith.constant 27 : index
      %1896 = vector.load %arg2[%c0_1268, %c1_1269, %c27_1270] : memref<1x18x34xf32, #tpu.memory_space<vmem>>, vector<1x16x1xf32>
      %1897 = vector.shape_cast %1896 : vector<1x16x1xf32> to vector<16x1xf32>
      %1898 = vector.broadcast %1897 : vector<16x1xf32> to vector<16x32xf32>
      %1899 = vector.broadcast %1895 : vector<1x32xf32> to vector<16x32xf32>
      %1900 = arith.mulf %1898, %1899 : vector<16x32xf32>
      %1901 = arith.addf %1894, %1900 : vector<16x32xf32>
      %c6_1271 = arith.constant 6 : index
      %c0_1272 = arith.constant 0 : index
      %1902 = vector.load %arg3[%c6_1271, %c0_1272] : memref<9x32xf32, #tpu.memory_space<vmem>>, vector<1x32xf32>
      %c0_1273 = arith.constant 0 : index
      %c2_1274 = arith.constant 2 : index
      %c25_1275 = arith.constant 25 : index
      %1903 = vector.load %arg2[%c0_1273, %c2_1274, %c25_1275] : memref<1x18x34xf32, #tpu.memory_space<vmem>>, vector<1x16x1xf32>
      %1904 = vector.shape_cast %1903 : vector<1x16x1xf32> to vector<16x1xf32>
      %1905 = vector.broadcast %1904 : vector<16x1xf32> to vector<16x32xf32>
      %1906 = vector.broadcast %1902 : vector<1x32xf32> to vector<16x32xf32>
      %1907 = arith.mulf %1905, %1906 : vector<16x32xf32>
      %1908 = arith.addf %1901, %1907 : vector<16x32xf32>
      %c7_1276 = arith.constant 7 : index
      %c0_1277 = arith.constant 0 : index
      %1909 = vector.load %arg3[%c7_1276, %c0_1277] : memref<9x32xf32, #tpu.memory_space<vmem>>, vector<1x32xf32>
      %c0_1278 = arith.constant 0 : index
      %c2_1279 = arith.constant 2 : index
      %c26_1280 = arith.constant 26 : index
      %1910 = vector.load %arg2[%c0_1278, %c2_1279, %c26_1280] : memref<1x18x34xf32, #tpu.memory_space<vmem>>, vector<1x16x1xf32>
      %1911 = vector.shape_cast %1910 : vector<1x16x1xf32> to vector<16x1xf32>
      %1912 = vector.broadcast %1911 : vector<16x1xf32> to vector<16x32xf32>
      %1913 = vector.broadcast %1909 : vector<1x32xf32> to vector<16x32xf32>
      %1914 = arith.mulf %1912, %1913 : vector<16x32xf32>
      %1915 = arith.addf %1908, %1914 : vector<16x32xf32>
      %c8_1281 = arith.constant 8 : index
      %c0_1282 = arith.constant 0 : index
      %1916 = vector.load %arg3[%c8_1281, %c0_1282] : memref<9x32xf32, #tpu.memory_space<vmem>>, vector<1x32xf32>
      %c0_1283 = arith.constant 0 : index
      %c2_1284 = arith.constant 2 : index
      %c27_1285 = arith.constant 27 : index
      %1917 = vector.load %arg2[%c0_1283, %c2_1284, %c27_1285] : memref<1x18x34xf32, #tpu.memory_space<vmem>>, vector<1x16x1xf32>
      %1918 = vector.shape_cast %1917 : vector<1x16x1xf32> to vector<16x1xf32>
      %1919 = vector.broadcast %1918 : vector<16x1xf32> to vector<16x32xf32>
      %1920 = vector.broadcast %1916 : vector<1x32xf32> to vector<16x32xf32>
      %1921 = arith.mulf %1919, %1920 : vector<16x32xf32>
      %1922 = arith.addf %1915, %1921 : vector<16x32xf32>
      %cst_1286 = arith.constant 0.000000e+00 : f32
      %1923 = vector.broadcast %cst_1286 : f32 to vector<16x32xf32>
      %1924 = arith.maximumf %1922, %1923 : vector<16x32xf32>
      %1925 = arith.addf %1857, %1924 : vector<16x32xf32>
      %c0_1287 = arith.constant 0 : index
      %c0_1288 = arith.constant 0 : index
      %1926 = vector.load %arg4[%c0_1287, %c0_1288] : memref<1x32xf32, #tpu.memory_space<vmem>>, vector<1x32xf32>
      %c0_1289 = arith.constant 0 : index
      %c0_1290 = arith.constant 0 : index
      %1927 = vector.load %arg3[%c0_1289, %c0_1290] : memref<9x32xf32, #tpu.memory_space<vmem>>, vector<1x32xf32>
      %c0_1291 = arith.constant 0 : index
      %c0_1292 = arith.constant 0 : index
      %c26_1293 = arith.constant 26 : index
      %1928 = vector.load %arg2[%c0_1291, %c0_1292, %c26_1293] : memref<1x18x34xf32, #tpu.memory_space<vmem>>, vector<1x16x1xf32>
      %1929 = vector.shape_cast %1928 : vector<1x16x1xf32> to vector<16x1xf32>
      %1930 = vector.broadcast %1929 : vector<16x1xf32> to vector<16x32xf32>
      %1931 = vector.broadcast %1927 : vector<1x32xf32> to vector<16x32xf32>
      %1932 = arith.mulf %1930, %1931 : vector<16x32xf32>
      %1933 = vector.broadcast %1926 : vector<1x32xf32> to vector<16x32xf32>
      %1934 = arith.addf %1933, %1932 : vector<16x32xf32>
      %c1_1294 = arith.constant 1 : index
      %c0_1295 = arith.constant 0 : index
      %1935 = vector.load %arg3[%c1_1294, %c0_1295] : memref<9x32xf32, #tpu.memory_space<vmem>>, vector<1x32xf32>
      %c0_1296 = arith.constant 0 : index
      %c0_1297 = arith.constant 0 : index
      %c27_1298 = arith.constant 27 : index
      %1936 = vector.load %arg2[%c0_1296, %c0_1297, %c27_1298] : memref<1x18x34xf32, #tpu.memory_space<vmem>>, vector<1x16x1xf32>
      %1937 = vector.shape_cast %1936 : vector<1x16x1xf32> to vector<16x1xf32>
      %1938 = vector.broadcast %1937 : vector<16x1xf32> to vector<16x32xf32>
      %1939 = vector.broadcast %1935 : vector<1x32xf32> to vector<16x32xf32>
      %1940 = arith.mulf %1938, %1939 : vector<16x32xf32>
      %1941 = arith.addf %1934, %1940 : vector<16x32xf32>
      %c2_1299 = arith.constant 2 : index
      %c0_1300 = arith.constant 0 : index
      %1942 = vector.load %arg3[%c2_1299, %c0_1300] : memref<9x32xf32, #tpu.memory_space<vmem>>, vector<1x32xf32>
      %c0_1301 = arith.constant 0 : index
      %c0_1302 = arith.constant 0 : index
      %c28 = arith.constant 28 : index
      %1943 = vector.load %arg2[%c0_1301, %c0_1302, %c28] : memref<1x18x34xf32, #tpu.memory_space<vmem>>, vector<1x16x1xf32>
      %1944 = vector.shape_cast %1943 : vector<1x16x1xf32> to vector<16x1xf32>
      %1945 = vector.broadcast %1944 : vector<16x1xf32> to vector<16x32xf32>
      %1946 = vector.broadcast %1942 : vector<1x32xf32> to vector<16x32xf32>
      %1947 = arith.mulf %1945, %1946 : vector<16x32xf32>
      %1948 = arith.addf %1941, %1947 : vector<16x32xf32>
      %c3_1303 = arith.constant 3 : index
      %c0_1304 = arith.constant 0 : index
      %1949 = vector.load %arg3[%c3_1303, %c0_1304] : memref<9x32xf32, #tpu.memory_space<vmem>>, vector<1x32xf32>
      %c0_1305 = arith.constant 0 : index
      %c1_1306 = arith.constant 1 : index
      %c26_1307 = arith.constant 26 : index
      %1950 = vector.load %arg2[%c0_1305, %c1_1306, %c26_1307] : memref<1x18x34xf32, #tpu.memory_space<vmem>>, vector<1x16x1xf32>
      %1951 = vector.shape_cast %1950 : vector<1x16x1xf32> to vector<16x1xf32>
      %1952 = vector.broadcast %1951 : vector<16x1xf32> to vector<16x32xf32>
      %1953 = vector.broadcast %1949 : vector<1x32xf32> to vector<16x32xf32>
      %1954 = arith.mulf %1952, %1953 : vector<16x32xf32>
      %1955 = arith.addf %1948, %1954 : vector<16x32xf32>
      %c4_1308 = arith.constant 4 : index
      %c0_1309 = arith.constant 0 : index
      %1956 = vector.load %arg3[%c4_1308, %c0_1309] : memref<9x32xf32, #tpu.memory_space<vmem>>, vector<1x32xf32>
      %c0_1310 = arith.constant 0 : index
      %c1_1311 = arith.constant 1 : index
      %c27_1312 = arith.constant 27 : index
      %1957 = vector.load %arg2[%c0_1310, %c1_1311, %c27_1312] : memref<1x18x34xf32, #tpu.memory_space<vmem>>, vector<1x16x1xf32>
      %1958 = vector.shape_cast %1957 : vector<1x16x1xf32> to vector<16x1xf32>
      %1959 = vector.broadcast %1958 : vector<16x1xf32> to vector<16x32xf32>
      %1960 = vector.broadcast %1956 : vector<1x32xf32> to vector<16x32xf32>
      %1961 = arith.mulf %1959, %1960 : vector<16x32xf32>
      %1962 = arith.addf %1955, %1961 : vector<16x32xf32>
      %c5_1313 = arith.constant 5 : index
      %c0_1314 = arith.constant 0 : index
      %1963 = vector.load %arg3[%c5_1313, %c0_1314] : memref<9x32xf32, #tpu.memory_space<vmem>>, vector<1x32xf32>
      %c0_1315 = arith.constant 0 : index
      %c1_1316 = arith.constant 1 : index
      %c28_1317 = arith.constant 28 : index
      %1964 = vector.load %arg2[%c0_1315, %c1_1316, %c28_1317] : memref<1x18x34xf32, #tpu.memory_space<vmem>>, vector<1x16x1xf32>
      %1965 = vector.shape_cast %1964 : vector<1x16x1xf32> to vector<16x1xf32>
      %1966 = vector.broadcast %1965 : vector<16x1xf32> to vector<16x32xf32>
      %1967 = vector.broadcast %1963 : vector<1x32xf32> to vector<16x32xf32>
      %1968 = arith.mulf %1966, %1967 : vector<16x32xf32>
      %1969 = arith.addf %1962, %1968 : vector<16x32xf32>
      %c6_1318 = arith.constant 6 : index
      %c0_1319 = arith.constant 0 : index
      %1970 = vector.load %arg3[%c6_1318, %c0_1319] : memref<9x32xf32, #tpu.memory_space<vmem>>, vector<1x32xf32>
      %c0_1320 = arith.constant 0 : index
      %c2_1321 = arith.constant 2 : index
      %c26_1322 = arith.constant 26 : index
      %1971 = vector.load %arg2[%c0_1320, %c2_1321, %c26_1322] : memref<1x18x34xf32, #tpu.memory_space<vmem>>, vector<1x16x1xf32>
      %1972 = vector.shape_cast %1971 : vector<1x16x1xf32> to vector<16x1xf32>
      %1973 = vector.broadcast %1972 : vector<16x1xf32> to vector<16x32xf32>
      %1974 = vector.broadcast %1970 : vector<1x32xf32> to vector<16x32xf32>
      %1975 = arith.mulf %1973, %1974 : vector<16x32xf32>
      %1976 = arith.addf %1969, %1975 : vector<16x32xf32>
      %c7_1323 = arith.constant 7 : index
      %c0_1324 = arith.constant 0 : index
      %1977 = vector.load %arg3[%c7_1323, %c0_1324] : memref<9x32xf32, #tpu.memory_space<vmem>>, vector<1x32xf32>
      %c0_1325 = arith.constant 0 : index
      %c2_1326 = arith.constant 2 : index
      %c27_1327 = arith.constant 27 : index
      %1978 = vector.load %arg2[%c0_1325, %c2_1326, %c27_1327] : memref<1x18x34xf32, #tpu.memory_space<vmem>>, vector<1x16x1xf32>
      %1979 = vector.shape_cast %1978 : vector<1x16x1xf32> to vector<16x1xf32>
      %1980 = vector.broadcast %1979 : vector<16x1xf32> to vector<16x32xf32>
      %1981 = vector.broadcast %1977 : vector<1x32xf32> to vector<16x32xf32>
      %1982 = arith.mulf %1980, %1981 : vector<16x32xf32>
      %1983 = arith.addf %1976, %1982 : vector<16x32xf32>
      %c8_1328 = arith.constant 8 : index
      %c0_1329 = arith.constant 0 : index
      %1984 = vector.load %arg3[%c8_1328, %c0_1329] : memref<9x32xf32, #tpu.memory_space<vmem>>, vector<1x32xf32>
      %c0_1330 = arith.constant 0 : index
      %c2_1331 = arith.constant 2 : index
      %c28_1332 = arith.constant 28 : index
      %1985 = vector.load %arg2[%c0_1330, %c2_1331, %c28_1332] : memref<1x18x34xf32, #tpu.memory_space<vmem>>, vector<1x16x1xf32>
      %1986 = vector.shape_cast %1985 : vector<1x16x1xf32> to vector<16x1xf32>
      %1987 = vector.broadcast %1986 : vector<16x1xf32> to vector<16x32xf32>
      %1988 = vector.broadcast %1984 : vector<1x32xf32> to vector<16x32xf32>
      %1989 = arith.mulf %1987, %1988 : vector<16x32xf32>
      %1990 = arith.addf %1983, %1989 : vector<16x32xf32>
      %cst_1333 = arith.constant 0.000000e+00 : f32
      %1991 = vector.broadcast %cst_1333 : f32 to vector<16x32xf32>
      %1992 = arith.maximumf %1990, %1991 : vector<16x32xf32>
      %1993 = arith.addf %1925, %1992 : vector<16x32xf32>
      %c0_1334 = arith.constant 0 : index
      %c0_1335 = arith.constant 0 : index
      %1994 = vector.load %arg4[%c0_1334, %c0_1335] : memref<1x32xf32, #tpu.memory_space<vmem>>, vector<1x32xf32>
      %c0_1336 = arith.constant 0 : index
      %c0_1337 = arith.constant 0 : index
      %1995 = vector.load %arg3[%c0_1336, %c0_1337] : memref<9x32xf32, #tpu.memory_space<vmem>>, vector<1x32xf32>
      %c0_1338 = arith.constant 0 : index
      %c0_1339 = arith.constant 0 : index
      %c27_1340 = arith.constant 27 : index
      %1996 = vector.load %arg2[%c0_1338, %c0_1339, %c27_1340] : memref<1x18x34xf32, #tpu.memory_space<vmem>>, vector<1x16x1xf32>
      %1997 = vector.shape_cast %1996 : vector<1x16x1xf32> to vector<16x1xf32>
      %1998 = vector.broadcast %1997 : vector<16x1xf32> to vector<16x32xf32>
      %1999 = vector.broadcast %1995 : vector<1x32xf32> to vector<16x32xf32>
      %2000 = arith.mulf %1998, %1999 : vector<16x32xf32>
      %2001 = vector.broadcast %1994 : vector<1x32xf32> to vector<16x32xf32>
      %2002 = arith.addf %2001, %2000 : vector<16x32xf32>
      %c1_1341 = arith.constant 1 : index
      %c0_1342 = arith.constant 0 : index
      %2003 = vector.load %arg3[%c1_1341, %c0_1342] : memref<9x32xf32, #tpu.memory_space<vmem>>, vector<1x32xf32>
      %c0_1343 = arith.constant 0 : index
      %c0_1344 = arith.constant 0 : index
      %c28_1345 = arith.constant 28 : index
      %2004 = vector.load %arg2[%c0_1343, %c0_1344, %c28_1345] : memref<1x18x34xf32, #tpu.memory_space<vmem>>, vector<1x16x1xf32>
      %2005 = vector.shape_cast %2004 : vector<1x16x1xf32> to vector<16x1xf32>
      %2006 = vector.broadcast %2005 : vector<16x1xf32> to vector<16x32xf32>
      %2007 = vector.broadcast %2003 : vector<1x32xf32> to vector<16x32xf32>
      %2008 = arith.mulf %2006, %2007 : vector<16x32xf32>
      %2009 = arith.addf %2002, %2008 : vector<16x32xf32>
      %c2_1346 = arith.constant 2 : index
      %c0_1347 = arith.constant 0 : index
      %2010 = vector.load %arg3[%c2_1346, %c0_1347] : memref<9x32xf32, #tpu.memory_space<vmem>>, vector<1x32xf32>
      %c0_1348 = arith.constant 0 : index
      %c0_1349 = arith.constant 0 : index
      %c29 = arith.constant 29 : index
      %2011 = vector.load %arg2[%c0_1348, %c0_1349, %c29] : memref<1x18x34xf32, #tpu.memory_space<vmem>>, vector<1x16x1xf32>
      %2012 = vector.shape_cast %2011 : vector<1x16x1xf32> to vector<16x1xf32>
      %2013 = vector.broadcast %2012 : vector<16x1xf32> to vector<16x32xf32>
      %2014 = vector.broadcast %2010 : vector<1x32xf32> to vector<16x32xf32>
      %2015 = arith.mulf %2013, %2014 : vector<16x32xf32>
      %2016 = arith.addf %2009, %2015 : vector<16x32xf32>
      %c3_1350 = arith.constant 3 : index
      %c0_1351 = arith.constant 0 : index
      %2017 = vector.load %arg3[%c3_1350, %c0_1351] : memref<9x32xf32, #tpu.memory_space<vmem>>, vector<1x32xf32>
      %c0_1352 = arith.constant 0 : index
      %c1_1353 = arith.constant 1 : index
      %c27_1354 = arith.constant 27 : index
      %2018 = vector.load %arg2[%c0_1352, %c1_1353, %c27_1354] : memref<1x18x34xf32, #tpu.memory_space<vmem>>, vector<1x16x1xf32>
      %2019 = vector.shape_cast %2018 : vector<1x16x1xf32> to vector<16x1xf32>
      %2020 = vector.broadcast %2019 : vector<16x1xf32> to vector<16x32xf32>
      %2021 = vector.broadcast %2017 : vector<1x32xf32> to vector<16x32xf32>
      %2022 = arith.mulf %2020, %2021 : vector<16x32xf32>
      %2023 = arith.addf %2016, %2022 : vector<16x32xf32>
      %c4_1355 = arith.constant 4 : index
      %c0_1356 = arith.constant 0 : index
      %2024 = vector.load %arg3[%c4_1355, %c0_1356] : memref<9x32xf32, #tpu.memory_space<vmem>>, vector<1x32xf32>
      %c0_1357 = arith.constant 0 : index
      %c1_1358 = arith.constant 1 : index
      %c28_1359 = arith.constant 28 : index
      %2025 = vector.load %arg2[%c0_1357, %c1_1358, %c28_1359] : memref<1x18x34xf32, #tpu.memory_space<vmem>>, vector<1x16x1xf32>
      %2026 = vector.shape_cast %2025 : vector<1x16x1xf32> to vector<16x1xf32>
      %2027 = vector.broadcast %2026 : vector<16x1xf32> to vector<16x32xf32>
      %2028 = vector.broadcast %2024 : vector<1x32xf32> to vector<16x32xf32>
      %2029 = arith.mulf %2027, %2028 : vector<16x32xf32>
      %2030 = arith.addf %2023, %2029 : vector<16x32xf32>
      %c5_1360 = arith.constant 5 : index
      %c0_1361 = arith.constant 0 : index
      %2031 = vector.load %arg3[%c5_1360, %c0_1361] : memref<9x32xf32, #tpu.memory_space<vmem>>, vector<1x32xf32>
      %c0_1362 = arith.constant 0 : index
      %c1_1363 = arith.constant 1 : index
      %c29_1364 = arith.constant 29 : index
      %2032 = vector.load %arg2[%c0_1362, %c1_1363, %c29_1364] : memref<1x18x34xf32, #tpu.memory_space<vmem>>, vector<1x16x1xf32>
      %2033 = vector.shape_cast %2032 : vector<1x16x1xf32> to vector<16x1xf32>
      %2034 = vector.broadcast %2033 : vector<16x1xf32> to vector<16x32xf32>
      %2035 = vector.broadcast %2031 : vector<1x32xf32> to vector<16x32xf32>
      %2036 = arith.mulf %2034, %2035 : vector<16x32xf32>
      %2037 = arith.addf %2030, %2036 : vector<16x32xf32>
      %c6_1365 = arith.constant 6 : index
      %c0_1366 = arith.constant 0 : index
      %2038 = vector.load %arg3[%c6_1365, %c0_1366] : memref<9x32xf32, #tpu.memory_space<vmem>>, vector<1x32xf32>
      %c0_1367 = arith.constant 0 : index
      %c2_1368 = arith.constant 2 : index
      %c27_1369 = arith.constant 27 : index
      %2039 = vector.load %arg2[%c0_1367, %c2_1368, %c27_1369] : memref<1x18x34xf32, #tpu.memory_space<vmem>>, vector<1x16x1xf32>
      %2040 = vector.shape_cast %2039 : vector<1x16x1xf32> to vector<16x1xf32>
      %2041 = vector.broadcast %2040 : vector<16x1xf32> to vector<16x32xf32>
      %2042 = vector.broadcast %2038 : vector<1x32xf32> to vector<16x32xf32>
      %2043 = arith.mulf %2041, %2042 : vector<16x32xf32>
      %2044 = arith.addf %2037, %2043 : vector<16x32xf32>
      %c7_1370 = arith.constant 7 : index
      %c0_1371 = arith.constant 0 : index
      %2045 = vector.load %arg3[%c7_1370, %c0_1371] : memref<9x32xf32, #tpu.memory_space<vmem>>, vector<1x32xf32>
      %c0_1372 = arith.constant 0 : index
      %c2_1373 = arith.constant 2 : index
      %c28_1374 = arith.constant 28 : index
      %2046 = vector.load %arg2[%c0_1372, %c2_1373, %c28_1374] : memref<1x18x34xf32, #tpu.memory_space<vmem>>, vector<1x16x1xf32>
      %2047 = vector.shape_cast %2046 : vector<1x16x1xf32> to vector<16x1xf32>
      %2048 = vector.broadcast %2047 : vector<16x1xf32> to vector<16x32xf32>
      %2049 = vector.broadcast %2045 : vector<1x32xf32> to vector<16x32xf32>
      %2050 = arith.mulf %2048, %2049 : vector<16x32xf32>
      %2051 = arith.addf %2044, %2050 : vector<16x32xf32>
      %c8_1375 = arith.constant 8 : index
      %c0_1376 = arith.constant 0 : index
      %2052 = vector.load %arg3[%c8_1375, %c0_1376] : memref<9x32xf32, #tpu.memory_space<vmem>>, vector<1x32xf32>
      %c0_1377 = arith.constant 0 : index
      %c2_1378 = arith.constant 2 : index
      %c29_1379 = arith.constant 29 : index
      %2053 = vector.load %arg2[%c0_1377, %c2_1378, %c29_1379] : memref<1x18x34xf32, #tpu.memory_space<vmem>>, vector<1x16x1xf32>
      %2054 = vector.shape_cast %2053 : vector<1x16x1xf32> to vector<16x1xf32>
      %2055 = vector.broadcast %2054 : vector<16x1xf32> to vector<16x32xf32>
      %2056 = vector.broadcast %2052 : vector<1x32xf32> to vector<16x32xf32>
      %2057 = arith.mulf %2055, %2056 : vector<16x32xf32>
      %2058 = arith.addf %2051, %2057 : vector<16x32xf32>
      %cst_1380 = arith.constant 0.000000e+00 : f32
      %2059 = vector.broadcast %cst_1380 : f32 to vector<16x32xf32>
      %2060 = arith.maximumf %2058, %2059 : vector<16x32xf32>
      %2061 = arith.addf %1993, %2060 : vector<16x32xf32>
      %c0_1381 = arith.constant 0 : index
      %c0_1382 = arith.constant 0 : index
      %2062 = vector.load %arg4[%c0_1381, %c0_1382] : memref<1x32xf32, #tpu.memory_space<vmem>>, vector<1x32xf32>
      %c0_1383 = arith.constant 0 : index
      %c0_1384 = arith.constant 0 : index
      %2063 = vector.load %arg3[%c0_1383, %c0_1384] : memref<9x32xf32, #tpu.memory_space<vmem>>, vector<1x32xf32>
      %c0_1385 = arith.constant 0 : index
      %c0_1386 = arith.constant 0 : index
      %c28_1387 = arith.constant 28 : index
      %2064 = vector.load %arg2[%c0_1385, %c0_1386, %c28_1387] : memref<1x18x34xf32, #tpu.memory_space<vmem>>, vector<1x16x1xf32>
      %2065 = vector.shape_cast %2064 : vector<1x16x1xf32> to vector<16x1xf32>
      %2066 = vector.broadcast %2065 : vector<16x1xf32> to vector<16x32xf32>
      %2067 = vector.broadcast %2063 : vector<1x32xf32> to vector<16x32xf32>
      %2068 = arith.mulf %2066, %2067 : vector<16x32xf32>
      %2069 = vector.broadcast %2062 : vector<1x32xf32> to vector<16x32xf32>
      %2070 = arith.addf %2069, %2068 : vector<16x32xf32>
      %c1_1388 = arith.constant 1 : index
      %c0_1389 = arith.constant 0 : index
      %2071 = vector.load %arg3[%c1_1388, %c0_1389] : memref<9x32xf32, #tpu.memory_space<vmem>>, vector<1x32xf32>
      %c0_1390 = arith.constant 0 : index
      %c0_1391 = arith.constant 0 : index
      %c29_1392 = arith.constant 29 : index
      %2072 = vector.load %arg2[%c0_1390, %c0_1391, %c29_1392] : memref<1x18x34xf32, #tpu.memory_space<vmem>>, vector<1x16x1xf32>
      %2073 = vector.shape_cast %2072 : vector<1x16x1xf32> to vector<16x1xf32>
      %2074 = vector.broadcast %2073 : vector<16x1xf32> to vector<16x32xf32>
      %2075 = vector.broadcast %2071 : vector<1x32xf32> to vector<16x32xf32>
      %2076 = arith.mulf %2074, %2075 : vector<16x32xf32>
      %2077 = arith.addf %2070, %2076 : vector<16x32xf32>
      %c2_1393 = arith.constant 2 : index
      %c0_1394 = arith.constant 0 : index
      %2078 = vector.load %arg3[%c2_1393, %c0_1394] : memref<9x32xf32, #tpu.memory_space<vmem>>, vector<1x32xf32>
      %c0_1395 = arith.constant 0 : index
      %c0_1396 = arith.constant 0 : index
      %c30 = arith.constant 30 : index
      %2079 = vector.load %arg2[%c0_1395, %c0_1396, %c30] : memref<1x18x34xf32, #tpu.memory_space<vmem>>, vector<1x16x1xf32>
      %2080 = vector.shape_cast %2079 : vector<1x16x1xf32> to vector<16x1xf32>
      %2081 = vector.broadcast %2080 : vector<16x1xf32> to vector<16x32xf32>
      %2082 = vector.broadcast %2078 : vector<1x32xf32> to vector<16x32xf32>
      %2083 = arith.mulf %2081, %2082 : vector<16x32xf32>
      %2084 = arith.addf %2077, %2083 : vector<16x32xf32>
      %c3_1397 = arith.constant 3 : index
      %c0_1398 = arith.constant 0 : index
      %2085 = vector.load %arg3[%c3_1397, %c0_1398] : memref<9x32xf32, #tpu.memory_space<vmem>>, vector<1x32xf32>
      %c0_1399 = arith.constant 0 : index
      %c1_1400 = arith.constant 1 : index
      %c28_1401 = arith.constant 28 : index
      %2086 = vector.load %arg2[%c0_1399, %c1_1400, %c28_1401] : memref<1x18x34xf32, #tpu.memory_space<vmem>>, vector<1x16x1xf32>
      %2087 = vector.shape_cast %2086 : vector<1x16x1xf32> to vector<16x1xf32>
      %2088 = vector.broadcast %2087 : vector<16x1xf32> to vector<16x32xf32>
      %2089 = vector.broadcast %2085 : vector<1x32xf32> to vector<16x32xf32>
      %2090 = arith.mulf %2088, %2089 : vector<16x32xf32>
      %2091 = arith.addf %2084, %2090 : vector<16x32xf32>
      %c4_1402 = arith.constant 4 : index
      %c0_1403 = arith.constant 0 : index
      %2092 = vector.load %arg3[%c4_1402, %c0_1403] : memref<9x32xf32, #tpu.memory_space<vmem>>, vector<1x32xf32>
      %c0_1404 = arith.constant 0 : index
      %c1_1405 = arith.constant 1 : index
      %c29_1406 = arith.constant 29 : index
      %2093 = vector.load %arg2[%c0_1404, %c1_1405, %c29_1406] : memref<1x18x34xf32, #tpu.memory_space<vmem>>, vector<1x16x1xf32>
      %2094 = vector.shape_cast %2093 : vector<1x16x1xf32> to vector<16x1xf32>
      %2095 = vector.broadcast %2094 : vector<16x1xf32> to vector<16x32xf32>
      %2096 = vector.broadcast %2092 : vector<1x32xf32> to vector<16x32xf32>
      %2097 = arith.mulf %2095, %2096 : vector<16x32xf32>
      %2098 = arith.addf %2091, %2097 : vector<16x32xf32>
      %c5_1407 = arith.constant 5 : index
      %c0_1408 = arith.constant 0 : index
      %2099 = vector.load %arg3[%c5_1407, %c0_1408] : memref<9x32xf32, #tpu.memory_space<vmem>>, vector<1x32xf32>
      %c0_1409 = arith.constant 0 : index
      %c1_1410 = arith.constant 1 : index
      %c30_1411 = arith.constant 30 : index
      %2100 = vector.load %arg2[%c0_1409, %c1_1410, %c30_1411] : memref<1x18x34xf32, #tpu.memory_space<vmem>>, vector<1x16x1xf32>
      %2101 = vector.shape_cast %2100 : vector<1x16x1xf32> to vector<16x1xf32>
      %2102 = vector.broadcast %2101 : vector<16x1xf32> to vector<16x32xf32>
      %2103 = vector.broadcast %2099 : vector<1x32xf32> to vector<16x32xf32>
      %2104 = arith.mulf %2102, %2103 : vector<16x32xf32>
      %2105 = arith.addf %2098, %2104 : vector<16x32xf32>
      %c6_1412 = arith.constant 6 : index
      %c0_1413 = arith.constant 0 : index
      %2106 = vector.load %arg3[%c6_1412, %c0_1413] : memref<9x32xf32, #tpu.memory_space<vmem>>, vector<1x32xf32>
      %c0_1414 = arith.constant 0 : index
      %c2_1415 = arith.constant 2 : index
      %c28_1416 = arith.constant 28 : index
      %2107 = vector.load %arg2[%c0_1414, %c2_1415, %c28_1416] : memref<1x18x34xf32, #tpu.memory_space<vmem>>, vector<1x16x1xf32>
      %2108 = vector.shape_cast %2107 : vector<1x16x1xf32> to vector<16x1xf32>
      %2109 = vector.broadcast %2108 : vector<16x1xf32> to vector<16x32xf32>
      %2110 = vector.broadcast %2106 : vector<1x32xf32> to vector<16x32xf32>
      %2111 = arith.mulf %2109, %2110 : vector<16x32xf32>
      %2112 = arith.addf %2105, %2111 : vector<16x32xf32>
      %c7_1417 = arith.constant 7 : index
      %c0_1418 = arith.constant 0 : index
      %2113 = vector.load %arg3[%c7_1417, %c0_1418] : memref<9x32xf32, #tpu.memory_space<vmem>>, vector<1x32xf32>
      %c0_1419 = arith.constant 0 : index
      %c2_1420 = arith.constant 2 : index
      %c29_1421 = arith.constant 29 : index
      %2114 = vector.load %arg2[%c0_1419, %c2_1420, %c29_1421] : memref<1x18x34xf32, #tpu.memory_space<vmem>>, vector<1x16x1xf32>
      %2115 = vector.shape_cast %2114 : vector<1x16x1xf32> to vector<16x1xf32>
      %2116 = vector.broadcast %2115 : vector<16x1xf32> to vector<16x32xf32>
      %2117 = vector.broadcast %2113 : vector<1x32xf32> to vector<16x32xf32>
      %2118 = arith.mulf %2116, %2117 : vector<16x32xf32>
      %2119 = arith.addf %2112, %2118 : vector<16x32xf32>
      %c8_1422 = arith.constant 8 : index
      %c0_1423 = arith.constant 0 : index
      %2120 = vector.load %arg3[%c8_1422, %c0_1423] : memref<9x32xf32, #tpu.memory_space<vmem>>, vector<1x32xf32>
      %c0_1424 = arith.constant 0 : index
      %c2_1425 = arith.constant 2 : index
      %c30_1426 = arith.constant 30 : index
      %2121 = vector.load %arg2[%c0_1424, %c2_1425, %c30_1426] : memref<1x18x34xf32, #tpu.memory_space<vmem>>, vector<1x16x1xf32>
      %2122 = vector.shape_cast %2121 : vector<1x16x1xf32> to vector<16x1xf32>
      %2123 = vector.broadcast %2122 : vector<16x1xf32> to vector<16x32xf32>
      %2124 = vector.broadcast %2120 : vector<1x32xf32> to vector<16x32xf32>
      %2125 = arith.mulf %2123, %2124 : vector<16x32xf32>
      %2126 = arith.addf %2119, %2125 : vector<16x32xf32>
      %cst_1427 = arith.constant 0.000000e+00 : f32
      %2127 = vector.broadcast %cst_1427 : f32 to vector<16x32xf32>
      %2128 = arith.maximumf %2126, %2127 : vector<16x32xf32>
      %2129 = arith.addf %2061, %2128 : vector<16x32xf32>
      %c0_1428 = arith.constant 0 : index
      %c0_1429 = arith.constant 0 : index
      %2130 = vector.load %arg4[%c0_1428, %c0_1429] : memref<1x32xf32, #tpu.memory_space<vmem>>, vector<1x32xf32>
      %c0_1430 = arith.constant 0 : index
      %c0_1431 = arith.constant 0 : index
      %2131 = vector.load %arg3[%c0_1430, %c0_1431] : memref<9x32xf32, #tpu.memory_space<vmem>>, vector<1x32xf32>
      %c0_1432 = arith.constant 0 : index
      %c0_1433 = arith.constant 0 : index
      %c29_1434 = arith.constant 29 : index
      %2132 = vector.load %arg2[%c0_1432, %c0_1433, %c29_1434] : memref<1x18x34xf32, #tpu.memory_space<vmem>>, vector<1x16x1xf32>
      %2133 = vector.shape_cast %2132 : vector<1x16x1xf32> to vector<16x1xf32>
      %2134 = vector.broadcast %2133 : vector<16x1xf32> to vector<16x32xf32>
      %2135 = vector.broadcast %2131 : vector<1x32xf32> to vector<16x32xf32>
      %2136 = arith.mulf %2134, %2135 : vector<16x32xf32>
      %2137 = vector.broadcast %2130 : vector<1x32xf32> to vector<16x32xf32>
      %2138 = arith.addf %2137, %2136 : vector<16x32xf32>
      %c1_1435 = arith.constant 1 : index
      %c0_1436 = arith.constant 0 : index
      %2139 = vector.load %arg3[%c1_1435, %c0_1436] : memref<9x32xf32, #tpu.memory_space<vmem>>, vector<1x32xf32>
      %c0_1437 = arith.constant 0 : index
      %c0_1438 = arith.constant 0 : index
      %c30_1439 = arith.constant 30 : index
      %2140 = vector.load %arg2[%c0_1437, %c0_1438, %c30_1439] : memref<1x18x34xf32, #tpu.memory_space<vmem>>, vector<1x16x1xf32>
      %2141 = vector.shape_cast %2140 : vector<1x16x1xf32> to vector<16x1xf32>
      %2142 = vector.broadcast %2141 : vector<16x1xf32> to vector<16x32xf32>
      %2143 = vector.broadcast %2139 : vector<1x32xf32> to vector<16x32xf32>
      %2144 = arith.mulf %2142, %2143 : vector<16x32xf32>
      %2145 = arith.addf %2138, %2144 : vector<16x32xf32>
      %c2_1440 = arith.constant 2 : index
      %c0_1441 = arith.constant 0 : index
      %2146 = vector.load %arg3[%c2_1440, %c0_1441] : memref<9x32xf32, #tpu.memory_space<vmem>>, vector<1x32xf32>
      %c0_1442 = arith.constant 0 : index
      %c0_1443 = arith.constant 0 : index
      %c31 = arith.constant 31 : index
      %2147 = vector.load %arg2[%c0_1442, %c0_1443, %c31] : memref<1x18x34xf32, #tpu.memory_space<vmem>>, vector<1x16x1xf32>
      %2148 = vector.shape_cast %2147 : vector<1x16x1xf32> to vector<16x1xf32>
      %2149 = vector.broadcast %2148 : vector<16x1xf32> to vector<16x32xf32>
      %2150 = vector.broadcast %2146 : vector<1x32xf32> to vector<16x32xf32>
      %2151 = arith.mulf %2149, %2150 : vector<16x32xf32>
      %2152 = arith.addf %2145, %2151 : vector<16x32xf32>
      %c3_1444 = arith.constant 3 : index
      %c0_1445 = arith.constant 0 : index
      %2153 = vector.load %arg3[%c3_1444, %c0_1445] : memref<9x32xf32, #tpu.memory_space<vmem>>, vector<1x32xf32>
      %c0_1446 = arith.constant 0 : index
      %c1_1447 = arith.constant 1 : index
      %c29_1448 = arith.constant 29 : index
      %2154 = vector.load %arg2[%c0_1446, %c1_1447, %c29_1448] : memref<1x18x34xf32, #tpu.memory_space<vmem>>, vector<1x16x1xf32>
      %2155 = vector.shape_cast %2154 : vector<1x16x1xf32> to vector<16x1xf32>
      %2156 = vector.broadcast %2155 : vector<16x1xf32> to vector<16x32xf32>
      %2157 = vector.broadcast %2153 : vector<1x32xf32> to vector<16x32xf32>
      %2158 = arith.mulf %2156, %2157 : vector<16x32xf32>
      %2159 = arith.addf %2152, %2158 : vector<16x32xf32>
      %c4_1449 = arith.constant 4 : index
      %c0_1450 = arith.constant 0 : index
      %2160 = vector.load %arg3[%c4_1449, %c0_1450] : memref<9x32xf32, #tpu.memory_space<vmem>>, vector<1x32xf32>
      %c0_1451 = arith.constant 0 : index
      %c1_1452 = arith.constant 1 : index
      %c30_1453 = arith.constant 30 : index
      %2161 = vector.load %arg2[%c0_1451, %c1_1452, %c30_1453] : memref<1x18x34xf32, #tpu.memory_space<vmem>>, vector<1x16x1xf32>
      %2162 = vector.shape_cast %2161 : vector<1x16x1xf32> to vector<16x1xf32>
      %2163 = vector.broadcast %2162 : vector<16x1xf32> to vector<16x32xf32>
      %2164 = vector.broadcast %2160 : vector<1x32xf32> to vector<16x32xf32>
      %2165 = arith.mulf %2163, %2164 : vector<16x32xf32>
      %2166 = arith.addf %2159, %2165 : vector<16x32xf32>
      %c5_1454 = arith.constant 5 : index
      %c0_1455 = arith.constant 0 : index
      %2167 = vector.load %arg3[%c5_1454, %c0_1455] : memref<9x32xf32, #tpu.memory_space<vmem>>, vector<1x32xf32>
      %c0_1456 = arith.constant 0 : index
      %c1_1457 = arith.constant 1 : index
      %c31_1458 = arith.constant 31 : index
      %2168 = vector.load %arg2[%c0_1456, %c1_1457, %c31_1458] : memref<1x18x34xf32, #tpu.memory_space<vmem>>, vector<1x16x1xf32>
      %2169 = vector.shape_cast %2168 : vector<1x16x1xf32> to vector<16x1xf32>
      %2170 = vector.broadcast %2169 : vector<16x1xf32> to vector<16x32xf32>
      %2171 = vector.broadcast %2167 : vector<1x32xf32> to vector<16x32xf32>
      %2172 = arith.mulf %2170, %2171 : vector<16x32xf32>
      %2173 = arith.addf %2166, %2172 : vector<16x32xf32>
      %c6_1459 = arith.constant 6 : index
      %c0_1460 = arith.constant 0 : index
      %2174 = vector.load %arg3[%c6_1459, %c0_1460] : memref<9x32xf32, #tpu.memory_space<vmem>>, vector<1x32xf32>
      %c0_1461 = arith.constant 0 : index
      %c2_1462 = arith.constant 2 : index
      %c29_1463 = arith.constant 29 : index
      %2175 = vector.load %arg2[%c0_1461, %c2_1462, %c29_1463] : memref<1x18x34xf32, #tpu.memory_space<vmem>>, vector<1x16x1xf32>
      %2176 = vector.shape_cast %2175 : vector<1x16x1xf32> to vector<16x1xf32>
      %2177 = vector.broadcast %2176 : vector<16x1xf32> to vector<16x32xf32>
      %2178 = vector.broadcast %2174 : vector<1x32xf32> to vector<16x32xf32>
      %2179 = arith.mulf %2177, %2178 : vector<16x32xf32>
      %2180 = arith.addf %2173, %2179 : vector<16x32xf32>
      %c7_1464 = arith.constant 7 : index
      %c0_1465 = arith.constant 0 : index
      %2181 = vector.load %arg3[%c7_1464, %c0_1465] : memref<9x32xf32, #tpu.memory_space<vmem>>, vector<1x32xf32>
      %c0_1466 = arith.constant 0 : index
      %c2_1467 = arith.constant 2 : index
      %c30_1468 = arith.constant 30 : index
      %2182 = vector.load %arg2[%c0_1466, %c2_1467, %c30_1468] : memref<1x18x34xf32, #tpu.memory_space<vmem>>, vector<1x16x1xf32>
      %2183 = vector.shape_cast %2182 : vector<1x16x1xf32> to vector<16x1xf32>
      %2184 = vector.broadcast %2183 : vector<16x1xf32> to vector<16x32xf32>
      %2185 = vector.broadcast %2181 : vector<1x32xf32> to vector<16x32xf32>
      %2186 = arith.mulf %2184, %2185 : vector<16x32xf32>
      %2187 = arith.addf %2180, %2186 : vector<16x32xf32>
      %c8_1469 = arith.constant 8 : index
      %c0_1470 = arith.constant 0 : index
      %2188 = vector.load %arg3[%c8_1469, %c0_1470] : memref<9x32xf32, #tpu.memory_space<vmem>>, vector<1x32xf32>
      %c0_1471 = arith.constant 0 : index
      %c2_1472 = arith.constant 2 : index
      %c31_1473 = arith.constant 31 : index
      %2189 = vector.load %arg2[%c0_1471, %c2_1472, %c31_1473] : memref<1x18x34xf32, #tpu.memory_space<vmem>>, vector<1x16x1xf32>
      %2190 = vector.shape_cast %2189 : vector<1x16x1xf32> to vector<16x1xf32>
      %2191 = vector.broadcast %2190 : vector<16x1xf32> to vector<16x32xf32>
      %2192 = vector.broadcast %2188 : vector<1x32xf32> to vector<16x32xf32>
      %2193 = arith.mulf %2191, %2192 : vector<16x32xf32>
      %2194 = arith.addf %2187, %2193 : vector<16x32xf32>
      %cst_1474 = arith.constant 0.000000e+00 : f32
      %2195 = vector.broadcast %cst_1474 : f32 to vector<16x32xf32>
      %2196 = arith.maximumf %2194, %2195 : vector<16x32xf32>
      %2197 = arith.addf %2129, %2196 : vector<16x32xf32>
      %c0_1475 = arith.constant 0 : index
      %c0_1476 = arith.constant 0 : index
      %2198 = vector.load %arg4[%c0_1475, %c0_1476] : memref<1x32xf32, #tpu.memory_space<vmem>>, vector<1x32xf32>
      %c0_1477 = arith.constant 0 : index
      %c0_1478 = arith.constant 0 : index
      %2199 = vector.load %arg3[%c0_1477, %c0_1478] : memref<9x32xf32, #tpu.memory_space<vmem>>, vector<1x32xf32>
      %c0_1479 = arith.constant 0 : index
      %c0_1480 = arith.constant 0 : index
      %c30_1481 = arith.constant 30 : index
      %2200 = vector.load %arg2[%c0_1479, %c0_1480, %c30_1481] : memref<1x18x34xf32, #tpu.memory_space<vmem>>, vector<1x16x1xf32>
      %2201 = vector.shape_cast %2200 : vector<1x16x1xf32> to vector<16x1xf32>
      %2202 = vector.broadcast %2201 : vector<16x1xf32> to vector<16x32xf32>
      %2203 = vector.broadcast %2199 : vector<1x32xf32> to vector<16x32xf32>
      %2204 = arith.mulf %2202, %2203 : vector<16x32xf32>
      %2205 = vector.broadcast %2198 : vector<1x32xf32> to vector<16x32xf32>
      %2206 = arith.addf %2205, %2204 : vector<16x32xf32>
      %c1_1482 = arith.constant 1 : index
      %c0_1483 = arith.constant 0 : index
      %2207 = vector.load %arg3[%c1_1482, %c0_1483] : memref<9x32xf32, #tpu.memory_space<vmem>>, vector<1x32xf32>
      %c0_1484 = arith.constant 0 : index
      %c0_1485 = arith.constant 0 : index
      %c31_1486 = arith.constant 31 : index
      %2208 = vector.load %arg2[%c0_1484, %c0_1485, %c31_1486] : memref<1x18x34xf32, #tpu.memory_space<vmem>>, vector<1x16x1xf32>
      %2209 = vector.shape_cast %2208 : vector<1x16x1xf32> to vector<16x1xf32>
      %2210 = vector.broadcast %2209 : vector<16x1xf32> to vector<16x32xf32>
      %2211 = vector.broadcast %2207 : vector<1x32xf32> to vector<16x32xf32>
      %2212 = arith.mulf %2210, %2211 : vector<16x32xf32>
      %2213 = arith.addf %2206, %2212 : vector<16x32xf32>
      %c2_1487 = arith.constant 2 : index
      %c0_1488 = arith.constant 0 : index
      %2214 = vector.load %arg3[%c2_1487, %c0_1488] : memref<9x32xf32, #tpu.memory_space<vmem>>, vector<1x32xf32>
      %c0_1489 = arith.constant 0 : index
      %c0_1490 = arith.constant 0 : index
      %c32 = arith.constant 32 : index
      %2215 = vector.load %arg2[%c0_1489, %c0_1490, %c32] : memref<1x18x34xf32, #tpu.memory_space<vmem>>, vector<1x16x1xf32>
      %2216 = vector.shape_cast %2215 : vector<1x16x1xf32> to vector<16x1xf32>
      %2217 = vector.broadcast %2216 : vector<16x1xf32> to vector<16x32xf32>
      %2218 = vector.broadcast %2214 : vector<1x32xf32> to vector<16x32xf32>
      %2219 = arith.mulf %2217, %2218 : vector<16x32xf32>
      %2220 = arith.addf %2213, %2219 : vector<16x32xf32>
      %c3_1491 = arith.constant 3 : index
      %c0_1492 = arith.constant 0 : index
      %2221 = vector.load %arg3[%c3_1491, %c0_1492] : memref<9x32xf32, #tpu.memory_space<vmem>>, vector<1x32xf32>
      %c0_1493 = arith.constant 0 : index
      %c1_1494 = arith.constant 1 : index
      %c30_1495 = arith.constant 30 : index
      %2222 = vector.load %arg2[%c0_1493, %c1_1494, %c30_1495] : memref<1x18x34xf32, #tpu.memory_space<vmem>>, vector<1x16x1xf32>
      %2223 = vector.shape_cast %2222 : vector<1x16x1xf32> to vector<16x1xf32>
      %2224 = vector.broadcast %2223 : vector<16x1xf32> to vector<16x32xf32>
      %2225 = vector.broadcast %2221 : vector<1x32xf32> to vector<16x32xf32>
      %2226 = arith.mulf %2224, %2225 : vector<16x32xf32>
      %2227 = arith.addf %2220, %2226 : vector<16x32xf32>
      %c4_1496 = arith.constant 4 : index
      %c0_1497 = arith.constant 0 : index
      %2228 = vector.load %arg3[%c4_1496, %c0_1497] : memref<9x32xf32, #tpu.memory_space<vmem>>, vector<1x32xf32>
      %c0_1498 = arith.constant 0 : index
      %c1_1499 = arith.constant 1 : index
      %c31_1500 = arith.constant 31 : index
      %2229 = vector.load %arg2[%c0_1498, %c1_1499, %c31_1500] : memref<1x18x34xf32, #tpu.memory_space<vmem>>, vector<1x16x1xf32>
      %2230 = vector.shape_cast %2229 : vector<1x16x1xf32> to vector<16x1xf32>
      %2231 = vector.broadcast %2230 : vector<16x1xf32> to vector<16x32xf32>
      %2232 = vector.broadcast %2228 : vector<1x32xf32> to vector<16x32xf32>
      %2233 = arith.mulf %2231, %2232 : vector<16x32xf32>
      %2234 = arith.addf %2227, %2233 : vector<16x32xf32>
      %c5_1501 = arith.constant 5 : index
      %c0_1502 = arith.constant 0 : index
      %2235 = vector.load %arg3[%c5_1501, %c0_1502] : memref<9x32xf32, #tpu.memory_space<vmem>>, vector<1x32xf32>
      %c0_1503 = arith.constant 0 : index
      %c1_1504 = arith.constant 1 : index
      %c32_1505 = arith.constant 32 : index
      %2236 = vector.load %arg2[%c0_1503, %c1_1504, %c32_1505] : memref<1x18x34xf32, #tpu.memory_space<vmem>>, vector<1x16x1xf32>
      %2237 = vector.shape_cast %2236 : vector<1x16x1xf32> to vector<16x1xf32>
      %2238 = vector.broadcast %2237 : vector<16x1xf32> to vector<16x32xf32>
      %2239 = vector.broadcast %2235 : vector<1x32xf32> to vector<16x32xf32>
      %2240 = arith.mulf %2238, %2239 : vector<16x32xf32>
      %2241 = arith.addf %2234, %2240 : vector<16x32xf32>
      %c6_1506 = arith.constant 6 : index
      %c0_1507 = arith.constant 0 : index
      %2242 = vector.load %arg3[%c6_1506, %c0_1507] : memref<9x32xf32, #tpu.memory_space<vmem>>, vector<1x32xf32>
      %c0_1508 = arith.constant 0 : index
      %c2_1509 = arith.constant 2 : index
      %c30_1510 = arith.constant 30 : index
      %2243 = vector.load %arg2[%c0_1508, %c2_1509, %c30_1510] : memref<1x18x34xf32, #tpu.memory_space<vmem>>, vector<1x16x1xf32>
      %2244 = vector.shape_cast %2243 : vector<1x16x1xf32> to vector<16x1xf32>
      %2245 = vector.broadcast %2244 : vector<16x1xf32> to vector<16x32xf32>
      %2246 = vector.broadcast %2242 : vector<1x32xf32> to vector<16x32xf32>
      %2247 = arith.mulf %2245, %2246 : vector<16x32xf32>
      %2248 = arith.addf %2241, %2247 : vector<16x32xf32>
      %c7_1511 = arith.constant 7 : index
      %c0_1512 = arith.constant 0 : index
      %2249 = vector.load %arg3[%c7_1511, %c0_1512] : memref<9x32xf32, #tpu.memory_space<vmem>>, vector<1x32xf32>
      %c0_1513 = arith.constant 0 : index
      %c2_1514 = arith.constant 2 : index
      %c31_1515 = arith.constant 31 : index
      %2250 = vector.load %arg2[%c0_1513, %c2_1514, %c31_1515] : memref<1x18x34xf32, #tpu.memory_space<vmem>>, vector<1x16x1xf32>
      %2251 = vector.shape_cast %2250 : vector<1x16x1xf32> to vector<16x1xf32>
      %2252 = vector.broadcast %2251 : vector<16x1xf32> to vector<16x32xf32>
      %2253 = vector.broadcast %2249 : vector<1x32xf32> to vector<16x32xf32>
      %2254 = arith.mulf %2252, %2253 : vector<16x32xf32>
      %2255 = arith.addf %2248, %2254 : vector<16x32xf32>
      %c8_1516 = arith.constant 8 : index
      %c0_1517 = arith.constant 0 : index
      %2256 = vector.load %arg3[%c8_1516, %c0_1517] : memref<9x32xf32, #tpu.memory_space<vmem>>, vector<1x32xf32>
      %c0_1518 = arith.constant 0 : index
      %c2_1519 = arith.constant 2 : index
      %c32_1520 = arith.constant 32 : index
      %2257 = vector.load %arg2[%c0_1518, %c2_1519, %c32_1520] : memref<1x18x34xf32, #tpu.memory_space<vmem>>, vector<1x16x1xf32>
      %2258 = vector.shape_cast %2257 : vector<1x16x1xf32> to vector<16x1xf32>
      %2259 = vector.broadcast %2258 : vector<16x1xf32> to vector<16x32xf32>
      %2260 = vector.broadcast %2256 : vector<1x32xf32> to vector<16x32xf32>
      %2261 = arith.mulf %2259, %2260 : vector<16x32xf32>
      %2262 = arith.addf %2255, %2261 : vector<16x32xf32>
      %cst_1521 = arith.constant 0.000000e+00 : f32
      %2263 = vector.broadcast %cst_1521 : f32 to vector<16x32xf32>
      %2264 = arith.maximumf %2262, %2263 : vector<16x32xf32>
      %2265 = arith.addf %2197, %2264 : vector<16x32xf32>
      %c0_1522 = arith.constant 0 : index
      %c0_1523 = arith.constant 0 : index
      %2266 = vector.load %arg4[%c0_1522, %c0_1523] : memref<1x32xf32, #tpu.memory_space<vmem>>, vector<1x32xf32>
      %c0_1524 = arith.constant 0 : index
      %c0_1525 = arith.constant 0 : index
      %2267 = vector.load %arg3[%c0_1524, %c0_1525] : memref<9x32xf32, #tpu.memory_space<vmem>>, vector<1x32xf32>
      %c0_1526 = arith.constant 0 : index
      %c0_1527 = arith.constant 0 : index
      %c31_1528 = arith.constant 31 : index
      %2268 = vector.load %arg2[%c0_1526, %c0_1527, %c31_1528] : memref<1x18x34xf32, #tpu.memory_space<vmem>>, vector<1x16x1xf32>
      %2269 = vector.shape_cast %2268 : vector<1x16x1xf32> to vector<16x1xf32>
      %2270 = vector.broadcast %2269 : vector<16x1xf32> to vector<16x32xf32>
      %2271 = vector.broadcast %2267 : vector<1x32xf32> to vector<16x32xf32>
      %2272 = arith.mulf %2270, %2271 : vector<16x32xf32>
      %2273 = vector.broadcast %2266 : vector<1x32xf32> to vector<16x32xf32>
      %2274 = arith.addf %2273, %2272 : vector<16x32xf32>
      %c1_1529 = arith.constant 1 : index
      %c0_1530 = arith.constant 0 : index
      %2275 = vector.load %arg3[%c1_1529, %c0_1530] : memref<9x32xf32, #tpu.memory_space<vmem>>, vector<1x32xf32>
      %c0_1531 = arith.constant 0 : index
      %c0_1532 = arith.constant 0 : index
      %c32_1533 = arith.constant 32 : index
      %2276 = vector.load %arg2[%c0_1531, %c0_1532, %c32_1533] : memref<1x18x34xf32, #tpu.memory_space<vmem>>, vector<1x16x1xf32>
      %2277 = vector.shape_cast %2276 : vector<1x16x1xf32> to vector<16x1xf32>
      %2278 = vector.broadcast %2277 : vector<16x1xf32> to vector<16x32xf32>
      %2279 = vector.broadcast %2275 : vector<1x32xf32> to vector<16x32xf32>
      %2280 = arith.mulf %2278, %2279 : vector<16x32xf32>
      %2281 = arith.addf %2274, %2280 : vector<16x32xf32>
      %c2_1534 = arith.constant 2 : index
      %c0_1535 = arith.constant 0 : index
      %2282 = vector.load %arg3[%c2_1534, %c0_1535] : memref<9x32xf32, #tpu.memory_space<vmem>>, vector<1x32xf32>
      %c0_1536 = arith.constant 0 : index
      %c0_1537 = arith.constant 0 : index
      %c33 = arith.constant 33 : index
      %2283 = vector.load %arg2[%c0_1536, %c0_1537, %c33] : memref<1x18x34xf32, #tpu.memory_space<vmem>>, vector<1x16x1xf32>
      %2284 = vector.shape_cast %2283 : vector<1x16x1xf32> to vector<16x1xf32>
      %2285 = vector.broadcast %2284 : vector<16x1xf32> to vector<16x32xf32>
      %2286 = vector.broadcast %2282 : vector<1x32xf32> to vector<16x32xf32>
      %2287 = arith.mulf %2285, %2286 : vector<16x32xf32>
      %2288 = arith.addf %2281, %2287 : vector<16x32xf32>
      %c3_1538 = arith.constant 3 : index
      %c0_1539 = arith.constant 0 : index
      %2289 = vector.load %arg3[%c3_1538, %c0_1539] : memref<9x32xf32, #tpu.memory_space<vmem>>, vector<1x32xf32>
      %c0_1540 = arith.constant 0 : index
      %c1_1541 = arith.constant 1 : index
      %c31_1542 = arith.constant 31 : index
      %2290 = vector.load %arg2[%c0_1540, %c1_1541, %c31_1542] : memref<1x18x34xf32, #tpu.memory_space<vmem>>, vector<1x16x1xf32>
      %2291 = vector.shape_cast %2290 : vector<1x16x1xf32> to vector<16x1xf32>
      %2292 = vector.broadcast %2291 : vector<16x1xf32> to vector<16x32xf32>
      %2293 = vector.broadcast %2289 : vector<1x32xf32> to vector<16x32xf32>
      %2294 = arith.mulf %2292, %2293 : vector<16x32xf32>
      %2295 = arith.addf %2288, %2294 : vector<16x32xf32>
      %c4_1543 = arith.constant 4 : index
      %c0_1544 = arith.constant 0 : index
      %2296 = vector.load %arg3[%c4_1543, %c0_1544] : memref<9x32xf32, #tpu.memory_space<vmem>>, vector<1x32xf32>
      %c0_1545 = arith.constant 0 : index
      %c1_1546 = arith.constant 1 : index
      %c32_1547 = arith.constant 32 : index
      %2297 = vector.load %arg2[%c0_1545, %c1_1546, %c32_1547] : memref<1x18x34xf32, #tpu.memory_space<vmem>>, vector<1x16x1xf32>
      %2298 = vector.shape_cast %2297 : vector<1x16x1xf32> to vector<16x1xf32>
      %2299 = vector.broadcast %2298 : vector<16x1xf32> to vector<16x32xf32>
      %2300 = vector.broadcast %2296 : vector<1x32xf32> to vector<16x32xf32>
      %2301 = arith.mulf %2299, %2300 : vector<16x32xf32>
      %2302 = arith.addf %2295, %2301 : vector<16x32xf32>
      %c5_1548 = arith.constant 5 : index
      %c0_1549 = arith.constant 0 : index
      %2303 = vector.load %arg3[%c5_1548, %c0_1549] : memref<9x32xf32, #tpu.memory_space<vmem>>, vector<1x32xf32>
      %c0_1550 = arith.constant 0 : index
      %c1_1551 = arith.constant 1 : index
      %c33_1552 = arith.constant 33 : index
      %2304 = vector.load %arg2[%c0_1550, %c1_1551, %c33_1552] : memref<1x18x34xf32, #tpu.memory_space<vmem>>, vector<1x16x1xf32>
      %2305 = vector.shape_cast %2304 : vector<1x16x1xf32> to vector<16x1xf32>
      %2306 = vector.broadcast %2305 : vector<16x1xf32> to vector<16x32xf32>
      %2307 = vector.broadcast %2303 : vector<1x32xf32> to vector<16x32xf32>
      %2308 = arith.mulf %2306, %2307 : vector<16x32xf32>
      %2309 = arith.addf %2302, %2308 : vector<16x32xf32>
      %c6_1553 = arith.constant 6 : index
      %c0_1554 = arith.constant 0 : index
      %2310 = vector.load %arg3[%c6_1553, %c0_1554] : memref<9x32xf32, #tpu.memory_space<vmem>>, vector<1x32xf32>
      %c0_1555 = arith.constant 0 : index
      %c2_1556 = arith.constant 2 : index
      %c31_1557 = arith.constant 31 : index
      %2311 = vector.load %arg2[%c0_1555, %c2_1556, %c31_1557] : memref<1x18x34xf32, #tpu.memory_space<vmem>>, vector<1x16x1xf32>
      %2312 = vector.shape_cast %2311 : vector<1x16x1xf32> to vector<16x1xf32>
      %2313 = vector.broadcast %2312 : vector<16x1xf32> to vector<16x32xf32>
      %2314 = vector.broadcast %2310 : vector<1x32xf32> to vector<16x32xf32>
      %2315 = arith.mulf %2313, %2314 : vector<16x32xf32>
      %2316 = arith.addf %2309, %2315 : vector<16x32xf32>
      %c7_1558 = arith.constant 7 : index
      %c0_1559 = arith.constant 0 : index
      %2317 = vector.load %arg3[%c7_1558, %c0_1559] : memref<9x32xf32, #tpu.memory_space<vmem>>, vector<1x32xf32>
      %c0_1560 = arith.constant 0 : index
      %c2_1561 = arith.constant 2 : index
      %c32_1562 = arith.constant 32 : index
      %2318 = vector.load %arg2[%c0_1560, %c2_1561, %c32_1562] : memref<1x18x34xf32, #tpu.memory_space<vmem>>, vector<1x16x1xf32>
      %2319 = vector.shape_cast %2318 : vector<1x16x1xf32> to vector<16x1xf32>
      %2320 = vector.broadcast %2319 : vector<16x1xf32> to vector<16x32xf32>
      %2321 = vector.broadcast %2317 : vector<1x32xf32> to vector<16x32xf32>
      %2322 = arith.mulf %2320, %2321 : vector<16x32xf32>
      %2323 = arith.addf %2316, %2322 : vector<16x32xf32>
      %c8_1563 = arith.constant 8 : index
      %c0_1564 = arith.constant 0 : index
      %2324 = vector.load %arg3[%c8_1563, %c0_1564] : memref<9x32xf32, #tpu.memory_space<vmem>>, vector<1x32xf32>
      %c0_1565 = arith.constant 0 : index
      %c2_1566 = arith.constant 2 : index
      %c33_1567 = arith.constant 33 : index
      %2325 = vector.load %arg2[%c0_1565, %c2_1566, %c33_1567] : memref<1x18x34xf32, #tpu.memory_space<vmem>>, vector<1x16x1xf32>
      %2326 = vector.shape_cast %2325 : vector<1x16x1xf32> to vector<16x1xf32>
      %2327 = vector.broadcast %2326 : vector<16x1xf32> to vector<16x32xf32>
      %2328 = vector.broadcast %2324 : vector<1x32xf32> to vector<16x32xf32>
      %2329 = arith.mulf %2327, %2328 : vector<16x32xf32>
      %2330 = arith.addf %2323, %2329 : vector<16x32xf32>
      %cst_1568 = arith.constant 0.000000e+00 : f32
      %2331 = vector.broadcast %cst_1568 : f32 to vector<16x32xf32>
      %2332 = arith.maximumf %2330, %2331 : vector<16x32xf32>
      %2333 = arith.addf %2265, %2332 : vector<16x32xf32>
      %cst_1569 = arith.constant 3.125000e-02 : f32
      %2334 = vector.broadcast %cst_1569 : f32 to vector<16x32xf32>
      %2335 = arith.mulf %2333, %2334 : vector<16x32xf32>
      %c0_1570 = arith.constant 0 : index
      %c0_1571 = arith.constant 0 : index
      %2336 = vector.load %arg5[%c0_1570, %c0_1571] : memref<16x32xf32, #tpu.memory_space<vmem>>, vector<16x32xf32>
      %2337 = arith.addf %2335, %2336 : vector<16x32xf32>
      %c0_1572 = arith.constant 0 : index
      %c0_1573 = arith.constant 0 : index
      %2338 = vector.load %arg32[%c0_1572, %c0_1573] : memref<16x32xf32, #tpu.memory_space<vmem>>, vector<16x32xf32>
      tpu.vector_store %arg32[%c0_1572, %c0_1573], %2337 {strides = array<i32>} : memref<16x32xf32, #tpu.memory_space<vmem>>, vector<16x32xf32>,
    } else {
    }
    %c0 = arith.constant 0 : index
    %c0_1 = arith.constant 0 : index
    %c0_2 = arith.constant 0 : index
    %3 = vector.load %arg6[%c0, %c0_1, %c0_2] : memref<1x1x16xf32, #tpu.memory_space<vmem>>, vector<1x1x16xf32>
    %4 = vector.shape_cast %3 : vector<1x1x16xf32> to vector<1x16xf32>
    %cst = arith.constant dense<0.000000e+00> : vector<1xf32>
    %5 = vector.multi_reduction <add>, %4, %cst [1] : vector<1x16xf32> to vector<1xf32>
    %6 = vector.shape_cast %5 : vector<1xf32> to vector<1x1xf32>
    %c0_3 = arith.constant 0 : index
    %c0_4 = arith.constant 0 : index
    %7 = vector.load %arg32[%c0_3, %c0_4] : memref<16x32xf32, #tpu.memory_space<vmem>>, vector<16x32xf32>
    %c0_5 = arith.constant 0 : index
    %c0_6 = arith.constant 0 : index
    %c0_7 = arith.constant 0 : index
    %8 = vector.load %arg12[%c0_5, %c0_6, %c0_7] : memref<1x1x32xf32, #tpu.memory_space<vmem>>, vector<1x1x32xf32>
    %9 = vector.shape_cast %8 : vector<1x1x32xf32> to vector<1x32xf32>
    %c0_8 = arith.constant 0 : index
    %c0_9 = arith.constant 0 : index
    %c0_10 = arith.constant 0 : index
    %10 = vector.load %arg13[%c0_8, %c0_9, %c0_10] : memref<1x1x32xf32, #tpu.memory_space<vmem>>, vector<1x1x32xf32>
    %11 = vector.shape_cast %10 : vector<1x1x32xf32> to vector<1x32xf32>
    %cst_11 = arith.constant dense<0.000000e+00> : vector<16xf32>
    %12 = vector.multi_reduction <add>, %7, %cst_11 [1] : vector<16x32xf32> to vector<16xf32>
    %13 = vector.shape_cast %12 : vector<16xf32> to vector<16x1xf32>
    %cst_12 = arith.constant 3.200000e+01 : f32
    %14 = vector.broadcast %cst_12 : f32 to vector<16x1xf32>
    %15 = arith.divf %13, %14 : vector<16x1xf32>
    %16 = vector.broadcast %15 : vector<16x1xf32> to vector<16x32xf32>
    %17 = arith.subf %7, %16 : vector<16x32xf32>
    %18 = vector.broadcast %15 : vector<16x1xf32> to vector<16x32xf32>
    %19 = arith.subf %7, %18 : vector<16x32xf32>
    %20 = arith.mulf %17, %19 : vector<16x32xf32>
    %cst_13 = arith.constant dense<0.000000e+00> : vector<16xf32>
    %21 = vector.multi_reduction <add>, %20, %cst_13 [1] : vector<16x32xf32> to vector<16xf32>
    %22 = vector.shape_cast %21 : vector<16xf32> to vector<16x1xf32>
    %cst_14 = arith.constant 0.0322580636 : f32
    %23 = vector.broadcast %cst_14 : f32 to vector<16x1xf32>
    %24 = arith.mulf %22, %23 : vector<16x1xf32>
    %25 = vector.broadcast %15 : vector<16x1xf32> to vector<16x32xf32>
    %26 = arith.subf %7, %25 : vector<16x32xf32>
    %27 = vector.broadcast %9 : vector<1x32xf32> to vector<16x32xf32>
    %28 = arith.mulf %27, %26 : vector<16x32xf32>
    %29 = math.sqrt %24 : vector<16x1xf32>
    %cst_15 = arith.constant 9.99999997E-7 : f32
    %30 = vector.broadcast %cst_15 : f32 to vector<16x1xf32>
    %31 = arith.addf %29, %30 : vector<16x1xf32>
    %32 = vector.broadcast %31 : vector<16x1xf32> to vector<16x32xf32>
    %33 = arith.divf %28, %32 : vector<16x32xf32>
    %34 = vector.broadcast %11 : vector<1x32xf32> to vector<16x32xf32>
    %35 = arith.addf %33, %34 : vector<16x32xf32>
    %36 = arith.truncf %35 : vector<16x32xf32> to vector<16x32xbf16>
    %c0_16 = arith.constant 0 : index
    %c0_17 = arith.constant 0 : index
    %c0_18 = arith.constant 0 : index
    %37 = vector.load %arg8[%c0_16, %c0_17, %c0_18] : memref<1x32x96xbf16, #tpu.memory_space<vmem>>, vector<1x32x96xbf16>
    %38 = vector.shape_cast %37 : vector<1x32x96xbf16> to vector<32x96xbf16>
    %cst_19 = arith.constant dense<0.000000e+00> : vector<16x96xf32>
    %39 = tpu.matmul %36, %38, %cst_19 {dimension_numbers = #tpu.dot_dimension_numbers<[1], [0], [0], [1], [0, 0, 1, 1], [], []>} : vector<16x32xbf16>, vector<32x96xbf16>, vector<16x96xf32> -> vector<16x96xf32>
    %c0_20 = arith.constant 0 : index
    %c0_21 = arith.constant 0 : index
    %c0_22 = arith.constant 0 : index
    %40 = vector.load %arg9[%c0_20, %c0_21, %c0_22] : memref<1x1x96xf32, #tpu.memory_space<vmem>>, vector<1x1x96xf32>
    %41 = vector.shape_cast %40 : vector<1x1x96xf32> to vector<1x96xf32>
    %42 = vector.broadcast %41 : vector<1x96xf32> to vector<16x96xf32>
    %43 = arith.addf %39, %42 : vector<16x96xf32>
    %44 = arith.truncf %43 : vector<16x96xf32> to vector<16x96xbf16>
    %45 = vector.extract_strided_slice %44 {offsets = [0, 0], sizes = [16, 8], strides = [1, 1]} : vector<16x96xbf16> to vector<16x8xbf16>
    %46 = vector.extract_strided_slice %44 {offsets = [0, 8], sizes = [16, 8], strides = [1, 1]} : vector<16x96xbf16> to vector<16x8xbf16>
    %47 = vector.extract_strided_slice %44 {offsets = [0, 16], sizes = [16, 8], strides = [1, 1]} : vector<16x96xbf16> to vector<16x8xbf16>
    %48 = vector.extract_strided_slice %44 {offsets = [0, 24], sizes = [16, 8], strides = [1, 1]} : vector<16x96xbf16> to vector<16x8xbf16>
    %49 = vector.shape_cast %45 : vector<16x8xbf16> to vector<1x16x8xbf16>
    %50 = vector.shape_cast %46 : vector<16x8xbf16> to vector<1x16x8xbf16>
    %51 = vector.shape_cast %47 : vector<16x8xbf16> to vector<1x16x8xbf16>
    %52 = vector.shape_cast %48 : vector<16x8xbf16> to vector<1x16x8xbf16>
    %53 = tpu.concatenate %49, %50, %51, %52 in 0 : vector<1x16x8xbf16>, vector<1x16x8xbf16>, vector<1x16x8xbf16>, vector<1x16x8xbf16> -> vector<4x16x8xbf16>
    %54 = vector.extract_strided_slice %44 {offsets = [0, 32], sizes = [16, 8], strides = [1, 1]} : vector<16x96xbf16> to vector<16x8xbf16>
    %55 = vector.extract_strided_slice %44 {offsets = [0, 40], sizes = [16, 8], strides = [1, 1]} : vector<16x96xbf16> to vector<16x8xbf16>
    %56 = vector.extract_strided_slice %44 {offsets = [0, 48], sizes = [16, 8], strides = [1, 1]} : vector<16x96xbf16> to vector<16x8xbf16>
    %57 = vector.extract_strided_slice %44 {offsets = [0, 56], sizes = [16, 8], strides = [1, 1]} : vector<16x96xbf16> to vector<16x8xbf16>
    %58 = vector.shape_cast %54 : vector<16x8xbf16> to vector<1x16x8xbf16>
    %59 = vector.shape_cast %55 : vector<16x8xbf16> to vector<1x16x8xbf16>
    %60 = vector.shape_cast %56 : vector<16x8xbf16> to vector<1x16x8xbf16>
    %61 = vector.shape_cast %57 : vector<16x8xbf16> to vector<1x16x8xbf16>
    %62 = tpu.concatenate %58, %59, %60, %61 in 0 : vector<1x16x8xbf16>, vector<1x16x8xbf16>, vector<1x16x8xbf16>, vector<1x16x8xbf16> -> vector<4x16x8xbf16>
    %63 = vector.extract_strided_slice %44 {offsets = [0, 64], sizes = [16, 8], strides = [1, 1]} : vector<16x96xbf16> to vector<16x8xbf16>
    %64 = vector.extract_strided_slice %44 {offsets = [0, 72], sizes = [16, 8], strides = [1, 1]} : vector<16x96xbf16> to vector<16x8xbf16>
    %65 = vector.extract_strided_slice %44 {offsets = [0, 80], sizes = [16, 8], strides = [1, 1]} : vector<16x96xbf16> to vector<16x8xbf16>
    %66 = vector.extract_strided_slice %44 {offsets = [0, 88], sizes = [16, 8], strides = [1, 1]} : vector<16x96xbf16> to vector<16x8xbf16>
    %67 = vector.shape_cast %63 : vector<16x8xbf16> to vector<1x16x8xbf16>
    %68 = vector.shape_cast %64 : vector<16x8xbf16> to vector<1x16x8xbf16>
    %69 = vector.shape_cast %65 : vector<16x8xbf16> to vector<1x16x8xbf16>
    %70 = vector.shape_cast %66 : vector<16x8xbf16> to vector<1x16x8xbf16>
    %71 = tpu.concatenate %67, %68, %69, %70 in 0 : vector<1x16x8xbf16>, vector<1x16x8xbf16>, vector<1x16x8xbf16>, vector<1x16x8xbf16> -> vector<4x16x8xbf16>
    "tpu.trace_start"() <{level = 10 : i32, message = "htk,hsk->hts"}> : () -> ()
    %cst_23 = arith.constant dense<0.000000e+00> : vector<4x16x16xf32>
    %72 = tpu.matmul %53, %62, %cst_23 {dimension_numbers = #tpu.dot_dimension_numbers<[2], [2], [1], [1], [0, 0, 0, 1, 1, 1], [0], [0]>} : vector<4x16x8xbf16>, vector<4x16x8xbf16>, vector<4x16x16xf32> -> vector<4x16x16xf32>
    "tpu.trace_stop"() : () -> ()
    %cst_24 = arith.constant dense<0xFF800000> : vector<4x16xf32>
    %73 = vector.multi_reduction <maximumf>, %72, %cst_24 [2] : vector<4x16x16xf32> to vector<4x16xf32>
    %74 = vector.shape_cast %73 : vector<4x16xf32> to vector<4x16x1xf32>
    %75 = vector.broadcast %74 : vector<4x16x1xf32> to vector<4x16x16xf32>
    %76 = arith.subf %72, %75 : vector<4x16x16xf32>
    %77 = math.exp %76 : vector<4x16x16xf32>
    %cst_25 = arith.constant dense<0.000000e+00> : vector<4x16xf32>
    %78 = vector.multi_reduction <add>, %77, %cst_25 [2] : vector<4x16x16xf32> to vector<4x16xf32>
    %79 = vector.shape_cast %78 : vector<4x16xf32> to vector<4x16x1xf32>
    %80 = tpu.reciprocal %79 {approx = true} : vector<4x16x1xf32> -> vector<4x16x1xf32>
    %81 = vector.broadcast %80 : vector<4x16x1xf32> to vector<4x16x16xf32>
    %82 = arith.mulf %77, %81 : vector<4x16x16xf32>
    %83 = arith.truncf %82 : vector<4x16x16xf32> to vector<4x16x16xbf16>
    "tpu.trace_start"() <{level = 10 : i32, message = "hts,hsk->htk"}> : () -> ()
    %cst_26 = arith.constant dense<0.000000e+00> : vector<4x16x8xf32>
    %84 = tpu.matmul %83, %71, %cst_26 {dimension_numbers = #tpu.dot_dimension_numbers<[2], [1], [1], [2], [0, 0, 0, 1, 1, 2], [0], [0]>} : vector<4x16x16xbf16>, vector<4x16x8xbf16>, vector<4x16x8xf32> -> vector<4x16x8xf32>
    "tpu.trace_stop"() : () -> ()
    %85 = vector.extract_strided_slice %84 {offsets = [0, 0, 0], sizes = [1, 16, 8], strides = [1, 1, 1]} : vector<4x16x8xf32> to vector<1x16x8xf32>
    %86 = vector.shape_cast %85 : vector<1x16x8xf32> to vector<16x8xf32>
    %87 = vector.extract_strided_slice %84 {offsets = [1, 0, 0], sizes = [1, 16, 8], strides = [1, 1, 1]} : vector<4x16x8xf32> to vector<1x16x8xf32>
    %88 = vector.shape_cast %87 : vector<1x16x8xf32> to vector<16x8xf32>
    %89 = vector.extract_strided_slice %84 {offsets = [2, 0, 0], sizes = [1, 16, 8], strides = [1, 1, 1]} : vector<4x16x8xf32> to vector<1x16x8xf32>
    %90 = vector.shape_cast %89 : vector<1x16x8xf32> to vector<16x8xf32>
    %91 = vector.extract_strided_slice %84 {offsets = [3, 0, 0], sizes = [1, 16, 8], strides = [1, 1, 1]} : vector<4x16x8xf32> to vector<1x16x8xf32>
    %92 = vector.shape_cast %91 : vector<1x16x8xf32> to vector<16x8xf32>
    %93 = tpu.concatenate %86, %88, %90, %92 in 1 : vector<16x8xf32>, vector<16x8xf32>, vector<16x8xf32>, vector<16x8xf32> -> vector<16x32xf32>
    %94 = arith.truncf %93 : vector<16x32xf32> to vector<16x32xbf16>
    %c0_27 = arith.constant 0 : index
    %c0_28 = arith.constant 0 : index
    %c0_29 = arith.constant 0 : index
    %95 = vector.load %arg10[%c0_27, %c0_28, %c0_29] : memref<1x32x32xbf16, #tpu.memory_space<vmem>>, vector<1x32x32xbf16>
    %96 = vector.shape_cast %95 : vector<1x32x32xbf16> to vector<32x32xbf16>
    %cst_30 = arith.constant dense<0.000000e+00> : vector<16x32xf32>
    %97 = tpu.matmul %94, %96, %cst_30 {dimension_numbers = #tpu.dot_dimension_numbers<[1], [0], [0], [1], [0, 0, 1, 1], [], []>} : vector<16x32xbf16>, vector<32x32xbf16>, vector<16x32xf32> -> vector<16x32xf32>
    %c0_31 = arith.constant 0 : index
    %c0_32 = arith.constant 0 : index
    %c0_33 = arith.constant 0 : index
    %98 = vector.load %arg11[%c0_31, %c0_32, %c0_33] : memref<1x1x32xf32, #tpu.memory_space<vmem>>, vector<1x1x32xf32>
    %99 = vector.shape_cast %98 : vector<1x1x32xf32> to vector<1x32xf32>
    %100 = vector.broadcast %99 : vector<1x32xf32> to vector<16x32xf32>
    %101 = arith.addf %97, %100 : vector<16x32xf32>
    %102 = arith.addf %7, %101 : vector<16x32xf32>
    %c0_34 = arith.constant 0 : index
    %c0_35 = arith.constant 0 : index
    %c0_36 = arith.constant 0 : index
    %103 = vector.load %arg18[%c0_34, %c0_35, %c0_36] : memref<1x1x32xf32, #tpu.memory_space<vmem>>, vector<1x1x32xf32>
    %104 = vector.shape_cast %103 : vector<1x1x32xf32> to vector<1x32xf32>
    %c0_37 = arith.constant 0 : index
    %c0_38 = arith.constant 0 : index
    %c0_39 = arith.constant 0 : index
    %105 = vector.load %arg19[%c0_37, %c0_38, %c0_39] : memref<1x1x32xf32, #tpu.memory_space<vmem>>, vector<1x1x32xf32>
    %106 = vector.shape_cast %105 : vector<1x1x32xf32> to vector<1x32xf32>
    %cst_40 = arith.constant dense<0.000000e+00> : vector<16xf32>
    %107 = vector.multi_reduction <add>, %102, %cst_40 [1] : vector<16x32xf32> to vector<16xf32>
    %108 = vector.shape_cast %107 : vector<16xf32> to vector<16x1xf32>
    %cst_41 = arith.constant 3.200000e+01 : f32
    %109 = vector.broadcast %cst_41 : f32 to vector<16x1xf32>
    %110 = arith.divf %108, %109 : vector<16x1xf32>
    %111 = vector.broadcast %110 : vector<16x1xf32> to vector<16x32xf32>
    %112 = arith.subf %102, %111 : vector<16x32xf32>
    %113 = vector.broadcast %110 : vector<16x1xf32> to vector<16x32xf32>
    %114 = arith.subf %102, %113 : vector<16x32xf32>
    %115 = arith.mulf %112, %114 : vector<16x32xf32>
    %cst_42 = arith.constant dense<0.000000e+00> : vector<16xf32>
    %116 = vector.multi_reduction <add>, %115, %cst_42 [1] : vector<16x32xf32> to vector<16xf32>
    %117 = vector.shape_cast %116 : vector<16xf32> to vector<16x1xf32>
    %cst_43 = arith.constant 0.0322580636 : f32
    %118 = vector.broadcast %cst_43 : f32 to vector<16x1xf32>
    %119 = arith.mulf %117, %118 : vector<16x1xf32>
    %120 = vector.broadcast %110 : vector<16x1xf32> to vector<16x32xf32>
    %121 = arith.subf %102, %120 : vector<16x32xf32>
    %122 = vector.broadcast %104 : vector<1x32xf32> to vector<16x32xf32>
    %123 = arith.mulf %122, %121 : vector<16x32xf32>
    %124 = math.sqrt %119 : vector<16x1xf32>
    %cst_44 = arith.constant 9.99999997E-7 : f32
    %125 = vector.broadcast %cst_44 : f32 to vector<16x1xf32>
    %126 = arith.addf %124, %125 : vector<16x1xf32>
    %127 = vector.broadcast %126 : vector<16x1xf32> to vector<16x32xf32>
    %128 = arith.divf %123, %127 : vector<16x32xf32>
    %129 = vector.broadcast %106 : vector<1x32xf32> to vector<16x32xf32>
    %130 = arith.addf %128, %129 : vector<16x32xf32>
    %131 = arith.truncf %130 : vector<16x32xf32> to vector<16x32xbf16>
    %c0_45 = arith.constant 0 : index
    %c0_46 = arith.constant 0 : index
    %c0_47 = arith.constant 0 : index
    %132 = vector.load %arg14[%c0_45, %c0_46, %c0_47] : memref<1x32x64xbf16, #tpu.memory_space<vmem>>, vector<1x32x64xbf16>
    %133 = vector.shape_cast %132 : vector<1x32x64xbf16> to vector<32x64xbf16>
    %cst_48 = arith.constant dense<0.000000e+00> : vector<16x64xf32>
    %134 = tpu.matmul %131, %133, %cst_48 {dimension_numbers = #tpu.dot_dimension_numbers<[1], [0], [0], [1], [0, 0, 1, 1], [], []>} : vector<16x32xbf16>, vector<32x64xbf16>, vector<16x64xf32> -> vector<16x64xf32>
    %c0_49 = arith.constant 0 : index
    %c0_50 = arith.constant 0 : index
    %c0_51 = arith.constant 0 : index
    %135 = vector.load %arg15[%c0_49, %c0_50, %c0_51] : memref<1x1x64xf32, #tpu.memory_space<vmem>>, vector<1x1x64xf32>
    %136 = vector.shape_cast %135 : vector<1x1x64xf32> to vector<1x64xf32>
    %137 = vector.broadcast %136 : vector<1x64xf32> to vector<16x64xf32>
    %138 = arith.addf %134, %137 : vector<16x64xf32>
    %cst_52 = arith.constant 0.000000e+00 : f32
    %139 = vector.broadcast %cst_52 : f32 to vector<16x64xf32>
    %140 = arith.maximumf %138, %139 : vector<16x64xf32>
    %141 = arith.truncf %140 : vector<16x64xf32> to vector<16x64xbf16>
    %c0_53 = arith.constant 0 : index
    %c0_54 = arith.constant 0 : index
    %c0_55 = arith.constant 0 : index
    %142 = vector.load %arg16[%c0_53, %c0_54, %c0_55] : memref<1x64x32xbf16, #tpu.memory_space<vmem>>, vector<1x64x32xbf16>
    %143 = vector.shape_cast %142 : vector<1x64x32xbf16> to vector<64x32xbf16>
    %cst_56 = arith.constant dense<0.000000e+00> : vector<16x32xf32>
    %144 = tpu.matmul %141, %143, %cst_56 {dimension_numbers = #tpu.dot_dimension_numbers<[1], [0], [0], [1], [0, 0, 1, 1], [], []>} : vector<16x64xbf16>, vector<64x32xbf16>, vector<16x32xf32> -> vector<16x32xf32>
    %145 = arith.addf %102, %144 : vector<16x32xf32>
    %c0_57 = arith.constant 0 : index
    %c0_58 = arith.constant 0 : index
    %c0_59 = arith.constant 0 : index
    %146 = vector.load %arg17[%c0_57, %c0_58, %c0_59] : memref<1x1x32xf32, #tpu.memory_space<vmem>>, vector<1x1x32xf32>
    %147 = vector.shape_cast %146 : vector<1x1x32xf32> to vector<1x32xf32>
    %148 = vector.broadcast %147 : vector<1x32xf32> to vector<16x32xf32>
    %149 = arith.addf %145, %148 : vector<16x32xf32>
    %c0_60 = arith.constant 0 : index
    %c0_61 = arith.constant 0 : index
    %150 = vector.load %arg32[%c0_60, %c0_61] : memref<16x32xf32, #tpu.memory_space<vmem>>, vector<16x32xf32>
    tpu.vector_store %arg32[%c0_60, %c0_61], %149 {strides = array<i32>} : memref<16x32xf32, #tpu.memory_space<vmem>>, vector<16x32xf32>,
    %c1_i32 = arith.constant 1 : i32
    %151 = arith.cmpi slt, %arg1, %c1_i32 : i32
    %152 = arith.extui %151 : i1 to i32
    %c0_i32_62 = arith.constant 0 : i32
    %153 = arith.cmpi ne, %152, %c0_i32_62 : i32
    scf.if %153 {
      %cst_65 = arith.constant dense<0.000000e+00> : vector<1x32xf32>
      %157 = tpu.matmul %4, %149, %cst_65 {dimension_numbers = #tpu.dot_dimension_numbers<[1], [0], [0], [1], [0, 0, 1, 1], [], []>} : vector<1x16xf32>, vector<16x32xf32>, vector<1x32xf32> -> vector<1x32xf32>
      %158 = vector.broadcast %6 : vector<1x1xf32> to vector<1x32xf32>
      %159 = arith.divf %157, %158 : vector<1x32xf32>
      %c0_66 = arith.constant 0 : index
      %160 = arith.index_cast %arg1 : i32 to index
      %c0_67 = arith.constant 0 : index
      %161 = vector.load %arg30[%c0_66, %160, %c0_67] : memref<1x2x32xf32, #tpu.memory_space<vmem>>, vector<1x1x32xf32>
      %162 = vector.shape_cast %161 : vector<1x1x32xf32> to vector<1x32xf32>
      %163 = vector.shape_cast %159 : vector<1x32xf32> to vector<1x1x32xf32>
      tpu.vector_store %arg30[%c0_66, %160, %c0_67], %163 {strides = array<i32>} : memref<1x2x32xf32, #tpu.memory_space<vmem>>, vector<1x1x32xf32>,
    } else {
    }
    %c1_i32_63 = arith.constant 1 : i32
    %154 = arith.cmpi eq, %arg1, %c1_i32_63 : i32
    %155 = arith.extui %154 : i1 to i32
    %c0_i32_64 = arith.constant 0 : i32
    %156 = arith.cmpi ne, %155, %c0_i32_64 : i32
    scf.if %156 {
      %157 = arith.mulf %149, %149 : vector<16x32xf32>
      %cst_65 = arith.constant dense<0.000000e+00> : vector<16xf32>
      %158 = vector.multi_reduction <add>, %157, %cst_65 [1] : vector<16x32xf32> to vector<16xf32>
      %159 = vector.shape_cast %158 : vector<16xf32> to vector<16x1xf32>
      %160 = math.sqrt %159 : vector<16x1xf32>
      %cst_66 = arith.constant 9.99999996E-13 : f32
      %161 = vector.broadcast %cst_66 : f32 to vector<16x1xf32>
      %162 = arith.maximumf %160, %161 : vector<16x1xf32>
      %163 = vector.broadcast %162 : vector<16x1xf32> to vector<16x32xf32>
      %164 = arith.divf %149, %163 : vector<16x32xf32>
      %c0_67 = arith.constant 0 : index
      %c0_68 = arith.constant 0 : index
      %c0_69 = arith.constant 0 : index
      %165 = vector.load %arg28[%c0_67, %c0_68, %c0_69] : memref<1x16x32xf32, #tpu.memory_space<vmem>>, vector<1x16x32xf32>
      %166 = vector.shape_cast %165 : vector<1x16x32xf32> to vector<16x32xf32>
      %167 = vector.shape_cast %164 : vector<16x32xf32> to vector<1x16x32xf32>
      tpu.vector_store %arg28[%c0_67, %c0_68, %c0_69], %167 {strides = array<i32>} : memref<1x16x32xf32, #tpu.memory_space<vmem>>, vector<1x16x32xf32>,
      %cst_70 = arith.constant dense<0.000000e+00> : vector<1x32xf32>
      %168 = tpu.matmul %4, %164, %cst_70 {dimension_numbers = #tpu.dot_dimension_numbers<[1], [0], [0], [1], [0, 0, 1, 1], [], []>} : vector<1x16xf32>, vector<16x32xf32>, vector<1x32xf32> -> vector<1x32xf32>
      %169 = vector.broadcast %6 : vector<1x1xf32> to vector<1x32xf32>
      %170 = arith.divf %168, %169 : vector<1x32xf32>
      %c0_71 = arith.constant 0 : index
      %171 = arith.index_cast %arg1 : i32 to index
      %c0_72 = arith.constant 0 : index
      %172 = vector.load %arg30[%c0_71, %171, %c0_72] : memref<1x2x32xf32, #tpu.memory_space<vmem>>, vector<1x1x32xf32>
      %173 = vector.shape_cast %172 : vector<1x1x32xf32> to vector<1x32xf32>
      %174 = vector.shape_cast %170 : vector<1x32xf32> to vector<1x1x32xf32>
      tpu.vector_store %arg30[%c0_71, %171, %c0_72], %174 {strides = array<i32>} : memref<1x2x32xf32, #tpu.memory_space<vmem>>, vector<1x1x32xf32>,
      %175 = arith.truncf %164 : vector<16x32xf32> to vector<16x32xbf16>
      %c0_73 = arith.constant 0 : index
      %c0_74 = arith.constant 0 : index
      %176 = vector.load %arg20[%c0_73, %c0_74] : memref<32x64xbf16, #tpu.memory_space<vmem>>, vector<32x64xbf16>
      %cst_75 = arith.constant dense<0.000000e+00> : vector<16x64xf32>
      %177 = tpu.matmul %175, %176, %cst_75 {dimension_numbers = #tpu.dot_dimension_numbers<[1], [0], [0], [1], [0, 0, 1, 1], [], []>} : vector<16x32xbf16>, vector<32x64xbf16>, vector<16x64xf32> -> vector<16x64xf32>
      %c0_76 = arith.constant 0 : index
      %c0_77 = arith.constant 0 : index
      %178 = vector.load %arg21[%c0_76, %c0_77] : memref<1x64xf32, #tpu.memory_space<vmem>>, vector<1x64xf32>
      %179 = vector.broadcast %178 : vector<1x64xf32> to vector<16x64xf32>
      %180 = arith.addf %177, %179 : vector<16x64xf32>
      %cst_78 = arith.constant 0.000000e+00 : f32
      %181 = vector.broadcast %cst_78 : f32 to vector<16x64xf32>
      %182 = arith.maximumf %180, %181 : vector<16x64xf32>
      %c0_79 = arith.constant 0 : index
      %c0_80 = arith.constant 0 : index
      %183 = vector.load %arg22[%c0_79, %c0_80] : memref<1x64xf32, #tpu.memory_space<vmem>>, vector<1x64xf32>
      %184 = vector.broadcast %183 : vector<1x64xf32> to vector<16x64xf32>
      %185 = arith.mulf %182, %184 : vector<16x64xf32>
      %cst_81 = arith.constant dense<0.000000e+00> : vector<16xf32>
      %186 = vector.multi_reduction <add>, %185, %cst_81 [1] : vector<16x64xf32> to vector<16xf32>
      %187 = vector.shape_cast %186 : vector<16xf32> to vector<16x1xf32>
      %c0_82 = arith.constant 0 : index
      %c0_83 = arith.constant 0 : index
      %188 = vector.load %arg23[%c0_82, %c0_83] : memref<1x1xf32, #tpu.memory_space<vmem>>, vector<1x1xf32>
      %189 = vector.broadcast %188 : vector<1x1xf32> to vector<16x1xf32>
      %190 = arith.addf %187, %189 : vector<16x1xf32>
      %c0_84 = arith.constant 0 : index
      %c0_85 = arith.constant 0 : index
      %c0_86 = arith.constant 0 : index
      %191 = vector.load %arg7[%c0_84, %c0_85, %c0_86] : memref<1x16x1xf32, #tpu.memory_space<vmem>>, vector<1x16x1xf32>
      %192 = vector.shape_cast %191 : vector<1x16x1xf32> to vector<16x1xf32>
      %193 = arith.mulf %190, %192 : vector<16x1xf32>
      %c0_87 = arith.constant 0 : index
      %c0_88 = arith.constant 0 : index
      %c0_89 = arith.constant 0 : index
      %194 = vector.load %arg29[%c0_87, %c0_88, %c0_89] : memref<1x16x1xf32, #tpu.memory_space<vmem>>, vector<1x16x1xf32>
      %195 = vector.shape_cast %194 : vector<1x16x1xf32> to vector<16x1xf32>
      %196 = vector.shape_cast %193 : vector<16x1xf32> to vector<1x16x1xf32>
      tpu.vector_store %arg29[%c0_87, %c0_88, %c0_89], %196 {strides = array<i32>} : memref<1x16x1xf32, #tpu.memory_space<vmem>>, vector<1x16x1xf32>,
      %197 = arith.truncf %170 : vector<1x32xf32> to vector<1x32xbf16>
      %c0_90 = arith.constant 0 : index
      %c0_91 = arith.constant 0 : index
      %198 = vector.load %arg24[%c0_90, %c0_91] : memref<32x64xbf16, #tpu.memory_space<vmem>>, vector<32x64xbf16>
      %cst_92 = arith.constant dense<0.000000e+00> : vector<1x64xf32>
      %199 = tpu.matmul %197, %198, %cst_92 {dimension_numbers = #tpu.dot_dimension_numbers<[1], [0], [0], [1], [0, 0, 1, 1], [], []>} : vector<1x32xbf16>, vector<32x64xbf16>, vector<1x64xf32> -> vector<1x64xf32>
      %c0_93 = arith.constant 0 : index
      %c0_94 = arith.constant 0 : index
      %200 = vector.load %arg25[%c0_93, %c0_94] : memref<1x64xf32, #tpu.memory_space<vmem>>, vector<1x64xf32>
      %201 = arith.addf %199, %200 : vector<1x64xf32>
      %cst_95 = arith.constant 0.000000e+00 : f32
      %202 = vector.broadcast %cst_95 : f32 to vector<1x64xf32>
      %203 = arith.maximumf %201, %202 : vector<1x64xf32>
      %c0_96 = arith.constant 0 : index
      %c0_97 = arith.constant 0 : index
      %204 = vector.load %arg26[%c0_96, %c0_97] : memref<1x64xf32, #tpu.memory_space<vmem>>, vector<1x64xf32>
      %205 = arith.mulf %203, %204 : vector<1x64xf32>
      %cst_98 = arith.constant dense<0.000000e+00> : vector<1xf32>
      %206 = vector.multi_reduction <add>, %205, %cst_98 [1] : vector<1x64xf32> to vector<1xf32>
      %207 = vector.shape_cast %206 : vector<1xf32> to vector<1x1xf32>
      %c0_99 = arith.constant 0 : index
      %c0_100 = arith.constant 0 : index
      %208 = vector.load %arg27[%c0_99, %c0_100] : memref<1x1xf32, #tpu.memory_space<vmem>>, vector<1x1xf32>
      %209 = arith.addf %207, %208 : vector<1x1xf32>
      %c0_101 = arith.constant 0 : index
      %c0_102 = arith.constant 0 : index
      %c0_103 = arith.constant 0 : index
      %210 = vector.load %arg31[%c0_101, %c0_102, %c0_103] : memref<1x1x1xf32, #tpu.memory_space<vmem>>, vector<1x1x1xf32>
      %211 = vector.shape_cast %210 : vector<1x1x1xf32> to vector<1x1xf32>
      %212 = vector.shape_cast %209 : vector<1x1xf32> to vector<1x1x1xf32>
      tpu.vector_store %arg31[%c0_101, %c0_102, %c0_103], %212 {strides = array<i32>} : memref<1x1x1xf32, #tpu.memory_space<vmem>>, vector<1x1x1xf32>,
    } else {
    }
    return
  }
  func.func @transform_0(%arg0: i32, %arg1: i32) -> (i32, i32, i32) {
    %c0_i32 = arith.constant 0 : i32
    %c0_i32_0 = arith.constant 0 : i32
    %c0_i32_1 = arith.constant 0 : i32
    return %arg0, %c0_i32, %c0_i32_0 : i32, i32, i32
  }
  func.func @transform_1(%arg0: i32, %arg1: i32) -> (i32, i32) {
    %c0_i32 = arith.constant 0 : i32
    %c0_i32_0 = arith.constant 0 : i32
    %c0_i32_1 = arith.constant 0 : i32
    return %c0_i32, %c0_i32_0 : i32, i32
  }
  func.func @transform_2(%arg0: i32, %arg1: i32) -> (i32, i32) {
    %c0_i32 = arith.constant 0 : i32
    %c0_i32_0 = arith.constant 0 : i32
    %c0_i32_1 = arith.constant 0 : i32
    return %c0_i32, %c0_i32_0 : i32, i32
  }
  func.func @transform_3(%arg0: i32, %arg1: i32) -> (i32, i32) {
    %c0_i32 = arith.constant 0 : i32
    %c0_i32_0 = arith.constant 0 : i32
    %c0_i32_1 = arith.constant 0 : i32
    return %c0_i32, %c0_i32_0 : i32, i32
  }
  func.func @transform_4(%arg0: i32, %arg1: i32) -> (i32, i32, i32) {
    %c0_i32 = arith.constant 0 : i32
    %c0_i32_0 = arith.constant 0 : i32
    %c0_i32_1 = arith.constant 0 : i32
    return %arg0, %c0_i32, %c0_i32_0 : i32, i32, i32
  }
  func.func @transform_5(%arg0: i32, %arg1: i32) -> (i32, i32, i32) {
    %c0_i32 = arith.constant 0 : i32
    %c0_i32_0 = arith.constant 0 : i32
    %c0_i32_1 = arith.constant 0 : i32
    return %arg0, %c0_i32, %c0_i32_0 : i32, i32, i32
  }
  func.func @transform_6(%arg0: i32, %arg1: i32) -> (i32, i32, i32) {
    %c0_i32 = arith.constant 0 : i32
    %c0_i32_0 = arith.constant 0 : i32
    %c0_i32_1 = arith.constant 0 : i32
    return %arg1, %c0_i32, %c0_i32_0 : i32, i32, i32
  }
  func.func @transform_7(%arg0: i32, %arg1: i32) -> (i32, i32, i32) {
    %c0_i32 = arith.constant 0 : i32
    %c0_i32_0 = arith.constant 0 : i32
    %c0_i32_1 = arith.constant 0 : i32
    return %arg1, %c0_i32, %c0_i32_0 : i32, i32, i32
  }
  func.func @transform_8(%arg0: i32, %arg1: i32) -> (i32, i32, i32) {
    %c0_i32 = arith.constant 0 : i32
    %c0_i32_0 = arith.constant 0 : i32
    %c0_i32_1 = arith.constant 0 : i32
    return %arg1, %c0_i32, %c0_i32_0 : i32, i32, i32
  }
  func.func @transform_9(%arg0: i32, %arg1: i32) -> (i32, i32, i32) {
    %c0_i32 = arith.constant 0 : i32
    %c0_i32_0 = arith.constant 0 : i32
    %c0_i32_1 = arith.constant 0 : i32
    return %arg1, %c0_i32, %c0_i32_0 : i32, i32, i32
  }
  func.func @transform_10(%arg0: i32, %arg1: i32) -> (i32, i32, i32) {
    %c0_i32 = arith.constant 0 : i32
    %c0_i32_0 = arith.constant 0 : i32
    %c0_i32_1 = arith.constant 0 : i32
    return %arg1, %c0_i32, %c0_i32_0 : i32, i32, i32
  }
  func.func @transform_11(%arg0: i32, %arg1: i32) -> (i32, i32, i32) {
    %c0_i32 = arith.constant 0 : i32
    %c0_i32_0 = arith.constant 0 : i32
    %c0_i32_1 = arith.constant 0 : i32
    return %arg1, %c0_i32, %c0_i32_0 : i32, i32, i32
  }
  func.func @transform_12(%arg0: i32, %arg1: i32) -> (i32, i32, i32) {
    %c0_i32 = arith.constant 0 : i32
    %c0_i32_0 = arith.constant 0 : i32
    %c0_i32_1 = arith.constant 0 : i32
    return %arg1, %c0_i32, %c0_i32_0 : i32, i32, i32
  }
  func.func @transform_13(%arg0: i32, %arg1: i32) -> (i32, i32, i32) {
    %c0_i32 = arith.constant 0 : i32
    %c0_i32_0 = arith.constant 0 : i32
    %c0_i32_1 = arith.constant 0 : i32
    return %arg1, %c0_i32, %c0_i32_0 : i32, i32, i32
  }
  func.func @transform_14(%arg0: i32, %arg1: i32) -> (i32, i32, i32) {
    %c0_i32 = arith.constant 0 : i32
    %c0_i32_0 = arith.constant 0 : i32
    %c0_i32_1 = arith.constant 0 : i32
    return %arg1, %c0_i32, %c0_i32_0 : i32, i32, i32
  }
  func.func @transform_15(%arg0: i32, %arg1: i32) -> (i32, i32, i32) {
    %c0_i32 = arith.constant 0 : i32
    %c0_i32_0 = arith.constant 0 : i32
    %c0_i32_1 = arith.constant 0 : i32
    return %arg1, %c0_i32, %c0_i32_0 : i32, i32, i32
  }
  func.func @transform_16(%arg0: i32, %arg1: i32) -> (i32, i32, i32) {
    %c0_i32 = arith.constant 0 : i32
    %c0_i32_0 = arith.constant 0 : i32
    %c0_i32_1 = arith.constant 0 : i32
    return %arg1, %c0_i32, %c0_i32_0 : i32, i32, i32
  }
  func.func @transform_17(%arg0: i32, %arg1: i32) -> (i32, i32, i32) {
    %c0_i32 = arith.constant 0 : i32
    %c0_i32_0 = arith.constant 0 : i32
    %c0_i32_1 = arith.constant 0 : i32
    return %arg1, %c0_i32, %c0_i32_0 : i32, i32, i32
  }
  func.func @transform_18(%arg0: i32, %arg1: i32) -> (i32, i32) {
    %c0_i32 = arith.constant 0 : i32
    %c0_i32_0 = arith.constant 0 : i32
    %c0_i32_1 = arith.constant 0 : i32
    return %c0_i32, %c0_i32_0 : i32, i32
  }
  func.func @transform_19(%arg0: i32, %arg1: i32) -> (i32, i32) {
    %c0_i32 = arith.constant 0 : i32
    %c0_i32_0 = arith.constant 0 : i32
    %c0_i32_1 = arith.constant 0 : i32
    return %c0_i32, %c0_i32_0 : i32, i32
  }
  func.func @transform_20(%arg0: i32, %arg1: i32) -> (i32, i32) {
    %c0_i32 = arith.constant 0 : i32
    %c0_i32_0 = arith.constant 0 : i32
    %c0_i32_1 = arith.constant 0 : i32
    return %c0_i32, %c0_i32_0 : i32, i32
  }
  func.func @transform_21(%arg0: i32, %arg1: i32) -> (i32, i32) {
    %c0_i32 = arith.constant 0 : i32
    %c0_i32_0 = arith.constant 0 : i32
    %c0_i32_1 = arith.constant 0 : i32
    return %c0_i32, %c0_i32_0 : i32, i32
  }
  func.func @transform_22(%arg0: i32, %arg1: i32) -> (i32, i32) {
    %c0_i32 = arith.constant 0 : i32
    %c0_i32_0 = arith.constant 0 : i32
    %c0_i32_1 = arith.constant 0 : i32
    return %c0_i32, %c0_i32_0 : i32, i32
  }
  func.func @transform_23(%arg0: i32, %arg1: i32) -> (i32, i32) {
    %c0_i32 = arith.constant 0 : i32
    %c0_i32_0 = arith.constant 0 : i32
    %c0_i32_1 = arith.constant 0 : i32
    return %c0_i32, %c0_i32_0 : i32, i32
  }
  func.func @transform_24(%arg0: i32, %arg1: i32) -> (i32, i32) {
    %c0_i32 = arith.constant 0 : i32
    %c0_i32_0 = arith.constant 0 : i32
    %c0_i32_1 = arith.constant 0 : i32
    return %c0_i32, %c0_i32_0 : i32, i32
  }
  func.func @transform_25(%arg0: i32, %arg1: i32) -> (i32, i32) {
    %c0_i32 = arith.constant 0 : i32
    %c0_i32_0 = arith.constant 0 : i32
    %c0_i32_1 = arith.constant 0 : i32
    return %c0_i32, %c0_i32_0 : i32, i32
  }
  func.func @transform_26(%arg0: i32, %arg1: i32) -> (i32, i32, i32) {
    %c0_i32 = arith.constant 0 : i32
    %c0_i32_0 = arith.constant 0 : i32
    %c0_i32_1 = arith.constant 0 : i32
    return %arg0, %c0_i32, %c0_i32_0 : i32, i32, i32
  }
  func.func @transform_27(%arg0: i32, %arg1: i32) -> (i32, i32, i32) {
    %c0_i32 = arith.constant 0 : i32
    %c0_i32_0 = arith.constant 0 : i32
    %c0_i32_1 = arith.constant 0 : i32
    return %arg0, %c0_i32, %c0_i32_0 : i32, i32, i32
  }
  func.func @transform_28(%arg0: i32, %arg1: i32) -> (i32, i32, i32) {
    %c0_i32 = arith.constant 0 : i32
    %c0_i32_0 = arith.constant 0 : i32
    %c0_i32_1 = arith.constant 0 : i32
    return %arg0, %c0_i32, %c0_i32_0 : i32, i32, i32
  }
  func.func @transform_29(%arg0: i32, %arg1: i32) -> (i32, i32, i32) {
    %c0_i32 = arith.constant 0 : i32
    %c0_i32_0 = arith.constant 0 : i32
    %c0_i32_1 = arith.constant 0 : i32
    return %arg0, %c0_i32, %c0_i32_0 : i32, i32, i32
  }
}

</mosaic_0001>

<llo_original>
// kernel: forward.1
$region0: #{forward.1}
  #allocation0 [shape = 'u32[]', space=smem, size = 0x4, offset = 0x4, fixed_abs, tag = 'smem constant byte address 0x4 - core index']
  #allocation1 [shape = 'u32[144,128]{1,0:T(1,128)}', space=vmem, size = 0x12000, scoped, tag = 'internal scratch']
  #allocation2 [shape = 'f32[16,32]{1,0:T(8,128)}', space=vmem, size = 0x2000, scoped, tag = 'scratch operand']
  #allocation3 [shape = 'f32[1,1]{1,0:T(1,128)S(1)}', space=vmem, size = 0x200, scoped, tag = 'scoped memory for forward.1']
  #allocation4 [shape = 'f32[1,1]{1,0:T(1,128)S(1)}', space=vmem, size = 0x200, scoped, tag = 'scoped memory for forward.1']
  %s0 = inlined_call_operand.smem [shape: u32[30], index: -1, kind: input, shape index: {}]
  %s1 = sld [smem:[%s0]]
  %s2 = scalar_lea.smem %s0, 1
  %s3 = sld [smem:[%s2]]
  %s4 = scalar_lea.smem %s0, 2
  %s5 = sld [smem:[%s4]]
  %s6 = scalar_lea.smem %s0, 3
  %s7 = sld [smem:[%s6]]
  %s8 = scalar_lea.smem %s0, 4
  %s9 = sld [smem:[%s8]]
  %s10 = scalar_lea.smem %s0, 5
  %s11 = sld [smem:[%s10]]
  %s12 = scalar_lea.smem %s0, 6
  %s13 = sld [smem:[%s12]]
  %s14 = scalar_lea.smem %s0, 7
  %s15 = sld [smem:[%s14]]
  %s16 = scalar_lea.smem %s0, 8
  %s17 = sld [smem:[%s16]]
  %s18 = scalar_lea.smem %s0, 9
  %s19 = sld [smem:[%s18]]
  %s20 = scalar_lea.smem %s0, 10
  %s21 = sld [smem:[%s20]]
  %s22 = scalar_lea.smem %s0, 11
  %s23 = sld [smem:[%s22]]
  %s24 = scalar_lea.smem %s0, 12
  %s25 = sld [smem:[%s24]]
  %s26 = scalar_lea.smem %s0, 13
  %s27 = sld [smem:[%s26]]
  %s28 = scalar_lea.smem %s0, 14
  %s29 = sld [smem:[%s28]]
  %s30 = scalar_lea.smem %s0, 15
  %s31 = sld [smem:[%s30]]
  %s32 = scalar_lea.smem %s0, 16
  %s33 = sld [smem:[%s32]]
  %s34 = scalar_lea.smem %s0, 17
  %s35 = sld [smem:[%s34]]
  %s36 = scalar_lea.smem %s0, 18
  %s37 = sld [smem:[%s36]]
  %s38 = scalar_lea.smem %s0, 19
  %s39 = sld [smem:[%s38]]
  %s40 = scalar_lea.smem %s0, 20
  %s41 = sld [smem:[%s40]]
  %s42 = scalar_lea.smem %s0, 21
  %s43 = sld [smem:[%s42]]
  %s44 = scalar_lea.smem %s0, 22
  %s45 = sld [smem:[%s44]]
  %s46 = scalar_lea.smem %s0, 23
  %s47 = sld [smem:[%s46]]
  %s48 = scalar_lea.smem %s0, 24
  %s49 = sld [smem:[%s48]]
  %s50 = scalar_lea.smem %s0, 25
  %s51 = sld [smem:[%s50]]
  %s52 = scalar_lea.smem %s0, 26
  %s53 = sld [smem:[%s52]]
  %s54 = scalar_lea.smem %s0, 27
  %s55 = sld [smem:[%s54]]
  %s56 = scalar_lea.smem %s0, 28
  %s57 = sld [smem:[%s56]]
  %s58 = scalar_lea.smem %s0, 29
  %s59 = sld [smem:[%s58]]
  %60 = xla_tuple %s53, %s55, %s57, %s59
  %s61 = sld [smem:[#allocation0]]
  $region173: #{forward.1} parent=0
    _
  %s63 = ssub.s32 1, %s61
  %s64 = scalar_select 0, %s63, %s61
  %v65 = vstv %s43
  %66 = vst [vmem:[#allocation3] sm:$0x1] %v65
  %v67 = vstv %s51
  %68 = vst [vmem:[#allocation4] sm:$0x1] %v67
  $region1: #{forward.1} parent=0
    #allocation5 [shape = 'u8[16384]{0}', space=vmem, size = 0x4000, scoped, tag = 'output window, operand 0']
    #allocation6 [shape = 's32[2]{0}', space=sflag, size = 0x8, scoped, tag = 'scoped memory for forward.1']
    %69 = vsyncpa [#allocation6], 0
    %s70 = scalar_lea.sflag [#allocation6], 1
    %71 = vsyncpa %s70, 0
    loop: start=0, step=1, limit=6
    $region2: #{forward.1} parent=1 // loop_pre_header
      _
    $region3: #{forward.1} parent=1 // loop_header
      %s73 = sphi 0, %s77
      %p74 = scmp.ge.s32.totalorder %s73, 6
      %s80 = sphi 0, %s92
      %s81 = sphi 0, %s88
      %s82 = sphi 0, %s80
      %s83 = sphi 0, %s81
      %s84 = sphi 0, %s82
      %s85 = sphi 0, %s83
      %s95 = sphi 0, %s97
      %s98 = sphi 0, %s95
      %s99 = sphi 0, %s98
      %s115 = sphi 0, %s99
      %s119 = sphi 0, %s119
      %s121 = sphi 0, %s119
      %s122 = sphi 0, %s121
      %s136 = sphi 0, %s122
      %s140 = sphi 0, %s140
      %s142 = sphi 0, %s140
      %s143 = sphi 0, %s142
      %s157 = sphi 0, %s143
      %s161 = sphi 0, %s161
      %s163 = sphi 0, %s161
      %s164 = sphi 0, %s163
      %s178 = sphi 0, %s164
      %s184 = sphi 0, %s186
      %s187 = sphi 0, %s184
      %s188 = sphi 0, %s187
      %s204 = sphi 0, %s188
      %s210 = sphi 0, %s212
      %s213 = sphi 0, %s210
      %s214 = sphi 0, %s213
      %s230 = sphi 0, %s214
      %s236 = sphi 0, %s238
      %s239 = sphi 0, %s236
      %s240 = sphi 0, %s239
      %s256 = sphi 0, %s240
      %s262 = sphi 0, %s264
      %s265 = sphi 0, %s262
      %s266 = sphi 0, %s265
      %s282 = sphi 0, %s266
      %s288 = sphi 0, %s290
      %s291 = sphi 0, %s288
      %s292 = sphi 0, %s291
      %s308 = sphi 0, %s292
      %s314 = sphi 0, %s316
      %s317 = sphi 0, %s314
      %s318 = sphi 0, %s317
      %s334 = sphi 0, %s318
      %s340 = sphi 0, %s342
      %s343 = sphi 0, %s340
      %s344 = sphi 0, %s343
      %s360 = sphi 0, %s344
      %s366 = sphi 0, %s368
      %s369 = sphi 0, %s366
      %s370 = sphi 0, %s369
      %s386 = sphi 0, %s370
      %s392 = sphi 0, %s394
      %s395 = sphi 0, %s392
      %s396 = sphi 0, %s395
      %s412 = sphi 0, %s396
      %s418 = sphi 0, %s420
      %s421 = sphi 0, %s418
      %s422 = sphi 0, %s421
      %s438 = sphi 0, %s422
      %s444 = sphi 0, %s446
      %s447 = sphi 0, %s444
      %s448 = sphi 0, %s447
      %s464 = sphi 0, %s448
      %s470 = sphi 0, %s472
      %s473 = sphi 0, %s470
      %s474 = sphi 0, %s473
      %s490 = sphi 0, %s474
      %s496 = sphi 0, %s498
      %s499 = sphi 0, %s496
      %s500 = sphi 0, %s499
      %s516 = sphi 0, %s500
      %s522 = sphi 0, %s524
      %s525 = sphi 0, %s522
      %s526 = sphi 0, %s525
      %s542 = sphi 0, %s526
      %s546 = sphi 0, %s546
      %s548 = sphi 0, %s546
      %s549 = sphi 0, %s548
      %s563 = sphi 0, %s549
      %s567 = sphi 0, %s567
      %s569 = sphi 0, %s567
      %s570 = sphi 0, %s569
      %s584 = sphi 0, %s570
      %s588 = sphi 0, %s588
      %s590 = sphi 0, %s588
      %s591 = sphi 0, %s590
      %s605 = sphi 0, %s591
      %s609 = sphi 0, %s609
      %s611 = sphi 0, %s609
      %s612 = sphi 0, %s611
      %s626 = sphi 0, %s612
      %s630 = sphi 0, %s630
      %s632 = sphi 0, %s630
      %s633 = sphi 0, %s632
      %s647 = sphi 0, %s633
      %s651 = sphi 0, %s651
      %s653 = sphi 0, %s651
      %s654 = sphi 0, %s653
      %s668 = sphi 0, %s654
      %s672 = sphi 0, %s672
      %s674 = sphi 0, %s672
      %s675 = sphi 0, %s674
      %s689 = sphi 0, %s675
      %s693 = sphi 0, %s693
      %s695 = sphi 0, %s693
      %s696 = sphi 0, %s695
      %s710 = sphi 0, %s696
      %s716 = sphi 0, %s718
      %s719 = sphi 0, %s716
      %s720 = sphi 0, %s719
      %s736 = sphi 0, %s720
      %s742 = sphi 0, %s744
      %s745 = sphi 0, %s742
      %s746 = sphi 0, %s745
      %s762 = sphi 0, %s746
      %s768 = sphi 0, %s770
      %s771 = sphi 0, %s768
      %s772 = sphi 0, %s771
      %s788 = sphi 0, %s772
      %s794 = sphi 0, %s796
      %s797 = sphi 0, %s794
      %s798 = sphi 0, %s797
      %s814 = sphi 0, %s798
    $region4: #{forward.1} parent=1 // loop_header_branch
      %76 = sbr.rel (%p74) target = $region8
    $region5: #{forward.1} parent=1 // loop_body
      %s78 = ssub.s32 %s73, 1
      %s79 = ssub.s32 %s73, 2
      %s86 = sadd.s32 1, %s81
      %p87 = scmp.ge.s32.totalorder %s86, 2
      %s88 = scalar_select %p87, 0, %s86
      %s89 = sadd.s32 1, %s80
      %s90 = scalar_select %p87, %s89, %s80
      %p91 = scmp.ge.s32.totalorder %s90, 2
      %s92 = scalar_select %p91, 0, %s90
      %s93 = ssub.s32 %s80, %s92
      %p94 = scmp.eq.s32.totalorder %s93, 0
      %s96 = sadd.s32 %s95, 1
      %s97 = scalar_select %p94, %s95, %s96
      %p100 = pneg %p94
      %p101 = scmp.eq.s32.totalorder %s73, 3
      %p102 = por %p100, %p101
      %p103 = scmp.ne.s32.totalorder %s95, %s98
      %p104 = scmp.eq.s32.totalorder %s73, 0
      %p105 = por %p103, %p104
      %p106 = scmp.ne.s32.totalorder %s95, %s98
      %p107 = scmp.eq.s32.totalorder %s78, 3
      %p108 = por %p106, %p107
      %p109 = scmp.ne.s32.totalorder %s98, %s99
      %p110 = scmp.eq.s32.totalorder %s78, 0
      %p111 = por %p109, %p110
      %p112 = scmp.ne.s32.totalorder %s98, %s99
      %p113 = scmp.eq.s32.totalorder %s79, 3
      %p114 = por %p112, %p113
      %p116 = scmp.ne.s32.totalorder %s99, %s115
      %p117 = scmp.eq.s32.totalorder %s79, 0
      %p118 = por %p116, %p117
      %s120 = sadd.s32 %s119, 1
      %p123 = scmp.eq.s32.totalorder %s73, 3
      %p124 = scmp.ne.s32.totalorder %s119, %s121
      %p125 = scmp.eq.s32.totalorder %s73, 0
      %p126 = por %p124, %p125
      %p127 = scmp.ne.s32.totalorder %s119, %s121
      %p128 = scmp.eq.s32.totalorder %s78, 3
      %p129 = por %p127, %p128
      %p130 = scmp.ne.s32.totalorder %s121, %s122
      %p131 = scmp.eq.s32.totalorder %s78, 0
      %p132 = por %p130, %p131
      %p133 = scmp.ne.s32.totalorder %s121, %s122
      %p134 = scmp.eq.s32.totalorder %s79, 3
      %p135 = por %p133, %p134
      %p137 = scmp.ne.s32.totalorder %s122, %s136
      %p138 = scmp.eq.s32.totalorder %s79, 0
      %p139 = por %p137, %p138
      %s141 = sadd.s32 %s140, 1
      %p144 = scmp.eq.s32.totalorder %s73, 3
      %p145 = scmp.ne.s32.totalorder %s140, %s142
      %p146 = scmp.eq.s32.totalorder %s73, 0
      %p147 = por %p145, %p146
      %p148 = scmp.ne.s32.totalorder %s140, %s142
      %p149 = scmp.eq.s32.totalorder %s78, 3
      %p150 = por %p148, %p149
      %p151 = scmp.ne.s32.totalorder %s142, %s143
      %p152 = scmp.eq.s32.totalorder %s78, 0
      %p153 = por %p151, %p152
      %p154 = scmp.ne.s32.totalorder %s142, %s143
      %p155 = scmp.eq.s32.totalorder %s79, 3
      %p156 = por %p154, %p155
      %p158 = scmp.ne.s32.totalorder %s143, %s157
      %p159 = scmp.eq.s32.totalorder %s79, 0
      %p160 = por %p158, %p159
      %s162 = sadd.s32 %s161, 1
      %p165 = scmp.eq.s32.totalorder %s73, 3
      %p166 = scmp.ne.s32.totalorder %s161, %s163
      %p167 = scmp.eq.s32.totalorder %s73, 0
      %p168 = por %p166, %p167
      %p169 = scmp.ne.s32.totalorder %s161, %s163
      %p170 = scmp.eq.s32.totalorder %s78, 3
      %p171 = por %p169, %p170
      %p172 = scmp.ne.s32.totalorder %s163, %s164
      %p173 = scmp.eq.s32.totalorder %s78, 0
      %p174 = por %p172, %p173
      %p175 = scmp.ne.s32.totalorder %s163, %s164
      %p176 = scmp.eq.s32.totalorder %s79, 3
      %p177 = por %p175, %p176
      %p179 = scmp.ne.s32.totalorder %s164, %s178
      %p180 = scmp.eq.s32.totalorder %s79, 0
      %p181 = por %p179, %p180
      %s182 = ssub.s32 %s80, %s92
      %p183 = scmp.eq.s32.totalorder %s182, 0
      %s185 = sadd.s32 %s184, 1
      %s186 = scalar_select %p183, %s184, %s185
      %p189 = pneg %p183
      %p190 = scmp.eq.s32.totalorder %s73, 3
      %p191 = por %p189, %p190
      %p192 = scmp.ne.s32.totalorder %s184, %s187
      %p193 = scmp.eq.s32.totalorder %s73, 0
      %p194 = por %p192, %p193
      %p195 = scmp.ne.s32.totalorder %s184, %s187
      %p196 = scmp.eq.s32.totalorder %s78, 3
      %p197 = por %p195, %p196
      %p198 = scmp.ne.s32.totalorder %s187, %s188
      %p199 = scmp.eq.s32.totalorder %s78, 0
      %p200 = por %p198, %p199
      %p201 = scmp.ne.s32.totalorder %s187, %s188
      %p202 = scmp.eq.s32.totalorder %s79, 3
      %p203 = por %p201, %p202
      %p205 = scmp.ne.s32.totalorder %s188, %s204
      %p206 = scmp.eq.s32.totalorder %s79, 0
      %p207 = por %p205, %p206
      %s208 = ssub.s32 %s80, %s92
      %p209 = scmp.eq.s32.totalorder %s208, 0
      %s211 = sadd.s32 %s210, 1
      %s212 = scalar_select %p209, %s210, %s211
      %p215 = pneg %p209
      %p216 = scmp.eq.s32.totalorder %s73, 3
      %p217 = por %p215, %p216
      %p218 = scmp.ne.s32.totalorder %s210, %s213
      %p219 = scmp.eq.s32.totalorder %s73, 0
      %p220 = por %p218, %p219
      %p221 = scmp.ne.s32.totalorder %s210, %s213
      %p222 = scmp.eq.s32.totalorder %s78, 3
      %p223 = por %p221, %p222
      %p224 = scmp.ne.s32.totalorder %s213, %s214
      %p225 = scmp.eq.s32.totalorder %s78, 0
      %p226 = por %p224, %p225
      %p227 = scmp.ne.s32.totalorder %s213, %s214
      %p228 = scmp.eq.s32.totalorder %s79, 3
      %p229 = por %p227, %p228
      %p231 = scmp.ne.s32.totalorder %s214, %s230
      %p232 = scmp.eq.s32.totalorder %s79, 0
      %p233 = por %p231, %p232
      %s234 = ssub.s32 %s81, %s88
      %p235 = scmp.eq.s32.totalorder %s234, 0
      %s237 = sadd.s32 %s236, 1
      %s238 = scalar_select %p235, %s236, %s237
      %p241 = pneg %p235
      %p242 = scmp.eq.s32.totalorder %s73, 3
      %p243 = por %p241, %p242
      %p244 = scmp.ne.s32.totalorder %s236, %s239
      %p245 = scmp.eq.s32.totalorder %s73, 0
      %p246 = por %p244, %p245
      %p247 = scmp.ne.s32.totalorder %s236, %s239
      %p248 = scmp.eq.s32.totalorder %s78, 3
      %p249 = por %p247, %p248
      %p250 = scmp.ne.s32.totalorder %s239, %s240
      %p251 = scmp.eq.s32.totalorder %s78, 0
      %p252 = por %p250, %p251
      %p253 = scmp.ne.s32.totalorder %s239, %s240
      %p254 = scmp.eq.s32.totalorder %s79, 3
      %p255 = por %p253, %p254
      %p257 = scmp.ne.s32.totalorder %s240, %s256
      %p258 = scmp.eq.s32.totalorder %s79, 0
      %p259 = por %p257, %p258
      %s260 = ssub.s32 %s81, %s88
      %p261 = scmp.eq.s32.totalorder %s260, 0
      %s263 = sadd.s32 %s262, 1
      %s264 = scalar_select %p261, %s262, %s263
      %p267 = pneg %p261
      %p268 = scmp.eq.s32.totalorder %s73, 3
      %p269 = por %p267, %p268
      %p270 = scmp.ne.s32.totalorder %s262, %s265
      %p271 = scmp.eq.s32.totalorder %s73, 0
      %p272 = por %p270, %p271
      %p273 = scmp.ne.s32.totalorder %s262, %s265
      %p274 = scmp.eq.s32.totalorder %s78, 3
      %p275 = por %p273, %p274
      %p276 = scmp.ne.s32.totalorder %s265, %s266
      %p277 = scmp.eq.s32.totalorder %s78, 0
      %p278 = por %p276, %p277
      %p279 = scmp.ne.s32.totalorder %s265, %s266
      %p280 = scmp.eq.s32.totalorder %s79, 3
      %p281 = por %p279, %p280
      %p283 = scmp.ne.s32.totalorder %s266, %s282
      %p284 = scmp.eq.s32.totalorder %s79, 0
      %p285 = por %p283, %p284
      %s286 = ssub.s32 %s81, %s88
      %p287 = scmp.eq.s32.totalorder %s286, 0
      %s289 = sadd.s32 %s288, 1
      %s290 = scalar_select %p287, %s288, %s289
      %p293 = pneg %p287
      %p294 = scmp.eq.s32.totalorder %s73, 3
      %p295 = por %p293, %p294
      %p296 = scmp.ne.s32.totalorder %s288, %s291
      %p297 = scmp.eq.s32.totalorder %s73, 0
      %p298 = por %p296, %p297
      %p299 = scmp.ne.s32.totalorder %s288, %s291
      %p300 = scmp.eq.s32.totalorder %s78, 3
      %p301 = por %p299, %p300
      %p302 = scmp.ne.s32.totalorder %s291, %s292
      %p303 = scmp.eq.s32.totalorder %s78, 0
      %p304 = por %p302, %p303
      %p305 = scmp.ne.s32.totalorder %s291, %s292
      %p306 = scmp.eq.s32.totalorder %s79, 3
      %p307 = por %p305, %p306
      %p309 = scmp.ne.s32.totalorder %s292, %s308
      %p310 = scmp.eq.s32.totalorder %s79, 0
      %p311 = por %p309, %p310
      %s312 = ssub.s32 %s81, %s88
      %p313 = scmp.eq.s32.totalorder %s312, 0
      %s315 = sadd.s32 %s314, 1
      %s316 = scalar_select %p313, %s314, %s315
      %p319 = pneg %p313
      %p320 = scmp.eq.s32.totalorder %s73, 3
      %p321 = por %p319, %p320
      %p322 = scmp.ne.s32.totalorder %s314, %s317
      %p323 = scmp.eq.s32.totalorder %s73, 0
      %p324 = por %p322, %p323
      %p325 = scmp.ne.s32.totalorder %s314, %s317
      %p326 = scmp.eq.s32.totalorder %s78, 3
      %p327 = por %p325, %p326
      %p328 = scmp.ne.s32.totalorder %s317, %s318
      %p329 = scmp.eq.s32.totalorder %s78, 0
      %p330 = por %p328, %p329
      %p331 = scmp.ne.s32.totalorder %s317, %s318
      %p332 = scmp.eq.s32.totalorder %s79, 3
      %p333 = por %p331, %p332
      %p335 = scmp.ne.s32.totalorder %s318, %s334
      %p336 = scmp.eq.s32.totalorder %s79, 0
      %p337 = por %p335, %p336
      %s338 = ssub.s32 %s81, %s88
      %p339 = scmp.eq.s32.totalorder %s338, 0
      %s341 = sadd.s32 %s340, 1
      %s342 = scalar_select %p339, %s340, %s341
      %p345 = pneg %p339
      %p346 = scmp.eq.s32.totalorder %s73, 3
      %p347 = por %p345, %p346
      %p348 = scmp.ne.s32.totalorder %s340, %s343
      %p349 = scmp.eq.s32.totalorder %s73, 0
      %p350 = por %p348, %p349
      %p351 = scmp.ne.s32.totalorder %s340, %s343
      %p352 = scmp.eq.s32.totalorder %s78, 3
      %p353 = por %p351, %p352
      %p354 = scmp.ne.s32.totalorder %s343, %s344
      %p355 = scmp.eq.s32.totalorder %s78, 0
      %p356 = por %p354, %p355
      %p357 = scmp.ne.s32.totalorder %s343, %s344
      %p358 = scmp.eq.s32.totalorder %s79, 3
      %p359 = por %p357, %p358
      %p361 = scmp.ne.s32.totalorder %s344, %s360
      %p362 = scmp.eq.s32.totalorder %s79, 0
      %p363 = por %p361, %p362
      %s364 = ssub.s32 %s81, %s88
      %p365 = scmp.eq.s32.totalorder %s364, 0
      %s367 = sadd.s32 %s366, 1
      %s368 = scalar_select %p365, %s366, %s367
      %p371 = pneg %p365
      %p372 = scmp.eq.s32.totalorder %s73, 3
      %p373 = por %p371, %p372
      %p374 = scmp.ne.s32.totalorder %s366, %s369
      %p375 = scmp.eq.s32.totalorder %s73, 0
      %p376 = por %p374, %p375
      %p377 = scmp.ne.s32.totalorder %s366, %s369
      %p378 = scmp.eq.s32.totalorder %s78, 3
      %p379 = por %p377, %p378
      %p380 = scmp.ne.s32.totalorder %s369, %s370
      %p381 = scmp.eq.s32.totalorder %s78, 0
      %p382 = por %p380, %p381
      %p383 = scmp.ne.s32.totalorder %s369, %s370
      %p384 = scmp.eq.s32.totalorder %s79, 3
      %p385 = por %p383, %p384
      %p387 = scmp.ne.s32.totalorder %s370, %s386
      %p388 = scmp.eq.s32.totalorder %s79, 0
      %p389 = por %p387, %p388
      %s390 = ssub.s32 %s81, %s88
      %p391 = scmp.eq.s32.totalorder %s390, 0
      %s393 = sadd.s32 %s392, 1
      %s394 = scalar_select %p391, %s392, %s393
      %p397 = pneg %p391
      %p398 = scmp.eq.s32.totalorder %s73, 3
      %p399 = por %p397, %p398
      %p400 = scmp.ne.s32.totalorder %s392, %s395
      %p401 = scmp.eq.s32.totalorder %s73, 0
      %p402 = por %p400, %p401
      %p403 = scmp.ne.s32.totalorder %s392, %s395
      %p404 = scmp.eq.s32.totalorder %s78, 3
      %p405 = por %p403, %p404
      %p406 = scmp.ne.s32.totalorder %s395, %s396
      %p407 = scmp.eq.s32.totalorder %s78, 0
      %p408 = por %p406, %p407
      %p409 = scmp.ne.s32.totalorder %s395, %s396
      %p410 = scmp.eq.s32.totalorder %s79, 3
      %p411 = por %p409, %p410
      %p413 = scmp.ne.s32.totalorder %s396, %s412
      %p414 = scmp.eq.s32.totalorder %s79, 0
      %p415 = por %p413, %p414
      %s416 = ssub.s32 %s81, %s88
      %p417 = scmp.eq.s32.totalorder %s416, 0
      %s419 = sadd.s32 %s418, 1
      %s420 = scalar_select %p417, %s418, %s419
      %p423 = pneg %p417
      %p424 = scmp.eq.s32.totalorder %s73, 3
      %p425 = por %p423, %p424
      %p426 = scmp.ne.s32.totalorder %s418, %s421
      %p427 = scmp.eq.s32.totalorder %s73, 0
      %p428 = por %p426, %p427
      %p429 = scmp.ne.s32.totalorder %s418, %s421
      %p430 = scmp.eq.s32.totalorder %s78, 3
      %p431 = por %p429, %p430
      %p432 = scmp.ne.s32.totalorder %s421, %s422
      %p433 = scmp.eq.s32.totalorder %s78, 0
      %p434 = por %p432, %p433
      %p435 = scmp.ne.s32.totalorder %s421, %s422
      %p436 = scmp.eq.s32.totalorder %s79, 3
      %p437 = por %p435, %p436
      %p439 = scmp.ne.s32.totalorder %s422, %s438
      %p440 = scmp.eq.s32.totalorder %s79, 0
      %p441 = por %p439, %p440
      %s442 = ssub.s32 %s81, %s88
      %p443 = scmp.eq.s32.totalorder %s442, 0
      %s445 = sadd.s32 %s444, 1
      %s446 = scalar_select %p443, %s444, %s445
      %p449 = pneg %p443
      %p450 = scmp.eq.s32.totalorder %s73, 3
      %p451 = por %p449, %p450
      %p452 = scmp.ne.s32.totalorder %s444, %s447
      %p453 = scmp.eq.s32.totalorder %s73, 0
      %p454 = por %p452, %p453
      %p455 = scmp.ne.s32.totalorder %s444, %s447
      %p456 = scmp.eq.s32.totalorder %s78, 3
      %p457 = por %p455, %p456
      %p458 = scmp.ne.s32.totalorder %s447, %s448
      %p459 = scmp.eq.s32.totalorder %s78, 0
      %p460 = por %p458, %p459
      %p461 = scmp.ne.s32.totalorder %s447, %s448
      %p462 = scmp.eq.s32.totalorder %s79, 3
      %p463 = por %p461, %p462
      %p465 = scmp.ne.s32.totalorder %s448, %s464
      %p466 = scmp.eq.s32.totalorder %s79, 0
      %p467 = por %p465, %p466
      %s468 = ssub.s32 %s81, %s88
      %p469 = scmp.eq.s32.totalorder %s468, 0
      %s471 = sadd.s32 %s470, 1
      %s472 = scalar_select %p469, %s470, %s471
      %p475 = pneg %p469
      %p476 = scmp.eq.s32.totalorder %s73, 3
      %p477 = por %p475, %p476
      %p478 = scmp.ne.s32.totalorder %s470, %s473
      %p479 = scmp.eq.s32.totalorder %s73, 0
      %p480 = por %p478, %p479
      %p481 = scmp.ne.s32.totalorder %s470, %s473
      %p482 = scmp.eq.s32.totalorder %s78, 3
      %p483 = por %p481, %p482
      %p484 = scmp.ne.s32.totalorder %s473, %s474
      %p485 = scmp.eq.s32.totalorder %s78, 0
      %p486 = por %p484, %p485
      %p487 = scmp.ne.s32.totalorder %s473, %s474
      %p488 = scmp.eq.s32.totalorder %s79, 3
      %p489 = por %p487, %p488
      %p491 = scmp.ne.s32.totalorder %s474, %s490
      %p492 = scmp.eq.s32.totalorder %s79, 0
      %p493 = por %p491, %p492
      %s494 = ssub.s32 %s81, %s88
      %p495 = scmp.eq.s32.totalorder %s494, 0
      %s497 = sadd.s32 %s496, 1
      %s498 = scalar_select %p495, %s496, %s497
      %p501 = pneg %p495
      %p502 = scmp.eq.s32.totalorder %s73, 3
      %p503 = por %p501, %p502
      %p504 = scmp.ne.s32.totalorder %s496, %s499
      %p505 = scmp.eq.s32.totalorder %s73, 0
      %p506 = por %p504, %p505
      %p507 = scmp.ne.s32.totalorder %s496, %s499
      %p508 = scmp.eq.s32.totalorder %s78, 3
      %p509 = por %p507, %p508
      %p510 = scmp.ne.s32.totalorder %s499, %s500
      %p511 = scmp.eq.s32.totalorder %s78, 0
      %p512 = por %p510, %p511
      %p513 = scmp.ne.s32.totalorder %s499, %s500
      %p514 = scmp.eq.s32.totalorder %s79, 3
      %p515 = por %p513, %p514
      %p517 = scmp.ne.s32.totalorder %s500, %s516
      %p518 = scmp.eq.s32.totalorder %s79, 0
      %p519 = por %p517, %p518
      %s520 = ssub.s32 %s81, %s88
      %p521 = scmp.eq.s32.totalorder %s520, 0
      %s523 = sadd.s32 %s522, 1
      %s524 = scalar_select %p521, %s522, %s523
      %p527 = pneg %p521
      %p528 = scmp.eq.s32.totalorder %s73, 3
      %p529 = por %p527, %p528
      %p530 = scmp.ne.s32.totalorder %s522, %s525
      %p531 = scmp.eq.s32.totalorder %s73, 0
      %p532 = por %p530, %p531
      %p533 = scmp.ne.s32.totalorder %s522, %s525
      %p534 = scmp.eq.s32.totalorder %s78, 3
      %p535 = por %p533, %p534
      %p536 = scmp.ne.s32.totalorder %s525, %s526
      %p537 = scmp.eq.s32.totalorder %s78, 0
      %p538 = por %p536, %p537
      %p539 = scmp.ne.s32.totalorder %s525, %s526
      %p540 = scmp.eq.s32.totalorder %s79, 3
      %p541 = por %p539, %p540
      %p543 = scmp.ne.s32.totalorder %s526, %s542
      %p544 = scmp.eq.s32.totalorder %s79, 0
      %p545 = por %p543, %p544
      %s547 = sadd.s32 %s546, 1
      %p550 = scmp.eq.s32.totalorder %s73, 3
      %p551 = scmp.ne.s32.totalorder %s546, %s548
      %p552 = scmp.eq.s32.totalorder %s73, 0
      %p553 = por %p551, %p552
      %p554 = scmp.ne.s32.totalorder %s546, %s548
      %p555 = scmp.eq.s32.totalorder %s78, 3
      %p556 = por %p554, %p555
      %p557 = scmp.ne.s32.totalorder %s548, %s549
      %p558 = scmp.eq.s32.totalorder %s78, 0
      %p559 = por %p557, %p558
      %p560 = scmp.ne.s32.totalorder %s548, %s549
      %p561 = scmp.eq.s32.totalorder %s79, 3
      %p562 = por %p560, %p561
      %p564 = scmp.ne.s32.totalorder %s549, %s563
      %p565 = scmp.eq.s32.totalorder %s79, 0
      %p566 = por %p564, %p565
      %s568 = sadd.s32 %s567, 1
      %p571 = scmp.eq.s32.totalorder %s73, 3
      %p572 = scmp.ne.s32.totalorder %s567, %s569
      %p573 = scmp.eq.s32.totalorder %s73, 0
      %p574 = por %p572, %p573
      %p575 = scmp.ne.s32.totalorder %s567, %s569
      %p576 = scmp.eq.s32.totalorder %s78, 3
      %p577 = por %p575, %p576
      %p578 = scmp.ne.s32.totalorder %s569, %s570
      %p579 = scmp.eq.s32.totalorder %s78, 0
      %p580 = por %p578, %p579
      %p581 = scmp.ne.s32.totalorder %s569, %s570
      %p582 = scmp.eq.s32.totalorder %s79, 3
      %p583 = por %p581, %p582
      %p585 = scmp.ne.s32.totalorder %s570, %s584
      %p586 = scmp.eq.s32.totalorder %s79, 0
      %p587 = por %p585, %p586
      %s589 = sadd.s32 %s588, 1
      %p592 = scmp.eq.s32.totalorder %s73, 3
      %p593 = scmp.ne.s32.totalorder %s588, %s590
      %p594 = scmp.eq.s32.totalorder %s73, 0
      %p595 = por %p593, %p594
      %p596 = scmp.ne.s32.totalorder %s588, %s590
      %p597 = scmp.eq.s32.totalorder %s78, 3
      %p598 = por %p596, %p597
      %p599 = scmp.ne.s32.totalorder %s590, %s591
      %p600 = scmp.eq.s32.totalorder %s78, 0
      %p601 = por %p599, %p600
      %p602 = scmp.ne.s32.totalorder %s590, %s591
      %p603 = scmp.eq.s32.totalorder %s79, 3
      %p604 = por %p602, %p603
      %p606 = scmp.ne.s32.totalorder %s591, %s605
      %p607 = scmp.eq.s32.totalorder %s79, 0
      %p608 = por %p606, %p607
      %s610 = sadd.s32 %s609, 1
      %p613 = scmp.eq.s32.totalorder %s73, 3
      %p614 = scmp.ne.s32.totalorder %s609, %s611
      %p615 = scmp.eq.s32.totalorder %s73, 0
      %p616 = por %p614, %p615
      %p617 = scmp.ne.s32.totalorder %s609, %s611
      %p618 = scmp.eq.s32.totalorder %s78, 3
      %p619 = por %p617, %p618
      %p620 = scmp.ne.s32.totalorder %s611, %s612
      %p621 = scmp.eq.s32.totalorder %s78, 0
      %p622 = por %p620, %p621
      %p623 = scmp.ne.s32.totalorder %s611, %s612
      %p624 = scmp.eq.s32.totalorder %s79, 3
      %p625 = por %p623, %p624
      %p627 = scmp.ne.s32.totalorder %s612, %s626
      %p628 = scmp.eq.s32.totalorder %s79, 0
      %p629 = por %p627, %p628
      %s631 = sadd.s32 %s630, 1
      %p634 = scmp.eq.s32.totalorder %s73, 3
      %p635 = scmp.ne.s32.totalorder %s630, %s632
      %p636 = scmp.eq.s32.totalorder %s73, 0
      %p637 = por %p635, %p636
      %p638 = scmp.ne.s32.totalorder %s630, %s632
      %p639 = scmp.eq.s32.totalorder %s78, 3
      %p640 = por %p638, %p639
      %p641 = scmp.ne.s32.totalorder %s632, %s633
      %p642 = scmp.eq.s32.totalorder %s78, 0
      %p643 = por %p641, %p642
      %p644 = scmp.ne.s32.totalorder %s632, %s633
      %p645 = scmp.eq.s32.totalorder %s79, 3
      %p646 = por %p644, %p645
      %p648 = scmp.ne.s32.totalorder %s633, %s647
      %p649 = scmp.eq.s32.totalorder %s79, 0
      %p650 = por %p648, %p649
      %s652 = sadd.s32 %s651, 1
      %p655 = scmp.eq.s32.totalorder %s73, 3
      %p656 = scmp.ne.s32.totalorder %s651, %s653
      %p657 = scmp.eq.s32.totalorder %s73, 0
      %p658 = por %p656, %p657
      %p659 = scmp.ne.s32.totalorder %s651, %s653
      %p660 = scmp.eq.s32.totalorder %s78, 3
      %p661 = por %p659, %p660
      %p662 = scmp.ne.s32.totalorder %s653, %s654
      %p663 = scmp.eq.s32.totalorder %s78, 0
      %p664 = por %p662, %p663
      %p665 = scmp.ne.s32.totalorder %s653, %s654
      %p666 = scmp.eq.s32.totalorder %s79, 3
      %p667 = por %p665, %p666
      %p669 = scmp.ne.s32.totalorder %s654, %s668
      %p670 = scmp.eq.s32.totalorder %s79, 0
      %p671 = por %p669, %p670
      %s673 = sadd.s32 %s672, 1
      %p676 = scmp.eq.s32.totalorder %s73, 3
      %p677 = scmp.ne.s32.totalorder %s672, %s674
      %p678 = scmp.eq.s32.totalorder %s73, 0
      %p679 = por %p677, %p678
      %p680 = scmp.ne.s32.totalorder %s672, %s674
      %p681 = scmp.eq.s32.totalorder %s78, 3
      %p682 = por %p680, %p681
      %p683 = scmp.ne.s32.totalorder %s674, %s675
      %p684 = scmp.eq.s32.totalorder %s78, 0
      %p685 = por %p683, %p684
      %p686 = scmp.ne.s32.totalorder %s674, %s675
      %p687 = scmp.eq.s32.totalorder %s79, 3
      %p688 = por %p686, %p687
      %p690 = scmp.ne.s32.totalorder %s675, %s689
      %p691 = scmp.eq.s32.totalorder %s79, 0
      %p692 = por %p690, %p691
      %s694 = sadd.s32 %s693, 1
      %p697 = scmp.eq.s32.totalorder %s73, 3
      %p698 = scmp.ne.s32.totalorder %s693, %s695
      %p699 = scmp.eq.s32.totalorder %s73, 0
      %p700 = por %p698, %p699
      %p701 = scmp.ne.s32.totalorder %s693, %s695
      %p702 = scmp.eq.s32.totalorder %s78, 3
      %p703 = por %p701, %p702
      %p704 = scmp.ne.s32.totalorder %s695, %s696
      %p705 = scmp.eq.s32.totalorder %s78, 0
      %p706 = por %p704, %p705
      %p707 = scmp.ne.s32.totalorder %s695, %s696
      %p708 = scmp.eq.s32.totalorder %s79, 3
      %p709 = por %p707, %p708
      %p711 = scmp.ne.s32.totalorder %s696, %s710
      %p712 = scmp.eq.s32.totalorder %s79, 0
      %p713 = por %p711, %p712
      %s714 = ssub.s32 %s80, %s92
      %p715 = scmp.eq.s32.totalorder %s714, 0
      %s717 = sadd.s32 %s716, 1
      %s718 = scalar_select %p715, %s716, %s717
      %p721 = pneg %p715
      %p722 = scmp.eq.s32.totalorder %s73, 3
      %p723 = por %p721, %p722
      %p724 = scmp.ne.s32.totalorder %s716, %s719
      %p725 = scmp.eq.s32.totalorder %s73, 0
      %p726 = por %p724, %p725
      %p727 = scmp.ne.s32.totalorder %s716, %s719
      %p728 = scmp.eq.s32.totalorder %s78, 3
      %p729 = por %p727, %p728
      %p730 = scmp.ne.s32.totalorder %s719, %s720
      %p731 = scmp.eq.s32.totalorder %s78, 0
      %p732 = por %p730, %p731
      %p733 = scmp.ne.s32.totalorder %s719, %s720
      %p734 = scmp.eq.s32.totalorder %s79, 3
      %p735 = por %p733, %p734
      %p737 = scmp.ne.s32.totalorder %s720, %s736
      %p738 = scmp.eq.s32.totalorder %s79, 0
      %p739 = por %p737, %p738
      %s740 = ssub.s32 %s80, %s92
      %p741 = scmp.eq.s32.totalorder %s740, 0
      %s743 = sadd.s32 %s742, 1
      %s744 = scalar_select %p741, %s742, %s743
      %p747 = pneg %p741
      %p748 = scmp.eq.s32.totalorder %s73, 3
      %p749 = por %p747, %p748
      %p750 = scmp.ne.s32.totalorder %s742, %s745
      %p751 = scmp.eq.s32.totalorder %s73, 0
      %p752 = por %p750, %p751
      %p753 = scmp.ne.s32.totalorder %s742, %s745
      %p754 = scmp.eq.s32.totalorder %s78, 3
      %p755 = por %p753, %p754
      %p756 = scmp.ne.s32.totalorder %s745, %s746
      %p757 = scmp.eq.s32.totalorder %s78, 0
      %p758 = por %p756, %p757
      %p759 = scmp.ne.s32.totalorder %s745, %s746
      %p760 = scmp.eq.s32.totalorder %s79, 3
      %p761 = por %p759, %p760
      %p763 = scmp.ne.s32.totalorder %s746, %s762
      %p764 = scmp.eq.s32.totalorder %s79, 0
      %p765 = por %p763, %p764
      %s766 = ssub.s32 %s80, %s92
      %p767 = scmp.eq.s32.totalorder %s766, 0
      %s769 = sadd.s32 %s768, 1
      %s770 = scalar_select %p767, %s768, %s769
      %p773 = pneg %p767
      %p774 = scmp.eq.s32.totalorder %s73, 3
      %p775 = por %p773, %p774
      %p776 = scmp.ne.s32.totalorder %s768, %s771
      %p777 = scmp.eq.s32.totalorder %s73, 0
      %p778 = por %p776, %p777
      %p779 = scmp.ne.s32.totalorder %s768, %s771
      %p780 = scmp.eq.s32.totalorder %s78, 3
      %p781 = por %p779, %p780
      %p782 = scmp.ne.s32.totalorder %s771, %s772
      %p783 = scmp.eq.s32.totalorder %s78, 0
      %p784 = por %p782, %p783
      %p785 = scmp.ne.s32.totalorder %s771, %s772
      %p786 = scmp.eq.s32.totalorder %s79, 3
      %p787 = por %p785, %p786
      %p789 = scmp.ne.s32.totalorder %s772, %s788
      %p790 = scmp.eq.s32.totalorder %s79, 0
      %p791 = por %p789, %p790
      %s792 = ssub.s32 %s80, %s92
      %p793 = scmp.eq.s32.totalorder %s792, 0
      %s795 = sadd.s32 %s794, 1
      %s796 = scalar_select %p793, %s794, %s795
      %p799 = pneg %p793
      %p800 = scmp.eq.s32.totalorder %s73, 3
      %p801 = por %p799, %p800
      %p802 = scmp.ne.s32.totalorder %s794, %s797
      %p803 = scmp.eq.s32.totalorder %s73, 0
      %p804 = por %p802, %p803
      %p805 = scmp.ne.s32.totalorder %s794, %s797
      %p806 = scmp.eq.s32.totalorder %s78, 3
      %p807 = por %p805, %p806
      %p808 = scmp.ne.s32.totalorder %s797, %s798
      %p809 = scmp.eq.s32.totalorder %s78, 0
      %p810 = por %p808, %p809
      %p811 = scmp.ne.s32.totalorder %s797, %s798
      %p812 = scmp.eq.s32.totalorder %s79, 3
      %p813 = por %p811, %p812
      %p815 = scmp.ne.s32.totalorder %s798, %s814
      %p816 = scmp.eq.s32.totalorder %s79, 0
      %p817 = por %p815, %p816
      %p818 = scmp.le.s32.totalorder 1, %s73
      %p819 = scmp.lt.s32.totalorder %s73, 5
      %p820 = pnand %p818, %p819
      %p821 = pneg %p820
      // Predicated region
      $region9: #{forward.1} parent=5 // pred_check
        _
      $region10: #{forward.1} parent=5 // pred_check_branch
        %823 = sbr.rel (%p820) target = $region12
      $region11: #{forward.1} parent=5 // pred_region
        %s824 = ssub.s32 %s73, 1
        // Predicated region
        $region13: #{forward.1} parent=11 // pred_check
          %p825 = pneg %p132
        $region14: #{forward.1} parent=11 // pred_check_branch
          %827 = sbr.rel (%p825) target = $region16
        $region15: #{forward.1} parent=11 // pred_region
          _
        $region16: #{forward.1} parent=11 // pred_fallthru
          _
        // Predicated region
        $region17: #{forward.1} parent=11 // pred_check
          %p828 = pneg %p153
        $region18: #{forward.1} parent=11 // pred_check_branch
          %830 = sbr.rel (%p828) target = $region20
        $region19: #{forward.1} parent=11 // pred_region
          _
        $region20: #{forward.1} parent=11 // pred_fallthru
          _
        // Predicated region
        $region21: #{forward.1} parent=11 // pred_check
          %p831 = pneg %p174
        $region22: #{forward.1} parent=11 // pred_check_branch
          %833 = sbr.rel (%p831) target = $region24
        $region23: #{forward.1} parent=11 // pred_region
          _
        $region24: #{forward.1} parent=11 // pred_fallthru
          _
        // Predicated region
        $region25: #{forward.1} parent=11 // pred_check
          %p834 = pneg %p559
        $region26: #{forward.1} parent=11 // pred_check_branch
          %836 = sbr.rel (%p834) target = $region28
        $region27: #{forward.1} parent=11 // pred_region
          _
        $region28: #{forward.1} parent=11 // pred_fallthru
          _
        // Predicated region
        $region29: #{forward.1} parent=11 // pred_check
          %p837 = pneg %p580
        $region30: #{forward.1} parent=11 // pred_check_branch
          %839 = sbr.rel (%p837) target = $region32
        $region31: #{forward.1} parent=11 // pred_region
          _
        $region32: #{forward.1} parent=11 // pred_fallthru
          _
        // Predicated region
        $region33: #{forward.1} parent=11 // pred_check
          %p840 = pneg %p601
        $region34: #{forward.1} parent=11 // pred_check_branch
          %842 = sbr.rel (%p840) target = $region36
        $region35: #{forward.1} parent=11 // pred_region
          _
        $region36: #{forward.1} parent=11 // pred_fallthru
          _
        // Predicated region
        $region37: #{forward.1} parent=11 // pred_check
          %p843 = pneg %p622
        $region38: #{forward.1} parent=11 // pred_check_branch
          %845 = sbr.rel (%p843) target = $region40
        $region39: #{forward.1} parent=11 // pred_region
          _
        $region40: #{forward.1} parent=11 // pred_fallthru
          _
        // Predicated region
        $region41: #{forward.1} parent=11 // pred_check
          %p846 = pneg %p643
        $region42: #{forward.1} parent=11 // pred_check_branch
          %848 = sbr.rel (%p846) target = $region44
        $region43: #{forward.1} parent=11 // pred_region
          _
        $region44: #{forward.1} parent=11 // pred_fallthru
          _
        // Predicated region
        $region45: #{forward.1} parent=11 // pred_check
          %p849 = pneg %p664
        $region46: #{forward.1} parent=11 // pred_check_branch
          %851 = sbr.rel (%p849) target = $region48
        $region47: #{forward.1} parent=11 // pred_region
          _
        $region48: #{forward.1} parent=11 // pred_fallthru
          _
        // Predicated region
        $region49: #{forward.1} parent=11 // pred_check
          %p852 = pneg %p685
        $region50: #{forward.1} parent=11 // pred_check_branch
          %854 = sbr.rel (%p852) target = $region52
        $region51: #{forward.1} parent=11 // pred_region
          _
        $region52: #{forward.1} parent=11 // pred_fallthru
          _
        // Predicated region
        $region53: #{forward.1} parent=11 // pred_check
          %p855 = pneg %p706
        $region54: #{forward.1} parent=11 // pred_check_branch
          %857 = sbr.rel (%p855) target = $region56
        $region55: #{forward.1} parent=11 // pred_region
          _
        $region56: #{forward.1} parent=11 // pred_fallthru
          _
      $region12: #{forward.1} parent=5 // pred_fallthru
        _
      %p858 = scmp.lt.s32.totalorder %s73, 4
      // Predicated region
      $region57: #{forward.1} parent=5 // pred_check
        %p859 = pneg %p858
      $region58: #{forward.1} parent=5 // pred_check_branch
        %861 = sbr.rel (%p859) target = $region60
      $region59: #{forward.1} parent=5 // pred_region
        // Predicated region
        $region61: #{forward.1} parent=59 // pred_check
          %p862 = pneg %p105
        $region62: #{forward.1} parent=59 // pred_check_branch
          %864 = sbr.rel (%p862) target = $region64
        $region63: #{forward.1} parent=59 // pred_region
          %p865 = scmp.lt.s32.totalorder %s80, 1
          %s866 = scalar_select %p865, %s80, 1
          %s867 = smul.addr %s866, 3
          %s868 = smul.addr %s867, 8
          %s869 = scalar_lea.vmem %s1, %s868
        $region64: #{forward.1} parent=59 // pred_fallthru
          _
        // Predicated region
        $region65: #{forward.1} parent=59 // pred_check
          %p870 = pneg %p194
        $region66: #{forward.1} parent=59 // pred_check_branch
          %872 = sbr.rel (%p870) target = $region68
        $region67: #{forward.1} parent=59 // pred_region
          %p873 = scmp.lt.s32.totalorder %s80, 1
          %s874 = scalar_select %p873, %s80, 1
          %s875 = scalar_lea.vmem %s9, %s874
        $region68: #{forward.1} parent=59 // pred_fallthru
          _
        // Predicated region
        $region69: #{forward.1} parent=59 // pred_check
          %p876 = pneg %p220
        $region70: #{forward.1} parent=59 // pred_check_branch
          %878 = sbr.rel (%p876) target = $region72
        $region71: #{forward.1} parent=59 // pred_region
          %p879 = scmp.lt.s32.totalorder %s80, 1
          %s880 = scalar_select %p879, %s80, 1
          %s881 = smul.addr %s880, 2
          %s882 = smul.addr %s881, 8
          %s883 = scalar_lea.vmem %s11, %s882
        $region72: #{forward.1} parent=59 // pred_fallthru
          _
        // Predicated region
        $region73: #{forward.1} parent=59 // pred_check
          %p884 = pneg %p246
        $region74: #{forward.1} parent=59 // pred_check_branch
          %886 = sbr.rel (%p884) target = $region76
        $region75: #{forward.1} parent=59 // pred_region
          %p887 = scmp.lt.s32.totalorder %s81, 1
          %s888 = scalar_select %p887, %s81, 1
          %s889 = smul.addr %s888, 4
          %s890 = smul.addr %s889, 4
          %s891 = scalar_lea.vmem %s13, %s890
        $region76: #{forward.1} parent=59 // pred_fallthru
          _
        // Predicated region
        $region77: #{forward.1} parent=59 // pred_check
          %p892 = pneg %p272
        $region78: #{forward.1} parent=59 // pred_check_branch
          %894 = sbr.rel (%p892) target = $region80
        $region79: #{forward.1} parent=59 // pred_region
          %p895 = scmp.lt.s32.totalorder %s81, 1
          %s896 = scalar_select %p895, %s81, 1
          %s897 = scalar_lea.vmem %s15, %s896
        $region80: #{forward.1} parent=59 // pred_fallthru
          _
        // Predicated region
        $region81: #{forward.1} parent=59 // pred_check
          %p898 = pneg %p298
        $region82: #{forward.1} parent=59 // pred_check_branch
          %900 = sbr.rel (%p898) target = $region84
        $region83: #{forward.1} parent=59 // pred_region
          %p901 = scmp.lt.s32.totalorder %s81, 1
          %s902 = scalar_select %p901, %s81, 1
          %s903 = smul.addr %s902, 4
          %s904 = smul.addr %s903, 4
          %s905 = scalar_lea.vmem %s17, %s904
        $region84: #{forward.1} parent=59 // pred_fallthru
          _
        // Predicated region
        $region85: #{forward.1} parent=59 // pred_check
          %p906 = pneg %p324
        $region86: #{forward.1} parent=59 // pred_check_branch
          %908 = sbr.rel (%p906) target = $region88
        $region87: #{forward.1} parent=59 // pred_region
          %p909 = scmp.lt.s32.totalorder %s81, 1
          %s910 = scalar_select %p909, %s81, 1
          %s911 = scalar_lea.vmem %s19, %s910
        $region88: #{forward.1} parent=59 // pred_fallthru
          _
        // Predicated region
        $region89: #{forward.1} parent=59 // pred_check
          %p912 = pneg %p350
        $region90: #{forward.1} parent=59 // pred_check_branch
          %914 = sbr.rel (%p912) target = $region92
        $region91: #{forward.1} parent=59 // pred_region
          %p915 = scmp.lt.s32.totalorder %s81, 1
          %s916 = scalar_select %p915, %s81, 1
          %s917 = scalar_lea.vmem %s21, %s916
        $region92: #{forward.1} parent=59 // pred_fallthru
          _
        // Predicated region
        $region93: #{forward.1} parent=59 // pred_check
          %p918 = pneg %p376
        $region94: #{forward.1} parent=59 // pred_check_branch
          %920 = sbr.rel (%p918) target = $region96
        $region95: #{forward.1} parent=59 // pred_region
          %p921 = scmp.lt.s32.totalorder %s81, 1
          %s922 = scalar_select %p921, %s81, 1
          %s923 = scalar_lea.vmem %s23, %s922
        $region96: #{forward.1} parent=59 // pred_fallthru
          _
        // Predicated region
        $region97: #{forward.1} parent=59 // pred_check
          %p924 = pneg %p402
        $region98: #{forward.1} parent=59 // pred_check_branch
          %926 = sbr.rel (%p924) target = $region100
        $region99: #{forward.1} parent=59 // pred_region
          %p927 = scmp.lt.s32.totalorder %s81, 1
          %s928 = scalar_select %p927, %s81, 1
          %s929 = smul.addr %s928, 4
          %s930 = smul.addr %s929, 4
          %s931 = scalar_lea.vmem %s25, %s930
        $region100: #{forward.1} parent=59 // pred_fallthru
          _
        // Predicated region
        $region101: #{forward.1} parent=59 // pred_check
          %p932 = pneg %p428
        $region102: #{forward.1} parent=59 // pred_check_branch
          %934 = sbr.rel (%p932) target = $region104
        $region103: #{forward.1} parent=59 // pred_region
          %p935 = scmp.lt.s32.totalorder %s81, 1
          %s936 = scalar_select %p935, %s81, 1
          %s937 = scalar_lea.vmem %s27, %s936
        $region104: #{forward.1} parent=59 // pred_fallthru
          _
        // Predicated region
        $region105: #{forward.1} parent=59 // pred_check
          %p938 = pneg %p454
        $region106: #{forward.1} parent=59 // pred_check_branch
          %940 = sbr.rel (%p938) target = $region108
        $region107: #{forward.1} parent=59 // pred_region
          %p941 = scmp.lt.s32.totalorder %s81, 1
          %s942 = scalar_select %p941, %s81, 1
          %s943 = smul.addr %s942, 8
          %s944 = smul.addr %s943, 4
          %s945 = scalar_lea.vmem %s29, %s944
        $region108: #{forward.1} parent=59 // pred_fallthru
          _
        // Predicated region
        $region109: #{forward.1} parent=59 // pred_check
          %p946 = pneg %p480
        $region110: #{forward.1} parent=59 // pred_check_branch
          %948 = sbr.rel (%p946) target = $region112
        $region111: #{forward.1} parent=59 // pred_region
          %p949 = scmp.lt.s32.totalorder %s81, 1
          %s950 = scalar_select %p949, %s81, 1
          %s951 = scalar_lea.vmem %s31, %s950
        $region112: #{forward.1} parent=59 // pred_fallthru
          _
        // Predicated region
        $region113: #{forward.1} parent=59 // pred_check
          %p952 = pneg %p506
        $region114: #{forward.1} parent=59 // pred_check_branch
          %954 = sbr.rel (%p952) target = $region116
        $region115: #{forward.1} parent=59 // pred_region
          %p955 = scmp.lt.s32.totalorder %s81, 1
          %s956 = scalar_select %p955, %s81, 1
          %s957 = scalar_lea.vmem %s33, %s956
        $region116: #{forward.1} parent=59 // pred_fallthru
          _
        // Predicated region
        $region117: #{forward.1} parent=59 // pred_check
          %p958 = pneg %p532
        $region118: #{forward.1} parent=59 // pred_check_branch
          %960 = sbr.rel (%p958) target = $region120
        $region119: #{forward.1} parent=59 // pred_region
          %p961 = scmp.lt.s32.totalorder %s81, 1
          %s962 = scalar_select %p961, %s81, 1
          %s963 = scalar_lea.vmem %s35, %s962
        $region120: #{forward.1} parent=59 // pred_fallthru
          _
      $region60: #{forward.1} parent=5 // pred_fallthru
        _
      %p964 = scmp.le.s32.totalorder 1, %s73
      %p965 = scmp.lt.s32.totalorder %s73, 5
      %p966 = pnand %p964, %p965
      %p967 = pneg %p966
      // Predicated region
      $region121: #{forward.1} parent=5 // pred_check
        _
      $region122: #{forward.1} parent=5 // pred_check_branch
        %969 = sbr.rel (%p966) target = $region124
      $region123: #{forward.1} parent=5 // pred_region
        %s970 = ssub.s32 %s73, 1
        %p971 = scmp.lt.s32.totalorder %s82, 1
        %s972 = scalar_select %p971, %s82, 1
        %s973 = smul.addr %s972, 3
        %s974 = smul.addr %s973, 8
        %s975 = scalar_lea.vmem %s1, %s974
        %p976 = pneg %p111
        %p977 = pneg %p108
        %p978 = pneg %p132
        %p979 = pneg %p129
        %p980 = pneg %p153
        %p981 = pneg %p150
        %p982 = pneg %p174
        %p983 = pneg %p171
        %p984 = scmp.lt.s32.totalorder %s82, 1
        %s985 = scalar_select %p984, %s82, 1
        %s986 = scalar_lea.vmem %s9, %s985
        %p987 = pneg %p200
        %p988 = pneg %p197
        %p989 = scmp.lt.s32.totalorder %s82, 1
        %s990 = scalar_select %p989, %s82, 1
        %s991 = smul.addr %s990, 2
        %s992 = smul.addr %s991, 8
        %s993 = scalar_lea.vmem %s11, %s992
        %p994 = pneg %p226
        %p995 = pneg %p223
        %p996 = scmp.lt.s32.totalorder %s83, 1
        %s997 = scalar_select %p996, %s83, 1
        %s998 = smul.addr %s997, 4
        %s999 = smul.addr %s998, 4
        %s1000 = scalar_lea.vmem %s13, %s999
        %p1001 = pneg %p252
        %p1002 = pneg %p249
        %p1003 = scmp.lt.s32.totalorder %s83, 1
        %s1004 = scalar_select %p1003, %s83, 1
        %s1005 = scalar_lea.vmem %s15, %s1004
        %p1006 = pneg %p278
        %p1007 = pneg %p275
        %p1008 = scmp.lt.s32.totalorder %s83, 1
        %s1009 = scalar_select %p1008, %s83, 1
        %s1010 = smul.addr %s1009, 4
        %s1011 = smul.addr %s1010, 4
        %s1012 = scalar_lea.vmem %s17, %s1011
        %p1013 = pneg %p304
        %p1014 = pneg %p301
        %p1015 = scmp.lt.s32.totalorder %s83, 1
        %s1016 = scalar_select %p1015, %s83, 1
        %s1017 = scalar_lea.vmem %s19, %s1016
        %p1018 = pneg %p330
        %p1019 = pneg %p327
        %p1020 = scmp.lt.s32.totalorder %s83, 1
        %s1021 = scalar_select %p1020, %s83, 1
        %s1022 = scalar_lea.vmem %s21, %s1021
        %p1023 = pneg %p356
        %p1024 = pneg %p353
        %p1025 = scmp.lt.s32.totalorder %s83, 1
        %s1026 = scalar_select %p1025, %s83, 1
        %s1027 = scalar_lea.vmem %s23, %s1026
        %p1028 = pneg %p382
        %p1029 = pneg %p379
        %p1030 = scmp.lt.s32.totalorder %s83, 1
        %s1031 = scalar_select %p1030, %s83, 1
        %s1032 = smul.addr %s1031, 4
        %s1033 = smul.addr %s1032, 4
        %s1034 = scalar_lea.vmem %s25, %s1033
        %p1035 = pneg %p408
        %p1036 = pneg %p405
        %p1037 = scmp.lt.s32.totalorder %s83, 1
        %s1038 = scalar_select %p1037, %s83, 1
        %s1039 = scalar_lea.vmem %s27, %s1038
        %p1040 = pneg %p434
        %p1041 = pneg %p431
        %p1042 = scmp.lt.s32.totalorder %s83, 1
        %s1043 = scalar_select %p1042, %s83, 1
        %s1044 = smul.addr %s1043, 8
        %s1045 = smul.addr %s1044, 4
        %s1046 = scalar_lea.vmem %s29, %s1045
        %p1047 = pneg %p460
        %p1048 = pneg %p457
        %p1049 = scmp.lt.s32.totalorder %s83, 1
        %s1050 = scalar_select %p1049, %s83, 1
        %s1051 = scalar_lea.vmem %s31, %s1050
        %p1052 = pneg %p486
        %p1053 = pneg %p483
        %p1054 = scmp.lt.s32.totalorder %s83, 1
        %s1055 = scalar_select %p1054, %s83, 1
        %s1056 = scalar_lea.vmem %s33, %s1055
        %p1057 = pneg %p512
        %p1058 = pneg %p509
        %p1059 = scmp.lt.s32.totalorder %s83, 1
        %s1060 = scalar_select %p1059, %s83, 1
        %s1061 = scalar_lea.vmem %s35, %s1060
        %p1062 = pneg %p538
        %p1063 = pneg %p535
        %p1064 = pneg %p559
        %p1065 = pneg %p556
        %p1066 = pneg %p580
        %p1067 = pneg %p577
        %p1068 = pneg %p601
        %p1069 = pneg %p598
        %p1070 = pneg %p622
        %p1071 = pneg %p619
        %p1072 = pneg %p643
        %p1073 = pneg %p640
        %p1074 = pneg %p664
        %p1075 = pneg %p661
        %p1076 = pneg %p685
        %p1077 = pneg %p682
        %p1078 = pneg %p706
        %p1079 = pneg %p703
        %p1080 = pneg %p732
        %p1081 = pneg %p729
        %s1082 = sand.u32 %s719, 1
        %s1083 = scalar_lea.sflag [#allocation6], %s1082
        %s1084 = sand.u32 %s719, 1
        %s1085 = smul.addr %s1084, 16
        %s1086 = scalar_lea.vmem [#allocation5], %s1085
        %p1087 = pneg %p758
        %p1088 = pneg %p755
        %p1089 = scmp.lt.s32.totalorder %s82, 1
        %s1090 = scalar_select %p1089, %s82, 1
        %s1091 = smul.addr %s1090, 2
        %s1092 = smul.addr %s1091, 8
        %s1093 = scalar_lea.vmem %s55, %s1092
        %p1094 = pneg %p784
        %p1095 = pneg %p781
        %p1096 = scmp.lt.s32.totalorder %s82, 1
        %s1097 = scalar_select %p1096, %s82, 1
        %s1098 = smul.addr %s1097, 2
        %s1099 = scalar_lea.vmem %s57, %s1098
        %p1100 = pneg %p810
        %p1101 = pneg %p807
        %p1102 = scmp.lt.s32.totalorder %s82, 1
        %s1103 = scalar_select %p1102, %s82, 1
        %s1104 = scalar_lea.vmem %s59, %s1103
        %p1105 = scmp.lt.s32.totalorder %s82, 1
        %s1106 = scalar_select %p1105, %s82, 1
        %s1107 = smul.addr %s1106, 3
        %s1108 = smul.addr %s1107, 8
        %s1109 = scalar_lea.vmem %s1, %s1108
        %p1110 = scmp.lt.s32.totalorder %s82, 1
        %s1111 = scalar_select %p1110, %s82, 1
        %s1112 = scalar_lea.vmem %s9, %s1111
        %p1113 = scmp.lt.s32.totalorder %s82, 1
        %s1114 = scalar_select %p1113, %s82, 1
        %s1115 = smul.addr %s1114, 2
        %s1116 = smul.addr %s1115, 8
        %s1117 = scalar_lea.vmem %s11, %s1116
        %p1118 = scmp.lt.s32.totalorder %s83, 1
        %s1119 = scalar_select %p1118, %s83, 1
        %s1120 = smul.addr %s1119, 4
        %s1121 = smul.addr %s1120, 4
        %s1122 = scalar_lea.vmem %s13, %s1121
        %p1123 = scmp.lt.s32.totalorder %s83, 1
        %s1124 = scalar_select %p1123, %s83, 1
        %s1125 = scalar_lea.vmem %s15, %s1124
        %p1126 = scmp.lt.s32.totalorder %s83, 1
        %s1127 = scalar_select %p1126, %s83, 1
        %s1128 = smul.addr %s1127, 4
        %s1129 = smul.addr %s1128, 4
        %s1130 = scalar_lea.vmem %s17, %s1129
        %p1131 = scmp.lt.s32.totalorder %s83, 1
        %s1132 = scalar_select %p1131, %s83, 1
        %s1133 = scalar_lea.vmem %s19, %s1132
        %p1134 = scmp.lt.s32.totalorder %s83, 1
        %s1135 = scalar_select %p1134, %s83, 1
        %s1136 = scalar_lea.vmem %s21, %s1135
        %p1137 = scmp.lt.s32.totalorder %s83, 1
        %s1138 = scalar_select %p1137, %s83, 1
        %s1139 = scalar_lea.vmem %s23, %s1138
        %p1140 = scmp.lt.s32.totalorder %s83, 1
        %s1141 = scalar_select %p1140, %s83, 1
        %s1142 = smul.addr %s1141, 4
        %s1143 = smul.addr %s1142, 4
        %s1144 = scalar_lea.vmem %s25, %s1143
        %p1145 = scmp.lt.s32.totalorder %s83, 1
        %s1146 = scalar_select %p1145, %s83, 1
        %s1147 = scalar_lea.vmem %s27, %s1146
        %p1148 = scmp.lt.s32.totalorder %s83, 1
        %s1149 = scalar_select %p1148, %s83, 1
        %s1150 = smul.addr %s1149, 8
        %s1151 = smul.addr %s1150, 4
        %s1152 = scalar_lea.vmem %s29, %s1151
        %p1153 = scmp.lt.s32.totalorder %s83, 1
        %s1154 = scalar_select %p1153, %s83, 1
        %s1155 = scalar_lea.vmem %s31, %s1154
        %p1156 = scmp.lt.s32.totalorder %s83, 1
        %s1157 = scalar_select %p1156, %s83, 1
        %s1158 = scalar_lea.vmem %s33, %s1157
        %p1159 = scmp.lt.s32.totalorder %s83, 1
        %s1160 = scalar_select %p1159, %s83, 1
        %s1161 = scalar_lea.vmem %s35, %s1160
        %p1162 = scmp.lt.s32.totalorder %s82, 1
        %s1163 = scalar_select %p1162, %s82, 1
        %s1164 = smul.addr %s1163, 2
        %s1165 = smul.addr %s1164, 8
        %s1166 = scalar_lea.vmem %s55, %s1165
        %p1167 = scmp.lt.s32.totalorder %s82, 1
        %s1168 = scalar_select %p1167, %s82, 1
        %s1169 = smul.addr %s1168, 2
        %s1170 = scalar_lea.vmem %s57, %s1169
        %p1171 = scmp.lt.s32.totalorder %s82, 1
        %s1172 = scalar_select %p1171, %s82, 1
        %s1173 = scalar_lea.vmem %s59, %s1172
        %p1175 = scmp.eq.s32.totalorder %s83, 0
        // Predicated region
        $region125: #{forward.1} parent=123 // pred_check
          %p1176 = pneg %p1175
        $region126: #{forward.1} parent=123 // pred_check_branch
          %1178 = sbr.rel (%p1176) target = $region128
        $region127: #{forward.1} parent=123 // pred_region
          %v1179 = vld [vmem:[%s5] sm:$0x1]
          %v1180 = vld [vmem:[%s3] sm:$0x1]
          %v1181 = vld [vmem:[%s1109] sm:$0xff]
          %v1182 = vld [vmem:[%s1109 + $0x8] sm:$0xff]
          %1184 = vset.pattern.permute.xlu0 0
          %1185 = vperm.xlu0 %1184, %v1181
          %v1186 = vpop.permute.xlu0 %1185
          %1189 = vset.pattern.permute.xlu0 0
          %1190 = vperm.xlu0 %1189, %v1182
          %v1191 = vpop.permute.xlu0 %1190
          %v1193 = vlaneseq
          %v1194 = vshrl.u32 %v1193, 7
          %v1195 = vsub.s32 0, %v1194
          %v1196 = vrot.slane %v1180, %v1195
          %v1197 = vmul.f32 %v1186, %v1196
          %v1198 = vmul.f32 %v1191, %v1196
          %v1200 = vlaneseq
          %v1201 = vshrl.u32 %v1200, 7
          %v1202 = vsub.s32 0, %v1201
          %v1203 = vrot.slane %v1179, %v1202
          %v1205 = vadd.f32 %v1203, %v1197
          %v1206 = vadd.f32 %v1203, %v1198
          %v1207 = vld [vmem:[%s3 + $0x1] sm:$0x1]
          %1208 = vset.pattern.permute.xlu0 1
          %1209 = vperm.xlu0 %1208, %v1181
          %v1210 = vpop.permute.xlu0 %1209
          %1212 = vset.pattern.permute.xlu0 1
          %1213 = vperm.xlu0 %1212, %v1182
          %v1214 = vpop.permute.xlu0 %1213
          %v1216 = vlaneseq
          %v1217 = vshrl.u32 %v1216, 7
          %v1218 = vsub.s32 0, %v1217
          %v1219 = vrot.slane %v1207, %v1218
          %v1220 = vmul.f32 %v1210, %v1219
          %v1221 = vmul.f32 %v1214, %v1219
          %v1222 = vadd.f32 %v1205, %v1220
          %v1223 = vadd.f32 %v1206, %v1221
          %v1224 = vld [vmem:[%s3 + $0x2] sm:$0x1]
          %1225 = vset.pattern.permute.xlu0 2
          %1226 = vperm.xlu0 %1225, %v1181
          %v1227 = vpop.permute.xlu0 %1226
          %1229 = vset.pattern.permute.xlu0 2
          %1230 = vperm.xlu0 %1229, %v1182
          %v1231 = vpop.permute.xlu0 %1230
          %v1233 = vlaneseq
          %v1234 = vshrl.u32 %v1233, 7
          %v1235 = vsub.s32 0, %v1234
          %v1236 = vrot.slane %v1224, %v1235
          %v1237 = vmul.f32 %v1227, %v1236
          %v1238 = vmul.f32 %v1231, %v1236
          %v1239 = vadd.f32 %v1222, %v1237
          %v1240 = vadd.f32 %v1223, %v1238
          %v1241 = vld [vmem:[%s3 + $0x3] sm:$0x1]
          %v1242 = vld [vmem:[%s1109 + $0x1] sm:$0xff]
          %v1243 = vld [vmem:[%s1109 + $0x9] sm:$0xff]
          %1245 = vset.pattern.permute.xlu0 0
          %1246 = vperm.xlu0 %1245, %v1242
          %v1247 = vpop.permute.xlu0 %1246
          %1250 = vset.pattern.permute.xlu0 0
          %1251 = vperm.xlu0 %1250, %v1243
          %v1252 = vpop.permute.xlu0 %1251
          %v1254 = vlaneseq
          %v1255 = vshrl.u32 %v1254, 7
          %v1256 = vsub.s32 0, %v1255
          %v1257 = vrot.slane %v1241, %v1256
          %v1258 = vmul.f32 %v1247, %v1257
          %v1259 = vmul.f32 %v1252, %v1257
          %v1260 = vadd.f32 %v1239, %v1258
          %v1261 = vadd.f32 %v1240, %v1259
          %v1262 = vld [vmem:[%s3 + $0x4] sm:$0x1]
          %1263 = vset.pattern.permute.xlu0 1
          %1264 = vperm.xlu0 %1263, %v1242
          %v1265 = vpop.permute.xlu0 %1264
          %1267 = vset.pattern.permute.xlu0 1
          %1268 = vperm.xlu0 %1267, %v1243
          %v1269 = vpop.permute.xlu0 %1268
          %v1271 = vlaneseq
          %v1272 = vshrl.u32 %v1271, 7
          %v1273 = vsub.s32 0, %v1272
          %v1274 = vrot.slane %v1262, %v1273
          %v1275 = vmul.f32 %v1265, %v1274
          %v1276 = vmul.f32 %v1269, %v1274
          %v1277 = vadd.f32 %v1260, %v1275
          %v1278 = vadd.f32 %v1261, %v1276
          %v1279 = vld [vmem:[%s3 + $0x5] sm:$0x1]
          %1280 = vset.pattern.permute.xlu0 2
          %1281 = vperm.xlu0 %1280, %v1242
          %v1282 = vpop.permute.xlu0 %1281
          %1284 = vset.pattern.permute.xlu0 2
          %1285 = vperm.xlu0 %1284, %v1243
          %v1286 = vpop.permute.xlu0 %1285
          %v1288 = vlaneseq
          %v1289 = vshrl.u32 %v1288, 7
          %v1290 = vsub.s32 0, %v1289
          %v1291 = vrot.slane %v1279, %v1290
          %v1292 = vmul.f32 %v1282, %v1291
          %v1293 = vmul.f32 %v1286, %v1291
          %v1294 = vadd.f32 %v1277, %v1292
          %v1295 = vadd.f32 %v1278, %v1293
          %v1296 = vld [vmem:[%s3 + $0x6] sm:$0x1]
          %v1297 = vld [vmem:[%s1109 + $0x2] sm:$0xff]
          %v1298 = vld [vmem:[%s1109 + $0xa] sm:$0xff]
          %1300 = vset.pattern.permute.xlu0 0
          %1301 = vperm.xlu0 %1300, %v1297
          %v1302 = vpop.permute.xlu0 %1301
          %1305 = vset.pattern.permute.xlu0 0
          %1306 = vperm.xlu0 %1305, %v1298
          %v1307 = vpop.permute.xlu0 %1306
          %v1309 = vlaneseq
          %v1310 = vshrl.u32 %v1309, 7
          %v1311 = vsub.s32 0, %v1310
          %v1312 = vrot.slane %v1296, %v1311
          %v1313 = vmul.f32 %v1302, %v1312
          %v1314 = vmul.f32 %v1307, %v1312
          %v1315 = vadd.f32 %v1294, %v1313
          %v1316 = vadd.f32 %v1295, %v1314
          %v1317 = vld [vmem:[%s3 + $0x7] sm:$0x1]
          %1318 = vset.pattern.permute.xlu0 1
          %1319 = vperm.xlu0 %1318, %v1297
          %v1320 = vpop.permute.xlu0 %1319
          %1322 = vset.pattern.permute.xlu0 1
          %1323 = vperm.xlu0 %1322, %v1298
          %v1324 = vpop.permute.xlu0 %1323
          %v1326 = vlaneseq
          %v1327 = vshrl.u32 %v1326, 7
          %v1328 = vsub.s32 0, %v1327
          %v1329 = vrot.slane %v1317, %v1328
          %v1330 = vmul.f32 %v1320, %v1329
          %v1331 = vmul.f32 %v1324, %v1329
          %v1332 = vadd.f32 %v1315, %v1330
          %v1333 = vadd.f32 %v1316, %v1331
          %v1334 = vld [vmem:[%s3 + $0x8] sm:$0x1]
          %1335 = vset.pattern.permute.xlu0 2
          %1336 = vperm.xlu0 %1335, %v1297
          %v1337 = vpop.permute.xlu0 %1336
          %1339 = vset.pattern.permute.xlu0 2
          %1340 = vperm.xlu0 %1339, %v1298
          %v1341 = vpop.permute.xlu0 %1340
          %v1343 = vlaneseq
          %v1344 = vshrl.u32 %v1343, 7
          %v1345 = vsub.s32 0, %v1344
          %v1346 = vrot.slane %v1334, %v1345
          %v1347 = vmul.f32 %v1337, %v1346
          %v1348 = vmul.f32 %v1341, %v1346
          %v1349 = vadd.f32 %v1332, %v1347
          %v1350 = vadd.f32 %v1333, %v1348
          %v1351 = vmax.f32 %v1349, 0.0
          %v1352 = vmax.f32 %v1350, 0.0
          %v1353 = vadd.f32 %v1351, 0.0
          %v1354 = vadd.f32 %v1352, 0.0
          %v1355 = vmul.f32 %v1210, %v1196
          %v1356 = vmul.f32 %v1214, %v1196
          %v1357 = vadd.f32 %v1203, %v1355
          %v1358 = vadd.f32 %v1203, %v1356
          %v1359 = vmul.f32 %v1227, %v1219
          %v1360 = vmul.f32 %v1231, %v1219
          %v1361 = vadd.f32 %v1357, %v1359
          %v1362 = vadd.f32 %v1358, %v1360
          %1363 = vset.pattern.permute.xlu0 3
          %1364 = vperm.xlu0 %1363, %v1181
          %v1365 = vpop.permute.xlu0 %1364
          %1367 = vset.pattern.permute.xlu0 3
          %1368 = vperm.xlu0 %1367, %v1182
          %v1369 = vpop.permute.xlu0 %1368
          %v1371 = vmul.f32 %v1365, %v1236
          %v1372 = vmul.f32 %v1369, %v1236
          %v1373 = vadd.f32 %v1361, %v1371
          %v1374 = vadd.f32 %v1362, %v1372
          %v1375 = vmul.f32 %v1265, %v1257
          %v1376 = vmul.f32 %v1269, %v1257
          %v1377 = vadd.f32 %v1373, %v1375
          %v1378 = vadd.f32 %v1374, %v1376
          %v1379 = vmul.f32 %v1282, %v1274
          %v1380 = vmul.f32 %v1286, %v1274
          %v1381 = vadd.f32 %v1377, %v1379
          %v1382 = vadd.f32 %v1378, %v1380
          %1383 = vset.pattern.permute.xlu0 3
          %1384 = vperm.xlu0 %1383, %v1242
          %v1385 = vpop.permute.xlu0 %1384
          %1387 = vset.pattern.permute.xlu0 3
          %1388 = vperm.xlu0 %1387, %v1243
          %v1389 = vpop.permute.xlu0 %1388
          %v1391 = vmul.f32 %v1385, %v1291
          %v1392 = vmul.f32 %v1389, %v1291
          %v1393 = vadd.f32 %v1381, %v1391
          %v1394 = vadd.f32 %v1382, %v1392
          %v1395 = vmul.f32 %v1320, %v1312
          %v1396 = vmul.f32 %v1324, %v1312
          %v1397 = vadd.f32 %v1393, %v1395
          %v1398 = vadd.f32 %v1394, %v1396
          %v1399 = vmul.f32 %v1337, %v1329
          %v1400 = vmul.f32 %v1341, %v1329
          %v1401 = vadd.f32 %v1397, %v1399
          %v1402 = vadd.f32 %v1398, %v1400
          %1403 = vset.pattern.permute.xlu0 3
          %1404 = vperm.xlu0 %1403, %v1297
          %v1405 = vpop.permute.xlu0 %1404
          %1407 = vset.pattern.permute.xlu0 3
          %1408 = vperm.xlu0 %1407, %v1298
          %v1409 = vpop.permute.xlu0 %1408
          %v1411 = vmul.f32 %v1405, %v1346
          %v1412 = vmul.f32 %v1409, %v1346
          %v1413 = vadd.f32 %v1401, %v1411
          %v1414 = vadd.f32 %v1402, %v1412
          %v1415 = vmax.f32 %v1413, 0.0
          %v1416 = vmax.f32 %v1414, 0.0
          %v1417 = vadd.f32 %v1353, %v1415
          %v1418 = vadd.f32 %v1354, %v1416
          %v1419 = vmul.f32 %v1227, %v1196
          %v1420 = vmul.f32 %v1231, %v1196
          %v1421 = vadd.f32 %v1203, %v1419
          %v1422 = vadd.f32 %v1203, %v1420
          %v1423 = vmul.f32 %v1365, %v1219
          %v1424 = vmul.f32 %v1369, %v1219
          %v1425 = vadd.f32 %v1421, %v1423
          %v1426 = vadd.f32 %v1422, %v1424
          %1427 = vset.pattern.permute.xlu0 4
          %1428 = vperm.xlu0 %1427, %v1181
          %v1429 = vpop.permute.xlu0 %1428
          %1431 = vset.pattern.permute.xlu0 4
          %1432 = vperm.xlu0 %1431, %v1182
          %v1433 = vpop.permute.xlu0 %1432
          %v1435 = vmul.f32 %v1429, %v1236
          %v1436 = vmul.f32 %v1433, %v1236
          %v1437 = vadd.f32 %v1425, %v1435
          %v1438 = vadd.f32 %v1426, %v1436
          %v1439 = vmul.f32 %v1282, %v1257
          %v1440 = vmul.f32 %v1286, %v1257
          %v1441 = vadd.f32 %v1437, %v1439
          %v1442 = vadd.f32 %v1438, %v1440
          %v1443 = vmul.f32 %v1385, %v1274
          %v1444 = vmul.f32 %v1389, %v1274
          %v1445 = vadd.f32 %v1441, %v1443
          %v1446 = vadd.f32 %v1442, %v1444
          %1447 = vset.pattern.permute.xlu0 4
          %1448 = vperm.xlu0 %1447, %v1242
          %v1449 = vpop.permute.xlu0 %1448
          %1451 = vset.pattern.permute.xlu0 4
          %1452 = vperm.xlu0 %1451, %v1243
          %v1453 = vpop.permute.xlu0 %1452
          %v1455 = vmul.f32 %v1449, %v1291
          %v1456 = vmul.f32 %v1453, %v1291
          %v1457 = vadd.f32 %v1445, %v1455
          %v1458 = vadd.f32 %v1446, %v1456
          %v1459 = vmul.f32 %v1337, %v1312
          %v1460 = vmul.f32 %v1341, %v1312
          %v1461 = vadd.f32 %v1457, %v1459
          %v1462 = vadd.f32 %v1458, %v1460
          %v1463 = vmul.f32 %v1405, %v1329
          %v1464 = vmul.f32 %v1409, %v1329
          %v1465 = vadd.f32 %v1461, %v1463
          %v1466 = vadd.f32 %v1462, %v1464
          %1467 = vset.pattern.permute.xlu0 4
          %1468 = vperm.xlu0 %1467, %v1297
          %v1469 = vpop.permute.xlu0 %1468
          %1471 = vset.pattern.permute.xlu0 4
          %1472 = vperm.xlu0 %1471, %v1298
          %v1473 = vpop.permute.xlu0 %1472
          %v1475 = vmul.f32 %v1469, %v1346
          %v1476 = vmul.f32 %v1473, %v1346
          %v1477 = vadd.f32 %v1465, %v1475
          %v1478 = vadd.f32 %v1466, %v1476
          %v1479 = vmax.f32 %v1477, 0.0
          %v1480 = vmax.f32 %v1478, 0.0
          %v1481 = vadd.f32 %v1417, %v1479
          %v1482 = vadd.f32 %v1418, %v1480
          %v1483 = vmul.f32 %v1365, %v1196
          %v1484 = vmul.f32 %v1369, %v1196
          %v1485 = vadd.f32 %v1203, %v1483
          %v1486 = vadd.f32 %v1203, %v1484
          %v1487 = vmul.f32 %v1429, %v1219
          %v1488 = vmul.f32 %v1433, %v1219
          %v1489 = vadd.f32 %v1485, %v1487
          %v1490 = vadd.f32 %v1486, %v1488
          %1491 = vset.pattern.permute.xlu0 5
          %1492 = vperm.xlu0 %1491, %v1181
          %v1493 = vpop.permute.xlu0 %1492
          %1495 = vset.pattern.permute.xlu0 5
          %1496 = vperm.xlu0 %1495, %v1182
          %v1497 = vpop.permute.xlu0 %1496
          %v1499 = vmul.f32 %v1493, %v1236
          %v1500 = vmul.f32 %v1497, %v1236
          %v1501 = vadd.f32 %v1489, %v1499
          %v1502 = vadd.f32 %v1490, %v1500
          %v1503 = vmul.f32 %v1385, %v1257
          %v1504 = vmul.f32 %v1389, %v1257
          %v1505 = vadd.f32 %v1501, %v1503
          %v1506 = vadd.f32 %v1502, %v1504
          %v1507 = vmul.f32 %v1449, %v1274
          %v1508 = vmul.f32 %v1453, %v1274
          %v1509 = vadd.f32 %v1505, %v1507
          %v1510 = vadd.f32 %v1506, %v1508
          %1511 = vset.pattern.permute.xlu0 5
          %1512 = vperm.xlu0 %1511, %v1242
          %v1513 = vpop.permute.xlu0 %1512
          %1515 = vset.pattern.permute.xlu0 5
          %1516 = vperm.xlu0 %1515, %v1243
          %v1517 = vpop.permute.xlu0 %1516
          %v1519 = vmul.f32 %v1513, %v1291
          %v1520 = vmul.f32 %v1517, %v1291
          %v1521 = vadd.f32 %v1509, %v1519
          %v1522 = vadd.f32 %v1510, %v1520
          %v1523 = vmul.f32 %v1405, %v1312
          %v1524 = vmul.f32 %v1409, %v1312
          %v1525 = vadd.f32 %v1521, %v1523
          %v1526 = vadd.f32 %v1522, %v1524
          %v1527 = vmul.f32 %v1469, %v1329
          %v1528 = vmul.f32 %v1473, %v1329
          %v1529 = vadd.f32 %v1525, %v1527
          %v1530 = vadd.f32 %v1526, %v1528
          %1531 = vset.pattern.permute.xlu0 5
          %1532 = vperm.xlu0 %1531, %v1297
          %v1533 = vpop.permute.xlu0 %1532
          %1535 = vset.pattern.permute.xlu0 5
          %1536 = vperm.xlu0 %1535, %v1298
          %v1537 = vpop.permute.xlu0 %1536
          %v1539 = vmul.f32 %v1533, %v1346
          %v1540 = vmul.f32 %v1537, %v1346
          %v1541 = vadd.f32 %v1529, %v1539
          %v1542 = vadd.f32 %v1530, %v1540
          %v1543 = vmax.f32 %v1541, 0.0
          %v1544 = vmax.f32 %v1542, 0.0
          %v1545 = vadd.f32 %v1481, %v1543
          %v1546 = vadd.f32 %v1482, %v1544
          %v1547 = vmul.f32 %v1429, %v1196
          %v1548 = vmul.f32 %v1433, %v1196
          %v1549 = vadd.f32 %v1203, %v1547
          %v1550 = vadd.f32 %v1203, %v1548
          %v1551 = vmul.f32 %v1493, %v1219
          %v1552 = vmul.f32 %v1497, %v1219
          %v1553 = vadd.f32 %v1549, %v1551
          %v1554 = vadd.f32 %v1550, %v1552
          %1555 = vset.pattern.permute.xlu0 6
          %1556 = vperm.xlu0 %1555, %v1181
          %v1557 = vpop.permute.xlu0 %1556
          %1559 = vset.pattern.permute.xlu0 6
          %1560 = vperm.xlu0 %1559, %v1182
          %v1561 = vpop.permute.xlu0 %1560
          %v1563 = vmul.f32 %v1557, %v1236
          %v1564 = vmul.f32 %v1561, %v1236
          %v1565 = vadd.f32 %v1553, %v1563
          %v1566 = vadd.f32 %v1554, %v1564
          %v1567 = vmul.f32 %v1449, %v1257
          %v1568 = vmul.f32 %v1453, %v1257
          %v1569 = vadd.f32 %v1565, %v1567
          %v1570 = vadd.f32 %v1566, %v1568
          %v1571 = vmul.f32 %v1513, %v1274
          %v1572 = vmul.f32 %v1517, %v1274
          %v1573 = vadd.f32 %v1569, %v1571
          %v1574 = vadd.f32 %v1570, %v1572
          %1575 = vset.pattern.permute.xlu0 6
          %1576 = vperm.xlu0 %1575, %v1242
          %v1577 = vpop.permute.xlu0 %1576
          %1579 = vset.pattern.permute.xlu0 6
          %1580 = vperm.xlu0 %1579, %v1243
          %v1581 = vpop.permute.xlu0 %1580
          %v1583 = vmul.f32 %v1577, %v1291
          %v1584 = vmul.f32 %v1581, %v1291
          %v1585 = vadd.f32 %v1573, %v1583
          %v1586 = vadd.f32 %v1574, %v1584
          %v1587 = vmul.f32 %v1469, %v1312
          %v1588 = vmul.f32 %v1473, %v1312
          %v1589 = vadd.f32 %v1585, %v1587
          %v1590 = vadd.f32 %v1586, %v1588
          %v1591 = vmul.f32 %v1533, %v1329
          %v1592 = vmul.f32 %v1537, %v1329
          %v1593 = vadd.f32 %v1589, %v1591
          %v1594 = vadd.f32 %v1590, %v1592
          %1595 = vset.pattern.permute.xlu0 6
          %1596 = vperm.xlu0 %1595, %v1297
          %v1597 = vpop.permute.xlu0 %1596
          %1599 = vset.pattern.permute.xlu0 6
          %1600 = vperm.xlu0 %1599, %v1298
          %v1601 = vpop.permute.xlu0 %1600
          %v1603 = vmul.f32 %v1597, %v1346
          %v1604 = vmul.f32 %v1601, %v1346
          %v1605 = vadd.f32 %v1593, %v1603
          %v1606 = vadd.f32 %v1594, %v1604
          %v1607 = vmax.f32 %v1605, 0.0
          %v1608 = vmax.f32 %v1606, 0.0
          %v1609 = vadd.f32 %v1545, %v1607
          %v1610 = vadd.f32 %v1546, %v1608
          %v1611 = vmul.f32 %v1493, %v1196
          %v1612 = vmul.f32 %v1497, %v1196
          %v1613 = vadd.f32 %v1203, %v1611
          %v1614 = vadd.f32 %v1203, %v1612
          %v1615 = vmul.f32 %v1557, %v1219
          %v1616 = vmul.f32 %v1561, %v1219
          %v1617 = vadd.f32 %v1613, %v1615
          %v1618 = vadd.f32 %v1614, %v1616
          %1619 = vset.pattern.permute.xlu0 7
          %1620 = vperm.xlu0 %1619, %v1181
          %v1621 = vpop.permute.xlu0 %1620
          %1623 = vset.pattern.permute.xlu0 7
          %1624 = vperm.xlu0 %1623, %v1182
          %v1625 = vpop.permute.xlu0 %1624
          %v1627 = vmul.f32 %v1621, %v1236
          %v1628 = vmul.f32 %v1625, %v1236
          %v1629 = vadd.f32 %v1617, %v1627
          %v1630 = vadd.f32 %v1618, %v1628
          %v1631 = vmul.f32 %v1513, %v1257
          %v1632 = vmul.f32 %v1517, %v1257
          %v1633 = vadd.f32 %v1629, %v1631
          %v1634 = vadd.f32 %v1630, %v1632
          %v1635 = vmul.f32 %v1577, %v1274
          %v1636 = vmul.f32 %v1581, %v1274
          %v1637 = vadd.f32 %v1633, %v1635
          %v1638 = vadd.f32 %v1634, %v1636
          %1639 = vset.pattern.permute.xlu0 7
          %1640 = vperm.xlu0 %1639, %v1242
          %v1641 = vpop.permute.xlu0 %1640
          %1643 = vset.pattern.permute.xlu0 7
          %1644 = vperm.xlu0 %1643, %v1243
          %v1645 = vpop.permute.xlu0 %1644
          %v1647 = vmul.f32 %v1641, %v1291
          %v1648 = vmul.f32 %v1645, %v1291
          %v1649 = vadd.f32 %v1637, %v1647
          %v1650 = vadd.f32 %v1638, %v1648
          %v1651 = vmul.f32 %v1533, %v1312
          %v1652 = vmul.f32 %v1537, %v1312
          %v1653 = vadd.f32 %v1649, %v1651
          %v1654 = vadd.f32 %v1650, %v1652
          %v1655 = vmul.f32 %v1597, %v1329
          %v1656 = vmul.f32 %v1601, %v1329
          %v1657 = vadd.f32 %v1653, %v1655
          %v1658 = vadd.f32 %v1654, %v1656
          %1659 = vset.pattern.permute.xlu0 7
          %1660 = vperm.xlu0 %1659, %v1297
          %v1661 = vpop.permute.xlu0 %1660
          %1663 = vset.pattern.permute.xlu0 7
          %1664 = vperm.xlu0 %1663, %v1298
          %v1665 = vpop.permute.xlu0 %1664
          %v1667 = vmul.f32 %v1661, %v1346
          %v1668 = vmul.f32 %v1665, %v1346
          %v1669 = vadd.f32 %v1657, %v1667
          %v1670 = vadd.f32 %v1658, %v1668
          %v1671 = vmax.f32 %v1669, 0.0
          %v1672 = vmax.f32 %v1670, 0.0
          %v1673 = vadd.f32 %v1609, %v1671
          %v1674 = vadd.f32 %v1610, %v1672
          %v1675 = vmul.f32 %v1557, %v1196
          %v1676 = vmul.f32 %v1561, %v1196
          %v1677 = vadd.f32 %v1203, %v1675
          %v1678 = vadd.f32 %v1203, %v1676
          %v1679 = vmul.f32 %v1621, %v1219
          %v1680 = vmul.f32 %v1625, %v1219
          %v1681 = vadd.f32 %v1677, %v1679
          %v1682 = vadd.f32 %v1678, %v1680
          %1683 = vset.pattern.permute.xlu0 8
          %1684 = vperm.xlu0 %1683, %v1181
          %v1685 = vpop.permute.xlu0 %1684
          %1687 = vset.pattern.permute.xlu0 8
          %1688 = vperm.xlu0 %1687, %v1182
          %v1689 = vpop.permute.xlu0 %1688
          %v1691 = vmul.f32 %v1685, %v1236
          %v1692 = vmul.f32 %v1689, %v1236
          %v1693 = vadd.f32 %v1681, %v1691
          %v1694 = vadd.f32 %v1682, %v1692
          %v1695 = vmul.f32 %v1577, %v1257
          %v1696 = vmul.f32 %v1581, %v1257
          %v1697 = vadd.f32 %v1693, %v1695
          %v1698 = vadd.f32 %v1694, %v1696
          %v1699 = vmul.f32 %v1641, %v1274
          %v1700 = vmul.f32 %v1645, %v1274
          %v1701 = vadd.f32 %v1697, %v1699
          %v1702 = vadd.f32 %v1698, %v1700
          %1703 = vset.pattern.permute.xlu0 8
          %1704 = vperm.xlu0 %1703, %v1242
          %v1705 = vpop.permute.xlu0 %1704
          %1707 = vset.pattern.permute.xlu0 8
          %1708 = vperm.xlu0 %1707, %v1243
          %v1709 = vpop.permute.xlu0 %1708
          %v1711 = vmul.f32 %v1705, %v1291
          %v1712 = vmul.f32 %v1709, %v1291
          %v1713 = vadd.f32 %v1701, %v1711
          %v1714 = vadd.f32 %v1702, %v1712
          %v1715 = vmul.f32 %v1597, %v1312
          %v1716 = vmul.f32 %v1601, %v1312
          %v1717 = vadd.f32 %v1713, %v1715
          %v1718 = vadd.f32 %v1714, %v1716
          %v1719 = vmul.f32 %v1661, %v1329
          %v1720 = vmul.f32 %v1665, %v1329
          %v1721 = vadd.f32 %v1717, %v1719
          %v1722 = vadd.f32 %v1718, %v1720
          %1723 = vset.pattern.permute.xlu0 8
          %1724 = vperm.xlu0 %1723, %v1297
          %v1725 = vpop.permute.xlu0 %1724
          %1727 = vset.pattern.permute.xlu0 8
          %1728 = vperm.xlu0 %1727, %v1298
          %v1729 = vpop.permute.xlu0 %1728
          %v1731 = vmul.f32 %v1725, %v1346
          %v1732 = vmul.f32 %v1729, %v1346
          %v1733 = vadd.f32 %v1721, %v1731
          %v1734 = vadd.f32 %v1722, %v1732
          %v1735 = vmax.f32 %v1733, 0.0
          %v1736 = vmax.f32 %v1734, 0.0
          %v1737 = vadd.f32 %v1673, %v1735
          %v1738 = vadd.f32 %v1674, %v1736
          %v1739 = vmul.f32 %v1621, %v1196
          %v1740 = vmul.f32 %v1625, %v1196
          %v1741 = vadd.f32 %v1203, %v1739
          %v1742 = vadd.f32 %v1203, %v1740
          %v1743 = vmul.f32 %v1685, %v1219
          %v1744 = vmul.f32 %v1689, %v1219
          %v1745 = vadd.f32 %v1741, %v1743
          %v1746 = vadd.f32 %v1742, %v1744
          %1747 = vset.pattern.permute.xlu0 9
          %1748 = vperm.xlu0 %1747, %v1181
          %v1749 = vpop.permute.xlu0 %1748
          %1751 = vset.pattern.permute.xlu0 9
          %1752 = vperm.xlu0 %1751, %v1182
          %v1753 = vpop.permute.xlu0 %1752
          %v1755 = vmul.f32 %v1749, %v1236
          %v1756 = vmul.f32 %v1753, %v1236
          %v1757 = vadd.f32 %v1745, %v1755
          %v1758 = vadd.f32 %v1746, %v1756
          %v1759 = vmul.f32 %v1641, %v1257
          %v1760 = vmul.f32 %v1645, %v1257
          %v1761 = vadd.f32 %v1757, %v1759
          %v1762 = vadd.f32 %v1758, %v1760
          %v1763 = vmul.f32 %v1705, %v1274
          %v1764 = vmul.f32 %v1709, %v1274
          %v1765 = vadd.f32 %v1761, %v1763
          %v1766 = vadd.f32 %v1762, %v1764
          %1767 = vset.pattern.permute.xlu0 9
          %1768 = vperm.xlu0 %1767, %v1242
          %v1769 = vpop.permute.xlu0 %1768
          %1771 = vset.pattern.permute.xlu0 9
          %1772 = vperm.xlu0 %1771, %v1243
          %v1773 = vpop.permute.xlu0 %1772
          %v1775 = vmul.f32 %v1769, %v1291
          %v1776 = vmul.f32 %v1773, %v1291
          %v1777 = vadd.f32 %v1765, %v1775
          %v1778 = vadd.f32 %v1766, %v1776
          %v1779 = vmul.f32 %v1661, %v1312
          %v1780 = vmul.f32 %v1665, %v1312
          %v1781 = vadd.f32 %v1777, %v1779
          %v1782 = vadd.f32 %v1778, %v1780
          %v1783 = vmul.f32 %v1725, %v1329
          %v1784 = vmul.f32 %v1729, %v1329
          %v1785 = vadd.f32 %v1781, %v1783
          %v1786 = vadd.f32 %v1782, %v1784
          %1787 = vset.pattern.permute.xlu0 9
          %1788 = vperm.xlu0 %1787, %v1297
          %v1789 = vpop.permute.xlu0 %1788
          %1791 = vset.pattern.permute.xlu0 9
          %1792 = vperm.xlu0 %1791, %v1298
          %v1793 = vpop.permute.xlu0 %1792
          %v1795 = vmul.f32 %v1789, %v1346
          %v1796 = vmul.f32 %v1793, %v1346
          %v1797 = vadd.f32 %v1785, %v1795
          %v1798 = vadd.f32 %v1786, %v1796
          %v1799 = vmax.f32 %v1797, 0.0
          %v1800 = vmax.f32 %v1798, 0.0
          %v1801 = vadd.f32 %v1737, %v1799
          %v1802 = vadd.f32 %v1738, %v1800
          %v1803 = vmul.f32 %v1685, %v1196
          %v1804 = vmul.f32 %v1689, %v1196
          %v1805 = vadd.f32 %v1203, %v1803
          %v1806 = vadd.f32 %v1203, %v1804
          %v1807 = vmul.f32 %v1749, %v1219
          %v1808 = vmul.f32 %v1753, %v1219
          %v1809 = vadd.f32 %v1805, %v1807
          %v1810 = vadd.f32 %v1806, %v1808
          %1811 = vset.pattern.permute.xlu0 10
          %1812 = vperm.xlu0 %1811, %v1181
          %v1813 = vpop.permute.xlu0 %1812
          %1815 = vset.pattern.permute.xlu0 10
          %1816 = vperm.xlu0 %1815, %v1182
          %v1817 = vpop.permute.xlu0 %1816
          %v1819 = vmul.f32 %v1813, %v1236
          %v1820 = vmul.f32 %v1817, %v1236
          %v1821 = vadd.f32 %v1809, %v1819
          %v1822 = vadd.f32 %v1810, %v1820
          %v1823 = vmul.f32 %v1705, %v1257
          %v1824 = vmul.f32 %v1709, %v1257
          %v1825 = vadd.f32 %v1821, %v1823
          %v1826 = vadd.f32 %v1822, %v1824
          %v1827 = vmul.f32 %v1769, %v1274
          %v1828 = vmul.f32 %v1773, %v1274
          %v1829 = vadd.f32 %v1825, %v1827
          %v1830 = vadd.f32 %v1826, %v1828
          %1831 = vset.pattern.permute.xlu0 10
          %1832 = vperm.xlu0 %1831, %v1242
          %v1833 = vpop.permute.xlu0 %1832
          %1835 = vset.pattern.permute.xlu0 10
          %1836 = vperm.xlu0 %1835, %v1243
          %v1837 = vpop.permute.xlu0 %1836
          %v1839 = vmul.f32 %v1833, %v1291
          %v1840 = vmul.f32 %v1837, %v1291
          %v1841 = vadd.f32 %v1829, %v1839
          %v1842 = vadd.f32 %v1830, %v1840
          %v1843 = vmul.f32 %v1725, %v1312
          %v1844 = vmul.f32 %v1729, %v1312
          %v1845 = vadd.f32 %v1841, %v1843
          %v1846 = vadd.f32 %v1842, %v1844
          %v1847 = vmul.f32 %v1789, %v1329
          %v1848 = vmul.f32 %v1793, %v1329
          %v1849 = vadd.f32 %v1845, %v1847
          %v1850 = vadd.f32 %v1846, %v1848
          %1851 = vset.pattern.permute.xlu0 10
          %1852 = vperm.xlu0 %1851, %v1297
          %v1853 = vpop.permute.xlu0 %1852
          %1855 = vset.pattern.permute.xlu0 10
          %1856 = vperm.xlu0 %1855, %v1298
          %v1857 = vpop.permute.xlu0 %1856
          %v1859 = vmul.f32 %v1853, %v1346
          %v1860 = vmul.f32 %v1857, %v1346
          %v1861 = vadd.f32 %v1849, %v1859
          %v1862 = vadd.f32 %v1850, %v1860
          %v1863 = vmax.f32 %v1861, 0.0
          %v1864 = vmax.f32 %v1862, 0.0
          %v1865 = vadd.f32 %v1801, %v1863
          %v1866 = vadd.f32 %v1802, %v1864
          %v1867 = vmul.f32 %v1749, %v1196
          %v1868 = vmul.f32 %v1753, %v1196
          %v1869 = vadd.f32 %v1203, %v1867
          %v1870 = vadd.f32 %v1203, %v1868
          %v1871 = vmul.f32 %v1813, %v1219
          %v1872 = vmul.f32 %v1817, %v1219
          %v1873 = vadd.f32 %v1869, %v1871
          %v1874 = vadd.f32 %v1870, %v1872
          %1875 = vset.pattern.permute.xlu0 11
          %1876 = vperm.xlu0 %1875, %v1181
          %v1877 = vpop.permute.xlu0 %1876
          %1879 = vset.pattern.permute.xlu0 11
          %1880 = vperm.xlu0 %1879, %v1182
          %v1881 = vpop.permute.xlu0 %1880
          %v1883 = vmul.f32 %v1877, %v1236
          %v1884 = vmul.f32 %v1881, %v1236
          %v1885 = vadd.f32 %v1873, %v1883
          %v1886 = vadd.f32 %v1874, %v1884
          %v1887 = vmul.f32 %v1769, %v1257
          %v1888 = vmul.f32 %v1773, %v1257
          %v1889 = vadd.f32 %v1885, %v1887
          %v1890 = vadd.f32 %v1886, %v1888
          %v1891 = vmul.f32 %v1833, %v1274
          %v1892 = vmul.f32 %v1837, %v1274
          %v1893 = vadd.f32 %v1889, %v1891
          %v1894 = vadd.f32 %v1890, %v1892
          %1895 = vset.pattern.permute.xlu0 11
          %1896 = vperm.xlu0 %1895, %v1242
          %v1897 = vpop.permute.xlu0 %1896
          %1899 = vset.pattern.permute.xlu0 11
          %1900 = vperm.xlu0 %1899, %v1243
          %v1901 = vpop.permute.xlu0 %1900
          %v1903 = vmul.f32 %v1897, %v1291
          %v1904 = vmul.f32 %v1901, %v1291
          %v1905 = vadd.f32 %v1893, %v1903
          %v1906 = vadd.f32 %v1894, %v1904
          %v1907 = vmul.f32 %v1789, %v1312
          %v1908 = vmul.f32 %v1793, %v1312
          %v1909 = vadd.f32 %v1905, %v1907
          %v1910 = vadd.f32 %v1906, %v1908
          %v1911 = vmul.f32 %v1853, %v1329
          %v1912 = vmul.f32 %v1857, %v1329
          %v1913 = vadd.f32 %v1909, %v1911
          %v1914 = vadd.f32 %v1910, %v1912
          %1915 = vset.pattern.permute.xlu0 11
          %1916 = vperm.xlu0 %1915, %v1297
          %v1917 = vpop.permute.xlu0 %1916
          %1919 = vset.pattern.permute.xlu0 11
          %1920 = vperm.xlu0 %1919, %v1298
          %v1921 = vpop.permute.xlu0 %1920
          %v1923 = vmul.f32 %v1917, %v1346
          %v1924 = vmul.f32 %v1921, %v1346
          %v1925 = vadd.f32 %v1913, %v1923
          %v1926 = vadd.f32 %v1914, %v1924
          %v1927 = vmax.f32 %v1925, 0.0
          %v1928 = vmax.f32 %v1926, 0.0
          %v1929 = vadd.f32 %v1865, %v1927
          %v1930 = vadd.f32 %v1866, %v1928
          %v1931 = vmul.f32 %v1813, %v1196
          %v1932 = vmul.f32 %v1817, %v1196
          %v1933 = vadd.f32 %v1203, %v1931
          %v1934 = vadd.f32 %v1203, %v1932
          %v1935 = vmul.f32 %v1877, %v1219
          %v1936 = vmul.f32 %v1881, %v1219
          %v1937 = vadd.f32 %v1933, %v1935
          %v1938 = vadd.f32 %v1934, %v1936
          %1939 = vset.pattern.permute.xlu0 12
          %1940 = vperm.xlu0 %1939, %v1181
          %v1941 = vpop.permute.xlu0 %1940
          %1943 = vset.pattern.permute.xlu0 12
          %1944 = vperm.xlu0 %1943, %v1182
          %v1945 = vpop.permute.xlu0 %1944
          %v1947 = vmul.f32 %v1941, %v1236
          %v1948 = vmul.f32 %v1945, %v1236
          %v1949 = vadd.f32 %v1937, %v1947
          %v1950 = vadd.f32 %v1938, %v1948
          %v1951 = vmul.f32 %v1833, %v1257
          %v1952 = vmul.f32 %v1837, %v1257
          %v1953 = vadd.f32 %v1949, %v1951
          %v1954 = vadd.f32 %v1950, %v1952
          %v1955 = vmul.f32 %v1897, %v1274
          %v1956 = vmul.f32 %v1901, %v1274
          %v1957 = vadd.f32 %v1953, %v1955
          %v1958 = vadd.f32 %v1954, %v1956
          %1959 = vset.pattern.permute.xlu0 12
          %1960 = vperm.xlu0 %1959, %v1242
          %v1961 = vpop.permute.xlu0 %1960
          %1963 = vset.pattern.permute.xlu0 12
          %1964 = vperm.xlu0 %1963, %v1243
          %v1965 = vpop.permute.xlu0 %1964
          %v1967 = vmul.f32 %v1961, %v1291
          %v1968 = vmul.f32 %v1965, %v1291
          %v1969 = vadd.f32 %v1957, %v1967
          %v1970 = vadd.f32 %v1958, %v1968
          %v1971 = vmul.f32 %v1853, %v1312
          %v1972 = vmul.f32 %v1857, %v1312
          %v1973 = vadd.f32 %v1969, %v1971
          %v1974 = vadd.f32 %v1970, %v1972
          %v1975 = vmul.f32 %v1917, %v1329
          %v1976 = vmul.f32 %v1921, %v1329
          %v1977 = vadd.f32 %v1973, %v1975
          %v1978 = vadd.f32 %v1974, %v1976
          %1979 = vset.pattern.permute.xlu0 12
          %1980 = vperm.xlu0 %1979, %v1297
          %v1981 = vpop.permute.xlu0 %1980
          %1983 = vset.pattern.permute.xlu0 12
          %1984 = vperm.xlu0 %1983, %v1298
          %v1985 = vpop.permute.xlu0 %1984
          %v1987 = vmul.f32 %v1981, %v1346
          %v1988 = vmul.f32 %v1985, %v1346
          %v1989 = vadd.f32 %v1977, %v1987
          %v1990 = vadd.f32 %v1978, %v1988
          %v1991 = vmax.f32 %v1989, 0.0
          %v1992 = vmax.f32 %v1990, 0.0
          %v1993 = vadd.f32 %v1929, %v1991
          %v1994 = vadd.f32 %v1930, %v1992
          %v1995 = vmul.f32 %v1877, %v1196
          %v1996 = vmul.f32 %v1881, %v1196
          %v1997 = vadd.f32 %v1203, %v1995
          %v1998 = vadd.f32 %v1203, %v1996
          %v1999 = vmul.f32 %v1941, %v1219
          %v2000 = vmul.f32 %v1945, %v1219
          %v2001 = vadd.f32 %v1997, %v1999
          %v2002 = vadd.f32 %v1998, %v2000
          %2003 = vset.pattern.permute.xlu0 13
          %2004 = vperm.xlu0 %2003, %v1181
          %v2005 = vpop.permute.xlu0 %2004
          %2007 = vset.pattern.permute.xlu0 13
          %2008 = vperm.xlu0 %2007, %v1182
          %v2009 = vpop.permute.xlu0 %2008
          %v2011 = vmul.f32 %v2005, %v1236
          %v2012 = vmul.f32 %v2009, %v1236
          %v2013 = vadd.f32 %v2001, %v2011
          %v2014 = vadd.f32 %v2002, %v2012
          %v2015 = vmul.f32 %v1897, %v1257
          %v2016 = vmul.f32 %v1901, %v1257
          %v2017 = vadd.f32 %v2013, %v2015
          %v2018 = vadd.f32 %v2014, %v2016
          %v2019 = vmul.f32 %v1961, %v1274
          %v2020 = vmul.f32 %v1965, %v1274
          %v2021 = vadd.f32 %v2017, %v2019
          %v2022 = vadd.f32 %v2018, %v2020
          %2023 = vset.pattern.permute.xlu0 13
          %2024 = vperm.xlu0 %2023, %v1242
          %v2025 = vpop.permute.xlu0 %2024
          %2027 = vset.pattern.permute.xlu0 13
          %2028 = vperm.xlu0 %2027, %v1243
          %v2029 = vpop.permute.xlu0 %2028
          %v2031 = vmul.f32 %v2025, %v1291
          %v2032 = vmul.f32 %v2029, %v1291
          %v2033 = vadd.f32 %v2021, %v2031
          %v2034 = vadd.f32 %v2022, %v2032
          %v2035 = vmul.f32 %v1917, %v1312
          %v2036 = vmul.f32 %v1921, %v1312
          %v2037 = vadd.f32 %v2033, %v2035
          %v2038 = vadd.f32 %v2034, %v2036
          %v2039 = vmul.f32 %v1981, %v1329
          %v2040 = vmul.f32 %v1985, %v1329
          %v2041 = vadd.f32 %v2037, %v2039
          %v2042 = vadd.f32 %v2038, %v2040
          %2043 = vset.pattern.permute.xlu0 13
          %2044 = vperm.xlu0 %2043, %v1297
          %v2045 = vpop.permute.xlu0 %2044
          %2047 = vset.pattern.permute.xlu0 13
          %2048 = vperm.xlu0 %2047, %v1298
          %v2049 = vpop.permute.xlu0 %2048
          %v2051 = vmul.f32 %v2045, %v1346
          %v2052 = vmul.f32 %v2049, %v1346
          %v2053 = vadd.f32 %v2041, %v2051
          %v2054 = vadd.f32 %v2042, %v2052
          %v2055 = vmax.f32 %v2053, 0.0
          %v2056 = vmax.f32 %v2054, 0.0
          %v2057 = vadd.f32 %v1993, %v2055
          %v2058 = vadd.f32 %v1994, %v2056
          %v2059 = vmul.f32 %v1941, %v1196
          %v2060 = vmul.f32 %v1945, %v1196
          %v2061 = vadd.f32 %v1203, %v2059
          %v2062 = vadd.f32 %v1203, %v2060
          %v2063 = vmul.f32 %v2005, %v1219
          %v2064 = vmul.f32 %v2009, %v1219
          %v2065 = vadd.f32 %v2061, %v2063
          %v2066 = vadd.f32 %v2062, %v2064
          %2067 = vset.pattern.permute.xlu0 14
          %2068 = vperm.xlu0 %2067, %v1181
          %v2069 = vpop.permute.xlu0 %2068
          %2071 = vset.pattern.permute.xlu0 14
          %2072 = vperm.xlu0 %2071, %v1182
          %v2073 = vpop.permute.xlu0 %2072
          %v2075 = vmul.f32 %v2069, %v1236
          %v2076 = vmul.f32 %v2073, %v1236
          %v2077 = vadd.f32 %v2065, %v2075
          %v2078 = vadd.f32 %v2066, %v2076
          %v2079 = vmul.f32 %v1961, %v1257
          %v2080 = vmul.f32 %v1965, %v1257
          %v2081 = vadd.f32 %v2077, %v2079
          %v2082 = vadd.f32 %v2078, %v2080
          %v2083 = vmul.f32 %v2025, %v1274
          %v2084 = vmul.f32 %v2029, %v1274
          %v2085 = vadd.f32 %v2081, %v2083
          %v2086 = vadd.f32 %v2082, %v2084
          %2087 = vset.pattern.permute.xlu0 14
          %2088 = vperm.xlu0 %2087, %v1242
          %v2089 = vpop.permute.xlu0 %2088
          %2091 = vset.pattern.permute.xlu0 14
          %2092 = vperm.xlu0 %2091, %v1243
          %v2093 = vpop.permute.xlu0 %2092
          %v2095 = vmul.f32 %v2089, %v1291
          %v2096 = vmul.f32 %v2093, %v1291
          %v2097 = vadd.f32 %v2085, %v2095
          %v2098 = vadd.f32 %v2086, %v2096
          %v2099 = vmul.f32 %v1981, %v1312
          %v2100 = vmul.f32 %v1985, %v1312
          %v2101 = vadd.f32 %v2097, %v2099
          %v2102 = vadd.f32 %v2098, %v2100
          %v2103 = vmul.f32 %v2045, %v1329
          %v2104 = vmul.f32 %v2049, %v1329
          %v2105 = vadd.f32 %v2101, %v2103
          %v2106 = vadd.f32 %v2102, %v2104
          %2107 = vset.pattern.permute.xlu0 14
          %2108 = vperm.xlu0 %2107, %v1297
          %v2109 = vpop.permute.xlu0 %2108
          %2111 = vset.pattern.permute.xlu0 14
          %2112 = vperm.xlu0 %2111, %v1298
          %v2113 = vpop.permute.xlu0 %2112
          %v2115 = vmul.f32 %v2109, %v1346
          %v2116 = vmul.f32 %v2113, %v1346
          %v2117 = vadd.f32 %v2105, %v2115
          %v2118 = vadd.f32 %v2106, %v2116
          %v2119 = vmax.f32 %v2117, 0.0
          %v2120 = vmax.f32 %v2118, 0.0
          %v2121 = vadd.f32 %v2057, %v2119
          %v2122 = vadd.f32 %v2058, %v2120
          %v2123 = vmul.f32 %v2005, %v1196
          %v2124 = vmul.f32 %v2009, %v1196
          %v2125 = vadd.f32 %v1203, %v2123
          %v2126 = vadd.f32 %v1203, %v2124
          %v2127 = vmul.f32 %v2069, %v1219
          %v2128 = vmul.f32 %v2073, %v1219
          %v2129 = vadd.f32 %v2125, %v2127
          %v2130 = vadd.f32 %v2126, %v2128
          %2131 = vset.pattern.permute.xlu0 15
          %2132 = vperm.xlu0 %2131, %v1181
          %v2133 = vpop.permute.xlu0 %2132
          %2135 = vset.pattern.permute.xlu0 15
          %2136 = vperm.xlu0 %2135, %v1182
          %v2137 = vpop.permute.xlu0 %2136
          %v2139 = vmul.f32 %v2133, %v1236
          %v2140 = vmul.f32 %v2137, %v1236
          %v2141 = vadd.f32 %v2129, %v2139
          %v2142 = vadd.f32 %v2130, %v2140
          %v2143 = vmul.f32 %v2025, %v1257
          %v2144 = vmul.f32 %v2029, %v1257
          %v2145 = vadd.f32 %v2141, %v2143
          %v2146 = vadd.f32 %v2142, %v2144
          %v2147 = vmul.f32 %v2089, %v1274
          %v2148 = vmul.f32 %v2093, %v1274
          %v2149 = vadd.f32 %v2145, %v2147
          %v2150 = vadd.f32 %v2146, %v2148
          %2151 = vset.pattern.permute.xlu0 15
          %2152 = vperm.xlu0 %2151, %v1242
          %v2153 = vpop.permute.xlu0 %2152
          %2155 = vset.pattern.permute.xlu0 15
          %2156 = vperm.xlu0 %2155, %v1243
          %v2157 = vpop.permute.xlu0 %2156
          %v2159 = vmul.f32 %v2153, %v1291
          %v2160 = vmul.f32 %v2157, %v1291
          %v2161 = vadd.f32 %v2149, %v2159
          %v2162 = vadd.f32 %v2150, %v2160
          %v2163 = vmul.f32 %v2045, %v1312
          %v2164 = vmul.f32 %v2049, %v1312
          %v2165 = vadd.f32 %v2161, %v2163
          %v2166 = vadd.f32 %v2162, %v2164
          %v2167 = vmul.f32 %v2109, %v1329
          %v2168 = vmul.f32 %v2113, %v1329
          %v2169 = vadd.f32 %v2165, %v2167
          %v2170 = vadd.f32 %v2166, %v2168
          %2171 = vset.pattern.permute.xlu0 15
          %2172 = vperm.xlu0 %2171, %v1297
          %v2173 = vpop.permute.xlu0 %2172
          %2175 = vset.pattern.permute.xlu0 15
          %2176 = vperm.xlu0 %2175, %v1298
          %v2177 = vpop.permute.xlu0 %2176
          %v2179 = vmul.f32 %v2173, %v1346
          %v2180 = vmul.f32 %v2177, %v1346
          %v2181 = vadd.f32 %v2169, %v2179
          %v2182 = vadd.f32 %v2170, %v2180
          %v2183 = vmax.f32 %v2181, 0.0
          %v2184 = vmax.f32 %v2182, 0.0
          %v2185 = vadd.f32 %v2121, %v2183
          %v2186 = vadd.f32 %v2122, %v2184
          %v2187 = vmul.f32 %v2069, %v1196
          %v2188 = vmul.f32 %v2073, %v1196
          %v2189 = vadd.f32 %v1203, %v2187
          %v2190 = vadd.f32 %v1203, %v2188
          %v2191 = vmul.f32 %v2133, %v1219
          %v2192 = vmul.f32 %v2137, %v1219
          %v2193 = vadd.f32 %v2189, %v2191
          %v2194 = vadd.f32 %v2190, %v2192
          %2195 = vset.pattern.permute.xlu0 16
          %2196 = vperm.xlu0 %2195, %v1181
          %v2197 = vpop.permute.xlu0 %2196
          %2199 = vset.pattern.permute.xlu0 16
          %2200 = vperm.xlu0 %2199, %v1182
          %v2201 = vpop.permute.xlu0 %2200
          %v2203 = vmul.f32 %v2197, %v1236
          %v2204 = vmul.f32 %v2201, %v1236
          %v2205 = vadd.f32 %v2193, %v2203
          %v2206 = vadd.f32 %v2194, %v2204
          %v2207 = vmul.f32 %v2089, %v1257
          %v2208 = vmul.f32 %v2093, %v1257
          %v2209 = vadd.f32 %v2205, %v2207
          %v2210 = vadd.f32 %v2206, %v2208
          %v2211 = vmul.f32 %v2153, %v1274
          %v2212 = vmul.f32 %v2157, %v1274
          %v2213 = vadd.f32 %v2209, %v2211
          %v2214 = vadd.f32 %v2210, %v2212
          %2215 = vset.pattern.permute.xlu0 16
          %2216 = vperm.xlu0 %2215, %v1242
          %v2217 = vpop.permute.xlu0 %2216
          %2219 = vset.pattern.permute.xlu0 16
          %2220 = vperm.xlu0 %2219, %v1243
          %v2221 = vpop.permute.xlu0 %2220
          %v2223 = vmul.f32 %v2217, %v1291
          %v2224 = vmul.f32 %v2221, %v1291
          %v2225 = vadd.f32 %v2213, %v2223
          %v2226 = vadd.f32 %v2214, %v2224
          %v2227 = vmul.f32 %v2109, %v1312
          %v2228 = vmul.f32 %v2113, %v1312
          %v2229 = vadd.f32 %v2225, %v2227
          %v2230 = vadd.f32 %v2226, %v2228
          %v2231 = vmul.f32 %v2173, %v1329
          %v2232 = vmul.f32 %v2177, %v1329
          %v2233 = vadd.f32 %v2229, %v2231
          %v2234 = vadd.f32 %v2230, %v2232
          %2235 = vset.pattern.permute.xlu0 16
          %2236 = vperm.xlu0 %2235, %v1297
          %v2237 = vpop.permute.xlu0 %2236
          %2239 = vset.pattern.permute.xlu0 16
          %2240 = vperm.xlu0 %2239, %v1298
          %v2241 = vpop.permute.xlu0 %2240
          %v2243 = vmul.f32 %v2237, %v1346
          %v2244 = vmul.f32 %v2241, %v1346
          %v2245 = vadd.f32 %v2233, %v2243
          %v2246 = vadd.f32 %v2234, %v2244
          %v2247 = vmax.f32 %v2245, 0.0
          %v2248 = vmax.f32 %v2246, 0.0
          %v2249 = vadd.f32 %v2185, %v2247
          %v2250 = vadd.f32 %v2186, %v2248
          %v2251 = vmul.f32 %v2133, %v1196
          %v2252 = vmul.f32 %v2137, %v1196
          %v2253 = vadd.f32 %v1203, %v2251
          %v2254 = vadd.f32 %v1203, %v2252
          %v2255 = vmul.f32 %v2197, %v1219
          %v2256 = vmul.f32 %v2201, %v1219
          %v2257 = vadd.f32 %v2253, %v2255
          %v2258 = vadd.f32 %v2254, %v2256
          %2259 = vset.pattern.permute.xlu0 17
          %2260 = vperm.xlu0 %2259, %v1181
          %v2261 = vpop.permute.xlu0 %2260
          %2263 = vset.pattern.permute.xlu0 17
          %2264 = vperm.xlu0 %2263, %v1182
          %v2265 = vpop.permute.xlu0 %2264
          %v2267 = vmul.f32 %v2261, %v1236
          %v2268 = vmul.f32 %v2265, %v1236
          %v2269 = vadd.f32 %v2257, %v2267
          %v2270 = vadd.f32 %v2258, %v2268
          %v2271 = vmul.f32 %v2153, %v1257
          %v2272 = vmul.f32 %v2157, %v1257
          %v2273 = vadd.f32 %v2269, %v2271
          %v2274 = vadd.f32 %v2270, %v2272
          %v2275 = vmul.f32 %v2217, %v1274
          %v2276 = vmul.f32 %v2221, %v1274
          %v2277 = vadd.f32 %v2273, %v2275
          %v2278 = vadd.f32 %v2274, %v2276
          %2279 = vset.pattern.permute.xlu0 17
          %2280 = vperm.xlu0 %2279, %v1242
          %v2281 = vpop.permute.xlu0 %2280
          %2283 = vset.pattern.permute.xlu0 17
          %2284 = vperm.xlu0 %2283, %v1243
          %v2285 = vpop.permute.xlu0 %2284
          %v2287 = vmul.f32 %v2281, %v1291
          %v2288 = vmul.f32 %v2285, %v1291
          %v2289 = vadd.f32 %v2277, %v2287
          %v2290 = vadd.f32 %v2278, %v2288
          %v2291 = vmul.f32 %v2173, %v1312
          %v2292 = vmul.f32 %v2177, %v1312
          %v2293 = vadd.f32 %v2289, %v2291
          %v2294 = vadd.f32 %v2290, %v2292
          %v2295 = vmul.f32 %v2237, %v1329
          %v2296 = vmul.f32 %v2241, %v1329
          %v2297 = vadd.f32 %v2293, %v2295
          %v2298 = vadd.f32 %v2294, %v2296
          %2299 = vset.pattern.permute.xlu0 17
          %2300 = vperm.xlu0 %2299, %v1297
          %v2301 = vpop.permute.xlu0 %2300
          %2303 = vset.pattern.permute.xlu0 17
          %2304 = vperm.xlu0 %2303, %v1298
          %v2305 = vpop.permute.xlu0 %2304
          %v2307 = vmul.f32 %v2301, %v1346
          %v2308 = vmul.f32 %v2305, %v1346
          %v2309 = vadd.f32 %v2297, %v2307
          %v2310 = vadd.f32 %v2298, %v2308
          %v2311 = vmax.f32 %v2309, 0.0
          %v2312 = vmax.f32 %v2310, 0.0
          %v2313 = vadd.f32 %v2249, %v2311
          %v2314 = vadd.f32 %v2250, %v2312
          %v2315 = vmul.f32 %v2197, %v1196
          %v2316 = vmul.f32 %v2201, %v1196
          %v2317 = vadd.f32 %v1203, %v2315
          %v2318 = vadd.f32 %v1203, %v2316
          %v2319 = vmul.f32 %v2261, %v1219
          %v2320 = vmul.f32 %v2265, %v1219
          %v2321 = vadd.f32 %v2317, %v2319
          %v2322 = vadd.f32 %v2318, %v2320
          %2323 = vset.pattern.permute.xlu0 18
          %2324 = vperm.xlu0 %2323, %v1181
          %v2325 = vpop.permute.xlu0 %2324
          %2327 = vset.pattern.permute.xlu0 18
          %2328 = vperm.xlu0 %2327, %v1182
          %v2329 = vpop.permute.xlu0 %2328
          %v2331 = vmul.f32 %v2325, %v1236
          %v2332 = vmul.f32 %v2329, %v1236
          %v2333 = vadd.f32 %v2321, %v2331
          %v2334 = vadd.f32 %v2322, %v2332
          %v2335 = vmul.f32 %v2217, %v1257
          %v2336 = vmul.f32 %v2221, %v1257
          %v2337 = vadd.f32 %v2333, %v2335
          %v2338 = vadd.f32 %v2334, %v2336
          %v2339 = vmul.f32 %v2281, %v1274
          %v2340 = vmul.f32 %v2285, %v1274
          %v2341 = vadd.f32 %v2337, %v2339
          %v2342 = vadd.f32 %v2338, %v2340
          %2343 = vset.pattern.permute.xlu0 18
          %2344 = vperm.xlu0 %2343, %v1242
          %v2345 = vpop.permute.xlu0 %2344
          %2347 = vset.pattern.permute.xlu0 18
          %2348 = vperm.xlu0 %2347, %v1243
          %v2349 = vpop.permute.xlu0 %2348
          %v2351 = vmul.f32 %v2345, %v1291
          %v2352 = vmul.f32 %v2349, %v1291
          %v2353 = vadd.f32 %v2341, %v2351
          %v2354 = vadd.f32 %v2342, %v2352
          %v2355 = vmul.f32 %v2237, %v1312
          %v2356 = vmul.f32 %v2241, %v1312
          %v2357 = vadd.f32 %v2353, %v2355
          %v2358 = vadd.f32 %v2354, %v2356
          %v2359 = vmul.f32 %v2301, %v1329
          %v2360 = vmul.f32 %v2305, %v1329
          %v2361 = vadd.f32 %v2357, %v2359
          %v2362 = vadd.f32 %v2358, %v2360
          %2363 = vset.pattern.permute.xlu0 18
          %2364 = vperm.xlu0 %2363, %v1297
          %v2365 = vpop.permute.xlu0 %2364
          %2367 = vset.pattern.permute.xlu0 18
          %2368 = vperm.xlu0 %2367, %v1298
          %v2369 = vpop.permute.xlu0 %2368
          %v2371 = vmul.f32 %v2365, %v1346
          %v2372 = vmul.f32 %v2369, %v1346
          %v2373 = vadd.f32 %v2361, %v2371
          %v2374 = vadd.f32 %v2362, %v2372
          %v2375 = vmax.f32 %v2373, 0.0
          %v2376 = vmax.f32 %v2374, 0.0
          %v2377 = vadd.f32 %v2313, %v2375
          %v2378 = vadd.f32 %v2314, %v2376
          %v2379 = vmul.f32 %v2261, %v1196
          %v2380 = vmul.f32 %v2265, %v1196
          %v2381 = vadd.f32 %v1203, %v2379
          %v2382 = vadd.f32 %v1203, %v2380
          %v2383 = vmul.f32 %v2325, %v1219
          %v2384 = vmul.f32 %v2329, %v1219
          %v2385 = vadd.f32 %v2381, %v2383
          %v2386 = vadd.f32 %v2382, %v2384
          %2387 = vset.pattern.permute.xlu0 19
          %2388 = vperm.xlu0 %2387, %v1181
          %v2389 = vpop.permute.xlu0 %2388
          %2391 = vset.pattern.permute.xlu0 19
          %2392 = vperm.xlu0 %2391, %v1182
          %v2393 = vpop.permute.xlu0 %2392
          %v2395 = vmul.f32 %v2389, %v1236
          %v2396 = vmul.f32 %v2393, %v1236
          %v2397 = vadd.f32 %v2385, %v2395
          %v2398 = vadd.f32 %v2386, %v2396
          %v2399 = vmul.f32 %v2281, %v1257
          %v2400 = vmul.f32 %v2285, %v1257
          %v2401 = vadd.f32 %v2397, %v2399
          %v2402 = vadd.f32 %v2398, %v2400
          %v2403 = vmul.f32 %v2345, %v1274
          %v2404 = vmul.f32 %v2349, %v1274
          %v2405 = vadd.f32 %v2401, %v2403
          %v2406 = vadd.f32 %v2402, %v2404
          %2407 = vset.pattern.permute.xlu0 19
          %2408 = vperm.xlu0 %2407, %v1242
          %v2409 = vpop.permute.xlu0 %2408
          %2411 = vset.pattern.permute.xlu0 19
          %2412 = vperm.xlu0 %2411, %v1243
          %v2413 = vpop.permute.xlu0 %2412
          %v2415 = vmul.f32 %v2409, %v1291
          %v2416 = vmul.f32 %v2413, %v1291
          %v2417 = vadd.f32 %v2405, %v2415
          %v2418 = vadd.f32 %v2406, %v2416
          %v2419 = vmul.f32 %v2301, %v1312
          %v2420 = vmul.f32 %v2305, %v1312
          %v2421 = vadd.f32 %v2417, %v2419
          %v2422 = vadd.f32 %v2418, %v2420
          %v2423 = vmul.f32 %v2365, %v1329
          %v2424 = vmul.f32 %v2369, %v1329
          %v2425 = vadd.f32 %v2421, %v2423
          %v2426 = vadd.f32 %v2422, %v2424
          %2427 = vset.pattern.permute.xlu0 19
          %2428 = vperm.xlu0 %2427, %v1297
          %v2429 = vpop.permute.xlu0 %2428
          %2431 = vset.pattern.permute.xlu0 19
          %2432 = vperm.xlu0 %2431, %v1298
          %v2433 = vpop.permute.xlu0 %2432
          %v2435 = vmul.f32 %v2429, %v1346
          %v2436 = vmul.f32 %v2433, %v1346
          %v2437 = vadd.f32 %v2425, %v2435
          %v2438 = vadd.f32 %v2426, %v2436
          %v2439 = vmax.f32 %v2437, 0.0
          %v2440 = vmax.f32 %v2438, 0.0
          %v2441 = vadd.f32 %v2377, %v2439
          %v2442 = vadd.f32 %v2378, %v2440
          %v2443 = vmul.f32 %v2325, %v1196
          %v2444 = vmul.f32 %v2329, %v1196
          %v2445 = vadd.f32 %v1203, %v2443
          %v2446 = vadd.f32 %v1203, %v2444
          %v2447 = vmul.f32 %v2389, %v1219
          %v2448 = vmul.f32 %v2393, %v1219
          %v2449 = vadd.f32 %v2445, %v2447
          %v2450 = vadd.f32 %v2446, %v2448
          %2451 = vset.pattern.permute.xlu0 20
          %2452 = vperm.xlu0 %2451, %v1181
          %v2453 = vpop.permute.xlu0 %2452
          %2455 = vset.pattern.permute.xlu0 20
          %2456 = vperm.xlu0 %2455, %v1182
          %v2457 = vpop.permute.xlu0 %2456
          %v2459 = vmul.f32 %v2453, %v1236
          %v2460 = vmul.f32 %v2457, %v1236
          %v2461 = vadd.f32 %v2449, %v2459
          %v2462 = vadd.f32 %v2450, %v2460
          %v2463 = vmul.f32 %v2345, %v1257
          %v2464 = vmul.f32 %v2349, %v1257
          %v2465 = vadd.f32 %v2461, %v2463
          %v2466 = vadd.f32 %v2462, %v2464
          %v2467 = vmul.f32 %v2409, %v1274
          %v2468 = vmul.f32 %v2413, %v1274
          %v2469 = vadd.f32 %v2465, %v2467
          %v2470 = vadd.f32 %v2466, %v2468
          %2471 = vset.pattern.permute.xlu0 20
          %2472 = vperm.xlu0 %2471, %v1242
          %v2473 = vpop.permute.xlu0 %2472
          %2475 = vset.pattern.permute.xlu0 20
          %2476 = vperm.xlu0 %2475, %v1243
          %v2477 = vpop.permute.xlu0 %2476
          %v2479 = vmul.f32 %v2473, %v1291
          %v2480 = vmul.f32 %v2477, %v1291
          %v2481 = vadd.f32 %v2469, %v2479
          %v2482 = vadd.f32 %v2470, %v2480
          %v2483 = vmul.f32 %v2365, %v1312
          %v2484 = vmul.f32 %v2369, %v1312
          %v2485 = vadd.f32 %v2481, %v2483
          %v2486 = vadd.f32 %v2482, %v2484
          %v2487 = vmul.f32 %v2429, %v1329
          %v2488 = vmul.f32 %v2433, %v1329
          %v2489 = vadd.f32 %v2485, %v2487
          %v2490 = vadd.f32 %v2486, %v2488
          %2491 = vset.pattern.permute.xlu0 20
          %2492 = vperm.xlu0 %2491, %v1297
          %v2493 = vpop.permute.xlu0 %2492
          %2495 = vset.pattern.permute.xlu0 20
          %2496 = vperm.xlu0 %2495, %v1298
          %v2497 = vpop.permute.xlu0 %2496
          %v2499 = vmul.f32 %v2493, %v1346
          %v2500 = vmul.f32 %v2497, %v1346
          %v2501 = vadd.f32 %v2489, %v2499
          %v2502 = vadd.f32 %v2490, %v2500
          %v2503 = vmax.f32 %v2501, 0.0
          %v2504 = vmax.f32 %v2502, 0.0
          %v2505 = vadd.f32 %v2441, %v2503
          %v2506 = vadd.f32 %v2442, %v2504
          %v2507 = vmul.f32 %v2389, %v1196
          %v2508 = vmul.f32 %v2393, %v1196
          %v2509 = vadd.f32 %v1203, %v2507
          %v2510 = vadd.f32 %v1203, %v2508
          %v2511 = vmul.f32 %v2453, %v1219
          %v2512 = vmul.f32 %v2457, %v1219
          %v2513 = vadd.f32 %v2509, %v2511
          %v2514 = vadd.f32 %v2510, %v2512
          %2515 = vset.pattern.permute.xlu0 21
          %2516 = vperm.xlu0 %2515, %v1181
          %v2517 = vpop.permute.xlu0 %2516
          %2519 = vset.pattern.permute.xlu0 21
          %2520 = vperm.xlu0 %2519, %v1182
          %v2521 = vpop.permute.xlu0 %2520
          %v2523 = vmul.f32 %v2517, %v1236
          %v2524 = vmul.f32 %v2521, %v1236
          %v2525 = vadd.f32 %v2513, %v2523
          %v2526 = vadd.f32 %v2514, %v2524
          %v2527 = vmul.f32 %v2409, %v1257
          %v2528 = vmul.f32 %v2413, %v1257
          %v2529 = vadd.f32 %v2525, %v2527
          %v2530 = vadd.f32 %v2526, %v2528
          %v2531 = vmul.f32 %v2473, %v1274
          %v2532 = vmul.f32 %v2477, %v1274
          %v2533 = vadd.f32 %v2529, %v2531
          %v2534 = vadd.f32 %v2530, %v2532
          %2535 = vset.pattern.permute.xlu0 21
          %2536 = vperm.xlu0 %2535, %v1242
          %v2537 = vpop.permute.xlu0 %2536
          %2539 = vset.pattern.permute.xlu0 21
          %2540 = vperm.xlu0 %2539, %v1243
          %v2541 = vpop.permute.xlu0 %2540
          %v2543 = vmul.f32 %v2537, %v1291
          %v2544 = vmul.f32 %v2541, %v1291
          %v2545 = vadd.f32 %v2533, %v2543
          %v2546 = vadd.f32 %v2534, %v2544
          %v2547 = vmul.f32 %v2429, %v1312
          %v2548 = vmul.f32 %v2433, %v1312
          %v2549 = vadd.f32 %v2545, %v2547
          %v2550 = vadd.f32 %v2546, %v2548
          %v2551 = vmul.f32 %v2493, %v1329
          %v2552 = vmul.f32 %v2497, %v1329
          %v2553 = vadd.f32 %v2549, %v2551
          %v2554 = vadd.f32 %v2550, %v2552
          %2555 = vset.pattern.permute.xlu0 21
          %2556 = vperm.xlu0 %2555, %v1297
          %v2557 = vpop.permute.xlu0 %2556
          %2559 = vset.pattern.permute.xlu0 21
          %2560 = vperm.xlu0 %2559, %v1298
          %v2561 = vpop.permute.xlu0 %2560
          %v2563 = vmul.f32 %v2557, %v1346
          %v2564 = vmul.f32 %v2561, %v1346
          %v2565 = vadd.f32 %v2553, %v2563
          %v2566 = vadd.f32 %v2554, %v2564
          %v2567 = vmax.f32 %v2565, 0.0
          %v2568 = vmax.f32 %v2566, 0.0
          %v2569 = vadd.f32 %v2505, %v2567
          %v2570 = vadd.f32 %v2506, %v2568
          %v2571 = vmul.f32 %v2453, %v1196
          %v2572 = vmul.f32 %v2457, %v1196
          %v2573 = vadd.f32 %v1203, %v2571
          %v2574 = vadd.f32 %v1203, %v2572
          %v2575 = vmul.f32 %v2517, %v1219
          %v2576 = vmul.f32 %v2521, %v1219
          %v2577 = vadd.f32 %v2573, %v2575
          %v2578 = vadd.f32 %v2574, %v2576
          %2579 = vset.pattern.permute.xlu0 22
          %2580 = vperm.xlu0 %2579, %v1181
          %v2581 = vpop.permute.xlu0 %2580
          %2583 = vset.pattern.permute.xlu0 22
          %2584 = vperm.xlu0 %2583, %v1182
          %v2585 = vpop.permute.xlu0 %2584
          %v2587 = vmul.f32 %v2581, %v1236
          %v2588 = vmul.f32 %v2585, %v1236
          %v2589 = vadd.f32 %v2577, %v2587
          %v2590 = vadd.f32 %v2578, %v2588
          %v2591 = vmul.f32 %v2473, %v1257
          %v2592 = vmul.f32 %v2477, %v1257
          %v2593 = vadd.f32 %v2589, %v2591
          %v2594 = vadd.f32 %v2590, %v2592
          %v2595 = vmul.f32 %v2537, %v1274
          %v2596 = vmul.f32 %v2541, %v1274
          %v2597 = vadd.f32 %v2593, %v2595
          %v2598 = vadd.f32 %v2594, %v2596
          %2599 = vset.pattern.permute.xlu0 22
          %2600 = vperm.xlu0 %2599, %v1242
          %v2601 = vpop.permute.xlu0 %2600
          %2603 = vset.pattern.permute.xlu0 22
          %2604 = vperm.xlu0 %2603, %v1243
          %v2605 = vpop.permute.xlu0 %2604
          %v2607 = vmul.f32 %v2601, %v1291
          %v2608 = vmul.f32 %v2605, %v1291
          %v2609 = vadd.f32 %v2597, %v2607
          %v2610 = vadd.f32 %v2598, %v2608
          %v2611 = vmul.f32 %v2493, %v1312
          %v2612 = vmul.f32 %v2497, %v1312
          %v2613 = vadd.f32 %v2609, %v2611
          %v2614 = vadd.f32 %v2610, %v2612
          %v2615 = vmul.f32 %v2557, %v1329
          %v2616 = vmul.f32 %v2561, %v1329
          %v2617 = vadd.f32 %v2613, %v2615
          %v2618 = vadd.f32 %v2614, %v2616
          %2619 = vset.pattern.permute.xlu0 22
          %2620 = vperm.xlu0 %2619, %v1297
          %v2621 = vpop.permute.xlu0 %2620
          %2623 = vset.pattern.permute.xlu0 22
          %2624 = vperm.xlu0 %2623, %v1298
          %v2625 = vpop.permute.xlu0 %2624
          %v2627 = vmul.f32 %v2621, %v1346
          %v2628 = vmul.f32 %v2625, %v1346
          %v2629 = vadd.f32 %v2617, %v2627
          %v2630 = vadd.f32 %v2618, %v2628
          %v2631 = vmax.f32 %v2629, 0.0
          %v2632 = vmax.f32 %v2630, 0.0
          %v2633 = vadd.f32 %v2569, %v2631
          %v2634 = vadd.f32 %v2570, %v2632
          %v2635 = vmul.f32 %v2517, %v1196
          %v2636 = vmul.f32 %v2521, %v1196
          %v2637 = vadd.f32 %v1203, %v2635
          %v2638 = vadd.f32 %v1203, %v2636
          %v2639 = vmul.f32 %v2581, %v1219
          %v2640 = vmul.f32 %v2585, %v1219
          %v2641 = vadd.f32 %v2637, %v2639
          %v2642 = vadd.f32 %v2638, %v2640
          %2643 = vset.pattern.permute.xlu0 23
          %2644 = vperm.xlu0 %2643, %v1181
          %v2645 = vpop.permute.xlu0 %2644
          %2647 = vset.pattern.permute.xlu0 23
          %2648 = vperm.xlu0 %2647, %v1182
          %v2649 = vpop.permute.xlu0 %2648
          %v2651 = vmul.f32 %v2645, %v1236
          %v2652 = vmul.f32 %v2649, %v1236
          %v2653 = vadd.f32 %v2641, %v2651
          %v2654 = vadd.f32 %v2642, %v2652
          %v2655 = vmul.f32 %v2537, %v1257
          %v2656 = vmul.f32 %v2541, %v1257
          %v2657 = vadd.f32 %v2653, %v2655
          %v2658 = vadd.f32 %v2654, %v2656
          %v2659 = vmul.f32 %v2601, %v1274
          %v2660 = vmul.f32 %v2605, %v1274
          %v2661 = vadd.f32 %v2657, %v2659
          %v2662 = vadd.f32 %v2658, %v2660
          %2663 = vset.pattern.permute.xlu0 23
          %2664 = vperm.xlu0 %2663, %v1242
          %v2665 = vpop.permute.xlu0 %2664
          %2667 = vset.pattern.permute.xlu0 23
          %2668 = vperm.xlu0 %2667, %v1243
          %v2669 = vpop.permute.xlu0 %2668
          %v2671 = vmul.f32 %v2665, %v1291
          %v2672 = vmul.f32 %v2669, %v1291
          %v2673 = vadd.f32 %v2661, %v2671
          %v2674 = vadd.f32 %v2662, %v2672
          %v2675 = vmul.f32 %v2557, %v1312
          %v2676 = vmul.f32 %v2561, %v1312
          %v2677 = vadd.f32 %v2673, %v2675
          %v2678 = vadd.f32 %v2674, %v2676
          %v2679 = vmul.f32 %v2621, %v1329
          %v2680 = vmul.f32 %v2625, %v1329
          %v2681 = vadd.f32 %v2677, %v2679
          %v2682 = vadd.f32 %v2678, %v2680
          %2683 = vset.pattern.permute.xlu0 23
          %2684 = vperm.xlu0 %2683, %v1297
          %v2685 = vpop.permute.xlu0 %2684
          %2687 = vset.pattern.permute.xlu0 23
          %2688 = vperm.xlu0 %2687, %v1298
          %v2689 = vpop.permute.xlu0 %2688
          %v2691 = vmul.f32 %v2685, %v1346
          %v2692 = vmul.f32 %v2689, %v1346
          %v2693 = vadd.f32 %v2681, %v2691
          %v2694 = vadd.f32 %v2682, %v2692
          %v2695 = vmax.f32 %v2693, 0.0
          %v2696 = vmax.f32 %v2694, 0.0
          %v2697 = vadd.f32 %v2633, %v2695
          %v2698 = vadd.f32 %v2634, %v2696
          %v2699 = vmul.f32 %v2581, %v1196
          %v2700 = vmul.f32 %v2585, %v1196
          %v2701 = vadd.f32 %v1203, %v2699
          %v2702 = vadd.f32 %v1203, %v2700
          %v2703 = vmul.f32 %v2645, %v1219
          %v2704 = vmul.f32 %v2649, %v1219
          %v2705 = vadd.f32 %v2701, %v2703
          %v2706 = vadd.f32 %v2702, %v2704
          %2707 = vset.pattern.permute.xlu0 24
          %2708 = vperm.xlu0 %2707, %v1181
          %v2709 = vpop.permute.xlu0 %2708
          %2711 = vset.pattern.permute.xlu0 24
          %2712 = vperm.xlu0 %2711, %v1182
          %v2713 = vpop.permute.xlu0 %2712
          %v2715 = vmul.f32 %v2709, %v1236
          %v2716 = vmul.f32 %v2713, %v1236
          %v2717 = vadd.f32 %v2705, %v2715
          %v2718 = vadd.f32 %v2706, %v2716
          %v2719 = vmul.f32 %v2601, %v1257
          %v2720 = vmul.f32 %v2605, %v1257
          %v2721 = vadd.f32 %v2717, %v2719
          %v2722 = vadd.f32 %v2718, %v2720
          %v2723 = vmul.f32 %v2665, %v1274
          %v2724 = vmul.f32 %v2669, %v1274
          %v2725 = vadd.f32 %v2721, %v2723
          %v2726 = vadd.f32 %v2722, %v2724
          %2727 = vset.pattern.permute.xlu0 24
          %2728 = vperm.xlu0 %2727, %v1242
          %v2729 = vpop.permute.xlu0 %2728
          %2731 = vset.pattern.permute.xlu0 24
          %2732 = vperm.xlu0 %2731, %v1243
          %v2733 = vpop.permute.xlu0 %2732
          %v2735 = vmul.f32 %v2729, %v1291
          %v2736 = vmul.f32 %v2733, %v1291
          %v2737 = vadd.f32 %v2725, %v2735
          %v2738 = vadd.f32 %v2726, %v2736
          %v2739 = vmul.f32 %v2621, %v1312
          %v2740 = vmul.f32 %v2625, %v1312
          %v2741 = vadd.f32 %v2737, %v2739
          %v2742 = vadd.f32 %v2738, %v2740
          %v2743 = vmul.f32 %v2685, %v1329
          %v2744 = vmul.f32 %v2689, %v1329
          %v2745 = vadd.f32 %v2741, %v2743
          %v2746 = vadd.f32 %v2742, %v2744
          %2747 = vset.pattern.permute.xlu0 24
          %2748 = vperm.xlu0 %2747, %v1297
          %v2749 = vpop.permute.xlu0 %2748
          %2751 = vset.pattern.permute.xlu0 24
          %2752 = vperm.xlu0 %2751, %v1298
          %v2753 = vpop.permute.xlu0 %2752
          %v2755 = vmul.f32 %v2749, %v1346
          %v2756 = vmul.f32 %v2753, %v1346
          %v2757 = vadd.f32 %v2745, %v2755
          %v2758 = vadd.f32 %v2746, %v2756
          %v2759 = vmax.f32 %v2757, 0.0
          %v2760 = vmax.f32 %v2758, 0.0
          %v2761 = vadd.f32 %v2697, %v2759
          %v2762 = vadd.f32 %v2698, %v2760
          %v2763 = vmul.f32 %v2645, %v1196
          %v2764 = vmul.f32 %v2649, %v1196
          %v2765 = vadd.f32 %v1203, %v2763
          %v2766 = vadd.f32 %v1203, %v2764
          %v2767 = vmul.f32 %v2709, %v1219
          %v2768 = vmul.f32 %v2713, %v1219
          %v2769 = vadd.f32 %v2765, %v2767
          %v2770 = vadd.f32 %v2766, %v2768
          %2771 = vset.pattern.permute.xlu0 25
          %2772 = vperm.xlu0 %2771, %v1181
          %v2773 = vpop.permute.xlu0 %2772
          %2775 = vset.pattern.permute.xlu0 25
          %2776 = vperm.xlu0 %2775, %v1182
          %v2777 = vpop.permute.xlu0 %2776
          %v2779 = vmul.f32 %v2773, %v1236
          %v2780 = vmul.f32 %v2777, %v1236
          %v2781 = vadd.f32 %v2769, %v2779
          %v2782 = vadd.f32 %v2770, %v2780
          %v2783 = vmul.f32 %v2665, %v1257
          %v2784 = vmul.f32 %v2669, %v1257
          %v2785 = vadd.f32 %v2781, %v2783
          %v2786 = vadd.f32 %v2782, %v2784
          %v2787 = vmul.f32 %v2729, %v1274
          %v2788 = vmul.f32 %v2733, %v1274
          %v2789 = vadd.f32 %v2785, %v2787
          %v2790 = vadd.f32 %v2786, %v2788
          %2791 = vset.pattern.permute.xlu0 25
          %2792 = vperm.xlu0 %2791, %v1242
          %v2793 = vpop.permute.xlu0 %2792
          %2795 = vset.pattern.permute.xlu0 25
          %2796 = vperm.xlu0 %2795, %v1243
          %v2797 = vpop.permute.xlu0 %2796
          %v2799 = vmul.f32 %v2793, %v1291
          %v2800 = vmul.f32 %v2797, %v1291
          %v2801 = vadd.f32 %v2789, %v2799
          %v2802 = vadd.f32 %v2790, %v2800
          %v2803 = vmul.f32 %v2685, %v1312
          %v2804 = vmul.f32 %v2689, %v1312
          %v2805 = vadd.f32 %v2801, %v2803
          %v2806 = vadd.f32 %v2802, %v2804
          %v2807 = vmul.f32 %v2749, %v1329
          %v2808 = vmul.f32 %v2753, %v1329
          %v2809 = vadd.f32 %v2805, %v2807
          %v2810 = vadd.f32 %v2806, %v2808
          %2811 = vset.pattern.permute.xlu0 25
          %2812 = vperm.xlu0 %2811, %v1297
          %v2813 = vpop.permute.xlu0 %2812
          %2815 = vset.pattern.permute.xlu0 25
          %2816 = vperm.xlu0 %2815, %v1298
          %v2817 = vpop.permute.xlu0 %2816
          %v2819 = vmul.f32 %v2813, %v1346
          %v2820 = vmul.f32 %v2817, %v1346
          %v2821 = vadd.f32 %v2809, %v2819
          %v2822 = vadd.f32 %v2810, %v2820
          %v2823 = vmax.f32 %v2821, 0.0
          %v2824 = vmax.f32 %v2822, 0.0
          %v2825 = vadd.f32 %v2761, %v2823
          %v2826 = vadd.f32 %v2762, %v2824
          %v2827 = vmul.f32 %v2709, %v1196
          %v2828 = vmul.f32 %v2713, %v1196
          %v2829 = vadd.f32 %v1203, %v2827
          %v2830 = vadd.f32 %v1203, %v2828
          %v2831 = vmul.f32 %v2773, %v1219
          %v2832 = vmul.f32 %v2777, %v1219
          %v2833 = vadd.f32 %v2829, %v2831
          %v2834 = vadd.f32 %v2830, %v2832
          %2835 = vset.pattern.permute.xlu0 26
          %2836 = vperm.xlu0 %2835, %v1181
          %v2837 = vpop.permute.xlu0 %2836
          %2839 = vset.pattern.permute.xlu0 26
          %2840 = vperm.xlu0 %2839, %v1182
          %v2841 = vpop.permute.xlu0 %2840
          %v2843 = vmul.f32 %v2837, %v1236
          %v2844 = vmul.f32 %v2841, %v1236
          %v2845 = vadd.f32 %v2833, %v2843
          %v2846 = vadd.f32 %v2834, %v2844
          %v2847 = vmul.f32 %v2729, %v1257
          %v2848 = vmul.f32 %v2733, %v1257
          %v2849 = vadd.f32 %v2845, %v2847
          %v2850 = vadd.f32 %v2846, %v2848
          %v2851 = vmul.f32 %v2793, %v1274
          %v2852 = vmul.f32 %v2797, %v1274
          %v2853 = vadd.f32 %v2849, %v2851
          %v2854 = vadd.f32 %v2850, %v2852
          %2855 = vset.pattern.permute.xlu0 26
          %2856 = vperm.xlu0 %2855, %v1242
          %v2857 = vpop.permute.xlu0 %2856
          %2859 = vset.pattern.permute.xlu0 26
          %2860 = vperm.xlu0 %2859, %v1243
          %v2861 = vpop.permute.xlu0 %2860
          %v2863 = vmul.f32 %v2857, %v1291
          %v2864 = vmul.f32 %v2861, %v1291
          %v2865 = vadd.f32 %v2853, %v2863
          %v2866 = vadd.f32 %v2854, %v2864
          %v2867 = vmul.f32 %v2749, %v1312
          %v2868 = vmul.f32 %v2753, %v1312
          %v2869 = vadd.f32 %v2865, %v2867
          %v2870 = vadd.f32 %v2866, %v2868
          %v2871 = vmul.f32 %v2813, %v1329
          %v2872 = vmul.f32 %v2817, %v1329
          %v2873 = vadd.f32 %v2869, %v2871
          %v2874 = vadd.f32 %v2870, %v2872
          %2875 = vset.pattern.permute.xlu0 26
          %2876 = vperm.xlu0 %2875, %v1297
          %v2877 = vpop.permute.xlu0 %2876
          %2879 = vset.pattern.permute.xlu0 26
          %2880 = vperm.xlu0 %2879, %v1298
          %v2881 = vpop.permute.xlu0 %2880
          %v2883 = vmul.f32 %v2877, %v1346
          %v2884 = vmul.f32 %v2881, %v1346
          %v2885 = vadd.f32 %v2873, %v2883
          %v2886 = vadd.f32 %v2874, %v2884
          %v2887 = vmax.f32 %v2885, 0.0
          %v2888 = vmax.f32 %v2886, 0.0
          %v2889 = vadd.f32 %v2825, %v2887
          %v2890 = vadd.f32 %v2826, %v2888
          %v2891 = vmul.f32 %v2773, %v1196
          %v2892 = vmul.f32 %v2777, %v1196
          %v2893 = vadd.f32 %v1203, %v2891
          %v2894 = vadd.f32 %v1203, %v2892
          %v2895 = vmul.f32 %v2837, %v1219
          %v2896 = vmul.f32 %v2841, %v1219
          %v2897 = vadd.f32 %v2893, %v2895
          %v2898 = vadd.f32 %v2894, %v2896
          %2899 = vset.pattern.permute.xlu0 27
          %2900 = vperm.xlu0 %2899, %v1181
          %v2901 = vpop.permute.xlu0 %2900
          %2903 = vset.pattern.permute.xlu0 27
          %2904 = vperm.xlu0 %2903, %v1182
          %v2905 = vpop.permute.xlu0 %2904
          %v2907 = vmul.f32 %v2901, %v1236
          %v2908 = vmul.f32 %v2905, %v1236
          %v2909 = vadd.f32 %v2897, %v2907
          %v2910 = vadd.f32 %v2898, %v2908
          %v2911 = vmul.f32 %v2793, %v1257
          %v2912 = vmul.f32 %v2797, %v1257
          %v2913 = vadd.f32 %v2909, %v2911
          %v2914 = vadd.f32 %v2910, %v2912
          %v2915 = vmul.f32 %v2857, %v1274
          %v2916 = vmul.f32 %v2861, %v1274
          %v2917 = vadd.f32 %v2913, %v2915
          %v2918 = vadd.f32 %v2914, %v2916
          %2919 = vset.pattern.permute.xlu0 27
          %2920 = vperm.xlu0 %2919, %v1242
          %v2921 = vpop.permute.xlu0 %2920
          %2923 = vset.pattern.permute.xlu0 27
          %2924 = vperm.xlu0 %2923, %v1243
          %v2925 = vpop.permute.xlu0 %2924
          %v2927 = vmul.f32 %v2921, %v1291
          %v2928 = vmul.f32 %v2925, %v1291
          %v2929 = vadd.f32 %v2917, %v2927
          %v2930 = vadd.f32 %v2918, %v2928
          %v2931 = vmul.f32 %v2813, %v1312
          %v2932 = vmul.f32 %v2817, %v1312
          %v2933 = vadd.f32 %v2929, %v2931
          %v2934 = vadd.f32 %v2930, %v2932
          %v2935 = vmul.f32 %v2877, %v1329
          %v2936 = vmul.f32 %v2881, %v1329
          %v2937 = vadd.f32 %v2933, %v2935
          %v2938 = vadd.f32 %v2934, %v2936
          %2939 = vset.pattern.permute.xlu0 27
          %2940 = vperm.xlu0 %2939, %v1297
          %v2941 = vpop.permute.xlu0 %2940
          %2943 = vset.pattern.permute.xlu0 27
          %2944 = vperm.xlu0 %2943, %v1298
          %v2945 = vpop.permute.xlu0 %2944
          %v2947 = vmul.f32 %v2941, %v1346
          %v2948 = vmul.f32 %v2945, %v1346
          %v2949 = vadd.f32 %v2937, %v2947
          %v2950 = vadd.f32 %v2938, %v2948
          %v2951 = vmax.f32 %v2949, 0.0
          %v2952 = vmax.f32 %v2950, 0.0
          %v2953 = vadd.f32 %v2889, %v2951
          %v2954 = vadd.f32 %v2890, %v2952
          %v2955 = vmul.f32 %v2837, %v1196
          %v2956 = vmul.f32 %v2841, %v1196
          %v2957 = vadd.f32 %v1203, %v2955
          %v2958 = vadd.f32 %v1203, %v2956
          %v2959 = vmul.f32 %v2901, %v1219
          %v2960 = vmul.f32 %v2905, %v1219
          %v2961 = vadd.f32 %v2957, %v2959
          %v2962 = vadd.f32 %v2958, %v2960
          %2963 = vset.pattern.permute.xlu0 28
          %2964 = vperm.xlu0 %2963, %v1181
          %v2965 = vpop.permute.xlu0 %2964
          %2967 = vset.pattern.permute.xlu0 28
          %2968 = vperm.xlu0 %2967, %v1182
          %v2969 = vpop.permute.xlu0 %2968
          %v2971 = vmul.f32 %v2965, %v1236
          %v2972 = vmul.f32 %v2969, %v1236
          %v2973 = vadd.f32 %v2961, %v2971
          %v2974 = vadd.f32 %v2962, %v2972
          %v2975 = vmul.f32 %v2857, %v1257
          %v2976 = vmul.f32 %v2861, %v1257
          %v2977 = vadd.f32 %v2973, %v2975
          %v2978 = vadd.f32 %v2974, %v2976
          %v2979 = vmul.f32 %v2921, %v1274
          %v2980 = vmul.f32 %v2925, %v1274
          %v2981 = vadd.f32 %v2977, %v2979
          %v2982 = vadd.f32 %v2978, %v2980
          %2983 = vset.pattern.permute.xlu0 28
          %2984 = vperm.xlu0 %2983, %v1242
          %v2985 = vpop.permute.xlu0 %2984
          %2987 = vset.pattern.permute.xlu0 28
          %2988 = vperm.xlu0 %2987, %v1243
          %v2989 = vpop.permute.xlu0 %2988
          %v2991 = vmul.f32 %v2985, %v1291
          %v2992 = vmul.f32 %v2989, %v1291
          %v2993 = vadd.f32 %v2981, %v2991
          %v2994 = vadd.f32 %v2982, %v2992
          %v2995 = vmul.f32 %v2877, %v1312
          %v2996 = vmul.f32 %v2881, %v1312
          %v2997 = vadd.f32 %v2993, %v2995
          %v2998 = vadd.f32 %v2994, %v2996
          %v2999 = vmul.f32 %v2941, %v1329
          %v3000 = vmul.f32 %v2945, %v1329
          %v3001 = vadd.f32 %v2997, %v2999
          %v3002 = vadd.f32 %v2998, %v3000
          %3003 = vset.pattern.permute.xlu0 28
          %3004 = vperm.xlu0 %3003, %v1297
          %v3005 = vpop.permute.xlu0 %3004
          %3007 = vset.pattern.permute.xlu0 28
          %3008 = vperm.xlu0 %3007, %v1298
          %v3009 = vpop.permute.xlu0 %3008
          %v3011 = vmul.f32 %v3005, %v1346
          %v3012 = vmul.f32 %v3009, %v1346
          %v3013 = vadd.f32 %v3001, %v3011
          %v3014 = vadd.f32 %v3002, %v3012
          %v3015 = vmax.f32 %v3013, 0.0
          %v3016 = vmax.f32 %v3014, 0.0
          %v3017 = vadd.f32 %v2953, %v3015
          %v3018 = vadd.f32 %v2954, %v3016
          %v3019 = vmul.f32 %v2901, %v1196
          %v3020 = vmul.f32 %v2905, %v1196
          %v3021 = vadd.f32 %v1203, %v3019
          %v3022 = vadd.f32 %v1203, %v3020
          %v3023 = vmul.f32 %v2965, %v1219
          %v3024 = vmul.f32 %v2969, %v1219
          %v3025 = vadd.f32 %v3021, %v3023
          %v3026 = vadd.f32 %v3022, %v3024
          %3027 = vset.pattern.permute.xlu0 29
          %3028 = vperm.xlu0 %3027, %v1181
          %v3029 = vpop.permute.xlu0 %3028
          %3031 = vset.pattern.permute.xlu0 29
          %3032 = vperm.xlu0 %3031, %v1182
          %v3033 = vpop.permute.xlu0 %3032
          %v3035 = vmul.f32 %v3029, %v1236
          %v3036 = vmul.f32 %v3033, %v1236
          %v3037 = vadd.f32 %v3025, %v3035
          %v3038 = vadd.f32 %v3026, %v3036
          %v3039 = vmul.f32 %v2921, %v1257
          %v3040 = vmul.f32 %v2925, %v1257
          %v3041 = vadd.f32 %v3037, %v3039
          %v3042 = vadd.f32 %v3038, %v3040
          %v3043 = vmul.f32 %v2985, %v1274
          %v3044 = vmul.f32 %v2989, %v1274
          %v3045 = vadd.f32 %v3041, %v3043
          %v3046 = vadd.f32 %v3042, %v3044
          %3047 = vset.pattern.permute.xlu0 29
          %3048 = vperm.xlu0 %3047, %v1242
          %v3049 = vpop.permute.xlu0 %3048
          %3051 = vset.pattern.permute.xlu0 29
          %3052 = vperm.xlu0 %3051, %v1243
          %v3053 = vpop.permute.xlu0 %3052
          %v3055 = vmul.f32 %v3049, %v1291
          %v3056 = vmul.f32 %v3053, %v1291
          %v3057 = vadd.f32 %v3045, %v3055
          %v3058 = vadd.f32 %v3046, %v3056
          %v3059 = vmul.f32 %v2941, %v1312
          %v3060 = vmul.f32 %v2945, %v1312
          %v3061 = vadd.f32 %v3057, %v3059
          %v3062 = vadd.f32 %v3058, %v3060
          %v3063 = vmul.f32 %v3005, %v1329
          %v3064 = vmul.f32 %v3009, %v1329
          %v3065 = vadd.f32 %v3061, %v3063
          %v3066 = vadd.f32 %v3062, %v3064
          %3067 = vset.pattern.permute.xlu0 29
          %3068 = vperm.xlu0 %3067, %v1297
          %v3069 = vpop.permute.xlu0 %3068
          %3071 = vset.pattern.permute.xlu0 29
          %3072 = vperm.xlu0 %3071, %v1298
          %v3073 = vpop.permute.xlu0 %3072
          %v3075 = vmul.f32 %v3069, %v1346
          %v3076 = vmul.f32 %v3073, %v1346
          %v3077 = vadd.f32 %v3065, %v3075
          %v3078 = vadd.f32 %v3066, %v3076
          %v3079 = vmax.f32 %v3077, 0.0
          %v3080 = vmax.f32 %v3078, 0.0
          %v3081 = vadd.f32 %v3017, %v3079
          %v3082 = vadd.f32 %v3018, %v3080
          %v3083 = vmul.f32 %v2965, %v1196
          %v3084 = vmul.f32 %v2969, %v1196
          %v3085 = vadd.f32 %v1203, %v3083
          %v3086 = vadd.f32 %v1203, %v3084
          %v3087 = vmul.f32 %v3029, %v1219
          %v3088 = vmul.f32 %v3033, %v1219
          %v3089 = vadd.f32 %v3085, %v3087
          %v3090 = vadd.f32 %v3086, %v3088
          %3091 = vset.pattern.permute.xlu0 30
          %3092 = vperm.xlu0 %3091, %v1181
          %v3093 = vpop.permute.xlu0 %3092
          %3095 = vset.pattern.permute.xlu0 30
          %3096 = vperm.xlu0 %3095, %v1182
          %v3097 = vpop.permute.xlu0 %3096
          %v3099 = vmul.f32 %v3093, %v1236
          %v3100 = vmul.f32 %v3097, %v1236
          %v3101 = vadd.f32 %v3089, %v3099
          %v3102 = vadd.f32 %v3090, %v3100
          %v3103 = vmul.f32 %v2985, %v1257
          %v3104 = vmul.f32 %v2989, %v1257
          %v3105 = vadd.f32 %v3101, %v3103
          %v3106 = vadd.f32 %v3102, %v3104
          %v3107 = vmul.f32 %v3049, %v1274
          %v3108 = vmul.f32 %v3053, %v1274
          %v3109 = vadd.f32 %v3105, %v3107
          %v3110 = vadd.f32 %v3106, %v3108
          %3111 = vset.pattern.permute.xlu0 30
          %3112 = vperm.xlu0 %3111, %v1242
          %v3113 = vpop.permute.xlu0 %3112
          %3115 = vset.pattern.permute.xlu0 30
          %3116 = vperm.xlu0 %3115, %v1243
          %v3117 = vpop.permute.xlu0 %3116
          %v3119 = vmul.f32 %v3113, %v1291
          %v3120 = vmul.f32 %v3117, %v1291
          %v3121 = vadd.f32 %v3109, %v3119
          %v3122 = vadd.f32 %v3110, %v3120
          %v3123 = vmul.f32 %v3005, %v1312
          %v3124 = vmul.f32 %v3009, %v1312
          %v3125 = vadd.f32 %v3121, %v3123
          %v3126 = vadd.f32 %v3122, %v3124
          %v3127 = vmul.f32 %v3069, %v1329
          %v3128 = vmul.f32 %v3073, %v1329
          %v3129 = vadd.f32 %v3125, %v3127
          %v3130 = vadd.f32 %v3126, %v3128
          %3131 = vset.pattern.permute.xlu0 30
          %3132 = vperm.xlu0 %3131, %v1297
          %v3133 = vpop.permute.xlu0 %3132
          %3135 = vset.pattern.permute.xlu0 30
          %3136 = vperm.xlu0 %3135, %v1298
          %v3137 = vpop.permute.xlu0 %3136
          %v3139 = vmul.f32 %v3133, %v1346
          %v3140 = vmul.f32 %v3137, %v1346
          %v3141 = vadd.f32 %v3129, %v3139
          %v3142 = vadd.f32 %v3130, %v3140
          %v3143 = vmax.f32 %v3141, 0.0
          %v3144 = vmax.f32 %v3142, 0.0
          %v3145 = vadd.f32 %v3081, %v3143
          %v3146 = vadd.f32 %v3082, %v3144
          %v3147 = vmul.f32 %v3029, %v1196
          %v3148 = vmul.f32 %v3033, %v1196
          %v3149 = vadd.f32 %v1203, %v3147
          %v3150 = vadd.f32 %v1203, %v3148
          %v3151 = vmul.f32 %v3093, %v1219
          %v3152 = vmul.f32 %v3097, %v1219
          %v3153 = vadd.f32 %v3149, %v3151
          %v3154 = vadd.f32 %v3150, %v3152
          %3155 = vset.pattern.permute.xlu0 31
          %3156 = vperm.xlu0 %3155, %v1181
          %v3157 = vpop.permute.xlu0 %3156
          %3159 = vset.pattern.permute.xlu0 31
          %3160 = vperm.xlu0 %3159, %v1182
          %v3161 = vpop.permute.xlu0 %3160
          %v3163 = vmul.f32 %v3157, %v1236
          %v3164 = vmul.f32 %v3161, %v1236
          %v3165 = vadd.f32 %v3153, %v3163
          %v3166 = vadd.f32 %v3154, %v3164
          %v3167 = vmul.f32 %v3049, %v1257
          %v3168 = vmul.f32 %v3053, %v1257
          %v3169 = vadd.f32 %v3165, %v3167
          %v3170 = vadd.f32 %v3166, %v3168
          %v3171 = vmul.f32 %v3113, %v1274
          %v3172 = vmul.f32 %v3117, %v1274
          %v3173 = vadd.f32 %v3169, %v3171
          %v3174 = vadd.f32 %v3170, %v3172
          %3175 = vset.pattern.permute.xlu0 31
          %3176 = vperm.xlu0 %3175, %v1242
          %v3177 = vpop.permute.xlu0 %3176
          %3179 = vset.pattern.permute.xlu0 31
          %3180 = vperm.xlu0 %3179, %v1243
          %v3181 = vpop.permute.xlu0 %3180
          %v3183 = vmul.f32 %v3177, %v1291
          %v3184 = vmul.f32 %v3181, %v1291
          %v3185 = vadd.f32 %v3173, %v3183
          %v3186 = vadd.f32 %v3174, %v3184
          %v3187 = vmul.f32 %v3069, %v1312
          %v3188 = vmul.f32 %v3073, %v1312
          %v3189 = vadd.f32 %v3185, %v3187
          %v3190 = vadd.f32 %v3186, %v3188
          %v3191 = vmul.f32 %v3133, %v1329
          %v3192 = vmul.f32 %v3137, %v1329
          %v3193 = vadd.f32 %v3189, %v3191
          %v3194 = vadd.f32 %v3190, %v3192
          %3195 = vset.pattern.permute.xlu0 31
          %3196 = vperm.xlu0 %3195, %v1297
          %v3197 = vpop.permute.xlu0 %3196
          %3199 = vset.pattern.permute.xlu0 31
          %3200 = vperm.xlu0 %3199, %v1298
          %v3201 = vpop.permute.xlu0 %3200
          %v3203 = vmul.f32 %v3197, %v1346
          %v3204 = vmul.f32 %v3201, %v1346
          %v3205 = vadd.f32 %v3193, %v3203
          %v3206 = vadd.f32 %v3194, %v3204
          %v3207 = vmax.f32 %v3205, 0.0
          %v3208 = vmax.f32 %v3206, 0.0
          %v3209 = vadd.f32 %v3145, %v3207
          %v3210 = vadd.f32 %v3146, %v3208
          %v3211 = vmul.f32 %v3093, %v1196
          %v3212 = vmul.f32 %v3097, %v1196
          %v3213 = vadd.f32 %v1203, %v3211
          %v3214 = vadd.f32 %v1203, %v3212
          %v3215 = vmul.f32 %v3157, %v1219
          %v3216 = vmul.f32 %v3161, %v1219
          %v3217 = vadd.f32 %v3213, %v3215
          %v3218 = vadd.f32 %v3214, %v3216
          %3219 = vset.pattern.permute.xlu0 32
          %3220 = vperm.xlu0 %3219, %v1181
          %v3221 = vpop.permute.xlu0 %3220
          %3223 = vset.pattern.permute.xlu0 32
          %3224 = vperm.xlu0 %3223, %v1182
          %v3225 = vpop.permute.xlu0 %3224
          %v3227 = vmul.f32 %v3221, %v1236
          %v3228 = vmul.f32 %v3225, %v1236
          %v3229 = vadd.f32 %v3217, %v3227
          %v3230 = vadd.f32 %v3218, %v3228
          %v3231 = vmul.f32 %v3113, %v1257
          %v3232 = vmul.f32 %v3117, %v1257
          %v3233 = vadd.f32 %v3229, %v3231
          %v3234 = vadd.f32 %v3230, %v3232
          %v3235 = vmul.f32 %v3177, %v1274
          %v3236 = vmul.f32 %v3181, %v1274
          %v3237 = vadd.f32 %v3233, %v3235
          %v3238 = vadd.f32 %v3234, %v3236
          %3239 = vset.pattern.permute.xlu0 32
          %3240 = vperm.xlu0 %3239, %v1242
          %v3241 = vpop.permute.xlu0 %3240
          %3243 = vset.pattern.permute.xlu0 32
          %3244 = vperm.xlu0 %3243, %v1243
          %v3245 = vpop.permute.xlu0 %3244
          %v3247 = vmul.f32 %v3241, %v1291
          %v3248 = vmul.f32 %v3245, %v1291
          %v3249 = vadd.f32 %v3237, %v3247
          %v3250 = vadd.f32 %v3238, %v3248
          %v3251 = vmul.f32 %v3133, %v1312
          %v3252 = vmul.f32 %v3137, %v1312
          %v3253 = vadd.f32 %v3249, %v3251
          %v3254 = vadd.f32 %v3250, %v3252
          %v3255 = vmul.f32 %v3197, %v1329
          %v3256 = vmul.f32 %v3201, %v1329
          %v3257 = vadd.f32 %v3253, %v3255
          %v3258 = vadd.f32 %v3254, %v3256
          %3259 = vset.pattern.permute.xlu0 32
          %3260 = vperm.xlu0 %3259, %v1297
          %v3261 = vpop.permute.xlu0 %3260
          %3263 = vset.pattern.permute.xlu0 32
          %3264 = vperm.xlu0 %3263, %v1298
          %v3265 = vpop.permute.xlu0 %3264
          %v3267 = vmul.f32 %v3261, %v1346
          %v3268 = vmul.f32 %v3265, %v1346
          %v3269 = vadd.f32 %v3257, %v3267
          %v3270 = vadd.f32 %v3258, %v3268
          %v3271 = vmax.f32 %v3269, 0.0
          %v3272 = vmax.f32 %v3270, 0.0
          %v3273 = vadd.f32 %v3209, %v3271
          %v3274 = vadd.f32 %v3210, %v3272
          %v3275 = vmul.f32 %v3157, %v1196
          %v3276 = vmul.f32 %v3161, %v1196
          %v3277 = vadd.f32 %v1203, %v3275
          %v3278 = vadd.f32 %v1203, %v3276
          %v3279 = vmul.f32 %v3221, %v1219
          %v3280 = vmul.f32 %v3225, %v1219
          %v3281 = vadd.f32 %v3277, %v3279
          %v3282 = vadd.f32 %v3278, %v3280
          %3283 = vset.pattern.permute.xlu0 33
          %3284 = vperm.xlu0 %3283, %v1181
          %v3285 = vpop.permute.xlu0 %3284
          %3287 = vset.pattern.permute.xlu0 33
          %3288 = vperm.xlu0 %3287, %v1182
          %v3289 = vpop.permute.xlu0 %3288
          %v3291 = vmul.f32 %v3285, %v1236
          %v3292 = vmul.f32 %v3289, %v1236
          %v3293 = vadd.f32 %v3281, %v3291
          %v3294 = vadd.f32 %v3282, %v3292
          %v3295 = vmul.f32 %v3177, %v1257
          %v3296 = vmul.f32 %v3181, %v1257
          %v3297 = vadd.f32 %v3293, %v3295
          %v3298 = vadd.f32 %v3294, %v3296
          %v3299 = vmul.f32 %v3241, %v1274
          %v3300 = vmul.f32 %v3245, %v1274
          %v3301 = vadd.f32 %v3297, %v3299
          %v3302 = vadd.f32 %v3298, %v3300
          %3303 = vset.pattern.permute.xlu0 33
          %3304 = vperm.xlu0 %3303, %v1242
          %v3305 = vpop.permute.xlu0 %3304
          %3307 = vset.pattern.permute.xlu0 33
          %3308 = vperm.xlu0 %3307, %v1243
          %v3309 = vpop.permute.xlu0 %3308
          %v3311 = vmul.f32 %v3305, %v1291
          %v3312 = vmul.f32 %v3309, %v1291
          %v3313 = vadd.f32 %v3301, %v3311
          %v3314 = vadd.f32 %v3302, %v3312
          %v3315 = vmul.f32 %v3197, %v1312
          %v3316 = vmul.f32 %v3201, %v1312
          %v3317 = vadd.f32 %v3313, %v3315
          %v3318 = vadd.f32 %v3314, %v3316
          %v3319 = vmul.f32 %v3261, %v1329
          %v3320 = vmul.f32 %v3265, %v1329
          %v3321 = vadd.f32 %v3317, %v3319
          %v3322 = vadd.f32 %v3318, %v3320
          %3323 = vset.pattern.permute.xlu0 33
          %3324 = vperm.xlu0 %3323, %v1297
          %v3325 = vpop.permute.xlu0 %3324
          %3327 = vset.pattern.permute.xlu0 33
          %3328 = vperm.xlu0 %3327, %v1298
          %v3329 = vpop.permute.xlu0 %3328
          %v3331 = vmul.f32 %v3325, %v1346
          %v3332 = vmul.f32 %v3329, %v1346
          %v3333 = vadd.f32 %v3321, %v3331
          %v3334 = vadd.f32 %v3322, %v3332
          %v3335 = vmax.f32 %v3333, 0.0
          %v3336 = vmax.f32 %v3334, 0.0
          %v3337 = vadd.f32 %v3273, %v3335
          %v3338 = vadd.f32 %v3274, %v3336
          %v3339 = vmul.f32 %v3337, 0.03125
          %v3340 = vmul.f32 %v3338, 0.03125
          %v3341 = vld [vmem:[%s7] sm:$0xff]
          %v3342 = vld [vmem:[%s7 + $0x8] sm:$0xff]
          %v3343 = vadd.f32 %v3339, %v3341
          %v3344 = vadd.f32 %v3340, %v3342
          %vm3345 = vcmask 261120
          %3346 = vst.msk [vmem:[#allocation2] sm:$0xff] %vm3345, %v3343
          %3347 = vst.msk [vmem:[#allocation2 + $0x8] sm:$0xff] %vm3345, %v3344
        $region128: #{forward.1} parent=123 // pred_fallthru
          _
        %v3348 = vld [vmem:[%s1112] sm:$0x1]
        %vm3349 = vcmask 122880
        %v3350 = vsel %vm3349, %v3348, 0.0
        %3351 = vadd.xlane.f32.xlu0 %v3350
        %v3352 = vpop.xlane.xlu0 %3351
        %v3353 = vld [vmem:[#allocation2] sm:$0xff]
        %v3354 = vld [vmem:[#allocation2 + $0x8] sm:$0xff]
        %v3355 = vld [vmem:[%s1136] sm:$0x1]
        %v3356 = vld [vmem:[%s1139] sm:$0x1]
        %vm3357 = vcmask 261120
        %v3358 = vsel %vm3357, %v3353, 0.0
        %3359 = vadd.xlane.f32.xlu0 %v3358
        %v3360 = vpop.xlane.xlu0 %3359
        %v3361 = vsel %vm3357, %v3354, 0.0
        %3362 = vadd.xlane.f32.xlu0 %v3361
        %v3363 = vpop.xlane.xlu0 %3362
        %v3364 = vrcp.pop 32.0
        %v3365 = vmul.f32 %v3360, %v3364
        %v3366 = vmul.f32 %v3363, %v3364
        %v3367 = vsub.f32 %v3353, %v3365
        %v3368 = vsub.f32 %v3354, %v3366
        %v3369 = vmul.f32 %v3367, %v3367
        %v3370 = vmul.f32 %v3368, %v3368
        %v3371 = vsel %vm3357, %v3369, 0.0
        %3372 = vadd.xlane.f32.xlu0 %v3371
        %v3373 = vpop.xlane.xlu0 %3372
        %v3374 = vsel %vm3357, %v3370, 0.0
        %3375 = vadd.xlane.f32.xlu0 %v3374
        %v3376 = vpop.xlane.xlu0 %3375
        %v3377 = vmul.f32 %v3373, 0.032258064
        %v3378 = vmul.f32 %v3376, 0.032258064
        %v3380 = vlaneseq
        %v3381 = vshrl.u32 %v3380, 7
        %v3382 = vsub.s32 0, %v3381
        %v3383 = vrot.slane %v3355, %v3382
        %v3385 = vmul.f32 %v3383, %v3367
        %v3386 = vmul.f32 %v3383, %v3368
        %v3387 = vrsqrt.pop %v3377
        %v3388 = vmul.f32 %v3377, %v3387
        %vm3389 = vcmp.eq.f32.partialorder %v3377, inf
        %v3390 = vsel %vm3389, %v3377, %v3388
        %vm3391 = vcmp.eq.f32.partialorder %v3377, 0.0
        %v3392 = vand.u32 %v3377, 2147483648
        %v3393 = vsel %vm3391, %v3392, %v3390
        %v3394 = vrsqrt.pop %v3378
        %v3395 = vmul.f32 %v3378, %v3394
        %vm3396 = vcmp.eq.f32.partialorder %v3378, inf
        %v3397 = vsel %vm3396, %v3378, %v3395
        %vm3398 = vcmp.eq.f32.partialorder %v3378, 0.0
        %v3399 = vand.u32 %v3378, 2147483648
        %v3400 = vsel %vm3398, %v3399, %v3397
        %v3401 = vadd.f32 %v3393, 1e-06
        %v3402 = vadd.f32 %v3400, 1e-06
        %v3403 = vrcp.pop %v3401
        %v3404 = vmul.f32 %v3385, %v3403
        %v3405 = vrcp.pop %v3402
        %v3406 = vmul.f32 %v3386, %v3405
        %v3408 = vlaneseq
        %v3409 = vshrl.u32 %v3408, 7
        %v3410 = vsub.s32 0, %v3409
        %v3411 = vrot.slane %v3356, %v3410
        %v3413 = vadd.f32 %v3404, %v3411
        %v3414 = vadd.f32 %v3406, %v3411
        %v3415 = vpack.c.bf16 %v3414, %v3413
        %v3416 = vld [vmem:[%s1122] sm:$0xf]
        %v3417 = vld [vmem:[%s1122 + $0x4] sm:$0xf]
        %v3418 = vld [vmem:[%s1122 + $0x8] sm:$0xf]
        %v3419 = vld [vmem:[%s1122 + $0xc] sm:$0xf]
        %v3420 = vld [vmem:[%s1125] sm:$0x1]
        %v3422 = vlaneseq
        %v3423 = vshrl.u32 %v3422, 7
        %v3424 = vsub.s32 0, %v3423
        %v3425 = vrot.slane %v3420, %v3424
        %v3431 = vunpack.c.l.b16 %v3416
        %v3432 = vunpack.c.l.b16 %v3417
        %v3433 = vunpack.c.l.b16 %v3418
        %v3434 = vunpack.c.l.b16 %v3419
        %v3435 = vpack.c.b16 %v3432, %v3431
        %v3436 = vpack.c.b16 %v3434, %v3433
        %v3440 = vsel %vm3357, %v3415, 0
        %3442 = vmatprep.subr.bf16.mxu0 0
        %3443 = vmatpush1.bf16.msra.mxu0 %v3435
        %3444 = vmatprep.subr.bf16.mxu0 0
        %3445 = vmatpush1.bf16.msra.mxu0 %v3436
        %3446 = vmatprep.subr.bf16.mxu0 0
        %3447 = vmatpush1.bf16.msra.mxu0 0
        %3448 = vmatprep.subr.bf16.mxu0 0
        %3449 = vmatpush1.bf16.msra.mxu0 0
        %3450 = vmatprep.subr.bf16.mxu0 0
        %3451 = vmatpush1.bf16.msra.mxu0 0
        %3452 = vmatprep.subr.bf16.mxu0 0
        %3453 = vmatpush1.bf16.msra.mxu0 0
        %3454 = vmatprep.subr.bf16.mxu0 0
        %3455 = vmatpush1.bf16.msra.mxu0 0
        %3456 = vmatprep.subr.bf16.mxu0 0
        %3457 = vmatpush1.bf16.msra.mxu0 0
        %3458 = vmatprep.subr.bf16.mxu0 0
        %3459 = vmatpush1.bf16.msra.mxu0 0
        %3460 = vmatprep.subr.bf16.mxu0 0
        %3461 = vmatpush1.bf16.msra.mxu0 0
        %3462 = vmatprep.subr.bf16.mxu0 0
        %3463 = vmatpush1.bf16.msra.mxu0 0
        %3464 = vmatprep.subr.bf16.mxu0 0
        %3465 = vmatpush1.bf16.msra.mxu0 0
        %3466 = vmatprep.subr.bf16.mxu0 0
        %3467 = vmatpush1.bf16.msra.mxu0 0
        %3468 = vmatprep.subr.bf16.mxu0 0
        %3469 = vmatpush1.bf16.msra.mxu0 0
        %3470 = vmatprep.subr.bf16.mxu0 0
        %3471 = vmatpush1.bf16.msra.mxu0 0
        %3472 = vmatprep.subr.bf16.mxu0 0
        %3473 = vmatpush1.bf16.msra.mxu0 0
        %3474 = vmatprep.mubr.bf16.mxu0 0
        %3475 = vmatmul.mubr.bf16.gmra.mrb[0].mxu0 %v3440
        %v3476 = vpop.f32.mrb[0].mxu0
        %v3477 = vadd.f32 %v3425, %v3476
        %v3478 = vpop.f32.mrb[0].mxu0
        %v3479 = vpop.f32.mrb[0].mxu0
        %v3480 = vadd.f32 %v3425, %v3479
        %v3481 = vpop.f32.mrb[0].mxu0
        %3482 = vdwg.mxu0
        %v3483 = vpack.c.bf16 %v3480, %v3477
        %3485 = vrot.lane.b32.xlu0 %v3483, 120
        %v3486 = vpop.permute.xlu0 %3485
        %3487 = vrot.lane.b32.xlu0 %v3483, 112
        %v3488 = vpop.permute.xlu0 %3487
        %3489 = vrot.lane.b32.xlu0 %v3483, 104
        %v3490 = vpop.permute.xlu0 %3489
        %3491 = vrot.lane.b32.xlu0 %v3483, 96
        %v3492 = vpop.permute.xlu0 %3491
        %vm3493 = vcmask 64512
        %v3495 = vsel %vm3493, %v3483, 0
        %v3498 = vsel %vm3493, %v3492, 0
        %3500 = vmatprep.subr.bf16.mxu0 0
        %3501 = vmatpush1.bf16.xpose.msra.mxu0 %v3498
        %3502 = vmatprep.subr.bf16.mxu0 0
        %3503 = vmatpush1.bf16.xpose.msra.mxu0 0
        %3504 = vmatprep.subr.bf16.mxu0 0
        %3505 = vmatpush1.bf16.xpose.msra.mxu0 0
        %3506 = vmatprep.subr.bf16.mxu0 0
        %3507 = vmatpush1.bf16.xpose.msra.mxu0 0
        %3508 = vmatprep.subr.bf16.mxu0 0
        %3509 = vmatpush1.bf16.xpose.msra.mxu0 0
        %3510 = vmatprep.subr.bf16.mxu0 0
        %3511 = vmatpush1.bf16.xpose.msra.mxu0 0
        %3512 = vmatprep.subr.bf16.mxu0 0
        %3513 = vmatpush1.bf16.xpose.msra.mxu0 0
        %3514 = vmatprep.subr.bf16.mxu0 0
        %3515 = vmatpush1.bf16.xpose.msra.mxu0 0
        %3516 = vmatprep.subr.bf16.mxu0 0
        %3517 = vmatpush1.bf16.xpose.msra.mxu0 0
        %3518 = vmatprep.subr.bf16.mxu0 0
        %3519 = vmatpush1.bf16.xpose.msra.mxu0 0
        %3520 = vmatprep.subr.bf16.mxu0 0
        %3521 = vmatpush1.bf16.xpose.msra.mxu0 0
        %3522 = vmatprep.subr.bf16.mxu0 0
        %3523 = vmatpush1.bf16.xpose.msra.mxu0 0
        %3524 = vmatprep.subr.bf16.mxu0 0
        %3525 = vmatpush1.bf16.xpose.msra.mxu0 0
        %3526 = vmatprep.subr.bf16.mxu0 0
        %3527 = vmatpush1.bf16.xpose.msra.mxu0 0
        %3528 = vmatprep.subr.bf16.mxu0 0
        %3529 = vmatpush1.bf16.xpose.msra.mxu0 0
        %3530 = vmatprep.subr.bf16.mxu0 0
        %3531 = vmatpush1.bf16.xpose.msra.mxu0 0
        %3532 = vmatprep.mubr.bf16.mxu0 0
        %3533 = vmatmul.mubr.bf16.gmra.mrb[0].mxu0 %v3495
        %v3534 = vpop.f32.mrb[0].mxu0
        %v3535 = vadd.f32 0.0, %v3534
        %v3536 = vpop.f32.mrb[0].mxu0
        %v3537 = vpop.f32.mrb[0].mxu0
        %v3538 = vadd.f32 0.0, %v3537
        %v3539 = vpop.f32.mrb[0].mxu0
        %3540 = vdwg.mxu0
        %3541 = vrot.lane.b32.xlu0 %v3486, 96
        %v3542 = vpop.permute.xlu0 %3541
        %v3544 = vsel %vm3493, %v3486, 0
        %v3547 = vsel %vm3493, %v3542, 0
        %3549 = vmatprep.subr.bf16.mxu0 0
        %3550 = vmatpush1.bf16.xpose.msra.mxu0 %v3547
        %3551 = vmatprep.subr.bf16.mxu0 0
        %3552 = vmatpush1.bf16.xpose.msra.mxu0 0
        %3553 = vmatprep.subr.bf16.mxu0 0
        %3554 = vmatpush1.bf16.xpose.msra.mxu0 0
        %3555 = vmatprep.subr.bf16.mxu0 0
        %3556 = vmatpush1.bf16.xpose.msra.mxu0 0
        %3557 = vmatprep.subr.bf16.mxu0 0
        %3558 = vmatpush1.bf16.xpose.msra.mxu0 0
        %3559 = vmatprep.subr.bf16.mxu0 0
        %3560 = vmatpush1.bf16.xpose.msra.mxu0 0
        %3561 = vmatprep.subr.bf16.mxu0 0
        %3562 = vmatpush1.bf16.xpose.msra.mxu0 0
        %3563 = vmatprep.subr.bf16.mxu0 0
        %3564 = vmatpush1.bf16.xpose.msra.mxu0 0
        %3565 = vmatprep.subr.bf16.mxu0 0
        %3566 = vmatpush1.bf16.xpose.msra.mxu0 0
        %3567 = vmatprep.subr.bf16.mxu0 0
        %3568 = vmatpush1.bf16.xpose.msra.mxu0 0
        %3569 = vmatprep.subr.bf16.mxu0 0
        %3570 = vmatpush1.bf16.xpose.msra.mxu0 0
        %3571 = vmatprep.subr.bf16.mxu0 0
        %3572 = vmatpush1.bf16.xpose.msra.mxu0 0
        %3573 = vmatprep.subr.bf16.mxu0 0
        %3574 = vmatpush1.bf16.xpose.msra.mxu0 0
        %3575 = vmatprep.subr.bf16.mxu0 0
        %3576 = vmatpush1.bf16.xpose.msra.mxu0 0
        %3577 = vmatprep.subr.bf16.mxu0 0
        %3578 = vmatpush1.bf16.xpose.msra.mxu0 0
        %3579 = vmatprep.subr.bf16.mxu0 0
        %3580 = vmatpush1.bf16.xpose.msra.mxu0 0
        %3581 = vmatprep.mubr.bf16.mxu0 0
        %3582 = vmatmul.mubr.bf16.gmra.mrb[0].mxu0 %v3544
        %v3583 = vpop.f32.mrb[0].mxu0
        %v3584 = vadd.f32 0.0, %v3583
        %v3585 = vpop.f32.mrb[0].mxu0
        %v3586 = vpop.f32.mrb[0].mxu0
        %v3587 = vadd.f32 0.0, %v3586
        %v3588 = vpop.f32.mrb[0].mxu0
        %3589 = vdwg.mxu0
        %3590 = vrot.lane.b32.xlu0 %v3488, 96
        %v3591 = vpop.permute.xlu0 %3590
        %v3593 = vsel %vm3493, %v3488, 0
        %v3596 = vsel %vm3493, %v3591, 0
        %3598 = vmatprep.subr.bf16.mxu0 0
        %3599 = vmatpush1.bf16.xpose.msra.mxu0 %v3596
        %3600 = vmatprep.subr.bf16.mxu0 0
        %3601 = vmatpush1.bf16.xpose.msra.mxu0 0
        %3602 = vmatprep.subr.bf16.mxu0 0
        %3603 = vmatpush1.bf16.xpose.msra.mxu0 0
        %3604 = vmatprep.subr.bf16.mxu0 0
        %3605 = vmatpush1.bf16.xpose.msra.mxu0 0
        %3606 = vmatprep.subr.bf16.mxu0 0
        %3607 = vmatpush1.bf16.xpose.msra.mxu0 0
        %3608 = vmatprep.subr.bf16.mxu0 0
        %3609 = vmatpush1.bf16.xpose.msra.mxu0 0
        %3610 = vmatprep.subr.bf16.mxu0 0
        %3611 = vmatpush1.bf16.xpose.msra.mxu0 0
        %3612 = vmatprep.subr.bf16.mxu0 0
        %3613 = vmatpush1.bf16.xpose.msra.mxu0 0
        %3614 = vmatprep.subr.bf16.mxu0 0
        %3615 = vmatpush1.bf16.xpose.msra.mxu0 0
        %3616 = vmatprep.subr.bf16.mxu0 0
        %3617 = vmatpush1.bf16.xpose.msra.mxu0 0
        %3618 = vmatprep.subr.bf16.mxu0 0
        %3619 = vmatpush1.bf16.xpose.msra.mxu0 0
        %3620 = vmatprep.subr.bf16.mxu0 0
        %3621 = vmatpush1.bf16.xpose.msra.mxu0 0
        %3622 = vmatprep.subr.bf16.mxu0 0
        %3623 = vmatpush1.bf16.xpose.msra.mxu0 0
        %3624 = vmatprep.subr.bf16.mxu0 0
        %3625 = vmatpush1.bf16.xpose.msra.mxu0 0
        %3626 = vmatprep.subr.bf16.mxu0 0
        %3627 = vmatpush1.bf16.xpose.msra.mxu0 0
        %3628 = vmatprep.subr.bf16.mxu0 0
        %3629 = vmatpush1.bf16.xpose.msra.mxu0 0
        %3630 = vmatprep.mubr.bf16.mxu0 0
        %3631 = vmatmul.mubr.bf16.gmra.mrb[0].mxu0 %v3593
        %v3632 = vpop.f32.mrb[0].mxu0
        %v3633 = vadd.f32 0.0, %v3632
        %v3634 = vpop.f32.mrb[0].mxu0
        %v3635 = vpop.f32.mrb[0].mxu0
        %v3636 = vadd.f32 0.0, %v3635
        %v3637 = vpop.f32.mrb[0].mxu0
        %3638 = vdwg.mxu0
        %3639 = vrot.lane.b32.xlu0 %v3490, 96
        %v3640 = vpop.permute.xlu0 %3639
        %v3642 = vsel %vm3493, %v3490, 0
        %v3645 = vsel %vm3493, %v3640, 0
        %3647 = vmatprep.subr.bf16.mxu0 0
        %3648 = vmatpush1.bf16.xpose.msra.mxu0 %v3645
        %3649 = vmatprep.subr.bf16.mxu0 0
        %3650 = vmatpush1.bf16.xpose.msra.mxu0 0
        %3651 = vmatprep.subr.bf16.mxu0 0
        %3652 = vmatpush1.bf16.xpose.msra.mxu0 0
        %3653 = vmatprep.subr.bf16.mxu0 0
        %3654 = vmatpush1.bf16.xpose.msra.mxu0 0
        %3655 = vmatprep.subr.bf16.mxu0 0
        %3656 = vmatpush1.bf16.xpose.msra.mxu0 0
        %3657 = vmatprep.subr.bf16.mxu0 0
        %3658 = vmatpush1.bf16.xpose.msra.mxu0 0
        %3659 = vmatprep.subr.bf16.mxu0 0
        %3660 = vmatpush1.bf16.xpose.msra.mxu0 0
        %3661 = vmatprep.subr.bf16.mxu0 0
        %3662 = vmatpush1.bf16.xpose.msra.mxu0 0
        %3663 = vmatprep.subr.bf16.mxu0 0
        %3664 = vmatpush1.bf16.xpose.msra.mxu0 0
        %3665 = vmatprep.subr.bf16.mxu0 0
        %3666 = vmatpush1.bf16.xpose.msra.mxu0 0
        %3667 = vmatprep.subr.bf16.mxu0 0
        %3668 = vmatpush1.bf16.xpose.msra.mxu0 0
        %3669 = vmatprep.subr.bf16.mxu0 0
        %3670 = vmatpush1.bf16.xpose.msra.mxu0 0
        %3671 = vmatprep.subr.bf16.mxu0 0
        %3672 = vmatpush1.bf16.xpose.msra.mxu0 0
        %3673 = vmatprep.subr.bf16.mxu0 0
        %3674 = vmatpush1.bf16.xpose.msra.mxu0 0
        %3675 = vmatprep.subr.bf16.mxu0 0
        %3676 = vmatpush1.bf16.xpose.msra.mxu0 0
        %3677 = vmatprep.subr.bf16.mxu0 0
        %3678 = vmatpush1.bf16.xpose.msra.mxu0 0
        %3679 = vmatprep.mubr.bf16.mxu0 0
        %3680 = vmatmul.mubr.bf16.gmra.mrb[0].mxu0 %v3642
        %v3681 = vpop.f32.mrb[0].mxu0
        %v3682 = vadd.f32 0.0, %v3681
        %v3683 = vpop.f32.mrb[0].mxu0
        %v3684 = vpop.f32.mrb[0].mxu0
        %v3685 = vadd.f32 0.0, %v3684
        %v3686 = vpop.f32.mrb[0].mxu0
        %3687 = vdwg.mxu0
        %vm3688 = vcmask 130048
        %v3689 = vsel %vm3688, %v3535, -inf
        %3690 = vmax.xlane.f32.xlu0 %v3689
        %v3691 = vpop.xlane.xlu0 %3690
        %v3692 = vsel %vm3688, %v3538, -inf
        %3693 = vmax.xlane.f32.xlu0 %v3692
        %v3694 = vpop.xlane.xlu0 %3693
        %v3695 = vsel %vm3688, %v3584, -inf
        %3696 = vmax.xlane.f32.xlu0 %v3695
        %v3697 = vpop.xlane.xlu0 %3696
        %v3698 = vsel %vm3688, %v3587, -inf
        %3699 = vmax.xlane.f32.xlu0 %v3698
        %v3700 = vpop.xlane.xlu0 %3699
        %v3701 = vsel %vm3688, %v3633, -inf
        %3702 = vmax.xlane.f32.xlu0 %v3701
        %v3703 = vpop.xlane.xlu0 %3702
        %v3704 = vsel %vm3688, %v3636, -inf
        %3705 = vmax.xlane.f32.xlu0 %v3704
        %v3706 = vpop.xlane.xlu0 %3705
        %v3707 = vsel %vm3688, %v3682, -inf
        %3708 = vmax.xlane.f32.xlu0 %v3707
        %v3709 = vpop.xlane.xlu0 %3708
        %v3710 = vsel %vm3688, %v3685, -inf
        %3711 = vmax.xlane.f32.xlu0 %v3710
        %v3712 = vpop.xlane.xlu0 %3711
        %v3713 = vsub.f32 %v3535, %v3691
        %v3714 = vsub.f32 %v3538, %v3694
        %v3715 = vsub.f32 %v3584, %v3697
        %v3716 = vsub.f32 %v3587, %v3700
        %v3717 = vsub.f32 %v3633, %v3703
        %v3718 = vsub.f32 %v3636, %v3706
        %v3719 = vsub.f32 %v3682, %v3709
        %v3720 = vsub.f32 %v3685, %v3712
        %v3721 = vmul.f32 %v3713, 1.442695
        %v3722 = vpow.pop %v3721
        %v3723 = vmul.f32 %v3714, 1.442695
        %v3724 = vpow.pop %v3723
        %v3725 = vmul.f32 %v3715, 1.442695
        %v3726 = vpow.pop %v3725
        %v3727 = vmul.f32 %v3716, 1.442695
        %v3728 = vpow.pop %v3727
        %v3729 = vmul.f32 %v3717, 1.442695
        %v3730 = vpow.pop %v3729
        %v3731 = vmul.f32 %v3718, 1.442695
        %v3732 = vpow.pop %v3731
        %v3733 = vmul.f32 %v3719, 1.442695
        %v3734 = vpow.pop %v3733
        %v3735 = vmul.f32 %v3720, 1.442695
        %v3736 = vpow.pop %v3735
        %v3737 = vsel %vm3688, %v3722, 0.0
        %3738 = vadd.xlane.f32.xlu0 %v3737
        %v3739 = vpop.xlane.xlu0 %3738
        %v3740 = vsel %vm3688, %v3724, 0.0
        %3741 = vadd.xlane.f32.xlu0 %v3740
        %v3742 = vpop.xlane.xlu0 %3741
        %v3743 = vsel %vm3688, %v3726, 0.0
        %3744 = vadd.xlane.f32.xlu0 %v3743
        %v3745 = vpop.xlane.xlu0 %3744
        %v3746 = vsel %vm3688, %v3728, 0.0
        %3747 = vadd.xlane.f32.xlu0 %v3746
        %v3748 = vpop.xlane.xlu0 %3747
        %v3749 = vsel %vm3688, %v3730, 0.0
        %3750 = vadd.xlane.f32.xlu0 %v3749
        %v3751 = vpop.xlane.xlu0 %3750
        %v3752 = vsel %vm3688, %v3732, 0.0
        %3753 = vadd.xlane.f32.xlu0 %v3752
        %v3754 = vpop.xlane.xlu0 %3753
        %v3755 = vsel %vm3688, %v3734, 0.0
        %3756 = vadd.xlane.f32.xlu0 %v3755
        %v3757 = vpop.xlane.xlu0 %3756
        %v3758 = vsel %vm3688, %v3736, 0.0
        %3759 = vadd.xlane.f32.xlu0 %v3758
        %v3760 = vpop.xlane.xlu0 %3759
        %v3761 = vrcp.pop %v3739
        %v3762 = vrcp.pop %v3742
        %v3763 = vrcp.pop %v3745
        %v3764 = vrcp.pop %v3748
        %v3765 = vrcp.pop %v3751
        %v3766 = vrcp.pop %v3754
        %v3767 = vrcp.pop %v3757
        %v3768 = vrcp.pop %v3760
        %v3769 = vmul.f32 %v3722, %v3761
        %v3770 = vmul.f32 %v3724, %v3762
        %v3771 = vmul.f32 %v3726, %v3763
        %v3772 = vmul.f32 %v3728, %v3764
        %v3773 = vmul.f32 %v3730, %v3765
        %v3774 = vmul.f32 %v3732, %v3766
        %v3775 = vmul.f32 %v3734, %v3767
        %v3776 = vmul.f32 %v3736, %v3768
        %v3777 = vpack.c.bf16 %v3770, %v3769
        %v3778 = vpack.c.bf16 %v3772, %v3771
        %v3779 = vpack.c.bf16 %v3774, %v3773
        %v3780 = vpack.c.bf16 %v3776, %v3775
        %3781 = vrot.lane.b32.xlu0 %v3483, 64
        %v3782 = vpop.permute.xlu0 %3781
        %v3785 = vsel %vm3688, %v3777, 0
        %3787 = vmatprep.subr.bf16.mxu0 0
        %3788 = vmatpush1.bf16.msra.mxu0 %v3782
        %3789 = vmatprep.subr.bf16.mxu0 0
        %3790 = vmatpush1.bf16.msra.mxu0 0
        %3791 = vmatprep.subr.bf16.mxu0 0
        %3792 = vmatpush1.bf16.msra.mxu0 0
        %3793 = vmatprep.subr.bf16.mxu0 0
        %3794 = vmatpush1.bf16.msra.mxu0 0
        %3795 = vmatprep.subr.bf16.mxu0 0
        %3796 = vmatpush1.bf16.msra.mxu0 0
        %3797 = vmatprep.subr.bf16.mxu0 0
        %3798 = vmatpush1.bf16.msra.mxu0 0
        %3799 = vmatprep.subr.bf16.mxu0 0
        %3800 = vmatpush1.bf16.msra.mxu0 0
        %3801 = vmatprep.subr.bf16.mxu0 0
        %3802 = vmatpush1.bf16.msra.mxu0 0
        %3803 = vmatprep.subr.bf16.mxu0 0
        %3804 = vmatpush1.bf16.msra.mxu0 0
        %3805 = vmatprep.subr.bf16.mxu0 0
        %3806 = vmatpush1.bf16.msra.mxu0 0
        %3807 = vmatprep.subr.bf16.mxu0 0
        %3808 = vmatpush1.bf16.msra.mxu0 0
        %3809 = vmatprep.subr.bf16.mxu0 0
        %3810 = vmatpush1.bf16.msra.mxu0 0
        %3811 = vmatprep.subr.bf16.mxu0 0
        %3812 = vmatpush1.bf16.msra.mxu0 0
        %3813 = vmatprep.subr.bf16.mxu0 0
        %3814 = vmatpush1.bf16.msra.mxu0 0
        %3815 = vmatprep.subr.bf16.mxu0 0
        %3816 = vmatpush1.bf16.msra.mxu0 0
        %3817 = vmatprep.subr.bf16.mxu0 0
        %3818 = vmatpush1.bf16.msra.mxu0 0
        %3819 = vmatprep.mubr.bf16.mxu0 0
        %3820 = vmatmul.mubr.bf16.gmra.mrb[0].mxu0 %v3785
        %v3821 = vpop.f32.mrb[0].mxu0
        %v3822 = vadd.f32 0.0, %v3821
        %v3823 = vpop.f32.mrb[0].mxu0
        %v3824 = vpop.f32.mrb[0].mxu0
        %v3825 = vadd.f32 0.0, %v3824
        %v3826 = vpop.f32.mrb[0].mxu0
        %3827 = vdwg.mxu0
        %3828 = vrot.lane.b32.xlu0 %v3486, 64
        %v3829 = vpop.permute.xlu0 %3828
        %v3832 = vsel %vm3688, %v3778, 0
        %3834 = vmatprep.subr.bf16.mxu0 0
        %3835 = vmatpush1.bf16.msra.mxu0 %v3829
        %3836 = vmatprep.subr.bf16.mxu0 0
        %3837 = vmatpush1.bf16.msra.mxu0 0
        %3838 = vmatprep.subr.bf16.mxu0 0
        %3839 = vmatpush1.bf16.msra.mxu0 0
        %3840 = vmatprep.subr.bf16.mxu0 0
        %3841 = vmatpush1.bf16.msra.mxu0 0
        %3842 = vmatprep.subr.bf16.mxu0 0
        %3843 = vmatpush1.bf16.msra.mxu0 0
        %3844 = vmatprep.subr.bf16.mxu0 0
        %3845 = vmatpush1.bf16.msra.mxu0 0
        %3846 = vmatprep.subr.bf16.mxu0 0
        %3847 = vmatpush1.bf16.msra.mxu0 0
        %3848 = vmatprep.subr.bf16.mxu0 0
        %3849 = vmatpush1.bf16.msra.mxu0 0
        %3850 = vmatprep.subr.bf16.mxu0 0
        %3851 = vmatpush1.bf16.msra.mxu0 0
        %3852 = vmatprep.subr.bf16.mxu0 0
        %3853 = vmatpush1.bf16.msra.mxu0 0
        %3854 = vmatprep.subr.bf16.mxu0 0
        %3855 = vmatpush1.bf16.msra.mxu0 0
        %3856 = vmatprep.subr.bf16.mxu0 0
        %3857 = vmatpush1.bf16.msra.mxu0 0
        %3858 = vmatprep.subr.bf16.mxu0 0
        %3859 = vmatpush1.bf16.msra.mxu0 0
        %3860 = vmatprep.subr.bf16.mxu0 0
        %3861 = vmatpush1.bf16.msra.mxu0 0
        %3862 = vmatprep.subr.bf16.mxu0 0
        %3863 = vmatpush1.bf16.msra.mxu0 0
        %3864 = vmatprep.subr.bf16.mxu0 0
        %3865 = vmatpush1.bf16.msra.mxu0 0
        %3866 = vmatprep.mubr.bf16.mxu0 0
        %3867 = vmatmul.mubr.bf16.gmra.mrb[0].mxu0 %v3832
        %v3868 = vpop.f32.mrb[0].mxu0
        %v3869 = vadd.f32 0.0, %v3868
        %v3870 = vpop.f32.mrb[0].mxu0
        %v3871 = vpop.f32.mrb[0].mxu0
        %v3872 = vadd.f32 0.0, %v3871
        %v3873 = vpop.f32.mrb[0].mxu0
        %3874 = vdwg.mxu0
        %3875 = vrot.lane.b32.xlu0 %v3488, 64
        %v3876 = vpop.permute.xlu0 %3875
        %v3879 = vsel %vm3688, %v3779, 0
        %3881 = vmatprep.subr.bf16.mxu0 0
        %3882 = vmatpush1.bf16.msra.mxu0 %v3876
        %3883 = vmatprep.subr.bf16.mxu0 0
        %3884 = vmatpush1.bf16.msra.mxu0 0
        %3885 = vmatprep.subr.bf16.mxu0 0
        %3886 = vmatpush1.bf16.msra.mxu0 0
        %3887 = vmatprep.subr.bf16.mxu0 0
        %3888 = vmatpush1.bf16.msra.mxu0 0
        %3889 = vmatprep.subr.bf16.mxu0 0
        %3890 = vmatpush1.bf16.msra.mxu0 0
        %3891 = vmatprep.subr.bf16.mxu0 0
        %3892 = vmatpush1.bf16.msra.mxu0 0
        %3893 = vmatprep.subr.bf16.mxu0 0
        %3894 = vmatpush1.bf16.msra.mxu0 0
        %3895 = vmatprep.subr.bf16.mxu0 0
        %3896 = vmatpush1.bf16.msra.mxu0 0
        %3897 = vmatprep.subr.bf16.mxu0 0
        %3898 = vmatpush1.bf16.msra.mxu0 0
        %3899 = vmatprep.subr.bf16.mxu0 0
        %3900 = vmatpush1.bf16.msra.mxu0 0
        %3901 = vmatprep.subr.bf16.mxu0 0
        %3902 = vmatpush1.bf16.msra.mxu0 0
        %3903 = vmatprep.subr.bf16.mxu0 0
        %3904 = vmatpush1.bf16.msra.mxu0 0
        %3905 = vmatprep.subr.bf16.mxu0 0
        %3906 = vmatpush1.bf16.msra.mxu0 0
        %3907 = vmatprep.subr.bf16.mxu0 0
        %3908 = vmatpush1.bf16.msra.mxu0 0
        %3909 = vmatprep.subr.bf16.mxu0 0
        %3910 = vmatpush1.bf16.msra.mxu0 0
        %3911 = vmatprep.subr.bf16.mxu0 0
        %3912 = vmatpush1.bf16.msra.mxu0 0
        %3913 = vmatprep.mubr.bf16.mxu0 0
        %3914 = vmatmul.mubr.bf16.gmra.mrb[0].mxu0 %v3879
        %v3915 = vpop.f32.mrb[0].mxu0
        %v3916 = vadd.f32 0.0, %v3915
        %v3917 = vpop.f32.mrb[0].mxu0
        %v3918 = vpop.f32.mrb[0].mxu0
        %v3919 = vadd.f32 0.0, %v3918
        %v3920 = vpop.f32.mrb[0].mxu0
        %3921 = vdwg.mxu0
        %3922 = vrot.lane.b32.xlu0 %v3490, 64
        %v3923 = vpop.permute.xlu0 %3922
        %v3926 = vsel %vm3688, %v3780, 0
        %3928 = vmatprep.subr.bf16.mxu0 0
        %3929 = vmatpush1.bf16.msra.mxu0 %v3923
        %3930 = vmatprep.subr.bf16.mxu0 0
        %3931 = vmatpush1.bf16.msra.mxu0 0
        %3932 = vmatprep.subr.bf16.mxu0 0
        %3933 = vmatpush1.bf16.msra.mxu0 0
        %3934 = vmatprep.subr.bf16.mxu0 0
        %3935 = vmatpush1.bf16.msra.mxu0 0
        %3936 = vmatprep.subr.bf16.mxu0 0
        %3937 = vmatpush1.bf16.msra.mxu0 0
        %3938 = vmatprep.subr.bf16.mxu0 0
        %3939 = vmatpush1.bf16.msra.mxu0 0
        %3940 = vmatprep.subr.bf16.mxu0 0
        %3941 = vmatpush1.bf16.msra.mxu0 0
        %3942 = vmatprep.subr.bf16.mxu0 0
        %3943 = vmatpush1.bf16.msra.mxu0 0
        %3944 = vmatprep.subr.bf16.mxu0 0
        %3945 = vmatpush1.bf16.msra.mxu0 0
        %3946 = vmatprep.subr.bf16.mxu0 0
        %3947 = vmatpush1.bf16.msra.mxu0 0
        %3948 = vmatprep.subr.bf16.mxu0 0
        %3949 = vmatpush1.bf16.msra.mxu0 0
        %3950 = vmatprep.subr.bf16.mxu0 0
        %3951 = vmatpush1.bf16.msra.mxu0 0
        %3952 = vmatprep.subr.bf16.mxu0 0
        %3953 = vmatpush1.bf16.msra.mxu0 0
        %3954 = vmatprep.subr.bf16.mxu0 0
        %3955 = vmatpush1.bf16.msra.mxu0 0
        %3956 = vmatprep.subr.bf16.mxu0 0
        %3957 = vmatpush1.bf16.msra.mxu0 0
        %3958 = vmatprep.subr.bf16.mxu0 0
        %3959 = vmatpush1.bf16.msra.mxu0 0
        %3960 = vmatprep.mubr.bf16.mxu0 0
        %3961 = vmatmul.mubr.bf16.gmra.mrb[0].mxu0 %v3926
        %v3962 = vpop.f32.mrb[0].mxu0
        %v3963 = vadd.f32 0.0, %v3962
        %v3964 = vpop.f32.mrb[0].mxu0
        %v3965 = vpop.f32.mrb[0].mxu0
        %v3966 = vadd.f32 0.0, %v3965
        %v3967 = vpop.f32.mrb[0].mxu0
        %3968 = vdwg.mxu0
        %3971 = vrot.lane.b32.xlu0 %v3869, 8
        %v3972 = vpop.permute.xlu0 %3971
        %3973 = vrot.lane.b32.xlu0 %v3872, 8
        %v3974 = vpop.permute.xlu0 %3973
        %3979 = vrot.lane.b32.xlu0 %v3916, 16
        %v3980 = vpop.permute.xlu0 %3979
        %3981 = vrot.lane.b32.xlu0 %v3919, 16
        %v3982 = vpop.permute.xlu0 %3981
        %3987 = vrot.lane.b32.xlu0 %v3963, 24
        %v3988 = vpop.permute.xlu0 %3987
        %3989 = vrot.lane.b32.xlu0 %v3966, 24
        %v3990 = vpop.permute.xlu0 %3989
        %v3993 = vsel %vm3493, %v3822, %v3972
        %v3994 = vsel %vm3493, %v3825, %v3974
        %v3995 = vsel %vm3688, %v3993, %v3980
        %v3996 = vsel %vm3688, %v3994, %v3982
        %vm3997 = vcmask 195584
        %v3998 = vsel %vm3997, %v3995, %v3988
        %v3999 = vsel %vm3997, %v3996, %v3990
        %v4000 = vpack.c.bf16 %v3999, %v3998
        %v4001 = vld [vmem:[%s1130] sm:$0xf]
        %v4002 = vld [vmem:[%s1130 + $0x4] sm:$0xf]
        %v4003 = vld [vmem:[%s1130 + $0x8] sm:$0xf]
        %v4004 = vld [vmem:[%s1130 + $0xc] sm:$0xf]
        %v4005 = vld [vmem:[%s1133] sm:$0x1]
        %v4007 = vlaneseq
        %v4008 = vshrl.u32 %v4007, 7
        %v4009 = vsub.s32 0, %v4008
        %v4010 = vrot.slane %v4005, %v4009
        %v4016 = vunpack.c.l.b16 %v4001
        %v4017 = vunpack.c.l.b16 %v4002
        %v4018 = vunpack.c.l.b16 %v4003
        %v4019 = vunpack.c.l.b16 %v4004
        %v4020 = vpack.c.b16 %v4017, %v4016
        %v4021 = vpack.c.b16 %v4019, %v4018
        %v4025 = vsel %vm3357, %v4000, 0
        %4027 = vmatprep.subr.bf16.mxu0 0
        %4028 = vmatpush1.bf16.msra.mxu0 %v4020
        %4029 = vmatprep.subr.bf16.mxu0 0
        %4030 = vmatpush1.bf16.msra.mxu0 %v4021
        %4031 = vmatprep.subr.bf16.mxu0 0
        %4032 = vmatpush1.bf16.msra.mxu0 0
        %4033 = vmatprep.subr.bf16.mxu0 0
        %4034 = vmatpush1.bf16.msra.mxu0 0
        %4035 = vmatprep.subr.bf16.mxu0 0
        %4036 = vmatpush1.bf16.msra.mxu0 0
        %4037 = vmatprep.subr.bf16.mxu0 0
        %4038 = vmatpush1.bf16.msra.mxu0 0
        %4039 = vmatprep.subr.bf16.mxu0 0
        %4040 = vmatpush1.bf16.msra.mxu0 0
        %4041 = vmatprep.subr.bf16.mxu0 0
        %4042 = vmatpush1.bf16.msra.mxu0 0
        %4043 = vmatprep.subr.bf16.mxu0 0
        %4044 = vmatpush1.bf16.msra.mxu0 0
        %4045 = vmatprep.subr.bf16.mxu0 0
        %4046 = vmatpush1.bf16.msra.mxu0 0
        %4047 = vmatprep.subr.bf16.mxu0 0
        %4048 = vmatpush1.bf16.msra.mxu0 0
        %4049 = vmatprep.subr.bf16.mxu0 0
        %4050 = vmatpush1.bf16.msra.mxu0 0
        %4051 = vmatprep.subr.bf16.mxu0 0
        %4052 = vmatpush1.bf16.msra.mxu0 0
        %4053 = vmatprep.subr.bf16.mxu0 0
        %4054 = vmatpush1.bf16.msra.mxu0 0
        %4055 = vmatprep.subr.bf16.mxu0 0
        %4056 = vmatpush1.bf16.msra.mxu0 0
        %4057 = vmatprep.subr.bf16.mxu0 0
        %4058 = vmatpush1.bf16.msra.mxu0 0
        %4059 = vmatprep.mubr.bf16.mxu0 0
        %4060 = vmatmul.mubr.bf16.gmra.mrb[0].mxu0 %v4025
        %v4061 = vpop.f32.mrb[0].mxu0
        %v4062 = vadd.f32 %v4010, %v4061
        %v4063 = vpop.f32.mrb[0].mxu0
        %v4064 = vpop.f32.mrb[0].mxu0
        %v4065 = vadd.f32 %v4010, %v4064
        %v4066 = vpop.f32.mrb[0].mxu0
        %4067 = vdwg.mxu0
        %v4068 = vadd.f32 %v3353, %v4062
        %v4069 = vadd.f32 %v3354, %v4065
        %v4070 = vld [vmem:[%s1158] sm:$0x1]
        %v4071 = vld [vmem:[%s1161] sm:$0x1]
        %v4072 = vsel %vm3357, %v4068, 0.0
        %4073 = vadd.xlane.f32.xlu0 %v4072
        %v4074 = vpop.xlane.xlu0 %4073
        %v4075 = vsel %vm3357, %v4069, 0.0
        %4076 = vadd.xlane.f32.xlu0 %v4075
        %v4077 = vpop.xlane.xlu0 %4076
        %v4078 = vmul.f32 %v4074, %v3364
        %v4079 = vmul.f32 %v4077, %v3364
        %v4080 = vsub.f32 %v4068, %v4078
        %v4081 = vsub.f32 %v4069, %v4079
        %v4082 = vmul.f32 %v4080, %v4080
        %v4083 = vmul.f32 %v4081, %v4081
        %v4084 = vsel %vm3357, %v4082, 0.0
        %4085 = vadd.xlane.f32.xlu0 %v4084
        %v4086 = vpop.xlane.xlu0 %4085
        %v4087 = vsel %vm3357, %v4083, 0.0
        %4088 = vadd.xlane.f32.xlu0 %v4087
        %v4089 = vpop.xlane.xlu0 %4088
        %v4090 = vmul.f32 %v4086, 0.032258064
        %v4091 = vmul.f32 %v4089, 0.032258064
        %v4093 = vlaneseq
        %v4094 = vshrl.u32 %v4093, 7
        %v4095 = vsub.s32 0, %v4094
        %v4096 = vrot.slane %v4070, %v4095
        %v4098 = vmul.f32 %v4096, %v4080
        %v4099 = vmul.f32 %v4096, %v4081
        %v4100 = vrsqrt.pop %v4090
        %v4101 = vmul.f32 %v4090, %v4100
        %vm4102 = vcmp.eq.f32.partialorder %v4090, inf
        %v4103 = vsel %vm4102, %v4090, %v4101
        %vm4104 = vcmp.eq.f32.partialorder %v4090, 0.0
        %v4105 = vand.u32 %v4090, 2147483648
        %v4106 = vsel %vm4104, %v4105, %v4103
        %v4107 = vrsqrt.pop %v4091
        %v4108 = vmul.f32 %v4091, %v4107
        %vm4109 = vcmp.eq.f32.partialorder %v4091, inf
        %v4110 = vsel %vm4109, %v4091, %v4108
        %vm4111 = vcmp.eq.f32.partialorder %v4091, 0.0
        %v4112 = vand.u32 %v4091, 2147483648
        %v4113 = vsel %vm4111, %v4112, %v4110
        %v4114 = vadd.f32 %v4106, 1e-06
        %v4115 = vadd.f32 %v4113, 1e-06
        %v4116 = vrcp.pop %v4114
        %v4117 = vmul.f32 %v4098, %v4116
        %v4118 = vrcp.pop %v4115
        %v4119 = vmul.f32 %v4099, %v4118
        %v4121 = vlaneseq
        %v4122 = vshrl.u32 %v4121, 7
        %v4123 = vsub.s32 0, %v4122
        %v4124 = vrot.slane %v4071, %v4123
        %v4126 = vadd.f32 %v4117, %v4124
        %v4127 = vadd.f32 %v4119, %v4124
        %v4128 = vpack.c.bf16 %v4127, %v4126
        %v4129 = vld [vmem:[%s1144] sm:$0xf]
        %v4130 = vld [vmem:[%s1144 + $0x4] sm:$0xf]
        %v4131 = vld [vmem:[%s1144 + $0x8] sm:$0xf]
        %v4132 = vld [vmem:[%s1144 + $0xc] sm:$0xf]
        %v4133 = vld [vmem:[%s1147] sm:$0x1]
        %v4135 = vlaneseq
        %v4136 = vshrl.u32 %v4135, 7
        %v4137 = vsub.s32 0, %v4136
        %v4138 = vrot.slane %v4133, %v4137
        %v4144 = vunpack.c.l.b16 %v4129
        %v4145 = vunpack.c.l.b16 %v4130
        %v4146 = vunpack.c.l.b16 %v4131
        %v4147 = vunpack.c.l.b16 %v4132
        %v4148 = vpack.c.b16 %v4145, %v4144
        %v4149 = vpack.c.b16 %v4147, %v4146
        %v4153 = vsel %vm3357, %v4128, 0
        %4155 = vmatprep.subr.bf16.mxu0 0
        %4156 = vmatpush1.bf16.msra.mxu0 %v4148
        %4157 = vmatprep.subr.bf16.mxu0 0
        %4158 = vmatpush1.bf16.msra.mxu0 %v4149
        %4159 = vmatprep.subr.bf16.mxu0 0
        %4160 = vmatpush1.bf16.msra.mxu0 0
        %4161 = vmatprep.subr.bf16.mxu0 0
        %4162 = vmatpush1.bf16.msra.mxu0 0
        %4163 = vmatprep.subr.bf16.mxu0 0
        %4164 = vmatpush1.bf16.msra.mxu0 0
        %4165 = vmatprep.subr.bf16.mxu0 0
        %4166 = vmatpush1.bf16.msra.mxu0 0
        %4167 = vmatprep.subr.bf16.mxu0 0
        %4168 = vmatpush1.bf16.msra.mxu0 0
        %4169 = vmatprep.subr.bf16.mxu0 0
        %4170 = vmatpush1.bf16.msra.mxu0 0
        %4171 = vmatprep.subr.bf16.mxu0 0
        %4172 = vmatpush1.bf16.msra.mxu0 0
        %4173 = vmatprep.subr.bf16.mxu0 0
        %4174 = vmatpush1.bf16.msra.mxu0 0
        %4175 = vmatprep.subr.bf16.mxu0 0
        %4176 = vmatpush1.bf16.msra.mxu0 0
        %4177 = vmatprep.subr.bf16.mxu0 0
        %4178 = vmatpush1.bf16.msra.mxu0 0
        %4179 = vmatprep.subr.bf16.mxu0 0
        %4180 = vmatpush1.bf16.msra.mxu0 0
        %4181 = vmatprep.subr.bf16.mxu0 0
        %4182 = vmatpush1.bf16.msra.mxu0 0
        %4183 = vmatprep.subr.bf16.mxu0 0
        %4184 = vmatpush1.bf16.msra.mxu0 0
        %4185 = vmatprep.subr.bf16.mxu0 0
        %4186 = vmatpush1.bf16.msra.mxu0 0
        %4187 = vmatprep.mubr.bf16.mxu0 0
        %4188 = vmatmul.mubr.bf16.gmra.mrb[0].mxu0 %v4153
        %v4189 = vpop.f32.mrb[0].mxu0
        %v4190 = vadd.f32 %v4138, %v4189
        %v4191 = vpop.f32.mrb[0].mxu0
        %v4192 = vpop.f32.mrb[0].mxu0
        %v4193 = vadd.f32 %v4138, %v4192
        %v4194 = vpop.f32.mrb[0].mxu0
        %4195 = vdwg.mxu0
        %v4196 = vmax.f32 %v4190, 0.0
        %v4197 = vmax.f32 %v4193, 0.0
        %v4198 = vpack.c.bf16 %v4197, %v4196
        %v4199 = vld [vmem:[%s1152] sm:$0xf]
        %v4200 = vld [vmem:[%s1152 + $0x4] sm:$0xf]
        %v4201 = vld [vmem:[%s1152 + $0x8] sm:$0xf]
        %v4202 = vld [vmem:[%s1152 + $0xc] sm:$0xf]
        %v4203 = vld [vmem:[%s1152 + $0x10] sm:$0xf]
        %v4204 = vld [vmem:[%s1152 + $0x14] sm:$0xf]
        %v4205 = vld [vmem:[%s1152 + $0x18] sm:$0xf]
        %v4206 = vld [vmem:[%s1152 + $0x1c] sm:$0xf]
        %v4215 = vunpack.c.l.b16 %v4199
        %v4216 = vunpack.c.l.b16 %v4200
        %v4217 = vunpack.c.l.b16 %v4201
        %v4218 = vunpack.c.l.b16 %v4202
        %v4219 = vunpack.c.l.b16 %v4203
        %v4220 = vunpack.c.l.b16 %v4204
        %v4221 = vunpack.c.l.b16 %v4205
        %v4222 = vunpack.c.l.b16 %v4206
        %v4223 = vpack.c.b16 %v4216, %v4215
        %v4224 = vpack.c.b16 %v4218, %v4217
        %v4225 = vpack.c.b16 %v4220, %v4219
        %v4226 = vpack.c.b16 %v4222, %v4221
        %vm4231 = vcmask 523264
        %v4233 = vsel %vm4231, %v4198, 0
        %4235 = vmatprep.subr.bf16.mxu0 0
        %4236 = vmatpush1.bf16.msra.mxu0 %v4223
        %4237 = vmatprep.subr.bf16.mxu0 0
        %4238 = vmatpush1.bf16.msra.mxu0 %v4224
        %4239 = vmatprep.subr.bf16.mxu0 0
        %4240 = vmatpush1.bf16.msra.mxu0 %v4225
        %4241 = vmatprep.subr.bf16.mxu0 0
        %4242 = vmatpush1.bf16.msra.mxu0 %v4226
        %4243 = vmatprep.subr.bf16.mxu0 0
        %4244 = vmatpush1.bf16.msra.mxu0 0
        %4245 = vmatprep.subr.bf16.mxu0 0
        %4246 = vmatpush1.bf16.msra.mxu0 0
        %4247 = vmatprep.subr.bf16.mxu0 0
        %4248 = vmatpush1.bf16.msra.mxu0 0
        %4249 = vmatprep.subr.bf16.mxu0 0
        %4250 = vmatpush1.bf16.msra.mxu0 0
        %4251 = vmatprep.subr.bf16.mxu0 0
        %4252 = vmatpush1.bf16.msra.mxu0 0
        %4253 = vmatprep.subr.bf16.mxu0 0
        %4254 = vmatpush1.bf16.msra.mxu0 0
        %4255 = vmatprep.subr.bf16.mxu0 0
        %4256 = vmatpush1.bf16.msra.mxu0 0
        %4257 = vmatprep.subr.bf16.mxu0 0
        %4258 = vmatpush1.bf16.msra.mxu0 0
        %4259 = vmatprep.subr.bf16.mxu0 0
        %4260 = vmatpush1.bf16.msra.mxu0 0
        %4261 = vmatprep.subr.bf16.mxu0 0
        %4262 = vmatpush1.bf16.msra.mxu0 0
        %4263 = vmatprep.subr.bf16.mxu0 0
        %4264 = vmatpush1.bf16.msra.mxu0 0
        %4265 = vmatprep.subr.bf16.mxu0 0
        %4266 = vmatpush1.bf16.msra.mxu0 0
        %4267 = vmatprep.mubr.bf16.mxu0 0
        %4268 = vmatmul.mubr.bf16.gmra.mrb[0].mxu0 %v4233
        %v4269 = vpop.f32.mrb[0].mxu0
        %v4270 = vadd.f32 0.0, %v4269
        %v4271 = vpop.f32.mrb[0].mxu0
        %v4272 = vpop.f32.mrb[0].mxu0
        %v4273 = vadd.f32 0.0, %v4272
        %v4274 = vpop.f32.mrb[0].mxu0
        %4275 = vdwg.mxu0
        %v4276 = vadd.f32 %v4068, %v4270
        %v4277 = vadd.f32 %v4069, %v4273
        %v4278 = vld [vmem:[%s1155] sm:$0x1]
        %v4280 = vlaneseq
        %v4281 = vshrl.u32 %v4280, 7
        %v4282 = vsub.s32 0, %v4281
        %v4283 = vrot.slane %v4278, %v4282
        %v4285 = vadd.f32 %v4276, %v4283
        %v4286 = vadd.f32 %v4277, %v4283
        %4287 = vst.msk [vmem:[#allocation2] sm:$0xff] %vm3357, %v4285
        %4288 = vst.msk [vmem:[#allocation2 + $0x8] sm:$0xff] %vm3357, %v4286
        %p4289 = scmp.lt.s32.totalorder %s83, 1
        // Predicated region
        $region129: #{forward.1} parent=123 // pred_check
          %p4290 = pneg %p4289
        $region130: #{forward.1} parent=123 // pred_check_branch
          %4292 = sbr.rel (%p4290) target = $region132
        $region131: #{forward.1} parent=123 // pred_region
          %v4294 = vsel %vm3688, %v3348, 0
          %4296 = vmatprep.subr.mxu0 0.0
          %4297 = vmatpush1.msra.mxu0 %v4285
          %4298 = vmatprep.subr.mxu0 0.0
          %4299 = vmatpush1.msra.mxu0 %v4286
          %4300 = vmatprep.subr.mxu0 0.0
          %4301 = vmatpush1.msra.mxu0 0.0
          %4302 = vmatprep.subr.mxu0 0.0
          %4303 = vmatpush1.msra.mxu0 0.0
          %4304 = vmatprep.subr.mxu0 0.0
          %4305 = vmatpush1.msra.mxu0 0.0
          %4306 = vmatprep.subr.mxu0 0.0
          %4307 = vmatpush1.msra.mxu0 0.0
          %4308 = vmatprep.subr.mxu0 0.0
          %4309 = vmatpush1.msra.mxu0 0.0
          %4310 = vmatprep.subr.mxu0 0.0
          %4311 = vmatpush1.msra.mxu0 0.0
          %4312 = vmatprep.subr.mxu0 0.0
          %4313 = vmatpush1.msra.mxu0 0.0
          %4314 = vmatprep.subr.mxu0 0.0
          %4315 = vmatpush1.msra.mxu0 0.0
          %4316 = vmatprep.subr.mxu0 0.0
          %4317 = vmatpush1.msra.mxu0 0.0
          %4318 = vmatprep.subr.mxu0 0.0
          %4319 = vmatpush1.msra.mxu0 0.0
          %4320 = vmatprep.subr.mxu0 0.0
          %4321 = vmatpush1.msra.mxu0 0.0
          %4322 = vmatprep.subr.mxu0 0.0
          %4323 = vmatpush1.msra.mxu0 0.0
          %4324 = vmatprep.subr.mxu0 0.0
          %4325 = vmatpush1.msra.mxu0 0.0
          %4326 = vmatprep.subr.mxu0 0.0
          %4327 = vmatpush1.msra.mxu0 0.0
          %4328 = vmatprep.subr.mxu0 0.0
          %4329 = vmatpush1.msra.mxu0 0.0
          %4330 = vmatprep.subr.mxu0 0.0
          %4331 = vmatpush1.msra.mxu0 0.0
          %4332 = vmatprep.subr.mxu0 0.0
          %4333 = vmatpush1.msra.mxu0 0.0
          %4334 = vmatprep.subr.mxu0 0.0
          %4335 = vmatpush1.msra.mxu0 0.0
          %4336 = vmatprep.subr.mxu0 0.0
          %4337 = vmatpush1.msra.mxu0 0.0
          %4338 = vmatprep.subr.mxu0 0.0
          %4339 = vmatpush1.msra.mxu0 0.0
          %4340 = vmatprep.subr.mxu0 0.0
          %4341 = vmatpush1.msra.mxu0 0.0
          %4342 = vmatprep.subr.mxu0 0.0
          %4343 = vmatpush1.msra.mxu0 0.0
          %4344 = vmatprep.subr.mxu0 0.0
          %4345 = vmatpush1.msra.mxu0 0.0
          %4346 = vmatprep.subr.mxu0 0.0
          %4347 = vmatpush1.msra.mxu0 0.0
          %4348 = vmatprep.subr.mxu0 0.0
          %4349 = vmatpush1.msra.mxu0 0.0
          %4350 = vmatprep.subr.mxu0 0.0
          %4351 = vmatpush1.msra.mxu0 0.0
          %4352 = vmatprep.subr.mxu0 0.0
          %4353 = vmatpush1.msra.mxu0 0.0
          %4354 = vmatprep.subr.mxu0 0.0
          %4355 = vmatpush1.msra.mxu0 0.0
          %4356 = vmatprep.subr.mxu0 0.0
          %4357 = vmatpush1.msra.mxu0 0.0
          %4358 = vmatprep.subr.mxu0 0.0
          %4359 = vmatpush1.msra.mxu0 0.0
          %4360 = vmatprep.mubr.f32.mxu0 0.0
          %4361 = vmatmul.mubr.f32.gmra.mrb[0].mxu0 %v4294
          %v4362 = vpop.f32.mrb[0].mxu0
          %v4363 = vadd.f32 0.0, %v4362
          %v4364 = vpop.f32.mrb[0].mxu0
          %4365 = vdwg.mxu0
          %v4366 = vrcp.pop %v3352
          %v4367 = vmul.f32 %v4363, %v4366
          %s4368 = scalar_lea.vmem %s1170, %s83
          %vm4369 = vcmask 253952
          %4370 = vst.msk [vmem:[%s4368] sm:$0x1] %vm4369, %v4367
        $region132: #{forward.1} parent=123 // pred_fallthru
          _
        %p4371 = scmp.eq.s32.totalorder %s83, 1
        // Predicated region
        $region133: #{forward.1} parent=123 // pred_check
          %p4372 = pneg %p4371
        $region134: #{forward.1} parent=123 // pred_check_branch
          %4374 = sbr.rel (%p4372) target = $region136
        $region135: #{forward.1} parent=123 // pred_region
          %v4375 = vmul.f32 %v4285, %v4285
          %v4376 = vmul.f32 %v4286, %v4286
          %v4377 = vsel %vm3357, %v4375, 0.0
          %4378 = vadd.xlane.f32.xlu0 %v4377
          %v4379 = vpop.xlane.xlu0 %4378
          %v4380 = vsel %vm3357, %v4376, 0.0
          %4381 = vadd.xlane.f32.xlu0 %v4380
          %v4382 = vpop.xlane.xlu0 %4381
          %v4383 = vrsqrt.pop %v4379
          %v4384 = vmul.f32 %v4379, %v4383
          %vm4385 = vcmp.eq.f32.partialorder %v4379, inf
          %v4386 = vsel %vm4385, %v4379, %v4384
          %vm4387 = vcmp.eq.f32.partialorder %v4379, 0.0
          %v4388 = vand.u32 %v4379, 2147483648
          %v4389 = vsel %vm4387, %v4388, %v4386
          %v4390 = vrsqrt.pop %v4382
          %v4391 = vmul.f32 %v4382, %v4390
          %vm4392 = vcmp.eq.f32.partialorder %v4382, inf
          %v4393 = vsel %vm4392, %v4382, %v4391
          %vm4394 = vcmp.eq.f32.partialorder %v4382, 0.0
          %v4395 = vand.u32 %v4382, 2147483648
          %v4396 = vsel %vm4394, %v4395, %v4393
          %v4397 = vmax.f32 %v4389, 1e-12
          %v4398 = vmax.f32 %v4396, 1e-12
          %v4399 = vrcp.pop %v4397
          %v4400 = vmul.f32 %v4285, %v4399
          %v4401 = vrcp.pop %v4398
          %v4402 = vmul.f32 %v4286, %v4401
          %4403 = vst.msk [vmem:[%s1086] sm:$0xff] %vm3357, %v4400
          %4404 = vst.msk [vmem:[%s1086 + $0x8] sm:$0xff] %vm3357, %v4402
          %v4406 = vsel %vm3688, %v3348, 0
          %4408 = vmatprep.subr.mxu0 0.0
          %4409 = vmatpush1.msra.mxu0 %v4400
          %4410 = vmatprep.subr.mxu0 0.0
          %4411 = vmatpush1.msra.mxu0 %v4402
          %4412 = vmatprep.subr.mxu0 0.0
          %4413 = vmatpush1.msra.mxu0 0.0
          %4414 = vmatprep.subr.mxu0 0.0
          %4415 = vmatpush1.msra.mxu0 0.0
          %4416 = vmatprep.subr.mxu0 0.0
          %4417 = vmatpush1.msra.mxu0 0.0
          %4418 = vmatprep.subr.mxu0 0.0
          %4419 = vmatpush1.msra.mxu0 0.0
          %4420 = vmatprep.subr.mxu0 0.0
          %4421 = vmatpush1.msra.mxu0 0.0
          %4422 = vmatprep.subr.mxu0 0.0
          %4423 = vmatpush1.msra.mxu0 0.0
          %4424 = vmatprep.subr.mxu0 0.0
          %4425 = vmatpush1.msra.mxu0 0.0
          %4426 = vmatprep.subr.mxu0 0.0
          %4427 = vmatpush1.msra.mxu0 0.0
          %4428 = vmatprep.subr.mxu0 0.0
          %4429 = vmatpush1.msra.mxu0 0.0
          %4430 = vmatprep.subr.mxu0 0.0
          %4431 = vmatpush1.msra.mxu0 0.0
          %4432 = vmatprep.subr.mxu0 0.0
          %4433 = vmatpush1.msra.mxu0 0.0
          %4434 = vmatprep.subr.mxu0 0.0
          %4435 = vmatpush1.msra.mxu0 0.0
          %4436 = vmatprep.subr.mxu0 0.0
          %4437 = vmatpush1.msra.mxu0 0.0
          %4438 = vmatprep.subr.mxu0 0.0
          %4439 = vmatpush1.msra.mxu0 0.0
          %4440 = vmatprep.subr.mxu0 0.0
          %4441 = vmatpush1.msra.mxu0 0.0
          %4442 = vmatprep.subr.mxu0 0.0
          %4443 = vmatpush1.msra.mxu0 0.0
          %4444 = vmatprep.subr.mxu0 0.0
          %4445 = vmatpush1.msra.mxu0 0.0
          %4446 = vmatprep.subr.mxu0 0.0
          %4447 = vmatpush1.msra.mxu0 0.0
          %4448 = vmatprep.subr.mxu0 0.0
          %4449 = vmatpush1.msra.mxu0 0.0
          %4450 = vmatprep.subr.mxu0 0.0
          %4451 = vmatpush1.msra.mxu0 0.0
          %4452 = vmatprep.subr.mxu0 0.0
          %4453 = vmatpush1.msra.mxu0 0.0
          %4454 = vmatprep.subr.mxu0 0.0
          %4455 = vmatpush1.msra.mxu0 0.0
          %4456 = vmatprep.subr.mxu0 0.0
          %4457 = vmatpush1.msra.mxu0 0.0
          %4458 = vmatprep.subr.mxu0 0.0
          %4459 = vmatpush1.msra.mxu0 0.0
          %4460 = vmatprep.subr.mxu0 0.0
          %4461 = vmatpush1.msra.mxu0 0.0
          %4462 = vmatprep.subr.mxu0 0.0
          %4463 = vmatpush1.msra.mxu0 0.0
          %4464 = vmatprep.subr.mxu0 0.0
          %4465 = vmatpush1.msra.mxu0 0.0
          %4466 = vmatprep.subr.mxu0 0.0
          %4467 = vmatpush1.msra.mxu0 0.0
          %4468 = vmatprep.subr.mxu0 0.0
          %4469 = vmatpush1.msra.mxu0 0.0
          %4470 = vmatprep.subr.mxu0 0.0
          %4471 = vmatpush1.msra.mxu0 0.0
          %4472 = vmatprep.mubr.f32.mxu0 0.0
          %4473 = vmatmul.mubr.f32.gmra.mrb[0].mxu0 %v4406
          %v4474 = vpop.f32.mrb[0].mxu0
          %v4475 = vadd.f32 0.0, %v4474
          %v4476 = vpop.f32.mrb[0].mxu0
          %4477 = vdwg.mxu0
          %v4478 = vrcp.pop %v3352
          %v4479 = vmul.f32 %v4475, %v4478
          %s4480 = scalar_lea.vmem %s1170, %s83
          %vm4481 = vcmask 253952
          %4482 = vst.msk [vmem:[%s4480] sm:$0x1] %vm4481, %v4479
          %v4483 = vpack.c.bf16 %v4402, %v4400
          %v4484 = vld [vmem:[%s37] sm:$0xf]
          %v4485 = vld [vmem:[%s37 + $0x4] sm:$0xf]
          %v4486 = vld [vmem:[%s37 + $0x8] sm:$0xf]
          %v4487 = vld [vmem:[%s37 + $0xc] sm:$0xf]
          %v4488 = vld [vmem:[%s39] sm:$0x1]
          %v4490 = vlaneseq
          %v4491 = vshrl.u32 %v4490, 7
          %v4492 = vsub.s32 0, %v4491
          %v4493 = vrot.slane %v4488, %v4492
          %v4499 = vunpack.c.l.b16 %v4484
          %v4500 = vunpack.c.l.b16 %v4485
          %v4501 = vunpack.c.l.b16 %v4486
          %v4502 = vunpack.c.l.b16 %v4487
          %v4503 = vpack.c.b16 %v4500, %v4499
          %v4504 = vpack.c.b16 %v4502, %v4501
          %v4508 = vsel %vm3357, %v4483, 0
          %4510 = vmatprep.subr.bf16.mxu0 0
          %4511 = vmatpush1.bf16.msra.mxu0 %v4503
          %4512 = vmatprep.subr.bf16.mxu0 0
          %4513 = vmatpush1.bf16.msra.mxu0 %v4504
          %4514 = vmatprep.subr.bf16.mxu0 0
          %4515 = vmatpush1.bf16.msra.mxu0 0
          %4516 = vmatprep.subr.bf16.mxu0 0
          %4517 = vmatpush1.bf16.msra.mxu0 0
          %4518 = vmatprep.subr.bf16.mxu0 0
          %4519 = vmatpush1.bf16.msra.mxu0 0
          %4520 = vmatprep.subr.bf16.mxu0 0
          %4521 = vmatpush1.bf16.msra.mxu0 0
          %4522 = vmatprep.subr.bf16.mxu0 0
          %4523 = vmatpush1.bf16.msra.mxu0 0
          %4524 = vmatprep.subr.bf16.mxu0 0
          %4525 = vmatpush1.bf16.msra.mxu0 0
          %4526 = vmatprep.subr.bf16.mxu0 0
          %4527 = vmatpush1.bf16.msra.mxu0 0
          %4528 = vmatprep.subr.bf16.mxu0 0
          %4529 = vmatpush1.bf16.msra.mxu0 0
          %4530 = vmatprep.subr.bf16.mxu0 0
          %4531 = vmatpush1.bf16.msra.mxu0 0
          %4532 = vmatprep.subr.bf16.mxu0 0
          %4533 = vmatpush1.bf16.msra.mxu0 0
          %4534 = vmatprep.subr.bf16.mxu0 0
          %4535 = vmatpush1.bf16.msra.mxu0 0
          %4536 = vmatprep.subr.bf16.mxu0 0
          %4537 = vmatpush1.bf16.msra.mxu0 0
          %4538 = vmatprep.subr.bf16.mxu0 0
          %4539 = vmatpush1.bf16.msra.mxu0 0
          %4540 = vmatprep.subr.bf16.mxu0 0
          %4541 = vmatpush1.bf16.msra.mxu0 0
          %4542 = vmatprep.mubr.bf16.mxu0 0
          %4543 = vmatmul.mubr.bf16.gmra.mrb[0].mxu0 %v4508
          %v4544 = vpop.f32.mrb[0].mxu0
          %v4545 = vadd.f32 %v4493, %v4544
          %v4546 = vpop.f32.mrb[0].mxu0
          %v4547 = vpop.f32.mrb[0].mxu0
          %v4548 = vadd.f32 %v4493, %v4547
          %v4549 = vpop.f32.mrb[0].mxu0
          %4550 = vdwg.mxu0
          %v4551 = vmax.f32 %v4545, 0.0
          %v4552 = vmax.f32 %v4548, 0.0
          %v4553 = vld [vmem:[%s41] sm:$0x1]
          %v4555 = vlaneseq
          %v4556 = vshrl.u32 %v4555, 7
          %v4557 = vsub.s32 0, %v4556
          %v4558 = vrot.slane %v4553, %v4557
          %v4560 = vmul.f32 %v4551, %v4558
          %v4561 = vmul.f32 %v4552, %v4558
          %v4562 = vsel %vm4231, %v4560, 0.0
          %4563 = vadd.xlane.f32.xlu0 %v4562
          %v4564 = vpop.xlane.xlu0 %4563
          %v4565 = vsel %vm4231, %v4561, 0.0
          %4566 = vadd.xlane.f32.xlu0 %v4565
          %v4567 = vpop.xlane.xlu0 %4566
          %v4568 = vld [vmem:[#allocation3] sm:$0x1]
          %v4570 = vlaneseq
          %v4571 = vshrl.u32 %v4570, 7
          %v4572 = vsub.s32 0, %v4571
          %v4573 = vrot.slane %v4568, %v4572
          %v4575 = vadd.f32 %v4564, %v4573
          %v4576 = vadd.f32 %v4567, %v4573
          %v4577 = vld [vmem:[%s1117] sm:$0xff]
          %v4578 = vld [vmem:[%s1117 + $0x8] sm:$0xff]
          %v4579 = vmul.f32 %v4575, %v4577
          %v4580 = vmul.f32 %v4576, %v4578
          %vm4581 = vcmask 7168
          %4582 = vst.msk [vmem:[%s1166] sm:$0xff] %vm4581, %v4579
          %4583 = vst.msk [vmem:[%s1166 + $0x8] sm:$0xff] %vm4581, %v4580
          %v4584 = vpack.c.bf16 %v4479, %v4479
          %v4585 = vld [vmem:[%s45] sm:$0xf]
          %v4586 = vld [vmem:[%s45 + $0x4] sm:$0xf]
          %v4587 = vld [vmem:[%s45 + $0x8] sm:$0xf]
          %v4588 = vld [vmem:[%s45 + $0xc] sm:$0xf]
          %v4589 = vld [vmem:[%s47] sm:$0x1]
          %v4594 = vunpack.c.l.b16 %v4585
          %v4595 = vunpack.c.l.b16 %v4586
          %v4596 = vunpack.c.l.b16 %v4587
          %v4597 = vunpack.c.l.b16 %v4588
          %v4598 = vpack.c.b16 %v4595, %v4594
          %v4599 = vpack.c.b16 %v4597, %v4596
          %v4603 = vsel %vm3357, %v4584, 0
          %4605 = vmatprep.subr.bf16.mxu0 0
          %4606 = vmatpush1.bf16.msra.mxu0 %v4598
          %4607 = vmatprep.subr.bf16.mxu0 0
          %4608 = vmatpush1.bf16.msra.mxu0 %v4599
          %4609 = vmatprep.subr.bf16.mxu0 0
          %4610 = vmatpush1.bf16.msra.mxu0 0
          %4611 = vmatprep.subr.bf16.mxu0 0
          %4612 = vmatpush1.bf16.msra.mxu0 0
          %4613 = vmatprep.subr.bf16.mxu0 0
          %4614 = vmatpush1.bf16.msra.mxu0 0
          %4615 = vmatprep.subr.bf16.mxu0 0
          %4616 = vmatpush1.bf16.msra.mxu0 0
          %4617 = vmatprep.subr.bf16.mxu0 0
          %4618 = vmatpush1.bf16.msra.mxu0 0
          %4619 = vmatprep.subr.bf16.mxu0 0
          %4620 = vmatpush1.bf16.msra.mxu0 0
          %4621 = vmatprep.subr.bf16.mxu0 0
          %4622 = vmatpush1.bf16.msra.mxu0 0
          %4623 = vmatprep.subr.bf16.mxu0 0
          %4624 = vmatpush1.bf16.msra.mxu0 0
          %4625 = vmatprep.subr.bf16.mxu0 0
          %4626 = vmatpush1.bf16.msra.mxu0 0
          %4627 = vmatprep.subr.bf16.mxu0 0
          %4628 = vmatpush1.bf16.msra.mxu0 0
          %4629 = vmatprep.subr.bf16.mxu0 0
          %4630 = vmatpush1.bf16.msra.mxu0 0
          %4631 = vmatprep.subr.bf16.mxu0 0
          %4632 = vmatpush1.bf16.msra.mxu0 0
          %4633 = vmatprep.subr.bf16.mxu0 0
          %4634 = vmatpush1.bf16.msra.mxu0 0
          %4635 = vmatprep.subr.bf16.mxu0 0
          %4636 = vmatpush1.bf16.msra.mxu0 0
          %4637 = vmatprep.mubr.bf16.mxu0 0
          %4638 = vmatmul.mubr.bf16.gmra.mrb[0].mxu0 %v4603
          %v4639 = vpop.f32.mrb[0].mxu0
          %v4640 = vadd.f32 %v4589, %v4639
          %v4641 = vpop.f32.mrb[0].mxu0
          %v4642 = vpop.f32.mrb[0].mxu0
          %v4643 = vpop.f32.mrb[0].mxu0
          %4644 = vdwg.mxu0
          %v4645 = vmax.f32 %v4640, 0.0
          %v4646 = vld [vmem:[%s49] sm:$0x1]
          %v4647 = vmul.f32 %v4645, %v4646
          %vm4648 = vcmask 516096
          %v4649 = vsel %vm4648, %v4647, 0.0
          %4650 = vadd.xlane.f32.xlu0 %v4649
          %v4651 = vpop.xlane.xlu0 %4650
          %v4652 = vld [vmem:[#allocation4] sm:$0x1]
          %v4653 = vadd.f32 %v4651, %v4652
          %vm4654 = vcmask 0
          %4655 = vst.msk [vmem:[%s1173] sm:$0x1] %vm4654, %v4653
        $region136: #{forward.1} parent=123 // pred_fallthru
          _
        %s4656 = sand.u32 %s719, 1
        %s4657 = scalar_lea.sflag [#allocation6], %s4656
        %s4658 = sand.u32 %s719, 1
        %s4659 = smul.addr %s4658, 16
        %s4660 = scalar_lea.vmem [#allocation5], %s4659
        %p4661 = scmp.lt.s32.totalorder %s82, 1
        %s4662 = scalar_select %p4661, %s82, 1
        %s4663 = smul.addr %s4662, 2
        %s4664 = smul.addr %s4663, 8
        %s4665 = scalar_lea.vmem %s55, %s4664
        %p4666 = scmp.lt.s32.totalorder %s82, 1
        %s4667 = scalar_select %p4666, %s82, 1
        %s4668 = smul.addr %s4667, 2
        %s4669 = scalar_lea.vmem %s57, %s4668
        %p4670 = scmp.lt.s32.totalorder %s82, 1
        %s4671 = scalar_select %p4670, %s82, 1
        %s4672 = scalar_lea.vmem %s59, %s4671
        // Predicated region
        $region137: #{forward.1} parent=123 // pred_check
          %p4673 = pneg %p729
        $region138: #{forward.1} parent=123 // pred_check_branch
          %4675 = sbr.rel (%p4673) target = $region140
        $region139: #{forward.1} parent=123 // pred_region
          %s4677 = ssub.s32 256, 256
          %4678 = vsyncadd %s4657, %s4677
          %s4679 = smul.addr %s82, 2
          %s4680 = smul.addr %s4679, 128
          %s4681 = scalar_lea.hbm %s53, %s4680
          %s4682 = sshll.u32 %s4660, 4
          %s4683 = int_to_ptr.vmem [resolvable:$true] %s4682
          %4688 = dma.vmem_to_hbm [thread:$0]  %s4683, 256, %s4681, %s4657, 128, 128, 8
        $region140: #{forward.1} parent=123 // pred_fallthru
          _
        // Predicated region
        $region141: #{forward.1} parent=123 // pred_check
          %p4689 = pneg %p755
        $region142: #{forward.1} parent=123 // pred_check_branch
          %4691 = sbr.rel (%p4689) target = $region144
        $region143: #{forward.1} parent=123 // pred_region
          _
        $region144: #{forward.1} parent=123 // pred_fallthru
          _
        // Predicated region
        $region145: #{forward.1} parent=123 // pred_check
          %p4692 = pneg %p781
        $region146: #{forward.1} parent=123 // pred_check_branch
          %4694 = sbr.rel (%p4692) target = $region148
        $region147: #{forward.1} parent=123 // pred_region
          _
        $region148: #{forward.1} parent=123 // pred_fallthru
          _
        // Predicated region
        $region149: #{forward.1} parent=123 // pred_check
          %p4695 = pneg %p807
        $region150: #{forward.1} parent=123 // pred_check_branch
          %4697 = sbr.rel (%p4695) target = $region152
        $region151: #{forward.1} parent=123 // pred_region
          _
        $region152: #{forward.1} parent=123 // pred_fallthru
          _
      $region124: #{forward.1} parent=5 // pred_fallthru
        _
      %p4698 = scmp.le.s32.totalorder 2, %s73
      // Predicated region
      $region153: #{forward.1} parent=5 // pred_check
        %p4699 = pneg %p4698
      $region154: #{forward.1} parent=5 // pred_check_branch
        %4701 = sbr.rel (%p4699) target = $region156
      $region155: #{forward.1} parent=5 // pred_region
        %s4702 = ssub.s32 %s73, 2
        // Predicated region
        $region157: #{forward.1} parent=155 // pred_check
          %p4703 = pneg %p735
        $region158: #{forward.1} parent=155 // pred_check_branch
          %4705 = sbr.rel (%p4703) target = $region160
        $region159: #{forward.1} parent=155 // pred_region
          %s4706 = sand.u32 %s720, 1
          %s4707 = scalar_lea.sflag [#allocation6], %s4706
          %s4708 = sand.u32 %s720, 1
          %s4709 = smul.addr %s4708, 16
          %s4710 = scalar_lea.vmem [#allocation5], %s4709
          %4711 = dma.done %s4707, 256
        $region160: #{forward.1} parent=155 // pred_fallthru
          _
        // Predicated region
        $region161: #{forward.1} parent=155 // pred_check
          %p4712 = pneg %p761
        $region162: #{forward.1} parent=155 // pred_check_branch
          %4714 = sbr.rel (%p4712) target = $region164
        $region163: #{forward.1} parent=155 // pred_region
          %p4715 = scmp.lt.s32.totalorder %s84, 1
          %s4716 = scalar_select %p4715, %s84, 1
          %s4717 = smul.addr %s4716, 2
          %s4718 = smul.addr %s4717, 8
          %s4719 = scalar_lea.vmem %s55, %s4718
        $region164: #{forward.1} parent=155 // pred_fallthru
          _
        // Predicated region
        $region165: #{forward.1} parent=155 // pred_check
          %p4720 = pneg %p787
        $region166: #{forward.1} parent=155 // pred_check_branch
          %4722 = sbr.rel (%p4720) target = $region168
        $region167: #{forward.1} parent=155 // pred_region
          %p4723 = scmp.lt.s32.totalorder %s84, 1
          %s4724 = scalar_select %p4723, %s84, 1
          %s4725 = smul.addr %s4724, 2
          %s4726 = scalar_lea.vmem %s57, %s4725
        $region168: #{forward.1} parent=155 // pred_fallthru
          _
        // Predicated region
        $region169: #{forward.1} parent=155 // pred_check
          %p4727 = pneg %p813
        $region170: #{forward.1} parent=155 // pred_check_branch
          %4729 = sbr.rel (%p4727) target = $region172
        $region171: #{forward.1} parent=155 // pred_region
          %p4730 = scmp.lt.s32.totalorder %s84, 1
          %s4731 = scalar_select %p4730, %s84, 1
          %s4732 = scalar_lea.vmem %s59, %s4731
        $region172: #{forward.1} parent=155 // pred_fallthru
          _
      $region156: #{forward.1} parent=5 // pred_fallthru
        _
    $region6: #{forward.1} parent=1 // loop_footer
      %s77 = sadd.s32 1, %s73
    $region7: #{forward.1} parent=1 // loop_footer_branch
      %72 = sbr.rel target = $region3
    $region8: #{forward.1} parent=1 // loop_exit
      _
    %4733 = vsyncpa [#allocation6], 1
    %s4734 = scalar_lea.sflag [#allocation6], 1
    %4735 = vsyncpa %s4734, 1

</llo_original>
